<compile_context>
chip_gen: v7x
topology: tpu7x:2x2x1
jax: 0.10.0
libtpu: 0.0.40
codegen_flags: <defaults>
</compile_context>

<pallas_src>
import functools

import jax
import jax.numpy as jnp
from jax.experimental import pallas as pl
from jax.experimental.pallas import tpu as pltpu


# ----------------------------------------------------------------------------
# Kernel 1: fused projection + 3x3 convs (to_sgnl ++ to_attn) for G templates.
# ----------------------------------------------------------------------------
def _proj_conv_kernel(t1d_ref, t2d_ref, pw2_ref, pwl_ref, pwr_ref, pb_ref,
                      wf_ref, bf_ref, out_ref, hp_ref, acc_ref):
    G, L, d1 = t1d_ref.shape
    d2 = t2d_ref.shape[-1]
    C = pw2_ref.shape[-1]
    Cp = wf_ref.shape[-1]
    M = G * L * L

    # Zero the padded projection scratch every step (border must be exactly 0
    # for conv "SAME"; per-step zeroing stays correct under megacore splits).
    hp_ref[...] = jnp.zeros_like(hp_ref)

    # --- Linear projection, split so feat = cat(t2d, left, right) is never
    # built.  Only the L*L interior rows are projected.
    h2 = jnp.dot(t2d_ref[...].reshape(M, d2), pw2_ref[...],
                 preferred_element_type=jnp.float32)               # (M, C)

    t1 = t1d_ref[...]                                              # (G, L, d1)
    pwl = pwl_ref[...]                                             # (d1, C)
    pwr = pwr_ref[...]                                             # (d1, C)
    rl = jnp.zeros((G, L, C), jnp.float32)
    rr = jnp.zeros((G, L, C), jnp.float32)
    for k in range(d1):            # d1 is tiny (1): VPU mul instead of K=1 MXU
        rl = rl + t1[:, :, k:k + 1] * pwl[k:k + 1, :]
        rr = rr + t1[:, :, k:k + 1] * pwr[k:k + 1, :]

    h = (h2.reshape(G, L, L, C)
         + rl[:, :, None, :]            # "left"  : constant along axis j
         + rr[:, None, :, :]            # "right" : constant along axis i
         + pb_ref[...])
    hp_ref[:, 1:L + 1, 1:L + 1, :] = h  # interior write; border stays zero

    # --- fused 3x3 conv: 9 tap matmuls, N = Cp (lane-dense), VMEM accumulator.
    # Channels [0:C] are to_sgnl, channel [C] is to_attn, rest zero padding.
    acc_ref[...] = jnp.broadcast_to(bf_ref[...], (M, Cp))
    for dy in range(3):
        for dx in range(3):
            xs = hp_ref[:, dy:dy + L, dx:dx + L, :].reshape(M, C)
            acc_ref[...] += jnp.dot(xs, wf_ref[dy * 3 + dx],
                                    preferred_element_type=jnp.float32)

    out_ref[...] = acc_ref[...].reshape(G, L, L, Cp)


# ----------------------------------------------------------------------------
# Kernel 2: softmax over templates T + weighted sum, straight off the slab.
# ----------------------------------------------------------------------------
def _softmax_sum_kernel(slab_ref, out_ref):
    C = out_ref.shape[-1]
    x = slab_ref[0]                               # (T, RT, L, Cp)
    a = x[:, :, :, C:C + 1]                       # attn logits (T, RT, L, 1)
    m = jnp.max(a, axis=0, keepdims=True)
    e = jnp.exp(a - m)
    w = e / jnp.sum(e, axis=0, keepdims=True)     # softmax over T (stable)
    out_ref[0] = jnp.sum(w * x[:, :, :, :C], axis=0)


# ----------------------------------------------------------------------------
# Block-size heuristics.
# ----------------------------------------------------------------------------
def _choose_group(bt, L, d2, C, Cp, want_rows=256, vmem_budget=6 << 20):
    """Templates per kernel-1 grid step: amortize per-step overhead, feed the
    MXU with >= ~256 rows per matmul, stay well inside VMEM, and keep >= 2
    grid steps so both v7x TensorCores get work."""
    per_t = 4 * (3 * L * L * d2 + (L + 2) * (L + 2) * C + 3 * L * L * Cp)
    best = 1
    for g in range(1, bt + 1):
        if bt % g:
            continue
        if g * per_t > vmem_budget:
            continue
        if bt >= 2 and bt // g < 2:
            continue
        best = g
        if g * L * L >= want_rows:
            break
    return best


def _choose_row_tile(T, L, Cp, budget=4 << 20):
    """Spatial row tile for kernel 2 so the (1,T,rt,L,Cp) block stays a few
    MiB (matters for large L on v7x's 64 MiB VMEM)."""
    rt = L
    for cand in range(L, 0, -1):
        if L % cand:
            continue
        if cand != L and cand % 8:
            continue
        rt = cand
        if 4 * T * cand * L * Cp <= budget:
            return cand
    return rt


# ----------------------------------------------------------------------------
# Wrapper.
# ----------------------------------------------------------------------------
@jax.jit
def templ_emb_forward(t1d, t2d, idx, params):
    del idx  # unused by the PyTorch forward as well
    B, T, L, d1 = t1d.shape
    d2 = t2d.shape[-1]
    C = params["proj_w"].shape[0]            # d_templ
    n_out = C + 1                            # sgnl channels + 1 attn channel
    Cp = ((n_out + 127) // 128) * 128        # lane-dense fused output width
    BT = B * T

    t1d_f = t1d.reshape(BT, L, d1).astype(jnp.float32)
    t2d_f = t2d.reshape(BT, L, L, d2).astype(jnp.float32)

    # Weight layout plumbing (PyTorch -> kernel).
    pw = params["proj_w"].T.astype(jnp.float32)            # (d_in, C)
    pw2, pwl, pwr = pw[:d2], pw[d2:d2 + d1], pw[d2 + d1:]  # t2d / left / right
    pb = params["proj_b"].reshape(1, C).astype(jnp.float32)

    sw = jnp.transpose(params["sgnl_w"], (2, 3, 1, 0))     # OIHW -> HWIO (3,3,C,C)
    aw = jnp.transpose(params["attn_w"], (2, 3, 1, 0))     # (3,3,C,1)
    wf = jnp.concatenate([sw, aw], axis=-1).astype(jnp.float32)   # (3,3,C,C+1)
    wf = jnp.pad(wf, ((0, 0), (0, 0), (0, 0), (0, Cp - n_out)))
    wf = wf.reshape(9, C, Cp)                               # tap-major fused weight
    bf = jnp.concatenate(
        [params["sgnl_b"].astype(jnp.float32),
         params["attn_b"].astype(jnp.float32),
         jnp.zeros((Cp - n_out,), jnp.float32)]).reshape(1, Cp)

    G = _choose_group(BT, L, d2, C, Cp)

    slab = pl.pallas_call(
        _proj_conv_kernel,
        out_shape=jax.ShapeDtypeStruct((BT, L, L, Cp), jnp.float32),
        grid_spec=pltpu.PrefetchScalarGridSpec(
            num_scalar_prefetch=0,
            grid=(BT // G,),
            in_specs=[
                pl.BlockSpec((G, L, d1), lambda n: (n, 0, 0)),
                pl.BlockSpec((G, L, L, d2), lambda n: (n, 0, 0, 0)),
                pl.BlockSpec((d2, C), lambda n: (0, 0)),
                pl.BlockSpec((d1, C), lambda n: (0, 0)),
                pl.BlockSpec((d1, C), lambda n: (0, 0)),
                pl.BlockSpec((1, C), lambda n: (0, 0)),
                pl.BlockSpec((9, C, Cp), lambda n: (0, 0, 0)),
                pl.BlockSpec((1, Cp), lambda n: (0, 0)),
            ],
            out_specs=pl.BlockSpec((G, L, L, Cp), lambda n: (n, 0, 0, 0)),
            scratch_shapes=[
                pltpu.VMEM((G, L + 2, L + 2, C), jnp.float32),  # padded proj map
                pltpu.VMEM((G * L * L, Cp), jnp.float32),       # conv accumulator
            ],
        ),
        compiler_params=pltpu.CompilerParams(
            dimension_semantics=("parallel",),
            vmem_limit_bytes=64 * 1024 * 1024),
    )(t1d_f, t2d_f, pw2, pwl, pwr, pb, wf, bf)

    # Kernel 2 consumes the fused slab directly (attn = channel C).
    slab5 = slab.reshape(B, T, L, L, Cp)
    RT = _choose_row_tile(T, L, Cp)
    out = pl.pallas_call(
        _softmax_sum_kernel,
        out_shape=jax.ShapeDtypeStruct((B, L, L, C), jnp.float32),
        grid_spec=pltpu.PrefetchScalarGridSpec(
            num_scalar_prefetch=0,
            grid=(B, L // RT),
            in_specs=[pl.BlockSpec((1, T, RT, L, Cp),
                                   lambda b, r: (b, 0, r, 0, 0))],
            out_specs=pl.BlockSpec((1, RT, L, C), lambda b, r: (b, r, 0, 0)),
        ),
        compiler_params=pltpu.CompilerParams(
            dimension_semantics=("parallel", "parallel"),
            vmem_limit_bytes=64 * 1024 * 1024),
    )(slab5)
    return out


# ----------------------------------------------------------------------------
# Pure-JAX reference (for correctness check against the Pallas kernels).
# ----------------------------------------------------------------------------
def templ_emb_reference(t1d, t2d, params):
    B, T, L, d1 = t1d.shape
    left = jnp.broadcast_to(t1d[:, :, :, None, :], (B, T, L, L, d1))
    right = jnp.broadcast_to(t1d[:, :, None, :, :], (B, T, L, L, d1))
    feat = jnp.concatenate([t2d, left, right], axis=-1)
    h = jnp.einsum("btijd,cd->btijc", feat, params["proj_w"],
                   precision=jax.lax.Precision.HIGHEST) + params["proj_b"]
    C = h.shape[-1]
    hn = h.reshape(B * T, L, L, C)
    sw = jnp.transpose(params["sgnl_w"], (2, 3, 1, 0))
    aw = jnp.transpose(params["attn_w"], (2, 3, 1, 0))
    dn = ("NHWC", "HWIO", "NHWC")
    sgnl = jax.lax.conv_general_dilated(
        hn, sw, (1, 1), "SAME", dimension_numbers=dn,
        precision=jax.lax.Precision.HIGHEST) + params["sgnl_b"]
    attn = jax.lax.conv_general_dilated(
        hn, aw, (1, 1), "SAME", dimension_numbers=dn,
        precision=jax.lax.Precision.HIGHEST) + params["attn_b"]
    sgnl = sgnl.reshape(B, T, L, L, C)
    attn = attn.reshape(B, T, L, L, 1)
    w = jax.nn.softmax(attn, axis=1)
    return jnp.sum(w * sgnl, axis=1)                      # (B, L, L, C)


def init_params(key, d_t1d=1, d_t2d=46, d_templ=64):
    d_in = 2 * d_t1d + d_t2d
    k = jax.random.split(key, 6)
    scale = 0.1
    return {
        # PyTorch nn.Linear / nn.Conv2d native layouts:
        "proj_w": scale * jax.random.normal(k[0], (d_templ, d_in), jnp.float32),
        "proj_b": scale * jax.random.normal(k[1], (d_templ,), jnp.float32),
        "sgnl_w": scale * jax.random.normal(k[2], (d_templ, d_templ, 3, 3), jnp.float32),
        "sgnl_b": scale * jax.random.normal(k[3], (d_templ,), jnp.float32),
        "attn_w": scale * jax.random.normal(k[4], (1, d_templ, 3, 3), jnp.float32),
        "attn_b": scale * jax.random.normal(k[5], (1,), jnp.float32),
    }


if __name__ == "__main__":
    B, T, L = 2, 4, 8
    d_t1d, d_t2d, d_templ = 1, 46, 64

    key = jax.random.PRNGKey(0)
    k1, k2, k3 = jax.random.split(key, 3)
    t1d = jax.random.normal(k1, (B, T, L, d_t1d), jnp.float32)
    t2d = jax.random.normal(k2, (B, T, L, L, d_t2d), jnp.float32)
    idx = jnp.broadcast_to(jnp.arange(L, dtype=jnp.int32), (B, L))  # unused

    params = init_params(k3, d_t1d, d_t2d, d_templ)

    out = templ_emb_forward(t1d, t2d, idx, params)
    out = jax.block_until_ready(out)
    assert out.shape == (B, L, L, d_templ), out.shape

    ref = jax.block_until_ready(templ_emb_reference(t1d, t2d, params))
    max_err = float(jnp.max(jnp.abs(out - ref)))
    assert jnp.allclose(out, ref, rtol=1e-2, atol=1e-2), max_err

    print("KERNEL_OK")
</pallas_src>

<mosaic_0001>
module attributes {stable_mosaic.version = 11 : i64} {
  func.func @_softmax_sum_kernel(%arg0: i32, %arg1: i32, %arg2: memref<1x4x8x8x128xf32, #tpu.memory_space<vmem>>, %arg3: memref<1x8x8x64xf32, #tpu.memory_space<vmem>>) attributes {dimension_semantics = [#tpu.dimension_semantics<parallel>, #tpu.dimension_semantics<parallel>], iteration_bounds = array<i64: 2, 1>, scalar_prefetch = 0 : i64, scratch_operands = 0 : i64, tpu.core_type = #tpu.core_type<tc>, window_params = [{transform_indices = @transform_0, window_bounds = array<i64: 1, 4, 8, 8, 128>}, {transform_indices = @transform_1, window_bounds = array<i64: 1, 8, 8, 64>}]} {
    %c0 = arith.constant 0 : index
    %c0_0 = arith.constant 0 : index
    %c0_1 = arith.constant 0 : index
    %c0_2 = arith.constant 0 : index
    %c0_3 = arith.constant 0 : index
    %0 = vector.load %arg2[%c0, %c0_0, %c0_1, %c0_2, %c0_3] : memref<1x4x8x8x128xf32, #tpu.memory_space<vmem>>, vector<1x4x8x8x128xf32>
    %1 = vector.shape_cast %0 : vector<1x4x8x8x128xf32> to vector<4x8x8x128xf32>
    %2 = vector.extract_strided_slice %1 {offsets = [0, 0, 0, 64], sizes = [4, 8, 8, 1], strides = [1, 1, 1, 1]} : vector<4x8x8x128xf32> to vector<4x8x8x1xf32>
    %cst = arith.constant dense<0xFF800000> : vector<8x8x1xf32>
    %3 = vector.multi_reduction <maximumf>, %2, %cst [0] : vector<4x8x8x1xf32> to vector<8x8x1xf32>
    %4 = vector.shape_cast %3 : vector<8x8x1xf32> to vector<1x8x8x1xf32>
    %5 = vector.broadcast %4 : vector<1x8x8x1xf32> to vector<4x8x8x1xf32>
    %6 = arith.subf %2, %5 : vector<4x8x8x1xf32>
    %7 = math.exp %6 : vector<4x8x8x1xf32>
    %cst_4 = arith.constant dense<0.000000e+00> : vector<8x8x1xf32>
    %8 = vector.multi_reduction <add>, %7, %cst_4 [0] : vector<4x8x8x1xf32> to vector<8x8x1xf32>
    %9 = vector.shape_cast %8 : vector<8x8x1xf32> to vector<1x8x8x1xf32>
    %10 = vector.broadcast %9 : vector<1x8x8x1xf32> to vector<4x8x8x1xf32>
    %11 = arith.divf %7, %10 : vector<4x8x8x1xf32>
    %12 = vector.extract_strided_slice %1 {offsets = [0, 0, 0, 0], sizes = [4, 8, 8, 64], strides = [1, 1, 1, 1]} : vector<4x8x8x128xf32> to vector<4x8x8x64xf32>
    %13 = vector.broadcast %11 : vector<4x8x8x1xf32> to vector<4x8x8x64xf32>
    %14 = arith.mulf %13, %12 : vector<4x8x8x64xf32>
    %cst_5 = arith.constant dense<0.000000e+00> : vector<8x8x64xf32>
    %15 = vector.multi_reduction <add>, %14, %cst_5 [0] : vector<4x8x8x64xf32> to vector<8x8x64xf32>
    %c0_6 = arith.constant 0 : index
    %c0_7 = arith.constant 0 : index
    %c0_8 = arith.constant 0 : index
    %c0_9 = arith.constant 0 : index
    %16 = vector.load %arg3[%c0_6, %c0_7, %c0_8, %c0_9] : memref<1x8x8x64xf32, #tpu.memory_space<vmem>>, vector<1x8x8x64xf32>
    %17 = vector.shape_cast %16 : vector<1x8x8x64xf32> to vector<8x8x64xf32>
    %18 = vector.shape_cast %15 : vector<8x8x64xf32> to vector<1x8x8x64xf32>
    tpu.vector_store %arg3[%c0_6, %c0_7, %c0_8, %c0_9], %18 {strides = array<i32>} : memref<1x8x8x64xf32, #tpu.memory_space<vmem>>, vector<1x8x8x64xf32>,
    return
  }
  func.func @transform_0(%arg0: i32, %arg1: i32) -> (i32, i32, i32, i32, i32) {
    %c0_i32 = arith.constant 0 : i32
    %c0_i32_0 = arith.constant 0 : i32
    %c0_i32_1 = arith.constant 0 : i32
    %c0_i32_2 = arith.constant 0 : i32
    return %arg0, %c0_i32, %arg1, %c0_i32_0, %c0_i32_1 : i32, i32, i32, i32, i32
  }
  func.func @transform_1(%arg0: i32, %arg1: i32) -> (i32, i32, i32, i32) {
    %c0_i32 = arith.constant 0 : i32
    %c0_i32_0 = arith.constant 0 : i32
    %c0_i32_1 = arith.constant 0 : i32
    return %arg0, %arg1, %c0_i32, %c0_i32_0 : i32, i32, i32, i32
  }
}

module attributes {stable_mosaic.version = 11 : i64} {
  func.func @_proj_conv_kernel(%arg0: i32, %arg1: memref<4x8x1xf32, #tpu.memory_space<vmem>>, %arg2: memref<4x8x8x46xf32, #tpu.memory_space<vmem>>, %arg3: memref<46x64xf32, #tpu.memory_space<vmem>>, %arg4: memref<1x64xf32, #tpu.memory_space<vmem>>, %arg5: memref<1x64xf32, #tpu.memory_space<vmem>>, %arg6: memref<1x64xf32, #tpu.memory_space<vmem>>, %arg7: memref<9x64x128xf32, #tpu.memory_space<vmem>>, %arg8: memref<1x128xf32, #tpu.memory_space<vmem>>, %arg9: memref<4x8x8x128xf32, #tpu.memory_space<vmem>>, %arg10: memref<4x10x10x64xf32, #tpu.memory_space<vmem>>, %arg11: memref<256x128xf32, #tpu.memory_space<vmem>>) attributes {dimension_semantics = [#tpu.dimension_semantics<parallel>], iteration_bounds = array<i64: 2>, scalar_prefetch = 0 : i64, scratch_operands = 2 : i64, tpu.core_type = #tpu.core_type<tc>, window_params = [{transform_indices = @transform_0, window_bounds = array<i64: 4, 8, 1>}, {transform_indices = @transform_1, window_bounds = array<i64: 4, 8, 8, 46>}, {pipeline_mode = #tpu.pipeline_mode<synchronous>, transform_indices = @transform_2, window_bounds = array<i64: 46, 64>}, {pipeline_mode = #tpu.pipeline_mode<synchronous>, transform_indices = @transform_3, window_bounds = array<i64: 1, 64>}, {pipeline_mode = #tpu.pipeline_mode<synchronous>, transform_indices = @transform_4, window_bounds = array<i64: 1, 64>}, {pipeline_mode = #tpu.pipeline_mode<synchronous>, transform_indices = @transform_5, window_bounds = array<i64: 1, 64>}, {pipeline_mode = #tpu.pipeline_mode<synchronous>, transform_indices = @transform_6, window_bounds = array<i64: 9, 64, 128>}, {pipeline_mode = #tpu.pipeline_mode<synchronous>, transform_indices = @transform_7, window_bounds = array<i64: 1, 128>}, {transform_indices = @transform_8, window_bounds = array<i64: 4, 8, 8, 128>}]} {
    %cst = arith.constant 0.000000e+00 : f32
    %0 = vector.broadcast %cst : f32 to vector<4x10x10x64xf32>
    %c0 = arith.constant 0 : index
    %c0_0 = arith.constant 0 : index
    %c0_1 = arith.constant 0 : index
    %c0_2 = arith.constant 0 : index
    %1 = vector.load %arg10[%c0, %c0_0, %c0_1, %c0_2] : memref<4x10x10x64xf32, #tpu.memory_space<vmem>>, vector<4x10x10x64xf32>
    tpu.vector_store %arg10[%c0, %c0_0, %c0_1, %c0_2], %0 {strides = array<i32>} : memref<4x10x10x64xf32, #tpu.memory_space<vmem>>, vector<4x10x10x64xf32>,
    %c0_3 = arith.constant 0 : index
    %c0_4 = arith.constant 0 : index
    %c0_5 = arith.constant 0 : index
    %c0_6 = arith.constant 0 : index
    %2 = vector.load %arg2[%c0_3, %c0_4, %c0_5, %c0_6] : memref<4x8x8x46xf32, #tpu.memory_space<vmem>>, vector<4x8x8x46xf32>
    %3 = vector.shape_cast %2 : vector<4x8x8x46xf32> to vector<256x46xf32>
    %c0_7 = arith.constant 0 : index
    %c0_8 = arith.constant 0 : index
    %4 = vector.load %arg3[%c0_7, %c0_8] : memref<46x64xf32, #tpu.memory_space<vmem>>, vector<46x64xf32>
    %cst_9 = arith.constant dense<0.000000e+00> : vector<256x64xf32>
    %5 = tpu.matmul %3, %4, %cst_9 {dimension_numbers = #tpu.dot_dimension_numbers<[1], [0], [0], [1], [0, 0, 1, 1], [], []>} : vector<256x46xf32>, vector<46x64xf32>, vector<256x64xf32> -> vector<256x64xf32>
    %c0_10 = arith.constant 0 : index
    %c0_11 = arith.constant 0 : index
    %c0_12 = arith.constant 0 : index
    %6 = vector.load %arg1[%c0_10, %c0_11, %c0_12] : memref<4x8x1xf32, #tpu.memory_space<vmem>>, vector<4x8x1xf32>
    %c0_13 = arith.constant 0 : index
    %c0_14 = arith.constant 0 : index
    %7 = vector.load %arg4[%c0_13, %c0_14] : memref<1x64xf32, #tpu.memory_space<vmem>>, vector<1x64xf32>
    %c0_15 = arith.constant 0 : index
    %c0_16 = arith.constant 0 : index
    %8 = vector.load %arg5[%c0_15, %c0_16] : memref<1x64xf32, #tpu.memory_space<vmem>>, vector<1x64xf32>
    %cst_17 = arith.constant 0.000000e+00 : f32
    %9 = vector.broadcast %cst_17 : f32 to vector<4x8x64xf32>
    %cst_18 = arith.constant 0.000000e+00 : f32
    %10 = vector.broadcast %cst_18 : f32 to vector<4x8x64xf32>
    %11 = vector.shape_cast %7 : vector<1x64xf32> to vector<1x1x64xf32>
    %12 = vector.broadcast %6 : vector<4x8x1xf32> to vector<4x8x64xf32>
    %13 = vector.broadcast %11 : vector<1x1x64xf32> to vector<4x8x64xf32>
    %14 = arith.mulf %12, %13 : vector<4x8x64xf32>
    %15 = arith.addf %9, %14 : vector<4x8x64xf32>
    %16 = vector.shape_cast %8 : vector<1x64xf32> to vector<1x1x64xf32>
    %17 = vector.broadcast %6 : vector<4x8x1xf32> to vector<4x8x64xf32>
    %18 = vector.broadcast %16 : vector<1x1x64xf32> to vector<4x8x64xf32>
    %19 = arith.mulf %17, %18 : vector<4x8x64xf32>
    %20 = arith.addf %10, %19 : vector<4x8x64xf32>
    %21 = vector.shape_cast %5 : vector<256x64xf32> to vector<4x8x8x64xf32>
    %22 = vector.shape_cast %15 : vector<4x8x64xf32> to vector<4x8x1x64xf32>
    %23 = vector.broadcast %22 : vector<4x8x1x64xf32> to vector<4x8x8x64xf32>
    %24 = arith.addf %21, %23 : vector<4x8x8x64xf32>
    %25 = vector.shape_cast %20 : vector<4x8x64xf32> to vector<4x1x8x64xf32>
    %26 = vector.broadcast %25 : vector<4x1x8x64xf32> to vector<4x8x8x64xf32>
    %27 = arith.addf %24, %26 : vector<4x8x8x64xf32>
    %c0_19 = arith.constant 0 : index
    %c0_20 = arith.constant 0 : index
    %28 = vector.load %arg6[%c0_19, %c0_20] : memref<1x64xf32, #tpu.memory_space<vmem>>, vector<1x64xf32>
    %29 = vector.shape_cast %28 : vector<1x64xf32> to vector<1x1x1x64xf32>
    %30 = vector.broadcast %29 : vector<1x1x1x64xf32> to vector<4x8x8x64xf32>
    %31 = arith.addf %27, %30 : vector<4x8x8x64xf32>
    %c0_21 = arith.constant 0 : index
    %c1 = arith.constant 1 : index
    %c1_22 = arith.constant 1 : index
    %c0_23 = arith.constant 0 : index
    %32 = vector.load %arg10[%c0_21, %c1, %c1_22, %c0_23] : memref<4x10x10x64xf32, #tpu.memory_space<vmem>>, vector<4x8x8x64xf32>
    tpu.vector_store %arg10[%c0_21, %c1, %c1_22, %c0_23], %31 {strides = array<i32>} : memref<4x10x10x64xf32, #tpu.memory_space<vmem>>, vector<4x8x8x64xf32>,
    %c0_24 = arith.constant 0 : index
    %c0_25 = arith.constant 0 : index
    %33 = vector.load %arg8[%c0_24, %c0_25] : memref<1x128xf32, #tpu.memory_space<vmem>>, vector<1x128xf32>
    %34 = vector.shape_cast %33 : vector<1x128xf32> to vector<1x128xf32>
    %35 = vector.broadcast %34 : vector<1x128xf32> to vector<256x128xf32>
    %c0_26 = arith.constant 0 : index
    %c0_27 = arith.constant 0 : index
    %36 = vector.load %arg11[%c0_26, %c0_27] : memref<256x128xf32, #tpu.memory_space<vmem>>, vector<256x128xf32>
    tpu.vector_store %arg11[%c0_26, %c0_27], %35 {strides = array<i32>} : memref<256x128xf32, #tpu.memory_space<vmem>>, vector<256x128xf32>,
    %c0_28 = arith.constant 0 : index
    %c0_29 = arith.constant 0 : index
    %c0_30 = arith.constant 0 : index
    %c0_31 = arith.constant 0 : index
    %37 = vector.load %arg10[%c0_28, %c0_29, %c0_30, %c0_31] : memref<4x10x10x64xf32, #tpu.memory_space<vmem>>, vector<4x8x8x64xf32>
    %38 = vector.shape_cast %37 : vector<4x8x8x64xf32> to vector<256x64xf32>
    %c0_32 = arith.constant 0 : index
    %c0_33 = arith.constant 0 : index
    %39 = vector.load %arg11[%c0_32, %c0_33] : memref<256x128xf32, #tpu.memory_space<vmem>>, vector<256x128xf32>
    %c0_34 = arith.constant 0 : index
    %c0_35 = arith.constant 0 : index
    %c0_36 = arith.constant 0 : index
    %40 = vector.load %arg7[%c0_34, %c0_35, %c0_36] : memref<9x64x128xf32, #tpu.memory_space<vmem>>, vector<1x64x128xf32>
    %41 = vector.shape_cast %40 : vector<1x64x128xf32> to vector<64x128xf32>
    %cst_37 = arith.constant dense<0.000000e+00> : vector<256x128xf32>
    %42 = tpu.matmul %38, %41, %cst_37 {dimension_numbers = #tpu.dot_dimension_numbers<[1], [0], [0], [1], [0, 0, 1, 1], [], []>} : vector<256x64xf32>, vector<64x128xf32>, vector<256x128xf32> -> vector<256x128xf32>
    %43 = arith.addf %39, %42 : vector<256x128xf32>
    %c0_38 = arith.constant 0 : index
    %c0_39 = arith.constant 0 : index
    %44 = vector.load %arg11[%c0_38, %c0_39] : memref<256x128xf32, #tpu.memory_space<vmem>>, vector<256x128xf32>
    tpu.vector_store %arg11[%c0_38, %c0_39], %43 {strides = array<i32>} : memref<256x128xf32, #tpu.memory_space<vmem>>, vector<256x128xf32>,
    %c0_40 = arith.constant 0 : index
    %c0_41 = arith.constant 0 : index
    %c1_42 = arith.constant 1 : index
    %c0_43 = arith.constant 0 : index
    %45 = vector.load %arg10[%c0_40, %c0_41, %c1_42, %c0_43] : memref<4x10x10x64xf32, #tpu.memory_space<vmem>>, vector<4x8x8x64xf32>
    %46 = vector.shape_cast %45 : vector<4x8x8x64xf32> to vector<256x64xf32>
    %c0_44 = arith.constant 0 : index
    %c0_45 = arith.constant 0 : index
    %47 = vector.load %arg11[%c0_44, %c0_45] : memref<256x128xf32, #tpu.memory_space<vmem>>, vector<256x128xf32>
    %c1_46 = arith.constant 1 : index
    %c0_47 = arith.constant 0 : index
    %c0_48 = arith.constant 0 : index
    %48 = vector.load %arg7[%c1_46, %c0_47, %c0_48] : memref<9x64x128xf32, #tpu.memory_space<vmem>>, vector<1x64x128xf32>
    %49 = vector.shape_cast %48 : vector<1x64x128xf32> to vector<64x128xf32>
    %cst_49 = arith.constant dense<0.000000e+00> : vector<256x128xf32>
    %50 = tpu.matmul %46, %49, %cst_49 {dimension_numbers = #tpu.dot_dimension_numbers<[1], [0], [0], [1], [0, 0, 1, 1], [], []>} : vector<256x64xf32>, vector<64x128xf32>, vector<256x128xf32> -> vector<256x128xf32>
    %51 = arith.addf %47, %50 : vector<256x128xf32>
    %c0_50 = arith.constant 0 : index
    %c0_51 = arith.constant 0 : index
    %52 = vector.load %arg11[%c0_50, %c0_51] : memref<256x128xf32, #tpu.memory_space<vmem>>, vector<256x128xf32>
    tpu.vector_store %arg11[%c0_50, %c0_51], %51 {strides = array<i32>} : memref<256x128xf32, #tpu.memory_space<vmem>>, vector<256x128xf32>,
    %c0_52 = arith.constant 0 : index
    %c0_53 = arith.constant 0 : index
    %c2 = arith.constant 2 : index
    %c0_54 = arith.constant 0 : index
    %53 = vector.load %arg10[%c0_52, %c0_53, %c2, %c0_54] : memref<4x10x10x64xf32, #tpu.memory_space<vmem>>, vector<4x8x8x64xf32>
    %54 = vector.shape_cast %53 : vector<4x8x8x64xf32> to vector<256x64xf32>
    %c0_55 = arith.constant 0 : index
    %c0_56 = arith.constant 0 : index
    %55 = vector.load %arg11[%c0_55, %c0_56] : memref<256x128xf32, #tpu.memory_space<vmem>>, vector<256x128xf32>
    %c2_57 = arith.constant 2 : index
    %c0_58 = arith.constant 0 : index
    %c0_59 = arith.constant 0 : index
    %56 = vector.load %arg7[%c2_57, %c0_58, %c0_59] : memref<9x64x128xf32, #tpu.memory_space<vmem>>, vector<1x64x128xf32>
    %57 = vector.shape_cast %56 : vector<1x64x128xf32> to vector<64x128xf32>
    %cst_60 = arith.constant dense<0.000000e+00> : vector<256x128xf32>
    %58 = tpu.matmul %54, %57, %cst_60 {dimension_numbers = #tpu.dot_dimension_numbers<[1], [0], [0], [1], [0, 0, 1, 1], [], []>} : vector<256x64xf32>, vector<64x128xf32>, vector<256x128xf32> -> vector<256x128xf32>
    %59 = arith.addf %55, %58 : vector<256x128xf32>
    %c0_61 = arith.constant 0 : index
    %c0_62 = arith.constant 0 : index
    %60 = vector.load %arg11[%c0_61, %c0_62] : memref<256x128xf32, #tpu.memory_space<vmem>>, vector<256x128xf32>
    tpu.vector_store %arg11[%c0_61, %c0_62], %59 {strides = array<i32>} : memref<256x128xf32, #tpu.memory_space<vmem>>, vector<256x128xf32>,
    %c0_63 = arith.constant 0 : index
    %c1_64 = arith.constant 1 : index
    %c0_65 = arith.constant 0 : index
    %c0_66 = arith.constant 0 : index
    %61 = vector.load %arg10[%c0_63, %c1_64, %c0_65, %c0_66] : memref<4x10x10x64xf32, #tpu.memory_space<vmem>>, vector<4x8x8x64xf32>
    %62 = vector.shape_cast %61 : vector<4x8x8x64xf32> to vector<256x64xf32>
    %c0_67 = arith.constant 0 : index
    %c0_68 = arith.constant 0 : index
    %63 = vector.load %arg11[%c0_67, %c0_68] : memref<256x128xf32, #tpu.memory_space<vmem>>, vector<256x128xf32>
    %c3 = arith.constant 3 : index
    %c0_69 = arith.constant 0 : index
    %c0_70 = arith.constant 0 : index
    %64 = vector.load %arg7[%c3, %c0_69, %c0_70] : memref<9x64x128xf32, #tpu.memory_space<vmem>>, vector<1x64x128xf32>
    %65 = vector.shape_cast %64 : vector<1x64x128xf32> to vector<64x128xf32>
    %cst_71 = arith.constant dense<0.000000e+00> : vector<256x128xf32>
    %66 = tpu.matmul %62, %65, %cst_71 {dimension_numbers = #tpu.dot_dimension_numbers<[1], [0], [0], [1], [0, 0, 1, 1], [], []>} : vector<256x64xf32>, vector<64x128xf32>, vector<256x128xf32> -> vector<256x128xf32>
    %67 = arith.addf %63, %66 : vector<256x128xf32>
    %c0_72 = arith.constant 0 : index
    %c0_73 = arith.constant 0 : index
    %68 = vector.load %arg11[%c0_72, %c0_73] : memref<256x128xf32, #tpu.memory_space<vmem>>, vector<256x128xf32>
    tpu.vector_store %arg11[%c0_72, %c0_73], %67 {strides = array<i32>} : memref<256x128xf32, #tpu.memory_space<vmem>>, vector<256x128xf32>,
    %c0_74 = arith.constant 0 : index
    %c1_75 = arith.constant 1 : index
    %c1_76 = arith.constant 1 : index
    %c0_77 = arith.constant 0 : index
    %69 = vector.load %arg10[%c0_74, %c1_75, %c1_76, %c0_77] : memref<4x10x10x64xf32, #tpu.memory_space<vmem>>, vector<4x8x8x64xf32>
    %70 = vector.shape_cast %69 : vector<4x8x8x64xf32> to vector<256x64xf32>
    %c0_78 = arith.constant 0 : index
    %c0_79 = arith.constant 0 : index
    %71 = vector.load %arg11[%c0_78, %c0_79] : memref<256x128xf32, #tpu.memory_space<vmem>>, vector<256x128xf32>
    %c4 = arith.constant 4 : index
    %c0_80 = arith.constant 0 : index
    %c0_81 = arith.constant 0 : index
    %72 = vector.load %arg7[%c4, %c0_80, %c0_81] : memref<9x64x128xf32, #tpu.memory_space<vmem>>, vector<1x64x128xf32>
    %73 = vector.shape_cast %72 : vector<1x64x128xf32> to vector<64x128xf32>
    %cst_82 = arith.constant dense<0.000000e+00> : vector<256x128xf32>
    %74 = tpu.matmul %70, %73, %cst_82 {dimension_numbers = #tpu.dot_dimension_numbers<[1], [0], [0], [1], [0, 0, 1, 1], [], []>} : vector<256x64xf32>, vector<64x128xf32>, vector<256x128xf32> -> vector<256x128xf32>
    %75 = arith.addf %71, %74 : vector<256x128xf32>
    %c0_83 = arith.constant 0 : index
    %c0_84 = arith.constant 0 : index
    %76 = vector.load %arg11[%c0_83, %c0_84] : memref<256x128xf32, #tpu.memory_space<vmem>>, vector<256x128xf32>
    tpu.vector_store %arg11[%c0_83, %c0_84], %75 {strides = array<i32>} : memref<256x128xf32, #tpu.memory_space<vmem>>, vector<256x128xf32>,
    %c0_85 = arith.constant 0 : index
    %c1_86 = arith.constant 1 : index
    %c2_87 = arith.constant 2 : index
    %c0_88 = arith.constant 0 : index
    %77 = vector.load %arg10[%c0_85, %c1_86, %c2_87, %c0_88] : memref<4x10x10x64xf32, #tpu.memory_space<vmem>>, vector<4x8x8x64xf32>
    %78 = vector.shape_cast %77 : vector<4x8x8x64xf32> to vector<256x64xf32>
    %c0_89 = arith.constant 0 : index
    %c0_90 = arith.constant 0 : index
    %79 = vector.load %arg11[%c0_89, %c0_90] : memref<256x128xf32, #tpu.memory_space<vmem>>, vector<256x128xf32>
    %c5 = arith.constant 5 : index
    %c0_91 = arith.constant 0 : index
    %c0_92 = arith.constant 0 : index
    %80 = vector.load %arg7[%c5, %c0_91, %c0_92] : memref<9x64x128xf32, #tpu.memory_space<vmem>>, vector<1x64x128xf32>
    %81 = vector.shape_cast %80 : vector<1x64x128xf32> to vector<64x128xf32>
    %cst_93 = arith.constant dense<0.000000e+00> : vector<256x128xf32>
    %82 = tpu.matmul %78, %81, %cst_93 {dimension_numbers = #tpu.dot_dimension_numbers<[1], [0], [0], [1], [0, 0, 1, 1], [], []>} : vector<256x64xf32>, vector<64x128xf32>, vector<256x128xf32> -> vector<256x128xf32>
    %83 = arith.addf %79, %82 : vector<256x128xf32>
    %c0_94 = arith.constant 0 : index
    %c0_95 = arith.constant 0 : index
    %84 = vector.load %arg11[%c0_94, %c0_95] : memref<256x128xf32, #tpu.memory_space<vmem>>, vector<256x128xf32>
    tpu.vector_store %arg11[%c0_94, %c0_95], %83 {strides = array<i32>} : memref<256x128xf32, #tpu.memory_space<vmem>>, vector<256x128xf32>,
    %c0_96 = arith.constant 0 : index
    %c2_97 = arith.constant 2 : index
    %c0_98 = arith.constant 0 : index
    %c0_99 = arith.constant 0 : index
    %85 = vector.load %arg10[%c0_96, %c2_97, %c0_98, %c0_99] : memref<4x10x10x64xf32, #tpu.memory_space<vmem>>, vector<4x8x8x64xf32>
    %86 = vector.shape_cast %85 : vector<4x8x8x64xf32> to vector<256x64xf32>
    %c0_100 = arith.constant 0 : index
    %c0_101 = arith.constant 0 : index
    %87 = vector.load %arg11[%c0_100, %c0_101] : memref<256x128xf32, #tpu.memory_space<vmem>>, vector<256x128xf32>
    %c6 = arith.constant 6 : index
    %c0_102 = arith.constant 0 : index
    %c0_103 = arith.constant 0 : index
    %88 = vector.load %arg7[%c6, %c0_102, %c0_103] : memref<9x64x128xf32, #tpu.memory_space<vmem>>, vector<1x64x128xf32>
    %89 = vector.shape_cast %88 : vector<1x64x128xf32> to vector<64x128xf32>
    %cst_104 = arith.constant dense<0.000000e+00> : vector<256x128xf32>
    %90 = tpu.matmul %86, %89, %cst_104 {dimension_numbers = #tpu.dot_dimension_numbers<[1], [0], [0], [1], [0, 0, 1, 1], [], []>} : vector<256x64xf32>, vector<64x128xf32>, vector<256x128xf32> -> vector<256x128xf32>
    %91 = arith.addf %87, %90 : vector<256x128xf32>
    %c0_105 = arith.constant 0 : index
    %c0_106 = arith.constant 0 : index
    %92 = vector.load %arg11[%c0_105, %c0_106] : memref<256x128xf32, #tpu.memory_space<vmem>>, vector<256x128xf32>
    tpu.vector_store %arg11[%c0_105, %c0_106], %91 {strides = array<i32>} : memref<256x128xf32, #tpu.memory_space<vmem>>, vector<256x128xf32>,
    %c0_107 = arith.constant 0 : index
    %c2_108 = arith.constant 2 : index
    %c1_109 = arith.constant 1 : index
    %c0_110 = arith.constant 0 : index
    %93 = vector.load %arg10[%c0_107, %c2_108, %c1_109, %c0_110] : memref<4x10x10x64xf32, #tpu.memory_space<vmem>>, vector<4x8x8x64xf32>
    %94 = vector.shape_cast %93 : vector<4x8x8x64xf32> to vector<256x64xf32>
    %c0_111 = arith.constant 0 : index
    %c0_112 = arith.constant 0 : index
    %95 = vector.load %arg11[%c0_111, %c0_112] : memref<256x128xf32, #tpu.memory_space<vmem>>, vector<256x128xf32>
    %c7 = arith.constant 7 : index
    %c0_113 = arith.constant 0 : index
    %c0_114 = arith.constant 0 : index
    %96 = vector.load %arg7[%c7, %c0_113, %c0_114] : memref<9x64x128xf32, #tpu.memory_space<vmem>>, vector<1x64x128xf32>
    %97 = vector.shape_cast %96 : vector<1x64x128xf32> to vector<64x128xf32>
    %cst_115 = arith.constant dense<0.000000e+00> : vector<256x128xf32>
    %98 = tpu.matmul %94, %97, %cst_115 {dimension_numbers = #tpu.dot_dimension_numbers<[1], [0], [0], [1], [0, 0, 1, 1], [], []>} : vector<256x64xf32>, vector<64x128xf32>, vector<256x128xf32> -> vector<256x128xf32>
    %99 = arith.addf %95, %98 : vector<256x128xf32>
    %c0_116 = arith.constant 0 : index
    %c0_117 = arith.constant 0 : index
    %100 = vector.load %arg11[%c0_116, %c0_117] : memref<256x128xf32, #tpu.memory_space<vmem>>, vector<256x128xf32>
    tpu.vector_store %arg11[%c0_116, %c0_117], %99 {strides = array<i32>} : memref<256x128xf32, #tpu.memory_space<vmem>>, vector<256x128xf32>,
    %c0_118 = arith.constant 0 : index
    %c2_119 = arith.constant 2 : index
    %c2_120 = arith.constant 2 : index
    %c0_121 = arith.constant 0 : index
    %101 = vector.load %arg10[%c0_118, %c2_119, %c2_120, %c0_121] : memref<4x10x10x64xf32, #tpu.memory_space<vmem>>, vector<4x8x8x64xf32>
    %102 = vector.shape_cast %101 : vector<4x8x8x64xf32> to vector<256x64xf32>
    %c0_122 = arith.constant 0 : index
    %c0_123 = arith.constant 0 : index
    %103 = vector.load %arg11[%c0_122, %c0_123] : memref<256x128xf32, #tpu.memory_space<vmem>>, vector<256x128xf32>
    %c8 = arith.constant 8 : index
    %c0_124 = arith.constant 0 : index
    %c0_125 = arith.constant 0 : index
    %104 = vector.load %arg7[%c8, %c0_124, %c0_125] : memref<9x64x128xf32, #tpu.memory_space<vmem>>, vector<1x64x128xf32>
    %105 = vector.shape_cast %104 : vector<1x64x128xf32> to vector<64x128xf32>
    %cst_126 = arith.constant dense<0.000000e+00> : vector<256x128xf32>
    %106 = tpu.matmul %102, %105, %cst_126 {dimension_numbers = #tpu.dot_dimension_numbers<[1], [0], [0], [1], [0, 0, 1, 1], [], []>} : vector<256x64xf32>, vector<64x128xf32>, vector<256x128xf32> -> vector<256x128xf32>
    %107 = arith.addf %103, %106 : vector<256x128xf32>
    %c0_127 = arith.constant 0 : index
    %c0_128 = arith.constant 0 : index
    %108 = vector.load %arg11[%c0_127, %c0_128] : memref<256x128xf32, #tpu.memory_space<vmem>>, vector<256x128xf32>
    tpu.vector_store %arg11[%c0_127, %c0_128], %107 {strides = array<i32>} : memref<256x128xf32, #tpu.memory_space<vmem>>, vector<256x128xf32>,
    %c0_129 = arith.constant 0 : index
    %c0_130 = arith.constant 0 : index
    %109 = vector.load %arg11[%c0_129, %c0_130] : memref<256x128xf32, #tpu.memory_space<vmem>>, vector<256x128xf32>
    %110 = vector.shape_cast %109 : vector<256x128xf32> to vector<4x8x8x128xf32>
    %c0_131 = arith.constant 0 : index
    %c0_132 = arith.constant 0 : index
    %c0_133 = arith.constant 0 : index
    %c0_134 = arith.constant 0 : index
    %111 = vector.load %arg9[%c0_131, %c0_132, %c0_133, %c0_134] : memref<4x8x8x128xf32, #tpu.memory_space<vmem>>, vector<4x8x8x128xf32>
    tpu.vector_store %arg9[%c0_131, %c0_132, %c0_133, %c0_134], %110 {strides = array<i32>} : memref<4x8x8x128xf32, #tpu.memory_space<vmem>>, vector<4x8x8x128xf32>,
    return
  }
  func.func @transform_0(%arg0: i32) -> (i32, i32, i32) {
    %c0_i32 = arith.constant 0 : i32
    %c0_i32_0 = arith.constant 0 : i32
    %c0_i32_1 = arith.constant 0 : i32
    return %arg0, %c0_i32, %c0_i32_0 : i32, i32, i32
  }
  func.func @transform_1(%arg0: i32) -> (i32, i32, i32, i32) {
    %c0_i32 = arith.constant 0 : i32
    %c0_i32_0 = arith.constant 0 : i32
    %c0_i32_1 = arith.constant 0 : i32
    %c0_i32_2 = arith.constant 0 : i32
    return %arg0, %c0_i32, %c0_i32_0, %c0_i32_1 : i32, i32, i32, i32
  }
  func.func @transform_2(%arg0: i32) -> (i32, i32) {
    %c0_i32 = arith.constant 0 : i32
    %c0_i32_0 = arith.constant 0 : i32
    %c0_i32_1 = arith.constant 0 : i32
    return %c0_i32, %c0_i32_0 : i32, i32
  }
  func.func @transform_3(%arg0: i32) -> (i32, i32) {
    %c0_i32 = arith.constant 0 : i32
    %c0_i32_0 = arith.constant 0 : i32
    %c0_i32_1 = arith.constant 0 : i32
    return %c0_i32, %c0_i32_0 : i32, i32
  }
  func.func @transform_4(%arg0: i32) -> (i32, i32) {
    %c0_i32 = arith.constant 0 : i32
    %c0_i32_0 = arith.constant 0 : i32
    %c0_i32_1 = arith.constant 0 : i32
    return %c0_i32, %c0_i32_0 : i32, i32
  }
  func.func @transform_5(%arg0: i32) -> (i32, i32) {
    %c0_i32 = arith.constant 0 : i32
    %c0_i32_0 = arith.constant 0 : i32
    %c0_i32_1 = arith.constant 0 : i32
    return %c0_i32, %c0_i32_0 : i32, i32
  }
  func.func @transform_6(%arg0: i32) -> (i32, i32, i32) {
    %c0_i32 = arith.constant 0 : i32
    %c0_i32_0 = arith.constant 0 : i32
    %c0_i32_1 = arith.constant 0 : i32
    %c0_i32_2 = arith.constant 0 : i32
    return %c0_i32, %c0_i32_0, %c0_i32_1 : i32, i32, i32
  }
  func.func @transform_7(%arg0: i32) -> (i32, i32) {
    %c0_i32 = arith.constant 0 : i32
    %c0_i32_0 = arith.constant 0 : i32
    %c0_i32_1 = arith.constant 0 : i32
    return %c0_i32, %c0_i32_0 : i32, i32
  }
  func.func @transform_8(%arg0: i32) -> (i32, i32, i32, i32) {
    %c0_i32 = arith.constant 0 : i32
    %c0_i32_0 = arith.constant 0 : i32
    %c0_i32_1 = arith.constant 0 : i32
    %c0_i32_2 = arith.constant 0 : i32
    return %arg0, %c0_i32, %c0_i32_0, %c0_i32_1 : i32, i32, i32, i32
  }
}

</mosaic_0001>

<llo_original>
// kernel: templ_emb_forward.3
$region0: #{templ_emb_forward.3}
  #allocation0 [shape = 'u32[]', space=smem, size = 0x4, offset = 0x4, fixed_abs, tag = 'smem constant byte address 0x4 - core index']
  #allocation1 [shape = 'u32[144,128]{1,0:T(1,128)}', space=vmem, size = 0x12000, scoped, tag = 'internal scratch']
  %s0 = inlined_call_operand.hbm [shape: f32[2,4,8,8,128], index: 0, kind: input, shape index: {}]
  %s1 = inlined_call_operand.hbm [shape: f32[2,8,8,64], index: 1, kind: output, shape index: {}]
  %s2 = sld [smem:[#allocation0]]
  $region41: #{templ_emb_forward.3} parent=0
    _
  %s4 = ssub.s32 1, %s2
  %s5 = scalar_select 0, %s4, %s2
  $region1: #{templ_emb_forward.3} parent=0
    #allocation2 [shape = 'u8[262144]{0}', space=vmem, size = 0x40000, scoped, tag = 'input window, operand 0']
    #allocation3 [shape = 's32[2]{0}', space=sflag, size = 0x8, scoped, tag = 'scoped memory for templ_emb_forward.3']
    #allocation4 [shape = 's32[2]{0}', space=sflag, size = 0x8, scoped, tag = 'scoped memory for templ_emb_forward.3']
    #allocation5 [shape = 'u8[65536]{0}', space=vmem, size = 0x10000, scoped, tag = 'output window, operand 0']
    %6 = vsyncpa [#allocation3], 0
    %s7 = scalar_lea.sflag [#allocation3], 1
    %8 = vsyncpa %s7, 0
    %9 = vsyncpa [#allocation4], 0
    %s10 = scalar_lea.sflag [#allocation4], 1
    %11 = vsyncpa %s10, 0
    loop: start=0, step=1, limit=4
    $region2: #{templ_emb_forward.3} parent=1 // loop_pre_header
      _
    $region3: #{templ_emb_forward.3} parent=1 // loop_header
      %s13 = sphi 0, %s17
      %p14 = scmp.ge.s32.totalorder %s13, 4
      %s20 = sphi 0, %s32
      %s21 = sphi 0, %s28
      %s22 = sphi 0, %s20
      %s23 = sphi 0, %s21
      %s24 = sphi 0, %s22
      %s25 = sphi 0, %s23
      %s37 = sphi 0, %s39
      %s40 = sphi 0, %s37
      %s41 = sphi 0, %s40
      %s57 = sphi 0, %s41
      %s65 = sphi 0, %s67
      %s68 = sphi 0, %s65
      %s69 = sphi 0, %s68
      %s85 = sphi 0, %s69
    $region4: #{templ_emb_forward.3} parent=1 // loop_header_branch
      %16 = sbr.rel (%p14) target = $region8
    $region5: #{templ_emb_forward.3} parent=1 // loop_body
      %s18 = ssub.s32 %s13, 1
      %s19 = ssub.s32 %s13, 2
      %s26 = sadd.s32 1, %s21
      %p27 = scmp.ge.s32.totalorder %s26, 1
      %s28 = scalar_select %p27, 0, %s26
      %s29 = sadd.s32 1, %s20
      %s30 = scalar_select %p27, %s29, %s20
      %p31 = scmp.ge.s32.totalorder %s30, 2
      %s32 = scalar_select %p31, 0, %s30
      %s33 = ssub.s32 %s20, %s32
      %s34 = ssub.s32 %s21, %s28
      %s35 = sor.u32 %s33, %s34
      %p36 = scmp.eq.s32.totalorder %s35, 0
      %s38 = sadd.s32 %s37, 1
      %s39 = scalar_select %p36, %s37, %s38
      %p42 = pneg %p36
      %p43 = scmp.eq.s32.totalorder %s13, 1
      %p44 = por %p42, %p43
      %p45 = scmp.ne.s32.totalorder %s37, %s40
      %p46 = scmp.eq.s32.totalorder %s13, 0
      %p47 = por %p45, %p46
      %p48 = scmp.ne.s32.totalorder %s37, %s40
      %p49 = scmp.eq.s32.totalorder %s18, 1
      %p50 = por %p48, %p49
      %p51 = scmp.ne.s32.totalorder %s40, %s41
      %p52 = scmp.eq.s32.totalorder %s18, 0
      %p53 = por %p51, %p52
      %p54 = scmp.ne.s32.totalorder %s40, %s41
      %p55 = scmp.eq.s32.totalorder %s19, 1
      %p56 = por %p54, %p55
      %p58 = scmp.ne.s32.totalorder %s41, %s57
      %p59 = scmp.eq.s32.totalorder %s19, 0
      %p60 = por %p58, %p59
      %s61 = ssub.s32 %s20, %s32
      %s62 = ssub.s32 %s21, %s28
      %s63 = sor.u32 %s61, %s62
      %p64 = scmp.eq.s32.totalorder %s63, 0
      %s66 = sadd.s32 %s65, 1
      %s67 = scalar_select %p64, %s65, %s66
      %p70 = pneg %p64
      %p71 = scmp.eq.s32.totalorder %s13, 1
      %p72 = por %p70, %p71
      %p73 = scmp.ne.s32.totalorder %s65, %s68
      %p74 = scmp.eq.s32.totalorder %s13, 0
      %p75 = por %p73, %p74
      %p76 = scmp.ne.s32.totalorder %s65, %s68
      %p77 = scmp.eq.s32.totalorder %s18, 1
      %p78 = por %p76, %p77
      %p79 = scmp.ne.s32.totalorder %s68, %s69
      %p80 = scmp.eq.s32.totalorder %s18, 0
      %p81 = por %p79, %p80
      %p82 = scmp.ne.s32.totalorder %s68, %s69
      %p83 = scmp.eq.s32.totalorder %s19, 1
      %p84 = por %p82, %p83
      %p86 = scmp.ne.s32.totalorder %s69, %s85
      %p87 = scmp.eq.s32.totalorder %s19, 0
      %p88 = por %p86, %p87
      %p89 = scmp.le.s32.totalorder 1, %s13
      %p90 = scmp.lt.s32.totalorder %s13, 3
      %p91 = pnand %p89, %p90
      %p92 = pneg %p91
      // Predicated region
      $region9: #{templ_emb_forward.3} parent=5 // pred_check
        _
      $region10: #{templ_emb_forward.3} parent=5 // pred_check_branch
        %94 = sbr.rel (%p91) target = $region12
      $region11: #{templ_emb_forward.3} parent=5 // pred_region
        %s95 = ssub.s32 %s13, 1
      $region12: #{templ_emb_forward.3} parent=5 // pred_fallthru
        _
      %p96 = scmp.lt.s32.totalorder %s13, 2
      // Predicated region
      $region13: #{templ_emb_forward.3} parent=5 // pred_check
        %p97 = pneg %p96
      $region14: #{templ_emb_forward.3} parent=5 // pred_check_branch
        %99 = sbr.rel (%p97) target = $region16
      $region15: #{templ_emb_forward.3} parent=5 // pred_region
        // Predicated region
        $region17: #{templ_emb_forward.3} parent=15 // pred_check
          %p100 = pneg %p47
        $region18: #{templ_emb_forward.3} parent=15 // pred_check_branch
          %102 = sbr.rel (%p100) target = $region20
        $region19: #{templ_emb_forward.3} parent=15 // pred_region
          %s103 = sand.u32 %s37, 1
          %s104 = scalar_lea.sflag [#allocation3], %s103
          %s105 = sand.u32 %s37, 1
          %s106 = smul.addr %s105, 256
          %s107 = scalar_lea.vmem [#allocation2], %s106
          %s108 = smul.u32 8, %s21
          %s110 = ssub.s32 4096, 4096
          %111 = vsyncadd %s104, %s110
          %s112 = smul.addr %s20, 32
          %s113 = sadd.s32 %s108, %s112
          %s114 = smul.addr %s113, 128
          %s115 = scalar_lea.hbm %s0, %s114
          %s116 = sshll.u32 %s107, 4
          %s117 = int_to_ptr.vmem [resolvable:$true] %s116
          %122 = dma.hbm_to_vmem [thread:$0]  %s115, 4096, %s117, %s104, 128, 128, 8
        $region20: #{templ_emb_forward.3} parent=15 // pred_fallthru
          _
      $region16: #{templ_emb_forward.3} parent=5 // pred_fallthru
        _
      %p123 = scmp.le.s32.totalorder 1, %s13
      %p124 = scmp.lt.s32.totalorder %s13, 3
      %p125 = pnand %p123, %p124
      %p126 = pneg %p125
      // Predicated region
      $region21: #{templ_emb_forward.3} parent=5 // pred_check
        _
      $region22: #{templ_emb_forward.3} parent=5 // pred_check_branch
        %128 = sbr.rel (%p125) target = $region24
      $region23: #{templ_emb_forward.3} parent=5 // pred_region
        %s129 = ssub.s32 %s13, 1
        %s130 = sand.u32 %s40, 1
        %s131 = scalar_lea.sflag [#allocation3], %s130
        %s132 = sand.u32 %s40, 1
        %s133 = smul.addr %s132, 256
        %s134 = scalar_lea.vmem [#allocation2], %s133
        // Predicated region
        $region25: #{templ_emb_forward.3} parent=23 // pred_check
          %p135 = pneg %p53
        $region26: #{templ_emb_forward.3} parent=23 // pred_check_branch
          %137 = sbr.rel (%p135) target = $region28
        $region27: #{templ_emb_forward.3} parent=23 // pred_region
          %138 = dma.done %s131, 4096
        $region28: #{templ_emb_forward.3} parent=23 // pred_fallthru
          _
        %s139 = sand.u32 %s40, 1
        %s140 = scalar_lea.sflag [#allocation3], %s139
        %s141 = sand.u32 %s40, 1
        %s142 = smul.addr %s141, 256
        %s143 = scalar_lea.vmem [#allocation2], %s142
        %p144 = pneg %p53
        %p145 = pneg %p50
        %p146 = pneg %p81
        %p147 = pneg %p78
        %s148 = sand.u32 %s68, 1
        %s149 = scalar_lea.sflag [#allocation4], %s148
        %s150 = sand.u32 %s68, 1
        %s151 = smul.addr %s150, 64
        %s152 = scalar_lea.vmem [#allocation5], %s151
        %s153 = smul.u32 8, %s23
        %s154 = smul.u32 8, %s23
        %v155 = vld [vmem:[%s134] sm:$0xff]
        %v156 = vld [vmem:[%s134 + $0x8] sm:$0xff]
        %v157 = vld [vmem:[%s134 + $0x10] sm:$0xff]
        %v158 = vld [vmem:[%s134 + $0x18] sm:$0xff]
        %v159 = vld [vmem:[%s134 + $0x20] sm:$0xff]
        %v160 = vld [vmem:[%s134 + $0x28] sm:$0xff]
        %v161 = vld [vmem:[%s134 + $0x30] sm:$0xff]
        %v162 = vld [vmem:[%s134 + $0x38] sm:$0xff]
        %v163 = vld [vmem:[%s134 + $0x40] sm:$0xff]
        %v164 = vld [vmem:[%s134 + $0x48] sm:$0xff]
        %v165 = vld [vmem:[%s134 + $0x50] sm:$0xff]
        %v166 = vld [vmem:[%s134 + $0x58] sm:$0xff]
        %v167 = vld [vmem:[%s134 + $0x60] sm:$0xff]
        %v168 = vld [vmem:[%s134 + $0x68] sm:$0xff]
        %v169 = vld [vmem:[%s134 + $0x70] sm:$0xff]
        %v170 = vld [vmem:[%s134 + $0x78] sm:$0xff]
        %v171 = vld [vmem:[%s134 + $0x80] sm:$0xff]
        %v172 = vld [vmem:[%s134 + $0x88] sm:$0xff]
        %v173 = vld [vmem:[%s134 + $0x90] sm:$0xff]
        %v174 = vld [vmem:[%s134 + $0x98] sm:$0xff]
        %v175 = vld [vmem:[%s134 + $0xa0] sm:$0xff]
        %v176 = vld [vmem:[%s134 + $0xa8] sm:$0xff]
        %v177 = vld [vmem:[%s134 + $0xb0] sm:$0xff]
        %v178 = vld [vmem:[%s134 + $0xb8] sm:$0xff]
        %v179 = vld [vmem:[%s134 + $0xc0] sm:$0xff]
        %v180 = vld [vmem:[%s134 + $0xc8] sm:$0xff]
        %v181 = vld [vmem:[%s134 + $0xd0] sm:$0xff]
        %v182 = vld [vmem:[%s134 + $0xd8] sm:$0xff]
        %v183 = vld [vmem:[%s134 + $0xe0] sm:$0xff]
        %v184 = vld [vmem:[%s134 + $0xe8] sm:$0xff]
        %v185 = vld [vmem:[%s134 + $0xf0] sm:$0xff]
        %v186 = vld [vmem:[%s134 + $0xf8] sm:$0xff]
        %vm187 = vcmask 531968
        %v188 = vsel %vm187, %v155, -inf
        %v189 = vsel %vm187, %v163, -inf
        %v190 = vmax.f32 %v188, %v189
        %v191 = vsel %vm187, %v171, -inf
        %v192 = vmax.f32 %v190, %v191
        %v193 = vsel %vm187, %v179, -inf
        %v194 = vmax.f32 %v192, %v193
        %v195 = vsel %vm187, %v156, -inf
        %v196 = vsel %vm187, %v164, -inf
        %v197 = vmax.f32 %v195, %v196
        %v198 = vsel %vm187, %v172, -inf
        %v199 = vmax.f32 %v197, %v198
        %v200 = vsel %vm187, %v180, -inf
        %v201 = vmax.f32 %v199, %v200
        %v202 = vsel %vm187, %v157, -inf
        %v203 = vsel %vm187, %v165, -inf
        %v204 = vmax.f32 %v202, %v203
        %v205 = vsel %vm187, %v173, -inf
        %v206 = vmax.f32 %v204, %v205
        %v207 = vsel %vm187, %v181, -inf
        %v208 = vmax.f32 %v206, %v207
        %v209 = vsel %vm187, %v158, -inf
        %v210 = vsel %vm187, %v166, -inf
        %v211 = vmax.f32 %v209, %v210
        %v212 = vsel %vm187, %v174, -inf
        %v213 = vmax.f32 %v211, %v212
        %v214 = vsel %vm187, %v182, -inf
        %v215 = vmax.f32 %v213, %v214
        %v216 = vsel %vm187, %v159, -inf
        %v217 = vsel %vm187, %v167, -inf
        %v218 = vmax.f32 %v216, %v217
        %v219 = vsel %vm187, %v175, -inf
        %v220 = vmax.f32 %v218, %v219
        %v221 = vsel %vm187, %v183, -inf
        %v222 = vmax.f32 %v220, %v221
        %v223 = vsel %vm187, %v160, -inf
        %v224 = vsel %vm187, %v168, -inf
        %v225 = vmax.f32 %v223, %v224
        %v226 = vsel %vm187, %v176, -inf
        %v227 = vmax.f32 %v225, %v226
        %v228 = vsel %vm187, %v184, -inf
        %v229 = vmax.f32 %v227, %v228
        %v230 = vsel %vm187, %v161, -inf
        %v231 = vsel %vm187, %v169, -inf
        %v232 = vmax.f32 %v230, %v231
        %v233 = vsel %vm187, %v177, -inf
        %v234 = vmax.f32 %v232, %v233
        %v235 = vsel %vm187, %v185, -inf
        %v236 = vmax.f32 %v234, %v235
        %v237 = vsel %vm187, %v162, -inf
        %v238 = vsel %vm187, %v170, -inf
        %v239 = vmax.f32 %v237, %v238
        %v240 = vsel %vm187, %v178, -inf
        %v241 = vmax.f32 %v239, %v240
        %v242 = vsel %vm187, %v186, -inf
        %v243 = vmax.f32 %v241, %v242
        %v244 = vsub.f32 %v155, %v194
        %v245 = vsub.f32 %v156, %v201
        %v246 = vsub.f32 %v157, %v208
        %v247 = vsub.f32 %v158, %v215
        %v248 = vsub.f32 %v159, %v222
        %v249 = vsub.f32 %v160, %v229
        %v250 = vsub.f32 %v161, %v236
        %v251 = vsub.f32 %v162, %v243
        %v252 = vsub.f32 %v163, %v194
        %v253 = vsub.f32 %v164, %v201
        %v254 = vsub.f32 %v165, %v208
        %v255 = vsub.f32 %v166, %v215
        %v256 = vsub.f32 %v167, %v222
        %v257 = vsub.f32 %v168, %v229
        %v258 = vsub.f32 %v169, %v236
        %v259 = vsub.f32 %v170, %v243
        %v260 = vsub.f32 %v171, %v194
        %v261 = vsub.f32 %v172, %v201
        %v262 = vsub.f32 %v173, %v208
        %v263 = vsub.f32 %v174, %v215
        %v264 = vsub.f32 %v175, %v222
        %v265 = vsub.f32 %v176, %v229
        %v266 = vsub.f32 %v177, %v236
        %v267 = vsub.f32 %v178, %v243
        %v268 = vsub.f32 %v179, %v194
        %v269 = vsub.f32 %v180, %v201
        %v270 = vsub.f32 %v181, %v208
        %v271 = vsub.f32 %v182, %v215
        %v272 = vsub.f32 %v183, %v222
        %v273 = vsub.f32 %v184, %v229
        %v274 = vsub.f32 %v185, %v236
        %v275 = vsub.f32 %v186, %v243
        %v276 = vmul.f32 %v244, 1.442695
        %v277 = vpow.pop %v276
        %v278 = vmul.f32 %v245, 1.442695
        %v279 = vpow.pop %v278
        %v280 = vmul.f32 %v246, 1.442695
        %v281 = vpow.pop %v280
        %v282 = vmul.f32 %v247, 1.442695
        %v283 = vpow.pop %v282
        %v284 = vmul.f32 %v248, 1.442695
        %v285 = vpow.pop %v284
        %v286 = vmul.f32 %v249, 1.442695
        %v287 = vpow.pop %v286
        %v288 = vmul.f32 %v250, 1.442695
        %v289 = vpow.pop %v288
        %v290 = vmul.f32 %v251, 1.442695
        %v291 = vpow.pop %v290
        %v292 = vmul.f32 %v252, 1.442695
        %v293 = vpow.pop %v292
        %v294 = vmul.f32 %v253, 1.442695
        %v295 = vpow.pop %v294
        %v296 = vmul.f32 %v254, 1.442695
        %v297 = vpow.pop %v296
        %v298 = vmul.f32 %v255, 1.442695
        %v299 = vpow.pop %v298
        %v300 = vmul.f32 %v256, 1.442695
        %v301 = vpow.pop %v300
        %v302 = vmul.f32 %v257, 1.442695
        %v303 = vpow.pop %v302
        %v304 = vmul.f32 %v258, 1.442695
        %v305 = vpow.pop %v304
        %v306 = vmul.f32 %v259, 1.442695
        %v307 = vpow.pop %v306
        %v308 = vmul.f32 %v260, 1.442695
        %v309 = vpow.pop %v308
        %v310 = vmul.f32 %v261, 1.442695
        %v311 = vpow.pop %v310
        %v312 = vmul.f32 %v262, 1.442695
        %v313 = vpow.pop %v312
        %v314 = vmul.f32 %v263, 1.442695
        %v315 = vpow.pop %v314
        %v316 = vmul.f32 %v264, 1.442695
        %v317 = vpow.pop %v316
        %v318 = vmul.f32 %v265, 1.442695
        %v319 = vpow.pop %v318
        %v320 = vmul.f32 %v266, 1.442695
        %v321 = vpow.pop %v320
        %v322 = vmul.f32 %v267, 1.442695
        %v323 = vpow.pop %v322
        %v324 = vmul.f32 %v268, 1.442695
        %v325 = vpow.pop %v324
        %v326 = vmul.f32 %v269, 1.442695
        %v327 = vpow.pop %v326
        %v328 = vmul.f32 %v270, 1.442695
        %v329 = vpow.pop %v328
        %v330 = vmul.f32 %v271, 1.442695
        %v331 = vpow.pop %v330
        %v332 = vmul.f32 %v272, 1.442695
        %v333 = vpow.pop %v332
        %v334 = vmul.f32 %v273, 1.442695
        %v335 = vpow.pop %v334
        %v336 = vmul.f32 %v274, 1.442695
        %v337 = vpow.pop %v336
        %v338 = vmul.f32 %v275, 1.442695
        %v339 = vpow.pop %v338
        %v340 = vsel %vm187, %v277, 0.0
        %v341 = vsel %vm187, %v293, 0.0
        %v342 = vadd.f32 %v340, %v341
        %v343 = vsel %vm187, %v309, 0.0
        %v344 = vadd.f32 %v342, %v343
        %v345 = vsel %vm187, %v325, 0.0
        %v346 = vadd.f32 %v344, %v345
        %v347 = vsel %vm187, %v279, 0.0
        %v348 = vsel %vm187, %v295, 0.0
        %v349 = vadd.f32 %v347, %v348
        %v350 = vsel %vm187, %v311, 0.0
        %v351 = vadd.f32 %v349, %v350
        %v352 = vsel %vm187, %v327, 0.0
        %v353 = vadd.f32 %v351, %v352
        %v354 = vsel %vm187, %v281, 0.0
        %v355 = vsel %vm187, %v297, 0.0
        %v356 = vadd.f32 %v354, %v355
        %v357 = vsel %vm187, %v313, 0.0
        %v358 = vadd.f32 %v356, %v357
        %v359 = vsel %vm187, %v329, 0.0
        %v360 = vadd.f32 %v358, %v359
        %v361 = vsel %vm187, %v283, 0.0
        %v362 = vsel %vm187, %v299, 0.0
        %v363 = vadd.f32 %v361, %v362
        %v364 = vsel %vm187, %v315, 0.0
        %v365 = vadd.f32 %v363, %v364
        %v366 = vsel %vm187, %v331, 0.0
        %v367 = vadd.f32 %v365, %v366
        %v368 = vsel %vm187, %v285, 0.0
        %v369 = vsel %vm187, %v301, 0.0
        %v370 = vadd.f32 %v368, %v369
        %v371 = vsel %vm187, %v317, 0.0
        %v372 = vadd.f32 %v370, %v371
        %v373 = vsel %vm187, %v333, 0.0
        %v374 = vadd.f32 %v372, %v373
        %v375 = vsel %vm187, %v287, 0.0
        %v376 = vsel %vm187, %v303, 0.0
        %v377 = vadd.f32 %v375, %v376
        %v378 = vsel %vm187, %v319, 0.0
        %v379 = vadd.f32 %v377, %v378
        %v380 = vsel %vm187, %v335, 0.0
        %v381 = vadd.f32 %v379, %v380
        %v382 = vsel %vm187, %v289, 0.0
        %v383 = vsel %vm187, %v305, 0.0
        %v384 = vadd.f32 %v382, %v383
        %v385 = vsel %vm187, %v321, 0.0
        %v386 = vadd.f32 %v384, %v385
        %v387 = vsel %vm187, %v337, 0.0
        %v388 = vadd.f32 %v386, %v387
        %v389 = vsel %vm187, %v291, 0.0
        %v390 = vsel %vm187, %v307, 0.0
        %v391 = vadd.f32 %v389, %v390
        %v392 = vsel %vm187, %v323, 0.0
        %v393 = vadd.f32 %v391, %v392
        %v394 = vsel %vm187, %v339, 0.0
        %v395 = vadd.f32 %v393, %v394
        %v396 = vrcp.pop %v346
        %v397 = vmul.f32 %v277, %v396
        %v398 = vrcp.pop %v353
        %v399 = vmul.f32 %v279, %v398
        %v400 = vrcp.pop %v360
        %v401 = vmul.f32 %v281, %v400
        %v402 = vrcp.pop %v367
        %v403 = vmul.f32 %v283, %v402
        %v404 = vrcp.pop %v374
        %v405 = vmul.f32 %v285, %v404
        %v406 = vrcp.pop %v381
        %v407 = vmul.f32 %v287, %v406
        %v408 = vrcp.pop %v388
        %v409 = vmul.f32 %v289, %v408
        %v410 = vrcp.pop %v395
        %v411 = vmul.f32 %v291, %v410
        %v412 = vmul.f32 %v293, %v396
        %v413 = vmul.f32 %v295, %v398
        %v414 = vmul.f32 %v297, %v400
        %v415 = vmul.f32 %v299, %v402
        %v416 = vmul.f32 %v301, %v404
        %v417 = vmul.f32 %v303, %v406
        %v418 = vmul.f32 %v305, %v408
        %v419 = vmul.f32 %v307, %v410
        %v420 = vmul.f32 %v309, %v396
        %v421 = vmul.f32 %v311, %v398
        %v422 = vmul.f32 %v313, %v400
        %v423 = vmul.f32 %v315, %v402
        %v424 = vmul.f32 %v317, %v404
        %v425 = vmul.f32 %v319, %v406
        %v426 = vmul.f32 %v321, %v408
        %v427 = vmul.f32 %v323, %v410
        %v428 = vmul.f32 %v325, %v396
        %v429 = vmul.f32 %v327, %v398
        %v430 = vmul.f32 %v329, %v400
        %v431 = vmul.f32 %v331, %v402
        %v432 = vmul.f32 %v333, %v404
        %v433 = vmul.f32 %v335, %v406
        %v434 = vmul.f32 %v337, %v408
        %v435 = vmul.f32 %v339, %v410
        %437 = vset.pattern.permute.xlu0 64
        %438 = vperm.xlu0 %437, %v397
        %v439 = vpop.permute.xlu0 %438
        %442 = vset.pattern.permute.xlu0 64
        %443 = vperm.xlu0 %442, %v399
        %v444 = vpop.permute.xlu0 %443
        %447 = vset.pattern.permute.xlu0 64
        %448 = vperm.xlu0 %447, %v401
        %v449 = vpop.permute.xlu0 %448
        %452 = vset.pattern.permute.xlu0 64
        %453 = vperm.xlu0 %452, %v403
        %v454 = vpop.permute.xlu0 %453
        %457 = vset.pattern.permute.xlu0 64
        %458 = vperm.xlu0 %457, %v405
        %v459 = vpop.permute.xlu0 %458
        %462 = vset.pattern.permute.xlu0 64
        %463 = vperm.xlu0 %462, %v407
        %v464 = vpop.permute.xlu0 %463
        %467 = vset.pattern.permute.xlu0 64
        %468 = vperm.xlu0 %467, %v409
        %v469 = vpop.permute.xlu0 %468
        %472 = vset.pattern.permute.xlu0 64
        %473 = vperm.xlu0 %472, %v411
        %v474 = vpop.permute.xlu0 %473
        %477 = vset.pattern.permute.xlu0 64
        %478 = vperm.xlu0 %477, %v412
        %v479 = vpop.permute.xlu0 %478
        %482 = vset.pattern.permute.xlu0 64
        %483 = vperm.xlu0 %482, %v413
        %v484 = vpop.permute.xlu0 %483
        %487 = vset.pattern.permute.xlu0 64
        %488 = vperm.xlu0 %487, %v414
        %v489 = vpop.permute.xlu0 %488
        %492 = vset.pattern.permute.xlu0 64
        %493 = vperm.xlu0 %492, %v415
        %v494 = vpop.permute.xlu0 %493
        %497 = vset.pattern.permute.xlu0 64
        %498 = vperm.xlu0 %497, %v416
        %v499 = vpop.permute.xlu0 %498
        %502 = vset.pattern.permute.xlu0 64
        %503 = vperm.xlu0 %502, %v417
        %v504 = vpop.permute.xlu0 %503
        %507 = vset.pattern.permute.xlu0 64
        %508 = vperm.xlu0 %507, %v418
        %v509 = vpop.permute.xlu0 %508
        %512 = vset.pattern.permute.xlu0 64
        %513 = vperm.xlu0 %512, %v419
        %v514 = vpop.permute.xlu0 %513
        %517 = vset.pattern.permute.xlu0 64
        %518 = vperm.xlu0 %517, %v420
        %v519 = vpop.permute.xlu0 %518
        %522 = vset.pattern.permute.xlu0 64
        %523 = vperm.xlu0 %522, %v421
        %v524 = vpop.permute.xlu0 %523
        %527 = vset.pattern.permute.xlu0 64
        %528 = vperm.xlu0 %527, %v422
        %v529 = vpop.permute.xlu0 %528
        %532 = vset.pattern.permute.xlu0 64
        %533 = vperm.xlu0 %532, %v423
        %v534 = vpop.permute.xlu0 %533
        %537 = vset.pattern.permute.xlu0 64
        %538 = vperm.xlu0 %537, %v424
        %v539 = vpop.permute.xlu0 %538
        %542 = vset.pattern.permute.xlu0 64
        %543 = vperm.xlu0 %542, %v425
        %v544 = vpop.permute.xlu0 %543
        %547 = vset.pattern.permute.xlu0 64
        %548 = vperm.xlu0 %547, %v426
        %v549 = vpop.permute.xlu0 %548
        %552 = vset.pattern.permute.xlu0 64
        %553 = vperm.xlu0 %552, %v427
        %v554 = vpop.permute.xlu0 %553
        %557 = vset.pattern.permute.xlu0 64
        %558 = vperm.xlu0 %557, %v428
        %v559 = vpop.permute.xlu0 %558
        %562 = vset.pattern.permute.xlu0 64
        %563 = vperm.xlu0 %562, %v429
        %v564 = vpop.permute.xlu0 %563
        %567 = vset.pattern.permute.xlu0 64
        %568 = vperm.xlu0 %567, %v430
        %v569 = vpop.permute.xlu0 %568
        %572 = vset.pattern.permute.xlu0 64
        %573 = vperm.xlu0 %572, %v431
        %v574 = vpop.permute.xlu0 %573
        %577 = vset.pattern.permute.xlu0 64
        %578 = vperm.xlu0 %577, %v432
        %v579 = vpop.permute.xlu0 %578
        %582 = vset.pattern.permute.xlu0 64
        %583 = vperm.xlu0 %582, %v433
        %v584 = vpop.permute.xlu0 %583
        %587 = vset.pattern.permute.xlu0 64
        %588 = vperm.xlu0 %587, %v434
        %v589 = vpop.permute.xlu0 %588
        %592 = vset.pattern.permute.xlu0 64
        %593 = vperm.xlu0 %592, %v435
        %v594 = vpop.permute.xlu0 %593
        %v596 = vmul.f32 %v439, %v155
        %v597 = vmul.f32 %v444, %v156
        %v598 = vmul.f32 %v449, %v157
        %v599 = vmul.f32 %v454, %v158
        %v600 = vmul.f32 %v459, %v159
        %v601 = vmul.f32 %v464, %v160
        %v602 = vmul.f32 %v469, %v161
        %v603 = vmul.f32 %v474, %v162
        %v604 = vmul.f32 %v479, %v163
        %v605 = vmul.f32 %v484, %v164
        %v606 = vmul.f32 %v489, %v165
        %v607 = vmul.f32 %v494, %v166
        %v608 = vmul.f32 %v499, %v167
        %v609 = vmul.f32 %v504, %v168
        %v610 = vmul.f32 %v509, %v169
        %v611 = vmul.f32 %v514, %v170
        %v612 = vmul.f32 %v519, %v171
        %v613 = vmul.f32 %v524, %v172
        %v614 = vmul.f32 %v529, %v173
        %v615 = vmul.f32 %v534, %v174
        %v616 = vmul.f32 %v539, %v175
        %v617 = vmul.f32 %v544, %v176
        %v618 = vmul.f32 %v549, %v177
        %v619 = vmul.f32 %v554, %v178
        %v620 = vmul.f32 %v559, %v179
        %v621 = vmul.f32 %v564, %v180
        %v622 = vmul.f32 %v569, %v181
        %v623 = vmul.f32 %v574, %v182
        %v624 = vmul.f32 %v579, %v183
        %v625 = vmul.f32 %v584, %v184
        %v626 = vmul.f32 %v589, %v185
        %v627 = vmul.f32 %v594, %v186
        %vm628 = vcmask 523264
        %v629 = vsel %vm628, %v596, 0.0
        %v630 = vsel %vm628, %v604, 0.0
        %v631 = vadd.f32 %v629, %v630
        %v632 = vsel %vm628, %v612, 0.0
        %v633 = vadd.f32 %v631, %v632
        %v634 = vsel %vm628, %v620, 0.0
        %v635 = vadd.f32 %v633, %v634
        %v636 = vsel %vm628, %v597, 0.0
        %v637 = vsel %vm628, %v605, 0.0
        %v638 = vadd.f32 %v636, %v637
        %v639 = vsel %vm628, %v613, 0.0
        %v640 = vadd.f32 %v638, %v639
        %v641 = vsel %vm628, %v621, 0.0
        %v642 = vadd.f32 %v640, %v641
        %v643 = vsel %vm628, %v598, 0.0
        %v644 = vsel %vm628, %v606, 0.0
        %v645 = vadd.f32 %v643, %v644
        %v646 = vsel %vm628, %v614, 0.0
        %v647 = vadd.f32 %v645, %v646
        %v648 = vsel %vm628, %v622, 0.0
        %v649 = vadd.f32 %v647, %v648
        %v650 = vsel %vm628, %v599, 0.0
        %v651 = vsel %vm628, %v607, 0.0
        %v652 = vadd.f32 %v650, %v651
        %v653 = vsel %vm628, %v615, 0.0
        %v654 = vadd.f32 %v652, %v653
        %v655 = vsel %vm628, %v623, 0.0
        %v656 = vadd.f32 %v654, %v655
        %v657 = vsel %vm628, %v600, 0.0
        %v658 = vsel %vm628, %v608, 0.0
        %v659 = vadd.f32 %v657, %v658
        %v660 = vsel %vm628, %v616, 0.0
        %v661 = vadd.f32 %v659, %v660
        %v662 = vsel %vm628, %v624, 0.0
        %v663 = vadd.f32 %v661, %v662
        %v664 = vsel %vm628, %v601, 0.0
        %v665 = vsel %vm628, %v609, 0.0
        %v666 = vadd.f32 %v664, %v665
        %v667 = vsel %vm628, %v617, 0.0
        %v668 = vadd.f32 %v666, %v667
        %v669 = vsel %vm628, %v625, 0.0
        %v670 = vadd.f32 %v668, %v669
        %v671 = vsel %vm628, %v602, 0.0
        %v672 = vsel %vm628, %v610, 0.0
        %v673 = vadd.f32 %v671, %v672
        %v674 = vsel %vm628, %v618, 0.0
        %v675 = vadd.f32 %v673, %v674
        %v676 = vsel %vm628, %v626, 0.0
        %v677 = vadd.f32 %v675, %v676
        %v678 = vsel %vm628, %v603, 0.0
        %v679 = vsel %vm628, %v611, 0.0
        %v680 = vadd.f32 %v678, %v679
        %v681 = vsel %vm628, %v619, 0.0
        %v682 = vadd.f32 %v680, %v681
        %v683 = vsel %vm628, %v627, 0.0
        %v684 = vadd.f32 %v682, %v683
        %685 = vst.msk [vmem:[%s152] sm:$0xff] %vm628, %v635
        %686 = vst.msk [vmem:[%s152 + $0x8] sm:$0xff] %vm628, %v642
        %687 = vst.msk [vmem:[%s152 + $0x10] sm:$0xff] %vm628, %v649
        %688 = vst.msk [vmem:[%s152 + $0x18] sm:$0xff] %vm628, %v656
        %689 = vst.msk [vmem:[%s152 + $0x20] sm:$0xff] %vm628, %v663
        %690 = vst.msk [vmem:[%s152 + $0x28] sm:$0xff] %vm628, %v670
        %691 = vst.msk [vmem:[%s152 + $0x30] sm:$0xff] %vm628, %v677
        %692 = vst.msk [vmem:[%s152 + $0x38] sm:$0xff] %vm628, %v684
        %s693 = sand.u32 %s68, 1
        %s694 = scalar_lea.sflag [#allocation4], %s693
        %s695 = sand.u32 %s68, 1
        %s696 = smul.addr %s695, 64
        %s697 = scalar_lea.vmem [#allocation5], %s696
        // Predicated region
        $region29: #{templ_emb_forward.3} parent=23 // pred_check
          %p698 = pneg %p78
        $region30: #{templ_emb_forward.3} parent=23 // pred_check_branch
          %700 = sbr.rel (%p698) target = $region32
        $region31: #{templ_emb_forward.3} parent=23 // pred_region
          %s701 = smul.u32 8, %s23
          %s703 = ssub.s32 1024, 1024
          %704 = vsyncadd %s694, %s703
          %s705 = smul.addr %s22, 8
          %s706 = sadd.s32 %s701, %s705
          %s707 = smul.addr %s706, 128
          %s708 = scalar_lea.hbm %s1, %s707
          %s709 = sshll.u32 %s697, 4
          %s710 = int_to_ptr.vmem [resolvable:$true] %s709
          %715 = dma.vmem_to_hbm [thread:$0]  %s710, 1024, %s708, %s694, 128, 128, 8
        $region32: #{templ_emb_forward.3} parent=23 // pred_fallthru
          _
      $region24: #{templ_emb_forward.3} parent=5 // pred_fallthru
        _
      %p716 = scmp.le.s32.totalorder 2, %s13
      // Predicated region
      $region33: #{templ_emb_forward.3} parent=5 // pred_check
        %p717 = pneg %p716
      $region34: #{templ_emb_forward.3} parent=5 // pred_check_branch
        %719 = sbr.rel (%p717) target = $region36
      $region35: #{templ_emb_forward.3} parent=5 // pred_region
        %s720 = ssub.s32 %s13, 2
        // Predicated region
        $region37: #{templ_emb_forward.3} parent=35 // pred_check
          %p721 = pneg %p84
        $region38: #{templ_emb_forward.3} parent=35 // pred_check_branch
          %723 = sbr.rel (%p721) target = $region40
        $region39: #{templ_emb_forward.3} parent=35 // pred_region
          %s724 = sand.u32 %s69, 1
          %s725 = scalar_lea.sflag [#allocation4], %s724
          %s726 = sand.u32 %s69, 1
          %s727 = smul.addr %s726, 64
          %s728 = scalar_lea.vmem [#allocation5], %s727
          %729 = dma.done %s725, 1024
        $region40: #{templ_emb_forward.3} parent=35 // pred_fallthru
          _
      $region36: #{templ_emb_forward.3} parent=5 // pred_fallthru
        _
    $region6: #{templ_emb_forward.3} parent=1 // loop_footer
      %s17 = sadd.s32 1, %s13
    $region7: #{templ_emb_forward.3} parent=1 // loop_footer_branch
      %12 = sbr.rel target = $region3
    $region8: #{templ_emb_forward.3} parent=1 // loop_exit
      _
    %730 = vsyncpa [#allocation3], 1
    %s731 = scalar_lea.sflag [#allocation3], 1
    %732 = vsyncpa %s731, 1
    %733 = vsyncpa [#allocation4], 1
    %s734 = scalar_lea.sflag [#allocation4], 1
    %735 = vsyncpa %s734, 1

// kernel: templ_emb_forward.2
$region0: #{templ_emb_forward.2}
  #allocation0 [shape = 'u32[]', space=smem, size = 0x4, offset = 0x4, fixed_abs, tag = 'smem constant byte address 0x4 - core index']
  #allocation1 [shape = 'u32[144,128]{1,0:T(1,128)}', space=vmem, size = 0x12000, scoped, tag = 'internal scratch']
  #allocation2 [shape = 'f32[4,10,10,64]{3,2,1,0:T(8,128)}', space=vmem, size = 0x50000, scoped, tag = 'scratch operand']
  #allocation3 [shape = 'f32[256,128]{1,0:T(8,128)}', space=vmem, size = 0x20000, scoped, tag = 'scratch operand']
  %s0 = inlined_call_operand.hbm [shape: f32[8,8,1], index: 0, kind: input, shape index: {}]
  %s1 = inlined_call_operand.hbm [shape: f32[8,8,8,46], index: 1, kind: input, shape index: {}]
  %s2 = inlined_call_operand.hbm [shape: f32[46,64], index: 2, kind: input, shape index: {}]
  %s3 = inlined_call_operand.hbm [shape: f32[1,64], index: 3, kind: input, shape index: {}]
  %s4 = inlined_call_operand.hbm [shape: f32[1,64], index: 4, kind: input, shape index: {}]
  %s5 = inlined_call_operand.hbm [shape: f32[1,64], index: 5, kind: input, shape index: {}]
  %s6 = inlined_call_operand.hbm [shape: f32[9,64,128], index: 6, kind: input, shape index: {}]
  %s7 = inlined_call_operand.hbm [shape: f32[1,128], index: 7, kind: input, shape index: {}]
  %s8 = inlined_call_operand.hbm [shape: f32[8,8,8,128], index: 8, kind: output, shape index: {}]
  %s9 = sld [smem:[#allocation0]]
  $region97: #{templ_emb_forward.2} parent=0
    _
  %s11 = ssub.s32 1, %s9
  %s12 = scalar_select 0, %s11, %s9
  $region1: #{templ_emb_forward.2} parent=0
    #allocation4 [shape = 'u8[32768]{0}', space=vmem, size = 0x8000, scoped, tag = 'input window, operand 0']
    #allocation5 [shape = 's32[2]{0}', space=sflag, size = 0x8, scoped, tag = 'scoped memory for templ_emb_forward.2']
    #allocation6 [shape = 's32[2]{0}', space=sflag, size = 0x8, scoped, tag = 'scoped memory for templ_emb_forward.2']
    #allocation7 [shape = 'u8[262144]{0}', space=vmem, size = 0x40000, scoped, tag = 'input window, operand 1']
    #allocation8 [shape = 's32[2]{0}', space=sflag, size = 0x8, scoped, tag = 'scoped memory for templ_emb_forward.2']
    #allocation9 [shape = 'u8[24576]{0}', space=vmem, size = 0x6000, scoped, tag = 'input window, operand 2, single buffered']
    #allocation10 [shape = 'u8[512]{0}', space=vmem, size = 0x400, scoped, tag = 'input window, operand 3, single buffered']
    #allocation11 [shape = 's32[1]{0}', space=sflag, size = 0x4, scoped, tag = 'scoped memory for templ_emb_forward.2']
    #allocation12 [shape = 'u8[512]{0}', space=vmem, size = 0x400, scoped, tag = 'input window, operand 4, single buffered']
    #allocation13 [shape = 'u8[512]{0}', space=vmem, size = 0x400, scoped, tag = 'input window, operand 5, single buffered']
    #allocation14 [shape = 's32[1]{0}', space=sflag, size = 0x4, scoped, tag = 'scoped memory for templ_emb_forward.2']
    #allocation15 [shape = 'u8[294912]{0}', space=vmem, size = 0x48000, scoped, tag = 'input window, operand 6, single buffered']
    #allocation16 [shape = 'u8[512]{0}', space=vmem, size = 0x400, scoped, tag = 'input window, operand 7, single buffered']
    #allocation17 [shape = 's32[1]{0}', space=sflag, size = 0x4, scoped, tag = 'scoped memory for templ_emb_forward.2']
    #allocation18 [shape = 'u8[262144]{0}', space=vmem, size = 0x40000, scoped, tag = 'output window, operand 0']
    %13 = vsyncpa [#allocation5], 0
    %s14 = scalar_lea.sflag [#allocation5], 1
    %15 = vsyncpa %s14, 0
    %16 = vsyncpa [#allocation8], 0
    %s17 = scalar_lea.sflag [#allocation8], 1
    %18 = vsyncpa %s17, 0
    %19 = vsyncpa [#allocation11], 0
    %20 = vsyncpa [#allocation14], 0
    %21 = vsyncpa [#allocation17], 0
    %22 = vsyncpa [#allocation6], 0
    %s23 = scalar_lea.sflag [#allocation6], 1
    %24 = vsyncpa %s23, 0
    loop: start=0, step=1, limit=4
    $region2: #{templ_emb_forward.2} parent=1 // loop_pre_header
      _
    $region3: #{templ_emb_forward.2} parent=1 // loop_header
      %s26 = sphi 0, %s30
      %p27 = scmp.ge.s32.totalorder %s26, 4
      %s36 = sphi 0, %s38
      %s39 = sphi 0, %s36
      %s40 = sphi 0, %s39
      %s56 = sphi 0, %s40
      %s62 = sphi 0, %s64
      %s65 = sphi 0, %s62
      %s66 = sphi 0, %s65
      %s82 = sphi 0, %s66
      %s86 = sphi 0, %s86
      %s88 = sphi 0, %s86
      %s89 = sphi 0, %s88
      %s103 = sphi 0, %s89
      %s107 = sphi 0, %s107
      %s109 = sphi 0, %s107
      %s110 = sphi 0, %s109
      %s124 = sphi 0, %s110
      %s128 = sphi 0, %s128
      %s130 = sphi 0, %s128
      %s131 = sphi 0, %s130
      %s145 = sphi 0, %s131
      %s149 = sphi 0, %s149
      %s151 = sphi 0, %s149
      %s152 = sphi 0, %s151
      %s166 = sphi 0, %s152
      %s170 = sphi 0, %s170
      %s172 = sphi 0, %s170
      %s173 = sphi 0, %s172
      %s187 = sphi 0, %s173
      %s191 = sphi 0, %s191
      %s193 = sphi 0, %s191
      %s194 = sphi 0, %s193
      %s208 = sphi 0, %s194
      %s214 = sphi 0, %s216
      %s217 = sphi 0, %s214
      %s218 = sphi 0, %s217
      %s234 = sphi 0, %s218
    $region4: #{templ_emb_forward.2} parent=1 // loop_header_branch
      %29 = sbr.rel (%p27) target = $region8
    $region5: #{templ_emb_forward.2} parent=1 // loop_body
      %s31 = ssub.s32 %s26, 1
      %s32 = ssub.s32 %s26, 2
      %s33 = sadd.s32 %s26, 1
      %s34 = ssub.s32 %s26, %s33
      %p35 = scmp.eq.s32.totalorder %s34, 0
      %s37 = sadd.s32 %s36, 1
      %s38 = scalar_select %p35, %s36, %s37
      %p41 = pneg %p35
      %p42 = scmp.eq.s32.totalorder %s26, 1
      %p43 = por %p41, %p42
      %p44 = scmp.ne.s32.totalorder %s36, %s39
      %p45 = scmp.eq.s32.totalorder %s26, 0
      %p46 = por %p44, %p45
      %p47 = scmp.ne.s32.totalorder %s36, %s39
      %p48 = scmp.eq.s32.totalorder %s31, 1
      %p49 = por %p47, %p48
      %p50 = scmp.ne.s32.totalorder %s39, %s40
      %p51 = scmp.eq.s32.totalorder %s31, 0
      %p52 = por %p50, %p51
      %p53 = scmp.ne.s32.totalorder %s39, %s40
      %p54 = scmp.eq.s32.totalorder %s32, 1
      %p55 = por %p53, %p54
      %p57 = scmp.ne.s32.totalorder %s40, %s56
      %p58 = scmp.eq.s32.totalorder %s32, 0
      %p59 = por %p57, %p58
      %s60 = ssub.s32 %s26, %s33
      %p61 = scmp.eq.s32.totalorder %s60, 0
      %s63 = sadd.s32 %s62, 1
      %s64 = scalar_select %p61, %s62, %s63
      %p67 = pneg %p61
      %p68 = scmp.eq.s32.totalorder %s26, 1
      %p69 = por %p67, %p68
      %p70 = scmp.ne.s32.totalorder %s62, %s65
      %p71 = scmp.eq.s32.totalorder %s26, 0
      %p72 = por %p70, %p71
      %p73 = scmp.ne.s32.totalorder %s62, %s65
      %p74 = scmp.eq.s32.totalorder %s31, 1
      %p75 = por %p73, %p74
      %p76 = scmp.ne.s32.totalorder %s65, %s66
      %p77 = scmp.eq.s32.totalorder %s31, 0
      %p78 = por %p76, %p77
      %p79 = scmp.ne.s32.totalorder %s65, %s66
      %p80 = scmp.eq.s32.totalorder %s32, 1
      %p81 = por %p79, %p80
      %p83 = scmp.ne.s32.totalorder %s66, %s82
      %p84 = scmp.eq.s32.totalorder %s32, 0
      %p85 = por %p83, %p84
      %s87 = sadd.s32 %s86, 1
      %p90 = scmp.eq.s32.totalorder %s26, 1
      %p91 = scmp.ne.s32.totalorder %s86, %s88
      %p92 = scmp.eq.s32.totalorder %s26, 0
      %p93 = por %p91, %p92
      %p94 = scmp.ne.s32.totalorder %s86, %s88
      %p95 = scmp.eq.s32.totalorder %s31, 1
      %p96 = por %p94, %p95
      %p97 = scmp.ne.s32.totalorder %s88, %s89
      %p98 = scmp.eq.s32.totalorder %s31, 0
      %p99 = por %p97, %p98
      %p100 = scmp.ne.s32.totalorder %s88, %s89
      %p101 = scmp.eq.s32.totalorder %s32, 1
      %p102 = por %p100, %p101
      %p104 = scmp.ne.s32.totalorder %s89, %s103
      %p105 = scmp.eq.s32.totalorder %s32, 0
      %p106 = por %p104, %p105
      %s108 = sadd.s32 %s107, 1
      %p111 = scmp.eq.s32.totalorder %s26, 1
      %p112 = scmp.ne.s32.totalorder %s107, %s109
      %p113 = scmp.eq.s32.totalorder %s26, 0
      %p114 = por %p112, %p113
      %p115 = scmp.ne.s32.totalorder %s107, %s109
      %p116 = scmp.eq.s32.totalorder %s31, 1
      %p117 = por %p115, %p116
      %p118 = scmp.ne.s32.totalorder %s109, %s110
      %p119 = scmp.eq.s32.totalorder %s31, 0
      %p120 = por %p118, %p119
      %p121 = scmp.ne.s32.totalorder %s109, %s110
      %p122 = scmp.eq.s32.totalorder %s32, 1
      %p123 = por %p121, %p122
      %p125 = scmp.ne.s32.totalorder %s110, %s124
      %p126 = scmp.eq.s32.totalorder %s32, 0
      %p127 = por %p125, %p126
      %s129 = sadd.s32 %s128, 1
      %p132 = scmp.eq.s32.totalorder %s26, 1
      %p133 = scmp.ne.s32.totalorder %s128, %s130
      %p134 = scmp.eq.s32.totalorder %s26, 0
      %p135 = por %p133, %p134
      %p136 = scmp.ne.s32.totalorder %s128, %s130
      %p137 = scmp.eq.s32.totalorder %s31, 1
      %p138 = por %p136, %p137
      %p139 = scmp.ne.s32.totalorder %s130, %s131
      %p140 = scmp.eq.s32.totalorder %s31, 0
      %p141 = por %p139, %p140
      %p142 = scmp.ne.s32.totalorder %s130, %s131
      %p143 = scmp.eq.s32.totalorder %s32, 1
      %p144 = por %p142, %p143
      %p146 = scmp.ne.s32.totalorder %s131, %s145
      %p147 = scmp.eq.s32.totalorder %s32, 0
      %p148 = por %p146, %p147
      %s150 = sadd.s32 %s149, 1
      %p153 = scmp.eq.s32.totalorder %s26, 1
      %p154 = scmp.ne.s32.totalorder %s149, %s151
      %p155 = scmp.eq.s32.totalorder %s26, 0
      %p156 = por %p154, %p155
      %p157 = scmp.ne.s32.totalorder %s149, %s151
      %p158 = scmp.eq.s32.totalorder %s31, 1
      %p159 = por %p157, %p158
      %p160 = scmp.ne.s32.totalorder %s151, %s152
      %p161 = scmp.eq.s32.totalorder %s31, 0
      %p162 = por %p160, %p161
      %p163 = scmp.ne.s32.totalorder %s151, %s152
      %p164 = scmp.eq.s32.totalorder %s32, 1
      %p165 = por %p163, %p164
      %p167 = scmp.ne.s32.totalorder %s152, %s166
      %p168 = scmp.eq.s32.totalorder %s32, 0
      %p169 = por %p167, %p168
      %s171 = sadd.s32 %s170, 1
      %p174 = scmp.eq.s32.totalorder %s26, 1
      %p175 = scmp.ne.s32.totalorder %s170, %s172
      %p176 = scmp.eq.s32.totalorder %s26, 0
      %p177 = por %p175, %p176
      %p178 = scmp.ne.s32.totalorder %s170, %s172
      %p179 = scmp.eq.s32.totalorder %s31, 1
      %p180 = por %p178, %p179
      %p181 = scmp.ne.s32.totalorder %s172, %s173
      %p182 = scmp.eq.s32.totalorder %s31, 0
      %p183 = por %p181, %p182
      %p184 = scmp.ne.s32.totalorder %s172, %s173
      %p185 = scmp.eq.s32.totalorder %s32, 1
      %p186 = por %p184, %p185
      %p188 = scmp.ne.s32.totalorder %s173, %s187
      %p189 = scmp.eq.s32.totalorder %s32, 0
      %p190 = por %p188, %p189
      %s192 = sadd.s32 %s191, 1
      %p195 = scmp.eq.s32.totalorder %s26, 1
      %p196 = scmp.ne.s32.totalorder %s191, %s193
      %p197 = scmp.eq.s32.totalorder %s26, 0
      %p198 = por %p196, %p197
      %p199 = scmp.ne.s32.totalorder %s191, %s193
      %p200 = scmp.eq.s32.totalorder %s31, 1
      %p201 = por %p199, %p200
      %p202 = scmp.ne.s32.totalorder %s193, %s194
      %p203 = scmp.eq.s32.totalorder %s31, 0
      %p204 = por %p202, %p203
      %p205 = scmp.ne.s32.totalorder %s193, %s194
      %p206 = scmp.eq.s32.totalorder %s32, 1
      %p207 = por %p205, %p206
      %p209 = scmp.ne.s32.totalorder %s194, %s208
      %p210 = scmp.eq.s32.totalorder %s32, 0
      %p211 = por %p209, %p210
      %s212 = ssub.s32 %s26, %s33
      %p213 = scmp.eq.s32.totalorder %s212, 0
      %s215 = sadd.s32 %s214, 1
      %s216 = scalar_select %p213, %s214, %s215
      %p219 = pneg %p213
      %p220 = scmp.eq.s32.totalorder %s26, 1
      %p221 = por %p219, %p220
      %p222 = scmp.ne.s32.totalorder %s214, %s217
      %p223 = scmp.eq.s32.totalorder %s26, 0
      %p224 = por %p222, %p223
      %p225 = scmp.ne.s32.totalorder %s214, %s217
      %p226 = scmp.eq.s32.totalorder %s31, 1
      %p227 = por %p225, %p226
      %p228 = scmp.ne.s32.totalorder %s217, %s218
      %p229 = scmp.eq.s32.totalorder %s31, 0
      %p230 = por %p228, %p229
      %p231 = scmp.ne.s32.totalorder %s217, %s218
      %p232 = scmp.eq.s32.totalorder %s32, 1
      %p233 = por %p231, %p232
      %p235 = scmp.ne.s32.totalorder %s218, %s234
      %p236 = scmp.eq.s32.totalorder %s32, 0
      %p237 = por %p235, %p236
      %p238 = scmp.le.s32.totalorder 1, %s26
      %p239 = scmp.lt.s32.totalorder %s26, 3
      %p240 = pnand %p238, %p239
      %p241 = pneg %p240
      // Predicated region
      $region9: #{templ_emb_forward.2} parent=5 // pred_check
        _
      $region10: #{templ_emb_forward.2} parent=5 // pred_check_branch
        %243 = sbr.rel (%p240) target = $region12
      $region11: #{templ_emb_forward.2} parent=5 // pred_region
        %s244 = ssub.s32 %s26, 1
        // Predicated region
        $region13: #{templ_emb_forward.2} parent=11 // pred_check
          %p245 = pneg %p99
        $region14: #{templ_emb_forward.2} parent=11 // pred_check_branch
          %247 = sbr.rel (%p245) target = $region16
        $region15: #{templ_emb_forward.2} parent=11 // pred_region
          %s249 = ssub.s32 768, 768
          %250 = vsyncadd [#allocation8], %s249
          %s251 = sshll.u32 [#allocation9], 4
          %s252 = int_to_ptr.vmem [resolvable:$true] %s251
          %257 = dma.hbm_to_vmem [thread:$0]  %s2, 768, %s252, [#allocation8], 128, 128, 8
        $region16: #{templ_emb_forward.2} parent=11 // pred_fallthru
          _
        // Predicated region
        $region17: #{templ_emb_forward.2} parent=11 // pred_check
          %p258 = pneg %p120
        $region18: #{templ_emb_forward.2} parent=11 // pred_check_branch
          %260 = sbr.rel (%p258) target = $region20
        $region19: #{templ_emb_forward.2} parent=11 // pred_region
          %s262 = ssub.s32 16, 16
          %263 = vsyncadd [#allocation11], %s262
          %s265 = sshll.u32 [#allocation10], 4
          %s266 = int_to_ptr.vmem [resolvable:$true] %s265
          %268 = dma.hbm_to_vmem [thread:$0]  %s3, 16, %s266, [#allocation11]
        $region20: #{templ_emb_forward.2} parent=11 // pred_fallthru
          _
        // Predicated region
        $region21: #{templ_emb_forward.2} parent=11 // pred_check
          %p269 = pneg %p141
        $region22: #{templ_emb_forward.2} parent=11 // pred_check_branch
          %271 = sbr.rel (%p269) target = $region24
        $region23: #{templ_emb_forward.2} parent=11 // pred_region
          %s273 = ssub.s32 16, 16
          %274 = vsyncadd [#allocation11], %s273
          %s276 = sshll.u32 [#allocation12], 4
          %s277 = int_to_ptr.vmem [resolvable:$true] %s276
          %279 = dma.hbm_to_vmem [thread:$0]  %s4, 16, %s277, [#allocation11]
        $region24: #{templ_emb_forward.2} parent=11 // pred_fallthru
          _
        // Predicated region
        $region25: #{templ_emb_forward.2} parent=11 // pred_check
          %p280 = pneg %p162
        $region26: #{templ_emb_forward.2} parent=11 // pred_check_branch
          %282 = sbr.rel (%p280) target = $region28
        $region27: #{templ_emb_forward.2} parent=11 // pred_region
          %s284 = ssub.s32 16, 16
          %285 = vsyncadd [#allocation14], %s284
          %s287 = sshll.u32 [#allocation13], 4
          %s288 = int_to_ptr.vmem [resolvable:$true] %s287
          %290 = dma.hbm_to_vmem [thread:$0]  %s5, 16, %s288, [#allocation14]
        $region28: #{templ_emb_forward.2} parent=11 // pred_fallthru
          _
        // Predicated region
        $region29: #{templ_emb_forward.2} parent=11 // pred_check
          %p291 = pneg %p183
        $region30: #{templ_emb_forward.2} parent=11 // pred_check_branch
          %293 = sbr.rel (%p291) target = $region32
        $region31: #{templ_emb_forward.2} parent=11 // pred_region
          %s295 = ssub.s32 9216, 9216
          %296 = vsyncadd [#allocation14], %s295
          %s297 = sshll.u32 [#allocation15], 4
          %s298 = int_to_ptr.vmem [resolvable:$true] %s297
          %303 = dma.hbm_to_vmem [thread:$0]  %s6, 9216, %s298, [#allocation14], 128, 128, 8
        $region32: #{templ_emb_forward.2} parent=11 // pred_fallthru
          _
        // Predicated region
        $region33: #{templ_emb_forward.2} parent=11 // pred_check
          %p304 = pneg %p204
        $region34: #{templ_emb_forward.2} parent=11 // pred_check_branch
          %306 = sbr.rel (%p304) target = $region36
        $region35: #{templ_emb_forward.2} parent=11 // pred_region
          %s308 = ssub.s32 16, 16
          %309 = vsyncadd [#allocation17], %s308
          %s311 = sshll.u32 [#allocation16], 4
          %s312 = int_to_ptr.vmem [resolvable:$true] %s311
          %314 = dma.hbm_to_vmem [thread:$0]  %s7, 16, %s312, [#allocation17]
        $region36: #{templ_emb_forward.2} parent=11 // pred_fallthru
          _
      $region12: #{templ_emb_forward.2} parent=5 // pred_fallthru
        _
      %p315 = scmp.lt.s32.totalorder %s26, 2
      // Predicated region
      $region37: #{templ_emb_forward.2} parent=5 // pred_check
        %p316 = pneg %p315
      $region38: #{templ_emb_forward.2} parent=5 // pred_check_branch
        %318 = sbr.rel (%p316) target = $region40
      $region39: #{templ_emb_forward.2} parent=5 // pred_region
        // Predicated region
        $region41: #{templ_emb_forward.2} parent=39 // pred_check
          %p319 = pneg %p46
        $region42: #{templ_emb_forward.2} parent=39 // pred_check_branch
          %321 = sbr.rel (%p319) target = $region44
        $region43: #{templ_emb_forward.2} parent=39 // pred_region
          %s322 = sand.u32 %s36, 1
          %s323 = scalar_lea.sflag [#allocation5], %s322
          %s324 = sand.u32 %s36, 1
          %s325 = smul.addr %s324, 32
          %s326 = scalar_lea.vmem [#allocation4], %s325
          %s327 = smul.u32 4, %s26
          %s329 = ssub.s32 512, 512
          %330 = vsyncadd %s323, %s329
          %s331 = smul.addr %s327, 128
          %s332 = scalar_lea.hbm %s0, %s331
          %s333 = sshll.u32 %s326, 4
          %s334 = int_to_ptr.vmem [resolvable:$true] %s333
          %339 = dma.hbm_to_vmem [thread:$0]  %s332, 512, %s334, %s323, 128, 128, 8
        $region44: #{templ_emb_forward.2} parent=39 // pred_fallthru
          _
        // Predicated region
        $region45: #{templ_emb_forward.2} parent=39 // pred_check
          %p340 = pneg %p72
        $region46: #{templ_emb_forward.2} parent=39 // pred_check_branch
          %342 = sbr.rel (%p340) target = $region48
        $region47: #{templ_emb_forward.2} parent=39 // pred_region
          %s343 = sand.u32 %s26, 1
          %s344 = scalar_lea.sflag [#allocation8], %s343
          %s345 = sand.u32 %s62, 1
          %s346 = smul.addr %s345, 256
          %s347 = scalar_lea.vmem [#allocation7], %s346
          %s348 = smul.u32 4, %s26
          %s350 = ssub.s32 4096, 4096
          %351 = vsyncadd %s344, %s350
          %s352 = smul.addr %s348, 8
          %s353 = smul.addr %s352, 128
          %s354 = scalar_lea.hbm %s1, %s353
          %s355 = sshll.u32 %s347, 4
          %s356 = int_to_ptr.vmem [resolvable:$true] %s355
          %361 = dma.hbm_to_vmem [thread:$0]  %s354, 4096, %s356, %s344, 128, 128, 8
        $region48: #{templ_emb_forward.2} parent=39 // pred_fallthru
          _
      $region40: #{templ_emb_forward.2} parent=5 // pred_fallthru
        _
      %p362 = scmp.le.s32.totalorder 1, %s26
      %p363 = scmp.lt.s32.totalorder %s26, 3
      %p364 = pnand %p362, %p363
      %p365 = pneg %p364
      // Predicated region
      $region49: #{templ_emb_forward.2} parent=5 // pred_check
        _
      $region50: #{templ_emb_forward.2} parent=5 // pred_check_branch
        %367 = sbr.rel (%p364) target = $region52
      $region51: #{templ_emb_forward.2} parent=5 // pred_region
        %s368 = ssub.s32 %s26, 1
        %s369 = sand.u32 %s39, 1
        %s370 = scalar_lea.sflag [#allocation5], %s369
        %s371 = sand.u32 %s39, 1
        %s372 = smul.addr %s371, 32
        %s373 = scalar_lea.vmem [#allocation4], %s372
        // Predicated region
        $region53: #{templ_emb_forward.2} parent=51 // pred_check
          %p374 = pneg %p52
        $region54: #{templ_emb_forward.2} parent=51 // pred_check_branch
          %376 = sbr.rel (%p374) target = $region56
        $region55: #{templ_emb_forward.2} parent=51 // pred_region
          %377 = dma.done %s370, 512
        $region56: #{templ_emb_forward.2} parent=51 // pred_fallthru
          _
        %s378 = sand.u32 %s31, 1
        %s379 = scalar_lea.sflag [#allocation8], %s378
        %s380 = sand.u32 %s65, 1
        %s381 = smul.addr %s380, 256
        %s382 = scalar_lea.vmem [#allocation7], %s381
        // Predicated region
        $region57: #{templ_emb_forward.2} parent=51 // pred_check
          %p383 = pneg %p78
        $region58: #{templ_emb_forward.2} parent=51 // pred_check_branch
          %385 = sbr.rel (%p383) target = $region60
        $region59: #{templ_emb_forward.2} parent=51 // pred_region
          %386 = dma.done %s379, 4096
        $region60: #{templ_emb_forward.2} parent=51 // pred_fallthru
          _
        // Predicated region
        $region61: #{templ_emb_forward.2} parent=51 // pred_check
          %p387 = pneg %p99
        $region62: #{templ_emb_forward.2} parent=51 // pred_check_branch
          %389 = sbr.rel (%p387) target = $region64
        $region63: #{templ_emb_forward.2} parent=51 // pred_region
          %390 = dma.done [#allocation8], 768
        $region64: #{templ_emb_forward.2} parent=51 // pred_fallthru
          _
        // Predicated region
        $region65: #{templ_emb_forward.2} parent=51 // pred_check
          %p391 = pneg %p120
        $region66: #{templ_emb_forward.2} parent=51 // pred_check_branch
          %393 = sbr.rel (%p391) target = $region68
        $region67: #{templ_emb_forward.2} parent=51 // pred_region
          %394 = dma.done [#allocation11], 16
        $region68: #{templ_emb_forward.2} parent=51 // pred_fallthru
          _
        // Predicated region
        $region69: #{templ_emb_forward.2} parent=51 // pred_check
          %p395 = pneg %p141
        $region70: #{templ_emb_forward.2} parent=51 // pred_check_branch
          %397 = sbr.rel (%p395) target = $region72
        $region71: #{templ_emb_forward.2} parent=51 // pred_region
          %398 = dma.done [#allocation11], 16
        $region72: #{templ_emb_forward.2} parent=51 // pred_fallthru
          _
        // Predicated region
        $region73: #{templ_emb_forward.2} parent=51 // pred_check
          %p399 = pneg %p162
        $region74: #{templ_emb_forward.2} parent=51 // pred_check_branch
          %401 = sbr.rel (%p399) target = $region76
        $region75: #{templ_emb_forward.2} parent=51 // pred_region
          %402 = dma.done [#allocation14], 16
        $region76: #{templ_emb_forward.2} parent=51 // pred_fallthru
          _
        // Predicated region
        $region77: #{templ_emb_forward.2} parent=51 // pred_check
          %p403 = pneg %p183
        $region78: #{templ_emb_forward.2} parent=51 // pred_check_branch
          %405 = sbr.rel (%p403) target = $region80
        $region79: #{templ_emb_forward.2} parent=51 // pred_region
          %406 = dma.done [#allocation14], 9216
        $region80: #{templ_emb_forward.2} parent=51 // pred_fallthru
          _
        // Predicated region
        $region81: #{templ_emb_forward.2} parent=51 // pred_check
          %p407 = pneg %p204
        $region82: #{templ_emb_forward.2} parent=51 // pred_check_branch
          %409 = sbr.rel (%p407) target = $region84
        $region83: #{templ_emb_forward.2} parent=51 // pred_region
          %410 = dma.done [#allocation17], 16
        $region84: #{templ_emb_forward.2} parent=51 // pred_fallthru
          _
        %s411 = sand.u32 %s39, 1
        %s412 = scalar_lea.sflag [#allocation5], %s411
        %s413 = sand.u32 %s39, 1
        %s414 = smul.addr %s413, 32
        %s415 = scalar_lea.vmem [#allocation4], %s414
        %p416 = pneg %p52
        %p417 = pneg %p49
        %s418 = sand.u32 %s31, 1
        %s419 = scalar_lea.sflag [#allocation8], %s418
        %s420 = sand.u32 %s65, 1
        %s421 = smul.addr %s420, 256
        %s422 = scalar_lea.vmem [#allocation7], %s421
        %p423 = pneg %p78
        %p424 = pneg %p75
        %p425 = pneg %p99
        %p426 = pneg %p96
        %p427 = pneg %p120
        %p428 = pneg %p117
        %p429 = pneg %p141
        %p430 = pneg %p138
        %p431 = pneg %p162
        %p432 = pneg %p159
        %p433 = pneg %p183
        %p434 = pneg %p180
        %p435 = pneg %p204
        %p436 = pneg %p201
        %p437 = pneg %p230
        %p438 = pneg %p227
        %s439 = sand.u32 %s217, 1
        %s440 = scalar_lea.sflag [#allocation6], %s439
        %s441 = sand.u32 %s217, 1
        %s442 = smul.addr %s441, 256
        %s443 = scalar_lea.vmem [#allocation18], %s442
        %s444 = smul.u32 4, %s31
        %s445 = smul.u32 4, %s31
        %s446 = smul.u32 4, %s31
        %vm447 = vcmask 523264
        %448 = vst.msk [vmem:[#allocation2] sm:$0xff] %vm447, 0.0
        %vm449 = vcmask 517120
        %450 = vst.msk [vmem:[#allocation2 + $0x8] sm:$0x3] %vm449, 0.0
        %451 = vst.msk [vmem:[#allocation2 + $0x10] sm:$0xff] %vm447, 0.0
        %452 = vst.msk [vmem:[#allocation2 + $0x18] sm:$0x3] %vm449, 0.0
        %453 = vst.msk [vmem:[#allocation2 + $0x20] sm:$0xff] %vm447, 0.0
        %454 = vst.msk [vmem:[#allocation2 + $0x28] sm:$0x3] %vm449, 0.0
        %455 = vst.msk [vmem:[#allocation2 + $0x30] sm:$0xff] %vm447, 0.0
        %456 = vst.msk [vmem:[#allocation2 + $0x38] sm:$0x3] %vm449, 0.0
        %457 = vst.msk [vmem:[#allocation2 + $0x40] sm:$0xff] %vm447, 0.0
        %458 = vst.msk [vmem:[#allocation2 + $0x48] sm:$0x3] %vm449, 0.0
        %459 = vst.msk [vmem:[#allocation2 + $0x50] sm:$0xff] %vm447, 0.0
        %460 = vst.msk [vmem:[#allocation2 + $0x58] sm:$0x3] %vm449, 0.0
        %461 = vst.msk [vmem:[#allocation2 + $0x60] sm:$0xff] %vm447, 0.0
        %462 = vst.msk [vmem:[#allocation2 + $0x68] sm:$0x3] %vm449, 0.0
        %463 = vst.msk [vmem:[#allocation2 + $0x70] sm:$0xff] %vm447, 0.0
        %464 = vst.msk [vmem:[#allocation2 + $0x78] sm:$0x3] %vm449, 0.0
        %465 = vst.msk [vmem:[#allocation2 + $0x80] sm:$0xff] %vm447, 0.0
        %466 = vst.msk [vmem:[#allocation2 + $0x88] sm:$0x3] %vm449, 0.0
        %467 = vst.msk [vmem:[#allocation2 + $0x90] sm:$0xff] %vm447, 0.0
        %468 = vst.msk [vmem:[#allocation2 + $0x98] sm:$0x3] %vm449, 0.0
        %469 = vst.msk [vmem:[#allocation2 + $0xa0] sm:$0xff] %vm447, 0.0
        %470 = vst.msk [vmem:[#allocation2 + $0xa8] sm:$0x3] %vm449, 0.0
        %471 = vst.msk [vmem:[#allocation2 + $0xb0] sm:$0xff] %vm447, 0.0
        %472 = vst.msk [vmem:[#allocation2 + $0xb8] sm:$0x3] %vm449, 0.0
        %473 = vst.msk [vmem:[#allocation2 + $0xc0] sm:$0xff] %vm447, 0.0
        %474 = vst.msk [vmem:[#allocation2 + $0xc8] sm:$0x3] %vm449, 0.0
        %475 = vst.msk [vmem:[#allocation2 + $0xd0] sm:$0xff] %vm447, 0.0
        %476 = vst.msk [vmem:[#allocation2 + $0xd8] sm:$0x3] %vm449, 0.0
        %477 = vst.msk [vmem:[#allocation2 + $0xe0] sm:$0xff] %vm447, 0.0
        %478 = vst.msk [vmem:[#allocation2 + $0xe8] sm:$0x3] %vm449, 0.0
        %479 = vst.msk [vmem:[#allocation2 + $0xf0] sm:$0xff] %vm447, 0.0
        %480 = vst.msk [vmem:[#allocation2 + $0xf8] sm:$0x3] %vm449, 0.0
        %481 = vst.msk [vmem:[#allocation2 + $0x100] sm:$0xff] %vm447, 0.0
        %482 = vst.msk [vmem:[#allocation2 + $0x108] sm:$0x3] %vm449, 0.0
        %483 = vst.msk [vmem:[#allocation2 + $0x110] sm:$0xff] %vm447, 0.0
        %484 = vst.msk [vmem:[#allocation2 + $0x118] sm:$0x3] %vm449, 0.0
        %485 = vst.msk [vmem:[#allocation2 + $0x120] sm:$0xff] %vm447, 0.0
        %486 = vst.msk [vmem:[#allocation2 + $0x128] sm:$0x3] %vm449, 0.0
        %487 = vst.msk [vmem:[#allocation2 + $0x130] sm:$0xff] %vm447, 0.0
        %488 = vst.msk [vmem:[#allocation2 + $0x138] sm:$0x3] %vm449, 0.0
        %489 = vst.msk [vmem:[#allocation2 + $0x140] sm:$0xff] %vm447, 0.0
        %490 = vst.msk [vmem:[#allocation2 + $0x148] sm:$0x3] %vm449, 0.0
        %491 = vst.msk [vmem:[#allocation2 + $0x150] sm:$0xff] %vm447, 0.0
        %492 = vst.msk [vmem:[#allocation2 + $0x158] sm:$0x3] %vm449, 0.0
        %493 = vst.msk [vmem:[#allocation2 + $0x160] sm:$0xff] %vm447, 0.0
        %494 = vst.msk [vmem:[#allocation2 + $0x168] sm:$0x3] %vm449, 0.0
        %495 = vst.msk [vmem:[#allocation2 + $0x170] sm:$0xff] %vm447, 0.0
        %496 = vst.msk [vmem:[#allocation2 + $0x178] sm:$0x3] %vm449, 0.0
        %497 = vst.msk [vmem:[#allocation2 + $0x180] sm:$0xff] %vm447, 0.0
        %498 = vst.msk [vmem:[#allocation2 + $0x188] sm:$0x3] %vm449, 0.0
        %499 = vst.msk [vmem:[#allocation2 + $0x190] sm:$0xff] %vm447, 0.0
        %500 = vst.msk [vmem:[#allocation2 + $0x198] sm:$0x3] %vm449, 0.0
        %501 = vst.msk [vmem:[#allocation2 + $0x1a0] sm:$0xff] %vm447, 0.0
        %502 = vst.msk [vmem:[#allocation2 + $0x1a8] sm:$0x3] %vm449, 0.0
        %503 = vst.msk [vmem:[#allocation2 + $0x1b0] sm:$0xff] %vm447, 0.0
        %504 = vst.msk [vmem:[#allocation2 + $0x1b8] sm:$0x3] %vm449, 0.0
        %505 = vst.msk [vmem:[#allocation2 + $0x1c0] sm:$0xff] %vm447, 0.0
        %506 = vst.msk [vmem:[#allocation2 + $0x1c8] sm:$0x3] %vm449, 0.0
        %507 = vst.msk [vmem:[#allocation2 + $0x1d0] sm:$0xff] %vm447, 0.0
        %508 = vst.msk [vmem:[#allocation2 + $0x1d8] sm:$0x3] %vm449, 0.0
        %509 = vst.msk [vmem:[#allocation2 + $0x1e0] sm:$0xff] %vm447, 0.0
        %510 = vst.msk [vmem:[#allocation2 + $0x1e8] sm:$0x3] %vm449, 0.0
        %511 = vst.msk [vmem:[#allocation2 + $0x1f0] sm:$0xff] %vm447, 0.0
        %512 = vst.msk [vmem:[#allocation2 + $0x1f8] sm:$0x3] %vm449, 0.0
        %513 = vst.msk [vmem:[#allocation2 + $0x200] sm:$0xff] %vm447, 0.0
        %514 = vst.msk [vmem:[#allocation2 + $0x208] sm:$0x3] %vm449, 0.0
        %515 = vst.msk [vmem:[#allocation2 + $0x210] sm:$0xff] %vm447, 0.0
        %516 = vst.msk [vmem:[#allocation2 + $0x218] sm:$0x3] %vm449, 0.0
        %517 = vst.msk [vmem:[#allocation2 + $0x220] sm:$0xff] %vm447, 0.0
        %518 = vst.msk [vmem:[#allocation2 + $0x228] sm:$0x3] %vm449, 0.0
        %519 = vst.msk [vmem:[#allocation2 + $0x230] sm:$0xff] %vm447, 0.0
        %520 = vst.msk [vmem:[#allocation2 + $0x238] sm:$0x3] %vm449, 0.0
        %521 = vst.msk [vmem:[#allocation2 + $0x240] sm:$0xff] %vm447, 0.0
        %522 = vst.msk [vmem:[#allocation2 + $0x248] sm:$0x3] %vm449, 0.0
        %523 = vst.msk [vmem:[#allocation2 + $0x250] sm:$0xff] %vm447, 0.0
        %524 = vst.msk [vmem:[#allocation2 + $0x258] sm:$0x3] %vm449, 0.0
        %525 = vst.msk [vmem:[#allocation2 + $0x260] sm:$0xff] %vm447, 0.0
        %526 = vst.msk [vmem:[#allocation2 + $0x268] sm:$0x3] %vm449, 0.0
        %527 = vst.msk [vmem:[#allocation2 + $0x270] sm:$0xff] %vm447, 0.0
        %528 = vst.msk [vmem:[#allocation2 + $0x278] sm:$0x3] %vm449, 0.0
        %v529 = vld [vmem:[%s382] sm:$0xff]
        %v530 = vld [vmem:[%s382 + $0x8] sm:$0xff]
        %v531 = vld [vmem:[%s382 + $0x10] sm:$0xff]
        %v532 = vld [vmem:[%s382 + $0x18] sm:$0xff]
        %v533 = vld [vmem:[%s382 + $0x20] sm:$0xff]
        %v534 = vld [vmem:[%s382 + $0x28] sm:$0xff]
        %v535 = vld [vmem:[%s382 + $0x30] sm:$0xff]
        %v536 = vld [vmem:[%s382 + $0x38] sm:$0xff]
        %v537 = vld [vmem:[%s382 + $0x40] sm:$0xff]
        %v538 = vld [vmem:[%s382 + $0x48] sm:$0xff]
        %v539 = vld [vmem:[%s382 + $0x50] sm:$0xff]
        %v540 = vld [vmem:[%s382 + $0x58] sm:$0xff]
        %v541 = vld [vmem:[%s382 + $0x60] sm:$0xff]
        %v542 = vld [vmem:[%s382 + $0x68] sm:$0xff]
        %v543 = vld [vmem:[%s382 + $0x70] sm:$0xff]
        %v544 = vld [vmem:[%s382 + $0x78] sm:$0xff]
        %v545 = vld [vmem:[%s382 + $0x80] sm:$0xff]
        %v546 = vld [vmem:[%s382 + $0x88] sm:$0xff]
        %v547 = vld [vmem:[%s382 + $0x90] sm:$0xff]
        %v548 = vld [vmem:[%s382 + $0x98] sm:$0xff]
        %v549 = vld [vmem:[%s382 + $0xa0] sm:$0xff]
        %v550 = vld [vmem:[%s382 + $0xa8] sm:$0xff]
        %v551 = vld [vmem:[%s382 + $0xb0] sm:$0xff]
        %v552 = vld [vmem:[%s382 + $0xb8] sm:$0xff]
        %v553 = vld [vmem:[%s382 + $0xc0] sm:$0xff]
        %v554 = vld [vmem:[%s382 + $0xc8] sm:$0xff]
        %v555 = vld [vmem:[%s382 + $0xd0] sm:$0xff]
        %v556 = vld [vmem:[%s382 + $0xd8] sm:$0xff]
        %v557 = vld [vmem:[%s382 + $0xe0] sm:$0xff]
        %v558 = vld [vmem:[%s382 + $0xe8] sm:$0xff]
        %v559 = vld [vmem:[%s382 + $0xf0] sm:$0xff]
        %v560 = vld [vmem:[%s382 + $0xf8] sm:$0xff]
        %v561 = vld [vmem:[#allocation9] sm:$0xff]
        %v562 = vld [vmem:[#allocation9 + $0x8] sm:$0xff]
        %v563 = vld [vmem:[#allocation9 + $0x10] sm:$0xff]
        %v564 = vld [vmem:[#allocation9 + $0x18] sm:$0xff]
        %v565 = vld [vmem:[#allocation9 + $0x20] sm:$0xff]
        %v566 = vld [vmem:[#allocation9 + $0x28] sm:$0x3f]
        %vm567 = vcmask 375808
        %v569 = vsel %vm567, %v529, 0
        %v572 = vsel %vm567, %v530, 0
        %v575 = vsel %vm567, %v531, 0
        %v578 = vsel %vm567, %v532, 0
        %v581 = vsel %vm567, %v533, 0
        %v584 = vsel %vm567, %v534, 0
        %v587 = vsel %vm567, %v535, 0
        %v590 = vsel %vm567, %v536, 0
        %v593 = vsel %vm567, %v537, 0
        %v596 = vsel %vm567, %v538, 0
        %v599 = vsel %vm567, %v539, 0
        %v602 = vsel %vm567, %v540, 0
        %v605 = vsel %vm567, %v541, 0
        %v608 = vsel %vm567, %v542, 0
        %v611 = vsel %vm567, %v543, 0
        %v614 = vsel %vm567, %v544, 0
        %v617 = vsel %vm567, %v545, 0
        %v620 = vsel %vm567, %v546, 0
        %v623 = vsel %vm567, %v547, 0
        %v626 = vsel %vm567, %v548, 0
        %v629 = vsel %vm567, %v549, 0
        %v632 = vsel %vm567, %v550, 0
        %v635 = vsel %vm567, %v551, 0
        %v638 = vsel %vm567, %v552, 0
        %v641 = vsel %vm567, %v553, 0
        %v644 = vsel %vm567, %v554, 0
        %v647 = vsel %vm567, %v555, 0
        %v650 = vsel %vm567, %v556, 0
        %v653 = vsel %vm567, %v557, 0
        %v656 = vsel %vm567, %v558, 0
        %v659 = vsel %vm567, %v559, 0
        %v662 = vsel %vm567, %v560, 0
        %vm664 = vcmask 1045504
        %v666 = vsel %vm664, %v566, 0
        %668 = vmatprep.subr.mxu0 0.0
        %669 = vmatpush1.msra.mxu0 %v561
        %670 = vmatprep.subr.mxu0 0.0
        %671 = vmatpush1.msra.mxu0 %v562
        %672 = vmatprep.subr.mxu0 0.0
        %673 = vmatpush1.msra.mxu0 %v563
        %674 = vmatprep.subr.mxu0 0.0
        %675 = vmatpush1.msra.mxu0 %v564
        %676 = vmatprep.subr.mxu0 0.0
        %677 = vmatpush1.msra.mxu0 %v565
        %678 = vmatprep.subr.mxu0 0.0
        %679 = vmatpush1.msra.mxu0 %v666
        %680 = vmatprep.subr.mxu0 0.0
        %681 = vmatpush1.msra.mxu0 0.0
        %682 = vmatprep.subr.mxu0 0.0
        %683 = vmatpush1.msra.mxu0 0.0
        %684 = vmatprep.subr.mxu0 0.0
        %685 = vmatpush1.msra.mxu0 0.0
        %686 = vmatprep.subr.mxu0 0.0
        %687 = vmatpush1.msra.mxu0 0.0
        %688 = vmatprep.subr.mxu0 0.0
        %689 = vmatpush1.msra.mxu0 0.0
        %690 = vmatprep.subr.mxu0 0.0
        %691 = vmatpush1.msra.mxu0 0.0
        %692 = vmatprep.subr.mxu0 0.0
        %693 = vmatpush1.msra.mxu0 0.0
        %694 = vmatprep.subr.mxu0 0.0
        %695 = vmatpush1.msra.mxu0 0.0
        %696 = vmatprep.subr.mxu0 0.0
        %697 = vmatpush1.msra.mxu0 0.0
        %698 = vmatprep.subr.mxu0 0.0
        %699 = vmatpush1.msra.mxu0 0.0
        %700 = vmatprep.subr.mxu0 0.0
        %701 = vmatpush1.msra.mxu0 0.0
        %702 = vmatprep.subr.mxu0 0.0
        %703 = vmatpush1.msra.mxu0 0.0
        %704 = vmatprep.subr.mxu0 0.0
        %705 = vmatpush1.msra.mxu0 0.0
        %706 = vmatprep.subr.mxu0 0.0
        %707 = vmatpush1.msra.mxu0 0.0
        %708 = vmatprep.subr.mxu0 0.0
        %709 = vmatpush1.msra.mxu0 0.0
        %710 = vmatprep.subr.mxu0 0.0
        %711 = vmatpush1.msra.mxu0 0.0
        %712 = vmatprep.subr.mxu0 0.0
        %713 = vmatpush1.msra.mxu0 0.0
        %714 = vmatprep.subr.mxu0 0.0
        %715 = vmatpush1.msra.mxu0 0.0
        %716 = vmatprep.subr.mxu0 0.0
        %717 = vmatpush1.msra.mxu0 0.0
        %718 = vmatprep.subr.mxu0 0.0
        %719 = vmatpush1.msra.mxu0 0.0
        %720 = vmatprep.subr.mxu0 0.0
        %721 = vmatpush1.msra.mxu0 0.0
        %722 = vmatprep.subr.mxu0 0.0
        %723 = vmatpush1.msra.mxu0 0.0
        %724 = vmatprep.subr.mxu0 0.0
        %725 = vmatpush1.msra.mxu0 0.0
        %726 = vmatprep.subr.mxu0 0.0
        %727 = vmatpush1.msra.mxu0 0.0
        %728 = vmatprep.subr.mxu0 0.0
        %729 = vmatpush1.msra.mxu0 0.0
        %730 = vmatprep.subr.mxu0 0.0
        %731 = vmatpush1.msra.mxu0 0.0
        %732 = vmatprep.mubr.f32.mxu0 0.0
        %733 = vmatmul.mubr.f32.gmra.mrb[0].mxu0 %v569
        %v734 = vpop.f32.mrb[0].mxu0
        %v735 = vadd.f32 0.0, %v734
        %v736 = vpop.f32.mrb[0].mxu0
        %737 = vmatprep.mubr.f32.mxu0 0.0
        %738 = vmatmul.mubr.f32.gmra.mrb[0].mxu0 %v572
        %v739 = vpop.f32.mrb[0].mxu0
        %v740 = vadd.f32 0.0, %v739
        %v741 = vpop.f32.mrb[0].mxu0
        %742 = vmatprep.mubr.f32.mxu0 0.0
        %743 = vmatmul.mubr.f32.gmra.mrb[0].mxu0 %v575
        %v744 = vpop.f32.mrb[0].mxu0
        %v745 = vadd.f32 0.0, %v744
        %v746 = vpop.f32.mrb[0].mxu0
        %747 = vmatprep.mubr.f32.mxu0 0.0
        %748 = vmatmul.mubr.f32.gmra.mrb[0].mxu0 %v578
        %v749 = vpop.f32.mrb[0].mxu0
        %v750 = vadd.f32 0.0, %v749
        %v751 = vpop.f32.mrb[0].mxu0
        %752 = vmatprep.mubr.f32.mxu0 0.0
        %753 = vmatmul.mubr.f32.gmra.mrb[0].mxu0 %v581
        %v754 = vpop.f32.mrb[0].mxu0
        %v755 = vadd.f32 0.0, %v754
        %v756 = vpop.f32.mrb[0].mxu0
        %757 = vmatprep.mubr.f32.mxu0 0.0
        %758 = vmatmul.mubr.f32.gmra.mrb[0].mxu0 %v584
        %v759 = vpop.f32.mrb[0].mxu0
        %v760 = vadd.f32 0.0, %v759
        %v761 = vpop.f32.mrb[0].mxu0
        %762 = vmatprep.mubr.f32.mxu0 0.0
        %763 = vmatmul.mubr.f32.gmra.mrb[0].mxu0 %v587
        %v764 = vpop.f32.mrb[0].mxu0
        %v765 = vadd.f32 0.0, %v764
        %v766 = vpop.f32.mrb[0].mxu0
        %767 = vmatprep.mubr.f32.mxu0 0.0
        %768 = vmatmul.mubr.f32.gmra.mrb[0].mxu0 %v590
        %v769 = vpop.f32.mrb[0].mxu0
        %v770 = vadd.f32 0.0, %v769
        %v771 = vpop.f32.mrb[0].mxu0
        %772 = vmatprep.mubr.f32.mxu0 0.0
        %773 = vmatmul.mubr.f32.gmra.mrb[0].mxu0 %v593
        %v774 = vpop.f32.mrb[0].mxu0
        %v775 = vadd.f32 0.0, %v774
        %v776 = vpop.f32.mrb[0].mxu0
        %777 = vmatprep.mubr.f32.mxu0 0.0
        %778 = vmatmul.mubr.f32.gmra.mrb[0].mxu0 %v596
        %v779 = vpop.f32.mrb[0].mxu0
        %v780 = vadd.f32 0.0, %v779
        %v781 = vpop.f32.mrb[0].mxu0
        %782 = vmatprep.mubr.f32.mxu0 0.0
        %783 = vmatmul.mubr.f32.gmra.mrb[0].mxu0 %v599
        %v784 = vpop.f32.mrb[0].mxu0
        %v785 = vadd.f32 0.0, %v784
        %v786 = vpop.f32.mrb[0].mxu0
        %787 = vmatprep.mubr.f32.mxu0 0.0
        %788 = vmatmul.mubr.f32.gmra.mrb[0].mxu0 %v602
        %v789 = vpop.f32.mrb[0].mxu0
        %v790 = vadd.f32 0.0, %v789
        %v791 = vpop.f32.mrb[0].mxu0
        %792 = vmatprep.mubr.f32.mxu0 0.0
        %793 = vmatmul.mubr.f32.gmra.mrb[0].mxu0 %v605
        %v794 = vpop.f32.mrb[0].mxu0
        %v795 = vadd.f32 0.0, %v794
        %v796 = vpop.f32.mrb[0].mxu0
        %797 = vmatprep.mubr.f32.mxu0 0.0
        %798 = vmatmul.mubr.f32.gmra.mrb[0].mxu0 %v608
        %v799 = vpop.f32.mrb[0].mxu0
        %v800 = vadd.f32 0.0, %v799
        %v801 = vpop.f32.mrb[0].mxu0
        %802 = vmatprep.mubr.f32.mxu0 0.0
        %803 = vmatmul.mubr.f32.gmra.mrb[0].mxu0 %v611
        %v804 = vpop.f32.mrb[0].mxu0
        %v805 = vadd.f32 0.0, %v804
        %v806 = vpop.f32.mrb[0].mxu0
        %807 = vmatprep.mubr.f32.mxu0 0.0
        %808 = vmatmul.mubr.f32.gmra.mrb[0].mxu0 %v614
        %v809 = vpop.f32.mrb[0].mxu0
        %v810 = vadd.f32 0.0, %v809
        %v811 = vpop.f32.mrb[0].mxu0
        %812 = vmatprep.mubr.f32.mxu0 0.0
        %813 = vmatmul.mubr.f32.gmra.mrb[0].mxu0 %v617
        %v814 = vpop.f32.mrb[0].mxu0
        %v815 = vadd.f32 0.0, %v814
        %v816 = vpop.f32.mrb[0].mxu0
        %817 = vmatprep.mubr.f32.mxu0 0.0
        %818 = vmatmul.mubr.f32.gmra.mrb[0].mxu0 %v620
        %v819 = vpop.f32.mrb[0].mxu0
        %v820 = vadd.f32 0.0, %v819
        %v821 = vpop.f32.mrb[0].mxu0
        %822 = vmatprep.mubr.f32.mxu0 0.0
        %823 = vmatmul.mubr.f32.gmra.mrb[0].mxu0 %v623
        %v824 = vpop.f32.mrb[0].mxu0
        %v825 = vadd.f32 0.0, %v824
        %v826 = vpop.f32.mrb[0].mxu0
        %827 = vmatprep.mubr.f32.mxu0 0.0
        %828 = vmatmul.mubr.f32.gmra.mrb[0].mxu0 %v626
        %v829 = vpop.f32.mrb[0].mxu0
        %v830 = vadd.f32 0.0, %v829
        %v831 = vpop.f32.mrb[0].mxu0
        %832 = vmatprep.mubr.f32.mxu0 0.0
        %833 = vmatmul.mubr.f32.gmra.mrb[0].mxu0 %v629
        %v834 = vpop.f32.mrb[0].mxu0
        %v835 = vadd.f32 0.0, %v834
        %v836 = vpop.f32.mrb[0].mxu0
        %837 = vmatprep.mubr.f32.mxu0 0.0
        %838 = vmatmul.mubr.f32.gmra.mrb[0].mxu0 %v632
        %v839 = vpop.f32.mrb[0].mxu0
        %v840 = vadd.f32 0.0, %v839
        %v841 = vpop.f32.mrb[0].mxu0
        %842 = vmatprep.mubr.f32.mxu0 0.0
        %843 = vmatmul.mubr.f32.gmra.mrb[0].mxu0 %v635
        %v844 = vpop.f32.mrb[0].mxu0
        %v845 = vadd.f32 0.0, %v844
        %v846 = vpop.f32.mrb[0].mxu0
        %847 = vmatprep.mubr.f32.mxu0 0.0
        %848 = vmatmul.mubr.f32.gmra.mrb[0].mxu0 %v638
        %v849 = vpop.f32.mrb[0].mxu0
        %v850 = vadd.f32 0.0, %v849
        %v851 = vpop.f32.mrb[0].mxu0
        %852 = vmatprep.mubr.f32.mxu0 0.0
        %853 = vmatmul.mubr.f32.gmra.mrb[0].mxu0 %v641
        %v854 = vpop.f32.mrb[0].mxu0
        %v855 = vadd.f32 0.0, %v854
        %v856 = vpop.f32.mrb[0].mxu0
        %857 = vmatprep.mubr.f32.mxu0 0.0
        %858 = vmatmul.mubr.f32.gmra.mrb[0].mxu0 %v644
        %v859 = vpop.f32.mrb[0].mxu0
        %v860 = vadd.f32 0.0, %v859
        %v861 = vpop.f32.mrb[0].mxu0
        %862 = vmatprep.mubr.f32.mxu0 0.0
        %863 = vmatmul.mubr.f32.gmra.mrb[0].mxu0 %v647
        %v864 = vpop.f32.mrb[0].mxu0
        %v865 = vadd.f32 0.0, %v864
        %v866 = vpop.f32.mrb[0].mxu0
        %867 = vmatprep.mubr.f32.mxu0 0.0
        %868 = vmatmul.mubr.f32.gmra.mrb[0].mxu0 %v650
        %v869 = vpop.f32.mrb[0].mxu0
        %v870 = vadd.f32 0.0, %v869
        %v871 = vpop.f32.mrb[0].mxu0
        %872 = vmatprep.mubr.f32.mxu0 0.0
        %873 = vmatmul.mubr.f32.gmra.mrb[0].mxu0 %v653
        %v874 = vpop.f32.mrb[0].mxu0
        %v875 = vadd.f32 0.0, %v874
        %v876 = vpop.f32.mrb[0].mxu0
        %877 = vmatprep.mubr.f32.mxu0 0.0
        %878 = vmatmul.mubr.f32.gmra.mrb[0].mxu0 %v656
        %v879 = vpop.f32.mrb[0].mxu0
        %v880 = vadd.f32 0.0, %v879
        %v881 = vpop.f32.mrb[0].mxu0
        %882 = vmatprep.mubr.f32.mxu0 0.0
        %883 = vmatmul.mubr.f32.gmra.mrb[0].mxu0 %v659
        %v884 = vpop.f32.mrb[0].mxu0
        %v885 = vadd.f32 0.0, %v884
        %v886 = vpop.f32.mrb[0].mxu0
        %887 = vmatprep.mubr.f32.mxu0 0.0
        %888 = vmatmul.mubr.f32.gmra.mrb[0].mxu0 %v662
        %v889 = vpop.f32.mrb[0].mxu0
        %v890 = vadd.f32 0.0, %v889
        %v891 = vpop.f32.mrb[0].mxu0
        %892 = vdwg.mxu0
        %v893 = vld [vmem:[%s373] sm:$0xff]
        %v894 = vld [vmem:[%s373 + $0x8] sm:$0xff]
        %v895 = vld [vmem:[%s373 + $0x10] sm:$0xff]
        %v896 = vld [vmem:[%s373 + $0x18] sm:$0xff]
        %v897 = vld [vmem:[#allocation10] sm:$0x1]
        %v898 = vld [vmem:[#allocation12] sm:$0x1]
        %900 = vset.pattern.permute.xlu0 0
        %901 = vperm.xlu0 %900, %v893
        %v902 = vpop.permute.xlu0 %901
        %905 = vset.pattern.permute.xlu0 0
        %906 = vperm.xlu0 %905, %v894
        %v907 = vpop.permute.xlu0 %906
        %910 = vset.pattern.permute.xlu0 0
        %911 = vperm.xlu0 %910, %v895
        %v912 = vpop.permute.xlu0 %911
        %915 = vset.pattern.permute.xlu0 0
        %916 = vperm.xlu0 %915, %v896
        %v917 = vpop.permute.xlu0 %916
        %v920 = vlaneseq
        %v921 = vshrl.u32 %v920, 7
        %v922 = vsub.s32 0, %v921
        %v923 = vrot.slane %v897, %v922
        %v925 = vmul.f32 %v902, %v923
        %v926 = vmul.f32 %v907, %v923
        %v927 = vmul.f32 %v912, %v923
        %v928 = vmul.f32 %v917, %v923
        %v929 = vadd.f32 %v925, 0.0
        %v930 = vadd.f32 %v926, 0.0
        %v931 = vadd.f32 %v927, 0.0
        %v932 = vadd.f32 %v928, 0.0
        %v934 = vlaneseq
        %v935 = vshrl.u32 %v934, 7
        %v936 = vsub.s32 0, %v935
        %v937 = vrot.slane %v898, %v936
        %v939 = vmul.f32 %v902, %v937
        %v940 = vmul.f32 %v907, %v937
        %v941 = vmul.f32 %v912, %v937
        %v942 = vmul.f32 %v917, %v937
        %v943 = vadd.f32 %v939, 0.0
        %v944 = vadd.f32 %v940, 0.0
        %v945 = vadd.f32 %v941, 0.0
        %v946 = vadd.f32 %v942, 0.0
        %v951 = vcombine.high %v929, %v929
        %v953 = vunpack.c.l.s4 1966171168
        %v954 = vunpack.c.0.s8 %v953
        %v955 = vlaneseq
        %v956 = vshrl.u32 %v955, 7
        %v957 = vsub.s32 %v954, %v956
        %v958 = vrot.slane %v929, %v957
        %v960 = vunpack.c.l.s4 1966171168
        %v961 = vunpack.c.0.s8 %v960
        %v962 = vlaneseq
        %v963 = vshrl.u32 %v962, 7
        %v964 = vsub.s32 %v961, %v963
        %v965 = vrot.slane %v951, %v964
        %v966 = vcombine.high %v958, %v958
        %v967 = vcombine.high %v965, %v965
        %v969 = vunpack.c.l.s4 1966171168
        %v970 = vunpack.c.0.s8 %v969
        %v971 = vlaneseq
        %v972 = vshrl.u32 %v971, 7
        %v973 = vsub.s32 %v970, %v972
        %v974 = vrot.slane %v958, %v973
        %v976 = vunpack.c.l.s4 1966171168
        %v977 = vunpack.c.0.s8 %v976
        %v978 = vlaneseq
        %v979 = vshrl.u32 %v978, 7
        %v980 = vsub.s32 %v977, %v979
        %v981 = vrot.slane %v965, %v980
        %v983 = vunpack.c.l.s4 1966171168
        %v984 = vunpack.c.0.s8 %v983
        %v985 = vlaneseq
        %v986 = vshrl.u32 %v985, 7
        %v987 = vsub.s32 %v984, %v986
        %v988 = vrot.slane %v966, %v987
        %v990 = vunpack.c.l.s4 1966171168
        %v991 = vunpack.c.0.s8 %v990
        %v992 = vlaneseq
        %v993 = vshrl.u32 %v992, 7
        %v994 = vsub.s32 %v991, %v993
        %v995 = vrot.slane %v967, %v994
        %v996 = vcombine.high %v974, %v974
        %v997 = vcombine.high %v981, %v981
        %v998 = vcombine.high %v988, %v988
        %v999 = vcombine.high %v995, %v995
        %v1000 = vcombine.high %v930, %v930
        %v1002 = vunpack.c.l.s4 1966171168
        %v1003 = vunpack.c.0.s8 %v1002
        %v1004 = vlaneseq
        %v1005 = vshrl.u32 %v1004, 7
        %v1006 = vsub.s32 %v1003, %v1005
        %v1007 = vrot.slane %v930, %v1006
        %v1009 = vunpack.c.l.s4 1966171168
        %v1010 = vunpack.c.0.s8 %v1009
        %v1011 = vlaneseq
        %v1012 = vshrl.u32 %v1011, 7
        %v1013 = vsub.s32 %v1010, %v1012
        %v1014 = vrot.slane %v1000, %v1013
        %v1015 = vcombine.high %v1007, %v1007
        %v1016 = vcombine.high %v1014, %v1014
        %v1018 = vunpack.c.l.s4 1966171168
        %v1019 = vunpack.c.0.s8 %v1018
        %v1020 = vlaneseq
        %v1021 = vshrl.u32 %v1020, 7
        %v1022 = vsub.s32 %v1019, %v1021
        %v1023 = vrot.slane %v1007, %v1022
        %v1025 = vunpack.c.l.s4 1966171168
        %v1026 = vunpack.c.0.s8 %v1025
        %v1027 = vlaneseq
        %v1028 = vshrl.u32 %v1027, 7
        %v1029 = vsub.s32 %v1026, %v1028
        %v1030 = vrot.slane %v1014, %v1029
        %v1032 = vunpack.c.l.s4 1966171168
        %v1033 = vunpack.c.0.s8 %v1032
        %v1034 = vlaneseq
        %v1035 = vshrl.u32 %v1034, 7
        %v1036 = vsub.s32 %v1033, %v1035
        %v1037 = vrot.slane %v1015, %v1036
        %v1039 = vunpack.c.l.s4 1966171168
        %v1040 = vunpack.c.0.s8 %v1039
        %v1041 = vlaneseq
        %v1042 = vshrl.u32 %v1041, 7
        %v1043 = vsub.s32 %v1040, %v1042
        %v1044 = vrot.slane %v1016, %v1043
        %v1045 = vcombine.high %v1023, %v1023
        %v1046 = vcombine.high %v1030, %v1030
        %v1047 = vcombine.high %v1037, %v1037
        %v1048 = vcombine.high %v1044, %v1044
        %v1049 = vcombine.high %v931, %v931
        %v1051 = vunpack.c.l.s4 1966171168
        %v1052 = vunpack.c.0.s8 %v1051
        %v1053 = vlaneseq
        %v1054 = vshrl.u32 %v1053, 7
        %v1055 = vsub.s32 %v1052, %v1054
        %v1056 = vrot.slane %v931, %v1055
        %v1058 = vunpack.c.l.s4 1966171168
        %v1059 = vunpack.c.0.s8 %v1058
        %v1060 = vlaneseq
        %v1061 = vshrl.u32 %v1060, 7
        %v1062 = vsub.s32 %v1059, %v1061
        %v1063 = vrot.slane %v1049, %v1062
        %v1064 = vcombine.high %v1056, %v1056
        %v1065 = vcombine.high %v1063, %v1063
        %v1067 = vunpack.c.l.s4 1966171168
        %v1068 = vunpack.c.0.s8 %v1067
        %v1069 = vlaneseq
        %v1070 = vshrl.u32 %v1069, 7
        %v1071 = vsub.s32 %v1068, %v1070
        %v1072 = vrot.slane %v1056, %v1071
        %v1074 = vunpack.c.l.s4 1966171168
        %v1075 = vunpack.c.0.s8 %v1074
        %v1076 = vlaneseq
        %v1077 = vshrl.u32 %v1076, 7
        %v1078 = vsub.s32 %v1075, %v1077
        %v1079 = vrot.slane %v1063, %v1078
        %v1081 = vunpack.c.l.s4 1966171168
        %v1082 = vunpack.c.0.s8 %v1081
        %v1083 = vlaneseq
        %v1084 = vshrl.u32 %v1083, 7
        %v1085 = vsub.s32 %v1082, %v1084
        %v1086 = vrot.slane %v1064, %v1085
        %v1088 = vunpack.c.l.s4 1966171168
        %v1089 = vunpack.c.0.s8 %v1088
        %v1090 = vlaneseq
        %v1091 = vshrl.u32 %v1090, 7
        %v1092 = vsub.s32 %v1089, %v1091
        %v1093 = vrot.slane %v1065, %v1092
        %v1094 = vcombine.high %v1072, %v1072
        %v1095 = vcombine.high %v1079, %v1079
        %v1096 = vcombine.high %v1086, %v1086
        %v1097 = vcombine.high %v1093, %v1093
        %v1098 = vcombine.high %v932, %v932
        %v1100 = vunpack.c.l.s4 1966171168
        %v1101 = vunpack.c.0.s8 %v1100
        %v1102 = vlaneseq
        %v1103 = vshrl.u32 %v1102, 7
        %v1104 = vsub.s32 %v1101, %v1103
        %v1105 = vrot.slane %v932, %v1104
        %v1107 = vunpack.c.l.s4 1966171168
        %v1108 = vunpack.c.0.s8 %v1107
        %v1109 = vlaneseq
        %v1110 = vshrl.u32 %v1109, 7
        %v1111 = vsub.s32 %v1108, %v1110
        %v1112 = vrot.slane %v1098, %v1111
        %v1113 = vcombine.high %v1105, %v1105
        %v1114 = vcombine.high %v1112, %v1112
        %v1116 = vunpack.c.l.s4 1966171168
        %v1117 = vunpack.c.0.s8 %v1116
        %v1118 = vlaneseq
        %v1119 = vshrl.u32 %v1118, 7
        %v1120 = vsub.s32 %v1117, %v1119
        %v1121 = vrot.slane %v1105, %v1120
        %v1123 = vunpack.c.l.s4 1966171168
        %v1124 = vunpack.c.0.s8 %v1123
        %v1125 = vlaneseq
        %v1126 = vshrl.u32 %v1125, 7
        %v1127 = vsub.s32 %v1124, %v1126
        %v1128 = vrot.slane %v1112, %v1127
        %v1130 = vunpack.c.l.s4 1966171168
        %v1131 = vunpack.c.0.s8 %v1130
        %v1132 = vlaneseq
        %v1133 = vshrl.u32 %v1132, 7
        %v1134 = vsub.s32 %v1131, %v1133
        %v1135 = vrot.slane %v1113, %v1134
        %v1137 = vunpack.c.l.s4 1966171168
        %v1138 = vunpack.c.0.s8 %v1137
        %v1139 = vlaneseq
        %v1140 = vshrl.u32 %v1139, 7
        %v1141 = vsub.s32 %v1138, %v1140
        %v1142 = vrot.slane %v1114, %v1141
        %v1143 = vcombine.high %v1121, %v1121
        %v1144 = vcombine.high %v1128, %v1128
        %v1145 = vcombine.high %v1135, %v1135
        %v1146 = vcombine.high %v1142, %v1142
        %v1147 = vlaneseq
        %v1148 = vshrl.u32 %v1147, 7
        %v1149 = vsub.s32 0, %v1148
        %v1150 = vrot.slane %v974, %v1149
        %v1151 = vlaneseq
        %v1152 = vshrl.u32 %v1151, 7
        %v1153 = vsub.s32 0, %v1152
        %v1154 = vrot.slane %v988, %v1153
        %v1155 = vlaneseq
        %v1156 = vshrl.u32 %v1155, 7
        %v1157 = vsub.s32 0, %v1156
        %v1158 = vrot.slane %v996, %v1157
        %v1159 = vlaneseq
        %v1160 = vshrl.u32 %v1159, 7
        %v1161 = vsub.s32 0, %v1160
        %v1162 = vrot.slane %v998, %v1161
        %v1163 = vlaneseq
        %v1164 = vshrl.u32 %v1163, 7
        %v1165 = vsub.s32 0, %v1164
        %v1166 = vrot.slane %v981, %v1165
        %v1167 = vlaneseq
        %v1168 = vshrl.u32 %v1167, 7
        %v1169 = vsub.s32 0, %v1168
        %v1170 = vrot.slane %v995, %v1169
        %v1171 = vlaneseq
        %v1172 = vshrl.u32 %v1171, 7
        %v1173 = vsub.s32 0, %v1172
        %v1174 = vrot.slane %v997, %v1173
        %v1175 = vlaneseq
        %v1176 = vshrl.u32 %v1175, 7
        %v1177 = vsub.s32 0, %v1176
        %v1178 = vrot.slane %v999, %v1177
        %v1179 = vlaneseq
        %v1180 = vshrl.u32 %v1179, 7
        %v1181 = vsub.s32 0, %v1180
        %v1182 = vrot.slane %v1023, %v1181
        %v1183 = vlaneseq
        %v1184 = vshrl.u32 %v1183, 7
        %v1185 = vsub.s32 0, %v1184
        %v1186 = vrot.slane %v1037, %v1185
        %v1187 = vlaneseq
        %v1188 = vshrl.u32 %v1187, 7
        %v1189 = vsub.s32 0, %v1188
        %v1190 = vrot.slane %v1045, %v1189
        %v1191 = vlaneseq
        %v1192 = vshrl.u32 %v1191, 7
        %v1193 = vsub.s32 0, %v1192
        %v1194 = vrot.slane %v1047, %v1193
        %v1195 = vlaneseq
        %v1196 = vshrl.u32 %v1195, 7
        %v1197 = vsub.s32 0, %v1196
        %v1198 = vrot.slane %v1030, %v1197
        %v1199 = vlaneseq
        %v1200 = vshrl.u32 %v1199, 7
        %v1201 = vsub.s32 0, %v1200
        %v1202 = vrot.slane %v1044, %v1201
        %v1203 = vlaneseq
        %v1204 = vshrl.u32 %v1203, 7
        %v1205 = vsub.s32 0, %v1204
        %v1206 = vrot.slane %v1046, %v1205
        %v1207 = vlaneseq
        %v1208 = vshrl.u32 %v1207, 7
        %v1209 = vsub.s32 0, %v1208
        %v1210 = vrot.slane %v1048, %v1209
        %v1211 = vlaneseq
        %v1212 = vshrl.u32 %v1211, 7
        %v1213 = vsub.s32 0, %v1212
        %v1214 = vrot.slane %v1072, %v1213
        %v1215 = vlaneseq
        %v1216 = vshrl.u32 %v1215, 7
        %v1217 = vsub.s32 0, %v1216
        %v1218 = vrot.slane %v1086, %v1217
        %v1219 = vlaneseq
        %v1220 = vshrl.u32 %v1219, 7
        %v1221 = vsub.s32 0, %v1220
        %v1222 = vrot.slane %v1094, %v1221
        %v1223 = vlaneseq
        %v1224 = vshrl.u32 %v1223, 7
        %v1225 = vsub.s32 0, %v1224
        %v1226 = vrot.slane %v1096, %v1225
        %v1227 = vlaneseq
        %v1228 = vshrl.u32 %v1227, 7
        %v1229 = vsub.s32 0, %v1228
        %v1230 = vrot.slane %v1079, %v1229
        %v1231 = vlaneseq
        %v1232 = vshrl.u32 %v1231, 7
        %v1233 = vsub.s32 0, %v1232
        %v1234 = vrot.slane %v1093, %v1233
        %v1235 = vlaneseq
        %v1236 = vshrl.u32 %v1235, 7
        %v1237 = vsub.s32 0, %v1236
        %v1238 = vrot.slane %v1095, %v1237
        %v1239 = vlaneseq
        %v1240 = vshrl.u32 %v1239, 7
        %v1241 = vsub.s32 0, %v1240
        %v1242 = vrot.slane %v1097, %v1241
        %v1243 = vlaneseq
        %v1244 = vshrl.u32 %v1243, 7
        %v1245 = vsub.s32 0, %v1244
        %v1246 = vrot.slane %v1121, %v1245
        %v1247 = vlaneseq
        %v1248 = vshrl.u32 %v1247, 7
        %v1249 = vsub.s32 0, %v1248
        %v1250 = vrot.slane %v1135, %v1249
        %v1251 = vlaneseq
        %v1252 = vshrl.u32 %v1251, 7
        %v1253 = vsub.s32 0, %v1252
        %v1254 = vrot.slane %v1143, %v1253
        %v1255 = vlaneseq
        %v1256 = vshrl.u32 %v1255, 7
        %v1257 = vsub.s32 0, %v1256
        %v1258 = vrot.slane %v1145, %v1257
        %v1259 = vlaneseq
        %v1260 = vshrl.u32 %v1259, 7
        %v1261 = vsub.s32 0, %v1260
        %v1262 = vrot.slane %v1128, %v1261
        %v1263 = vlaneseq
        %v1264 = vshrl.u32 %v1263, 7
        %v1265 = vsub.s32 0, %v1264
        %v1266 = vrot.slane %v1142, %v1265
        %v1267 = vlaneseq
        %v1268 = vshrl.u32 %v1267, 7
        %v1269 = vsub.s32 0, %v1268
        %v1270 = vrot.slane %v1144, %v1269
        %v1271 = vlaneseq
        %v1272 = vshrl.u32 %v1271, 7
        %v1273 = vsub.s32 0, %v1272
        %v1274 = vrot.slane %v1146, %v1273
        %v1307 = vadd.f32 %v735, %v1150
        %v1308 = vadd.f32 %v740, %v1154
        %v1309 = vadd.f32 %v745, %v1158
        %v1310 = vadd.f32 %v750, %v1162
        %v1311 = vadd.f32 %v755, %v1166
        %v1312 = vadd.f32 %v760, %v1170
        %v1313 = vadd.f32 %v765, %v1174
        %v1314 = vadd.f32 %v770, %v1178
        %v1315 = vadd.f32 %v775, %v1182
        %v1316 = vadd.f32 %v780, %v1186
        %v1317 = vadd.f32 %v785, %v1190
        %v1318 = vadd.f32 %v790, %v1194
        %v1319 = vadd.f32 %v795, %v1198
        %v1320 = vadd.f32 %v800, %v1202
        %v1321 = vadd.f32 %v805, %v1206
        %v1322 = vadd.f32 %v810, %v1210
        %v1323 = vadd.f32 %v815, %v1214
        %v1324 = vadd.f32 %v820, %v1218
        %v1325 = vadd.f32 %v825, %v1222
        %v1326 = vadd.f32 %v830, %v1226
        %v1327 = vadd.f32 %v835, %v1230
        %v1328 = vadd.f32 %v840, %v1234
        %v1329 = vadd.f32 %v845, %v1238
        %v1330 = vadd.f32 %v850, %v1242
        %v1331 = vadd.f32 %v855, %v1246
        %v1332 = vadd.f32 %v860, %v1250
        %v1333 = vadd.f32 %v865, %v1254
        %v1334 = vadd.f32 %v870, %v1258
        %v1335 = vadd.f32 %v875, %v1262
        %v1336 = vadd.f32 %v880, %v1266
        %v1337 = vadd.f32 %v885, %v1270
        %v1338 = vadd.f32 %v890, %v1274
        %v1339 = vadd.f32 %v1307, %v943
        %v1340 = vadd.f32 %v1308, %v943
        %v1341 = vadd.f32 %v1309, %v943
        %v1342 = vadd.f32 %v1310, %v943
        %v1343 = vadd.f32 %v1311, %v943
        %v1344 = vadd.f32 %v1312, %v943
        %v1345 = vadd.f32 %v1313, %v943
        %v1346 = vadd.f32 %v1314, %v943
        %v1347 = vadd.f32 %v1315, %v944
        %v1348 = vadd.f32 %v1316, %v944
        %v1349 = vadd.f32 %v1317, %v944
        %v1350 = vadd.f32 %v1318, %v944
        %v1351 = vadd.f32 %v1319, %v944
        %v1352 = vadd.f32 %v1320, %v944
        %v1353 = vadd.f32 %v1321, %v944
        %v1354 = vadd.f32 %v1322, %v944
        %v1355 = vadd.f32 %v1323, %v945
        %v1356 = vadd.f32 %v1324, %v945
        %v1357 = vadd.f32 %v1325, %v945
        %v1358 = vadd.f32 %v1326, %v945
        %v1359 = vadd.f32 %v1327, %v945
        %v1360 = vadd.f32 %v1328, %v945
        %v1361 = vadd.f32 %v1329, %v945
        %v1362 = vadd.f32 %v1330, %v945
        %v1363 = vadd.f32 %v1331, %v946
        %v1364 = vadd.f32 %v1332, %v946
        %v1365 = vadd.f32 %v1333, %v946
        %v1366 = vadd.f32 %v1334, %v946
        %v1367 = vadd.f32 %v1335, %v946
        %v1368 = vadd.f32 %v1336, %v946
        %v1369 = vadd.f32 %v1337, %v946
        %v1370 = vadd.f32 %v1338, %v946
        %v1371 = vld [vmem:[#allocation13] sm:$0x1]
        %v1373 = vlaneseq
        %v1374 = vshrl.u32 %v1373, 7
        %v1375 = vsub.s32 0, %v1374
        %v1376 = vrot.slane %v1371, %v1375
        %v1378 = vadd.f32 %v1339, %v1376
        %v1379 = vadd.f32 %v1340, %v1376
        %v1380 = vadd.f32 %v1341, %v1376
        %v1381 = vadd.f32 %v1342, %v1376
        %v1382 = vadd.f32 %v1343, %v1376
        %v1383 = vadd.f32 %v1344, %v1376
        %v1384 = vadd.f32 %v1345, %v1376
        %v1385 = vadd.f32 %v1346, %v1376
        %v1386 = vadd.f32 %v1347, %v1376
        %v1387 = vadd.f32 %v1348, %v1376
        %v1388 = vadd.f32 %v1349, %v1376
        %v1389 = vadd.f32 %v1350, %v1376
        %v1390 = vadd.f32 %v1351, %v1376
        %v1391 = vadd.f32 %v1352, %v1376
        %v1392 = vadd.f32 %v1353, %v1376
        %v1393 = vadd.f32 %v1354, %v1376
        %v1394 = vadd.f32 %v1355, %v1376
        %v1395 = vadd.f32 %v1356, %v1376
        %v1396 = vadd.f32 %v1357, %v1376
        %v1397 = vadd.f32 %v1358, %v1376
        %v1398 = vadd.f32 %v1359, %v1376
        %v1399 = vadd.f32 %v1360, %v1376
        %v1400 = vadd.f32 %v1361, %v1376
        %v1401 = vadd.f32 %v1362, %v1376
        %v1402 = vadd.f32 %v1363, %v1376
        %v1403 = vadd.f32 %v1364, %v1376
        %v1404 = vadd.f32 %v1365, %v1376
        %v1405 = vadd.f32 %v1366, %v1376
        %v1406 = vadd.f32 %v1367, %v1376
        %v1407 = vadd.f32 %v1368, %v1376
        %v1408 = vadd.f32 %v1369, %v1376
        %v1409 = vadd.f32 %v1370, %v1376
        %s1410 = scalar_lea.vmem [#allocation2], 16
        %1411 = vst.msk [vmem:[%s1410 + $0x1] sm:$0xff] %vm447, %v1378
        %1412 = vst.msk [vmem:[%s1410 + $0x11] sm:$0xff] %vm447, %v1379
        %1413 = vst.msk [vmem:[%s1410 + $0x21] sm:$0xff] %vm447, %v1380
        %1414 = vst.msk [vmem:[%s1410 + $0x31] sm:$0xff] %vm447, %v1381
        %1415 = vst.msk [vmem:[%s1410 + $0x41] sm:$0xff] %vm447, %v1382
        %1416 = vst.msk [vmem:[%s1410 + $0x51] sm:$0xff] %vm447, %v1383
        %1417 = vst.msk [vmem:[%s1410 + $0x61] sm:$0xff] %vm447, %v1384
        %1418 = vst.msk [vmem:[%s1410 + $0x71] sm:$0xff] %vm447, %v1385
        %1419 = vst.msk [vmem:[%s1410 + $0xa1] sm:$0xff] %vm447, %v1386
        %1420 = vst.msk [vmem:[%s1410 + $0xb1] sm:$0xff] %vm447, %v1387
        %1421 = vst.msk [vmem:[%s1410 + $0xc1] sm:$0xff] %vm447, %v1388
        %1422 = vst.msk [vmem:[%s1410 + $0xd1] sm:$0xff] %vm447, %v1389
        %1423 = vst.msk [vmem:[%s1410 + $0xe1] sm:$0xff] %vm447, %v1390
        %1424 = vst.msk [vmem:[%s1410 + $0xf1] sm:$0xff] %vm447, %v1391
        %1425 = vst.msk [vmem:[%s1410 + $0x101] sm:$0xff] %vm447, %v1392
        %1426 = vst.msk [vmem:[%s1410 + $0x111] sm:$0xff] %vm447, %v1393
        %1427 = vst.msk [vmem:[%s1410 + $0x141] sm:$0xff] %vm447, %v1394
        %1428 = vst.msk [vmem:[%s1410 + $0x151] sm:$0xff] %vm447, %v1395
        %1429 = vst.msk [vmem:[%s1410 + $0x161] sm:$0xff] %vm447, %v1396
        %1430 = vst.msk [vmem:[%s1410 + $0x171] sm:$0xff] %vm447, %v1397
        %1431 = vst.msk [vmem:[%s1410 + $0x181] sm:$0xff] %vm447, %v1398
        %1432 = vst.msk [vmem:[%s1410 + $0x191] sm:$0xff] %vm447, %v1399
        %1433 = vst.msk [vmem:[%s1410 + $0x1a1] sm:$0xff] %vm447, %v1400
        %1434 = vst.msk [vmem:[%s1410 + $0x1b1] sm:$0xff] %vm447, %v1401
        %1435 = vst.msk [vmem:[%s1410 + $0x1e1] sm:$0xff] %vm447, %v1402
        %1436 = vst.msk [vmem:[%s1410 + $0x1f1] sm:$0xff] %vm447, %v1403
        %1437 = vst.msk [vmem:[%s1410 + $0x201] sm:$0xff] %vm447, %v1404
        %1438 = vst.msk [vmem:[%s1410 + $0x211] sm:$0xff] %vm447, %v1405
        %1439 = vst.msk [vmem:[%s1410 + $0x221] sm:$0xff] %vm447, %v1406
        %1440 = vst.msk [vmem:[%s1410 + $0x231] sm:$0xff] %vm447, %v1407
        %1441 = vst.msk [vmem:[%s1410 + $0x241] sm:$0xff] %vm447, %v1408
        %1442 = vst.msk [vmem:[%s1410 + $0x251] sm:$0xff] %vm447, %v1409
        %v1443 = vld [vmem:[#allocation16] sm:$0x1]
        %v1445 = vlaneseq
        %v1446 = vshrl.u32 %v1445, 7
        %v1447 = vsub.s32 0, %v1446
        %v1448 = vrot.slane %v1443, %v1447
        %1450 = vst [vmem:[#allocation3] sm:$0xff] %v1448
        %1451 = vst [vmem:[#allocation3 + $0x8] sm:$0xff] %v1448
        %1452 = vst [vmem:[#allocation3 + $0x10] sm:$0xff] %v1448
        %1453 = vst [vmem:[#allocation3 + $0x18] sm:$0xff] %v1448
        %1454 = vst [vmem:[#allocation3 + $0x20] sm:$0xff] %v1448
        %1455 = vst [vmem:[#allocation3 + $0x28] sm:$0xff] %v1448
        %1456 = vst [vmem:[#allocation3 + $0x30] sm:$0xff] %v1448
        %1457 = vst [vmem:[#allocation3 + $0x38] sm:$0xff] %v1448
        %1458 = vst [vmem:[#allocation3 + $0x40] sm:$0xff] %v1448
        %1459 = vst [vmem:[#allocation3 + $0x48] sm:$0xff] %v1448
        %1460 = vst [vmem:[#allocation3 + $0x50] sm:$0xff] %v1448
        %1461 = vst [vmem:[#allocation3 + $0x58] sm:$0xff] %v1448
        %1462 = vst [vmem:[#allocation3 + $0x60] sm:$0xff] %v1448
        %1463 = vst [vmem:[#allocation3 + $0x68] sm:$0xff] %v1448
        %1464 = vst [vmem:[#allocation3 + $0x70] sm:$0xff] %v1448
        %1465 = vst [vmem:[#allocation3 + $0x78] sm:$0xff] %v1448
        %1466 = vst [vmem:[#allocation3 + $0x80] sm:$0xff] %v1448
        %1467 = vst [vmem:[#allocation3 + $0x88] sm:$0xff] %v1448
        %1468 = vst [vmem:[#allocation3 + $0x90] sm:$0xff] %v1448
        %1469 = vst [vmem:[#allocation3 + $0x98] sm:$0xff] %v1448
        %1470 = vst [vmem:[#allocation3 + $0xa0] sm:$0xff] %v1448
        %1471 = vst [vmem:[#allocation3 + $0xa8] sm:$0xff] %v1448
        %1472 = vst [vmem:[#allocation3 + $0xb0] sm:$0xff] %v1448
        %1473 = vst [vmem:[#allocation3 + $0xb8] sm:$0xff] %v1448
        %1474 = vst [vmem:[#allocation3 + $0xc0] sm:$0xff] %v1448
        %1475 = vst [vmem:[#allocation3 + $0xc8] sm:$0xff] %v1448
        %1476 = vst [vmem:[#allocation3 + $0xd0] sm:$0xff] %v1448
        %1477 = vst [vmem:[#allocation3 + $0xd8] sm:$0xff] %v1448
        %1478 = vst [vmem:[#allocation3 + $0xe0] sm:$0xff] %v1448
        %1479 = vst [vmem:[#allocation3 + $0xe8] sm:$0xff] %v1448
        %1480 = vst [vmem:[#allocation3 + $0xf0] sm:$0xff] %v1448
        %1481 = vst [vmem:[#allocation3 + $0xf8] sm:$0xff] %v1448
        %v1482 = vld [vmem:[#allocation2] sm:$0xff]
        %v1483 = vld [vmem:[#allocation2 + $0x10] sm:$0xff]
        %v1484 = vld [vmem:[#allocation2 + $0x20] sm:$0xff]
        %v1485 = vld [vmem:[#allocation2 + $0x30] sm:$0xff]
        %v1486 = vld [vmem:[#allocation2 + $0x40] sm:$0xff]
        %v1487 = vld [vmem:[#allocation2 + $0x50] sm:$0xff]
        %v1488 = vld [vmem:[#allocation2 + $0x60] sm:$0xff]
        %v1489 = vld [vmem:[#allocation2 + $0x70] sm:$0xff]
        %v1490 = vld [vmem:[#allocation2 + $0xa0] sm:$0xff]
        %v1491 = vld [vmem:[#allocation2 + $0xb0] sm:$0xff]
        %v1492 = vld [vmem:[#allocation2 + $0xc0] sm:$0xff]
        %v1493 = vld [vmem:[#allocation2 + $0xd0] sm:$0xff]
        %v1494 = vld [vmem:[#allocation2 + $0xe0] sm:$0xff]
        %v1495 = vld [vmem:[#allocation2 + $0xf0] sm:$0xff]
        %v1496 = vld [vmem:[#allocation2 + $0x100] sm:$0xff]
        %v1497 = vld [vmem:[#allocation2 + $0x110] sm:$0xff]
        %v1498 = vld [vmem:[#allocation2 + $0x140] sm:$0xff]
        %v1499 = vld [vmem:[#allocation2 + $0x150] sm:$0xff]
        %v1500 = vld [vmem:[#allocation2 + $0x160] sm:$0xff]
        %v1501 = vld [vmem:[#allocation2 + $0x170] sm:$0xff]
        %v1502 = vld [vmem:[#allocation2 + $0x180] sm:$0xff]
        %v1503 = vld [vmem:[#allocation2 + $0x190] sm:$0xff]
        %v1504 = vld [vmem:[#allocation2 + $0x1a0] sm:$0xff]
        %v1505 = vld [vmem:[#allocation2 + $0x1b0] sm:$0xff]
        %v1506 = vld [vmem:[#allocation2 + $0x1e0] sm:$0xff]
        %v1507 = vld [vmem:[#allocation2 + $0x1f0] sm:$0xff]
        %v1508 = vld [vmem:[#allocation2 + $0x200] sm:$0xff]
        %v1509 = vld [vmem:[#allocation2 + $0x210] sm:$0xff]
        %v1510 = vld [vmem:[#allocation2 + $0x220] sm:$0xff]
        %v1511 = vld [vmem:[#allocation2 + $0x230] sm:$0xff]
        %v1512 = vld [vmem:[#allocation2 + $0x240] sm:$0xff]
        %v1513 = vld [vmem:[#allocation2 + $0x250] sm:$0xff]
        %v1514 = vld [vmem:[#allocation3] sm:$0xff]
        %v1515 = vld [vmem:[#allocation3 + $0x8] sm:$0xff]
        %v1516 = vld [vmem:[#allocation3 + $0x10] sm:$0xff]
        %v1517 = vld [vmem:[#allocation3 + $0x18] sm:$0xff]
        %v1518 = vld [vmem:[#allocation3 + $0x20] sm:$0xff]
        %v1519 = vld [vmem:[#allocation3 + $0x28] sm:$0xff]
        %v1520 = vld [vmem:[#allocation3 + $0x30] sm:$0xff]
        %v1521 = vld [vmem:[#allocation3 + $0x38] sm:$0xff]
        %v1522 = vld [vmem:[#allocation3 + $0x40] sm:$0xff]
        %v1523 = vld [vmem:[#allocation3 + $0x48] sm:$0xff]
        %v1524 = vld [vmem:[#allocation3 + $0x50] sm:$0xff]
        %v1525 = vld [vmem:[#allocation3 + $0x58] sm:$0xff]
        %v1526 = vld [vmem:[#allocation3 + $0x60] sm:$0xff]
        %v1527 = vld [vmem:[#allocation3 + $0x68] sm:$0xff]
        %v1528 = vld [vmem:[#allocation3 + $0x70] sm:$0xff]
        %v1529 = vld [vmem:[#allocation3 + $0x78] sm:$0xff]
        %v1530 = vld [vmem:[#allocation3 + $0x80] sm:$0xff]
        %v1531 = vld [vmem:[#allocation3 + $0x88] sm:$0xff]
        %v1532 = vld [vmem:[#allocation3 + $0x90] sm:$0xff]
        %v1533 = vld [vmem:[#allocation3 + $0x98] sm:$0xff]
        %v1534 = vld [vmem:[#allocation3 + $0xa0] sm:$0xff]
        %v1535 = vld [vmem:[#allocation3 + $0xa8] sm:$0xff]
        %v1536 = vld [vmem:[#allocation3 + $0xb0] sm:$0xff]
        %v1537 = vld [vmem:[#allocation3 + $0xb8] sm:$0xff]
        %v1538 = vld [vmem:[#allocation3 + $0xc0] sm:$0xff]
        %v1539 = vld [vmem:[#allocation3 + $0xc8] sm:$0xff]
        %v1540 = vld [vmem:[#allocation3 + $0xd0] sm:$0xff]
        %v1541 = vld [vmem:[#allocation3 + $0xd8] sm:$0xff]
        %v1542 = vld [vmem:[#allocation3 + $0xe0] sm:$0xff]
        %v1543 = vld [vmem:[#allocation3 + $0xe8] sm:$0xff]
        %v1544 = vld [vmem:[#allocation3 + $0xf0] sm:$0xff]
        %v1545 = vld [vmem:[#allocation3 + $0xf8] sm:$0xff]
        %v1546 = vld [vmem:[#allocation15] sm:$0xff]
        %v1547 = vld [vmem:[#allocation15 + $0x8] sm:$0xff]
        %v1548 = vld [vmem:[#allocation15 + $0x10] sm:$0xff]
        %v1549 = vld [vmem:[#allocation15 + $0x18] sm:$0xff]
        %v1550 = vld [vmem:[#allocation15 + $0x20] sm:$0xff]
        %v1551 = vld [vmem:[#allocation15 + $0x28] sm:$0xff]
        %v1552 = vld [vmem:[#allocation15 + $0x30] sm:$0xff]
        %v1553 = vld [vmem:[#allocation15 + $0x38] sm:$0xff]
        %v1555 = vsel %vm447, %v1482, 0
        %v1558 = vsel %vm447, %v1483, 0
        %v1561 = vsel %vm447, %v1484, 0
        %v1564 = vsel %vm447, %v1485, 0
        %v1567 = vsel %vm447, %v1486, 0
        %v1570 = vsel %vm447, %v1487, 0
        %v1573 = vsel %vm447, %v1488, 0
        %v1576 = vsel %vm447, %v1489, 0
        %v1579 = vsel %vm447, %v1490, 0
        %v1582 = vsel %vm447, %v1491, 0
        %v1585 = vsel %vm447, %v1492, 0
        %v1588 = vsel %vm447, %v1493, 0
        %v1591 = vsel %vm447, %v1494, 0
        %v1594 = vsel %vm447, %v1495, 0
        %v1597 = vsel %vm447, %v1496, 0
        %v1600 = vsel %vm447, %v1497, 0
        %v1603 = vsel %vm447, %v1498, 0
        %v1606 = vsel %vm447, %v1499, 0
        %v1609 = vsel %vm447, %v1500, 0
        %v1612 = vsel %vm447, %v1501, 0
        %v1615 = vsel %vm447, %v1502, 0
        %v1618 = vsel %vm447, %v1503, 0
        %v1621 = vsel %vm447, %v1504, 0
        %v1624 = vsel %vm447, %v1505, 0
        %v1627 = vsel %vm447, %v1506, 0
        %v1630 = vsel %vm447, %v1507, 0
        %v1633 = vsel %vm447, %v1508, 0
        %v1636 = vsel %vm447, %v1509, 0
        %v1639 = vsel %vm447, %v1510, 0
        %v1642 = vsel %vm447, %v1511, 0
        %v1645 = vsel %vm447, %v1512, 0
        %v1648 = vsel %vm447, %v1513, 0
        %1650 = vmatprep.subr.mxu0 0.0
        %1651 = vmatpush1.msra.mxu0 %v1546
        %1652 = vmatprep.subr.mxu0 0.0
        %1653 = vmatpush1.msra.mxu0 %v1547
        %1654 = vmatprep.subr.mxu0 0.0
        %1655 = vmatpush1.msra.mxu0 %v1548
        %1656 = vmatprep.subr.mxu0 0.0
        %1657 = vmatpush1.msra.mxu0 %v1549
        %1658 = vmatprep.subr.mxu0 0.0
        %1659 = vmatpush1.msra.mxu0 %v1550
        %1660 = vmatprep.subr.mxu0 0.0
        %1661 = vmatpush1.msra.mxu0 %v1551
        %1662 = vmatprep.subr.mxu0 0.0
        %1663 = vmatpush1.msra.mxu0 %v1552
        %1664 = vmatprep.subr.mxu0 0.0
        %1665 = vmatpush1.msra.mxu0 %v1553
        %1666 = vmatprep.subr.mxu0 0.0
        %1667 = vmatpush1.msra.mxu0 0.0
        %1668 = vmatprep.subr.mxu0 0.0
        %1669 = vmatpush1.msra.mxu0 0.0
        %1670 = vmatprep.subr.mxu0 0.0
        %1671 = vmatpush1.msra.mxu0 0.0
        %1672 = vmatprep.subr.mxu0 0.0
        %1673 = vmatpush1.msra.mxu0 0.0
        %1674 = vmatprep.subr.mxu0 0.0
        %1675 = vmatpush1.msra.mxu0 0.0
        %1676 = vmatprep.subr.mxu0 0.0
        %1677 = vmatpush1.msra.mxu0 0.0
        %1678 = vmatprep.subr.mxu0 0.0
        %1679 = vmatpush1.msra.mxu0 0.0
        %1680 = vmatprep.subr.mxu0 0.0
        %1681 = vmatpush1.msra.mxu0 0.0
        %1682 = vmatprep.subr.mxu0 0.0
        %1683 = vmatpush1.msra.mxu0 0.0
        %1684 = vmatprep.subr.mxu0 0.0
        %1685 = vmatpush1.msra.mxu0 0.0
        %1686 = vmatprep.subr.mxu0 0.0
        %1687 = vmatpush1.msra.mxu0 0.0
        %1688 = vmatprep.subr.mxu0 0.0
        %1689 = vmatpush1.msra.mxu0 0.0
        %1690 = vmatprep.subr.mxu0 0.0
        %1691 = vmatpush1.msra.mxu0 0.0
        %1692 = vmatprep.subr.mxu0 0.0
        %1693 = vmatpush1.msra.mxu0 0.0
        %1694 = vmatprep.subr.mxu0 0.0
        %1695 = vmatpush1.msra.mxu0 0.0
        %1696 = vmatprep.subr.mxu0 0.0
        %1697 = vmatpush1.msra.mxu0 0.0
        %1698 = vmatprep.subr.mxu0 0.0
        %1699 = vmatpush1.msra.mxu0 0.0
        %1700 = vmatprep.subr.mxu0 0.0
        %1701 = vmatpush1.msra.mxu0 0.0
        %1702 = vmatprep.subr.mxu0 0.0
        %1703 = vmatpush1.msra.mxu0 0.0
        %1704 = vmatprep.subr.mxu0 0.0
        %1705 = vmatpush1.msra.mxu0 0.0
        %1706 = vmatprep.subr.mxu0 0.0
        %1707 = vmatpush1.msra.mxu0 0.0
        %1708 = vmatprep.subr.mxu0 0.0
        %1709 = vmatpush1.msra.mxu0 0.0
        %1710 = vmatprep.subr.mxu0 0.0
        %1711 = vmatpush1.msra.mxu0 0.0
        %1712 = vmatprep.subr.mxu0 0.0
        %1713 = vmatpush1.msra.mxu0 0.0
        %1714 = vmatprep.mubr.f32.mxu0 0.0
        %1715 = vmatmul.mubr.f32.gmra.mrb[0].mxu0 %v1555
        %v1716 = vpop.f32.mrb[0].mxu0
        %v1717 = vadd.f32 0.0, %v1716
        %v1718 = vpop.f32.mrb[0].mxu0
        %1719 = vmatprep.mubr.f32.mxu0 0.0
        %1720 = vmatmul.mubr.f32.gmra.mrb[0].mxu0 %v1558
        %v1721 = vpop.f32.mrb[0].mxu0
        %v1722 = vadd.f32 0.0, %v1721
        %v1723 = vpop.f32.mrb[0].mxu0
        %1724 = vmatprep.mubr.f32.mxu0 0.0
        %1725 = vmatmul.mubr.f32.gmra.mrb[0].mxu0 %v1561
        %v1726 = vpop.f32.mrb[0].mxu0
        %v1727 = vadd.f32 0.0, %v1726
        %v1728 = vpop.f32.mrb[0].mxu0
        %1729 = vmatprep.mubr.f32.mxu0 0.0
        %1730 = vmatmul.mubr.f32.gmra.mrb[0].mxu0 %v1564
        %v1731 = vpop.f32.mrb[0].mxu0
        %v1732 = vadd.f32 0.0, %v1731
        %v1733 = vpop.f32.mrb[0].mxu0
        %1734 = vmatprep.mubr.f32.mxu0 0.0
        %1735 = vmatmul.mubr.f32.gmra.mrb[0].mxu0 %v1567
        %v1736 = vpop.f32.mrb[0].mxu0
        %v1737 = vadd.f32 0.0, %v1736
        %v1738 = vpop.f32.mrb[0].mxu0
        %1739 = vmatprep.mubr.f32.mxu0 0.0
        %1740 = vmatmul.mubr.f32.gmra.mrb[0].mxu0 %v1570
        %v1741 = vpop.f32.mrb[0].mxu0
        %v1742 = vadd.f32 0.0, %v1741
        %v1743 = vpop.f32.mrb[0].mxu0
        %1744 = vmatprep.mubr.f32.mxu0 0.0
        %1745 = vmatmul.mubr.f32.gmra.mrb[0].mxu0 %v1573
        %v1746 = vpop.f32.mrb[0].mxu0
        %v1747 = vadd.f32 0.0, %v1746
        %v1748 = vpop.f32.mrb[0].mxu0
        %1749 = vmatprep.mubr.f32.mxu0 0.0
        %1750 = vmatmul.mubr.f32.gmra.mrb[0].mxu0 %v1576
        %v1751 = vpop.f32.mrb[0].mxu0
        %v1752 = vadd.f32 0.0, %v1751
        %v1753 = vpop.f32.mrb[0].mxu0
        %1754 = vmatprep.mubr.f32.mxu0 0.0
        %1755 = vmatmul.mubr.f32.gmra.mrb[0].mxu0 %v1579
        %v1756 = vpop.f32.mrb[0].mxu0
        %v1757 = vadd.f32 0.0, %v1756
        %v1758 = vpop.f32.mrb[0].mxu0
        %1759 = vmatprep.mubr.f32.mxu0 0.0
        %1760 = vmatmul.mubr.f32.gmra.mrb[0].mxu0 %v1582
        %v1761 = vpop.f32.mrb[0].mxu0
        %v1762 = vadd.f32 0.0, %v1761
        %v1763 = vpop.f32.mrb[0].mxu0
        %1764 = vmatprep.mubr.f32.mxu0 0.0
        %1765 = vmatmul.mubr.f32.gmra.mrb[0].mxu0 %v1585
        %v1766 = vpop.f32.mrb[0].mxu0
        %v1767 = vadd.f32 0.0, %v1766
        %v1768 = vpop.f32.mrb[0].mxu0
        %1769 = vmatprep.mubr.f32.mxu0 0.0
        %1770 = vmatmul.mubr.f32.gmra.mrb[0].mxu0 %v1588
        %v1771 = vpop.f32.mrb[0].mxu0
        %v1772 = vadd.f32 0.0, %v1771
        %v1773 = vpop.f32.mrb[0].mxu0
        %1774 = vmatprep.mubr.f32.mxu0 0.0
        %1775 = vmatmul.mubr.f32.gmra.mrb[0].mxu0 %v1591
        %v1776 = vpop.f32.mrb[0].mxu0
        %v1777 = vadd.f32 0.0, %v1776
        %v1778 = vpop.f32.mrb[0].mxu0
        %1779 = vmatprep.mubr.f32.mxu0 0.0
        %1780 = vmatmul.mubr.f32.gmra.mrb[0].mxu0 %v1594
        %v1781 = vpop.f32.mrb[0].mxu0
        %v1782 = vadd.f32 0.0, %v1781
        %v1783 = vpop.f32.mrb[0].mxu0
        %1784 = vmatprep.mubr.f32.mxu0 0.0
        %1785 = vmatmul.mubr.f32.gmra.mrb[0].mxu0 %v1597
        %v1786 = vpop.f32.mrb[0].mxu0
        %v1787 = vadd.f32 0.0, %v1786
        %v1788 = vpop.f32.mrb[0].mxu0
        %1789 = vmatprep.mubr.f32.mxu0 0.0
        %1790 = vmatmul.mubr.f32.gmra.mrb[0].mxu0 %v1600
        %v1791 = vpop.f32.mrb[0].mxu0
        %v1792 = vadd.f32 0.0, %v1791
        %v1793 = vpop.f32.mrb[0].mxu0
        %1794 = vmatprep.mubr.f32.mxu0 0.0
        %1795 = vmatmul.mubr.f32.gmra.mrb[0].mxu0 %v1603
        %v1796 = vpop.f32.mrb[0].mxu0
        %v1797 = vadd.f32 0.0, %v1796
        %v1798 = vpop.f32.mrb[0].mxu0
        %1799 = vmatprep.mubr.f32.mxu0 0.0
        %1800 = vmatmul.mubr.f32.gmra.mrb[0].mxu0 %v1606
        %v1801 = vpop.f32.mrb[0].mxu0
        %v1802 = vadd.f32 0.0, %v1801
        %v1803 = vpop.f32.mrb[0].mxu0
        %1804 = vmatprep.mubr.f32.mxu0 0.0
        %1805 = vmatmul.mubr.f32.gmra.mrb[0].mxu0 %v1609
        %v1806 = vpop.f32.mrb[0].mxu0
        %v1807 = vadd.f32 0.0, %v1806
        %v1808 = vpop.f32.mrb[0].mxu0
        %1809 = vmatprep.mubr.f32.mxu0 0.0
        %1810 = vmatmul.mubr.f32.gmra.mrb[0].mxu0 %v1612
        %v1811 = vpop.f32.mrb[0].mxu0
        %v1812 = vadd.f32 0.0, %v1811
        %v1813 = vpop.f32.mrb[0].mxu0
        %1814 = vmatprep.mubr.f32.mxu0 0.0
        %1815 = vmatmul.mubr.f32.gmra.mrb[0].mxu0 %v1615
        %v1816 = vpop.f32.mrb[0].mxu0
        %v1817 = vadd.f32 0.0, %v1816
        %v1818 = vpop.f32.mrb[0].mxu0
        %1819 = vmatprep.mubr.f32.mxu0 0.0
        %1820 = vmatmul.mubr.f32.gmra.mrb[0].mxu0 %v1618
        %v1821 = vpop.f32.mrb[0].mxu0
        %v1822 = vadd.f32 0.0, %v1821
        %v1823 = vpop.f32.mrb[0].mxu0
        %1824 = vmatprep.mubr.f32.mxu0 0.0
        %1825 = vmatmul.mubr.f32.gmra.mrb[0].mxu0 %v1621
        %v1826 = vpop.f32.mrb[0].mxu0
        %v1827 = vadd.f32 0.0, %v1826
        %v1828 = vpop.f32.mrb[0].mxu0
        %1829 = vmatprep.mubr.f32.mxu0 0.0
        %1830 = vmatmul.mubr.f32.gmra.mrb[0].mxu0 %v1624
        %v1831 = vpop.f32.mrb[0].mxu0
        %v1832 = vadd.f32 0.0, %v1831
        %v1833 = vpop.f32.mrb[0].mxu0
        %1834 = vmatprep.mubr.f32.mxu0 0.0
        %1835 = vmatmul.mubr.f32.gmra.mrb[0].mxu0 %v1627
        %v1836 = vpop.f32.mrb[0].mxu0
        %v1837 = vadd.f32 0.0, %v1836
        %v1838 = vpop.f32.mrb[0].mxu0
        %1839 = vmatprep.mubr.f32.mxu0 0.0
        %1840 = vmatmul.mubr.f32.gmra.mrb[0].mxu0 %v1630
        %v1841 = vpop.f32.mrb[0].mxu0
        %v1842 = vadd.f32 0.0, %v1841
        %v1843 = vpop.f32.mrb[0].mxu0
        %1844 = vmatprep.mubr.f32.mxu0 0.0
        %1845 = vmatmul.mubr.f32.gmra.mrb[0].mxu0 %v1633
        %v1846 = vpop.f32.mrb[0].mxu0
        %v1847 = vadd.f32 0.0, %v1846
        %v1848 = vpop.f32.mrb[0].mxu0
        %1849 = vmatprep.mubr.f32.mxu0 0.0
        %1850 = vmatmul.mubr.f32.gmra.mrb[0].mxu0 %v1636
        %v1851 = vpop.f32.mrb[0].mxu0
        %v1852 = vadd.f32 0.0, %v1851
        %v1853 = vpop.f32.mrb[0].mxu0
        %1854 = vmatprep.mubr.f32.mxu0 0.0
        %1855 = vmatmul.mubr.f32.gmra.mrb[0].mxu0 %v1639
        %v1856 = vpop.f32.mrb[0].mxu0
        %v1857 = vadd.f32 0.0, %v1856
        %v1858 = vpop.f32.mrb[0].mxu0
        %1859 = vmatprep.mubr.f32.mxu0 0.0
        %1860 = vmatmul.mubr.f32.gmra.mrb[0].mxu0 %v1642
        %v1861 = vpop.f32.mrb[0].mxu0
        %v1862 = vadd.f32 0.0, %v1861
        %v1863 = vpop.f32.mrb[0].mxu0
        %1864 = vmatprep.mubr.f32.mxu0 0.0
        %1865 = vmatmul.mubr.f32.gmra.mrb[0].mxu0 %v1645
        %v1866 = vpop.f32.mrb[0].mxu0
        %v1867 = vadd.f32 0.0, %v1866
        %v1868 = vpop.f32.mrb[0].mxu0
        %1869 = vmatprep.mubr.f32.mxu0 0.0
        %1870 = vmatmul.mubr.f32.gmra.mrb[0].mxu0 %v1648
        %v1871 = vpop.f32.mrb[0].mxu0
        %v1872 = vadd.f32 0.0, %v1871
        %v1873 = vpop.f32.mrb[0].mxu0
        %1874 = vdwg.mxu0
        %v1875 = vadd.f32 %v1514, %v1717
        %v1876 = vadd.f32 %v1515, %v1722
        %v1877 = vadd.f32 %v1516, %v1727
        %v1878 = vadd.f32 %v1517, %v1732
        %v1879 = vadd.f32 %v1518, %v1737
        %v1880 = vadd.f32 %v1519, %v1742
        %v1881 = vadd.f32 %v1520, %v1747
        %v1882 = vadd.f32 %v1521, %v1752
        %v1883 = vadd.f32 %v1522, %v1757
        %v1884 = vadd.f32 %v1523, %v1762
        %v1885 = vadd.f32 %v1524, %v1767
        %v1886 = vadd.f32 %v1525, %v1772
        %v1887 = vadd.f32 %v1526, %v1777
        %v1888 = vadd.f32 %v1527, %v1782
        %v1889 = vadd.f32 %v1528, %v1787
        %v1890 = vadd.f32 %v1529, %v1792
        %v1891 = vadd.f32 %v1530, %v1797
        %v1892 = vadd.f32 %v1531, %v1802
        %v1893 = vadd.f32 %v1532, %v1807
        %v1894 = vadd.f32 %v1533, %v1812
        %v1895 = vadd.f32 %v1534, %v1817
        %v1896 = vadd.f32 %v1535, %v1822
        %v1897 = vadd.f32 %v1536, %v1827
        %v1898 = vadd.f32 %v1537, %v1832
        %v1899 = vadd.f32 %v1538, %v1837
        %v1900 = vadd.f32 %v1539, %v1842
        %v1901 = vadd.f32 %v1540, %v1847
        %v1902 = vadd.f32 %v1541, %v1852
        %v1903 = vadd.f32 %v1542, %v1857
        %v1904 = vadd.f32 %v1543, %v1862
        %v1905 = vadd.f32 %v1544, %v1867
        %v1906 = vadd.f32 %v1545, %v1872
        %1907 = vst [vmem:[#allocation3] sm:$0xff] %v1875
        %1908 = vst [vmem:[#allocation3 + $0x8] sm:$0xff] %v1876
        %1909 = vst [vmem:[#allocation3 + $0x10] sm:$0xff] %v1877
        %1910 = vst [vmem:[#allocation3 + $0x18] sm:$0xff] %v1878
        %1911 = vst [vmem:[#allocation3 + $0x20] sm:$0xff] %v1879
        %1912 = vst [vmem:[#allocation3 + $0x28] sm:$0xff] %v1880
        %1913 = vst [vmem:[#allocation3 + $0x30] sm:$0xff] %v1881
        %1914 = vst [vmem:[#allocation3 + $0x38] sm:$0xff] %v1882
        %1915 = vst [vmem:[#allocation3 + $0x40] sm:$0xff] %v1883
        %1916 = vst [vmem:[#allocation3 + $0x48] sm:$0xff] %v1884
        %1917 = vst [vmem:[#allocation3 + $0x50] sm:$0xff] %v1885
        %1918 = vst [vmem:[#allocation3 + $0x58] sm:$0xff] %v1886
        %1919 = vst [vmem:[#allocation3 + $0x60] sm:$0xff] %v1887
        %1920 = vst [vmem:[#allocation3 + $0x68] sm:$0xff] %v1888
        %1921 = vst [vmem:[#allocation3 + $0x70] sm:$0xff] %v1889
        %1922 = vst [vmem:[#allocation3 + $0x78] sm:$0xff] %v1890
        %1923 = vst [vmem:[#allocation3 + $0x80] sm:$0xff] %v1891
        %1924 = vst [vmem:[#allocation3 + $0x88] sm:$0xff] %v1892
        %1925 = vst [vmem:[#allocation3 + $0x90] sm:$0xff] %v1893
        %1926 = vst [vmem:[#allocation3 + $0x98] sm:$0xff] %v1894
        %1927 = vst [vmem:[#allocation3 + $0xa0] sm:$0xff] %v1895
        %1928 = vst [vmem:[#allocation3 + $0xa8] sm:$0xff] %v1896
        %1929 = vst [vmem:[#allocation3 + $0xb0] sm:$0xff] %v1897
        %1930 = vst [vmem:[#allocation3 + $0xb8] sm:$0xff] %v1898
        %1931 = vst [vmem:[#allocation3 + $0xc0] sm:$0xff] %v1899
        %1932 = vst [vmem:[#allocation3 + $0xc8] sm:$0xff] %v1900
        %1933 = vst [vmem:[#allocation3 + $0xd0] sm:$0xff] %v1901
        %1934 = vst [vmem:[#allocation3 + $0xd8] sm:$0xff] %v1902
        %1935 = vst [vmem:[#allocation3 + $0xe0] sm:$0xff] %v1903
        %1936 = vst [vmem:[#allocation3 + $0xe8] sm:$0xff] %v1904
        %1937 = vst [vmem:[#allocation3 + $0xf0] sm:$0xff] %v1905
        %1938 = vst [vmem:[#allocation3 + $0xf8] sm:$0xff] %v1906
        %v1939 = vld [vmem:[#allocation2 + $0x1] sm:$0xff]
        %v1940 = vld [vmem:[#allocation2 + $0x11] sm:$0xff]
        %v1941 = vld [vmem:[#allocation2 + $0x21] sm:$0xff]
        %v1942 = vld [vmem:[#allocation2 + $0x31] sm:$0xff]
        %v1943 = vld [vmem:[#allocation2 + $0x41] sm:$0xff]
        %v1944 = vld [vmem:[#allocation2 + $0x51] sm:$0xff]
        %v1945 = vld [vmem:[#allocation2 + $0x61] sm:$0xff]
        %v1946 = vld [vmem:[#allocation2 + $0x71] sm:$0xff]
        %v1947 = vld [vmem:[#allocation2 + $0xa1] sm:$0xff]
        %v1948 = vld [vmem:[#allocation2 + $0xb1] sm:$0xff]
        %v1949 = vld [vmem:[#allocation2 + $0xc1] sm:$0xff]
        %v1950 = vld [vmem:[#allocation2 + $0xd1] sm:$0xff]
        %v1951 = vld [vmem:[#allocation2 + $0xe1] sm:$0xff]
        %v1952 = vld [vmem:[#allocation2 + $0xf1] sm:$0xff]
        %v1953 = vld [vmem:[#allocation2 + $0x101] sm:$0xff]
        %v1954 = vld [vmem:[#allocation2 + $0x111] sm:$0xff]
        %v1955 = vld [vmem:[#allocation2 + $0x141] sm:$0xff]
        %v1956 = vld [vmem:[#allocation2 + $0x151] sm:$0xff]
        %v1957 = vld [vmem:[#allocation2 + $0x161] sm:$0xff]
        %v1958 = vld [vmem:[#allocation2 + $0x171] sm:$0xff]
        %v1959 = vld [vmem:[#allocation2 + $0x181] sm:$0xff]
        %v1960 = vld [vmem:[#allocation2 + $0x191] sm:$0xff]
        %v1961 = vld [vmem:[#allocation2 + $0x1a1] sm:$0xff]
        %v1962 = vld [vmem:[#allocation2 + $0x1b1] sm:$0xff]
        %v1963 = vld [vmem:[#allocation2 + $0x1e1] sm:$0xff]
        %v1964 = vld [vmem:[#allocation2 + $0x1f1] sm:$0xff]
        %v1965 = vld [vmem:[#allocation2 + $0x201] sm:$0xff]
        %v1966 = vld [vmem:[#allocation2 + $0x211] sm:$0xff]
        %v1967 = vld [vmem:[#allocation2 + $0x221] sm:$0xff]
        %v1968 = vld [vmem:[#allocation2 + $0x231] sm:$0xff]
        %v1969 = vld [vmem:[#allocation2 + $0x241] sm:$0xff]
        %v1970 = vld [vmem:[#allocation2 + $0x251] sm:$0xff]
        %v1971 = vld [vmem:[#allocation3] sm:$0xff]
        %v1972 = vld [vmem:[#allocation3 + $0x8] sm:$0xff]
        %v1973 = vld [vmem:[#allocation3 + $0x10] sm:$0xff]
        %v1974 = vld [vmem:[#allocation3 + $0x18] sm:$0xff]
        %v1975 = vld [vmem:[#allocation3 + $0x20] sm:$0xff]
        %v1976 = vld [vmem:[#allocation3 + $0x28] sm:$0xff]
        %v1977 = vld [vmem:[#allocation3 + $0x30] sm:$0xff]
        %v1978 = vld [vmem:[#allocation3 + $0x38] sm:$0xff]
        %v1979 = vld [vmem:[#allocation3 + $0x40] sm:$0xff]
        %v1980 = vld [vmem:[#allocation3 + $0x48] sm:$0xff]
        %v1981 = vld [vmem:[#allocation3 + $0x50] sm:$0xff]
        %v1982 = vld [vmem:[#allocation3 + $0x58] sm:$0xff]
        %v1983 = vld [vmem:[#allocation3 + $0x60] sm:$0xff]
        %v1984 = vld [vmem:[#allocation3 + $0x68] sm:$0xff]
        %v1985 = vld [vmem:[#allocation3 + $0x70] sm:$0xff]
        %v1986 = vld [vmem:[#allocation3 + $0x78] sm:$0xff]
        %v1987 = vld [vmem:[#allocation3 + $0x80] sm:$0xff]
        %v1988 = vld [vmem:[#allocation3 + $0x88] sm:$0xff]
        %v1989 = vld [vmem:[#allocation3 + $0x90] sm:$0xff]
        %v1990 = vld [vmem:[#allocation3 + $0x98] sm:$0xff]
        %v1991 = vld [vmem:[#allocation3 + $0xa0] sm:$0xff]
        %v1992 = vld [vmem:[#allocation3 + $0xa8] sm:$0xff]
        %v1993 = vld [vmem:[#allocation3 + $0xb0] sm:$0xff]
        %v1994 = vld [vmem:[#allocation3 + $0xb8] sm:$0xff]
        %v1995 = vld [vmem:[#allocation3 + $0xc0] sm:$0xff]
        %v1996 = vld [vmem:[#allocation3 + $0xc8] sm:$0xff]
        %v1997 = vld [vmem:[#allocation3 + $0xd0] sm:$0xff]
        %v1998 = vld [vmem:[#allocation3 + $0xd8] sm:$0xff]
        %v1999 = vld [vmem:[#allocation3 + $0xe0] sm:$0xff]
        %v2000 = vld [vmem:[#allocation3 + $0xe8] sm:$0xff]
        %v2001 = vld [vmem:[#allocation3 + $0xf0] sm:$0xff]
        %v2002 = vld [vmem:[#allocation3 + $0xf8] sm:$0xff]
        %s2003 = scalar_lea.vmem [#allocation15], 64
        %v2004 = vld [vmem:[%s2003] sm:$0xff]
        %v2005 = vld [vmem:[%s2003 + $0x8] sm:$0xff]
        %v2006 = vld [vmem:[%s2003 + $0x10] sm:$0xff]
        %v2007 = vld [vmem:[%s2003 + $0x18] sm:$0xff]
        %v2008 = vld [vmem:[%s2003 + $0x20] sm:$0xff]
        %v2009 = vld [vmem:[%s2003 + $0x28] sm:$0xff]
        %v2010 = vld [vmem:[%s2003 + $0x30] sm:$0xff]
        %v2011 = vld [vmem:[%s2003 + $0x38] sm:$0xff]
        %v2013 = vsel %vm447, %v1939, 0
        %v2016 = vsel %vm447, %v1940, 0
        %v2019 = vsel %vm447, %v1941, 0
        %v2022 = vsel %vm447, %v1942, 0
        %v2025 = vsel %vm447, %v1943, 0
        %v2028 = vsel %vm447, %v1944, 0
        %v2031 = vsel %vm447, %v1945, 0
        %v2034 = vsel %vm447, %v1946, 0
        %v2037 = vsel %vm447, %v1947, 0
        %v2040 = vsel %vm447, %v1948, 0
        %v2043 = vsel %vm447, %v1949, 0
        %v2046 = vsel %vm447, %v1950, 0
        %v2049 = vsel %vm447, %v1951, 0
        %v2052 = vsel %vm447, %v1952, 0
        %v2055 = vsel %vm447, %v1953, 0
        %v2058 = vsel %vm447, %v1954, 0
        %v2061 = vsel %vm447, %v1955, 0
        %v2064 = vsel %vm447, %v1956, 0
        %v2067 = vsel %vm447, %v1957, 0
        %v2070 = vsel %vm447, %v1958, 0
        %v2073 = vsel %vm447, %v1959, 0
        %v2076 = vsel %vm447, %v1960, 0
        %v2079 = vsel %vm447, %v1961, 0
        %v2082 = vsel %vm447, %v1962, 0
        %v2085 = vsel %vm447, %v1963, 0
        %v2088 = vsel %vm447, %v1964, 0
        %v2091 = vsel %vm447, %v1965, 0
        %v2094 = vsel %vm447, %v1966, 0
        %v2097 = vsel %vm447, %v1967, 0
        %v2100 = vsel %vm447, %v1968, 0
        %v2103 = vsel %vm447, %v1969, 0
        %v2106 = vsel %vm447, %v1970, 0
        %2108 = vmatprep.subr.mxu0 0.0
        %2109 = vmatpush1.msra.mxu0 %v2004
        %2110 = vmatprep.subr.mxu0 0.0
        %2111 = vmatpush1.msra.mxu0 %v2005
        %2112 = vmatprep.subr.mxu0 0.0
        %2113 = vmatpush1.msra.mxu0 %v2006
        %2114 = vmatprep.subr.mxu0 0.0
        %2115 = vmatpush1.msra.mxu0 %v2007
        %2116 = vmatprep.subr.mxu0 0.0
        %2117 = vmatpush1.msra.mxu0 %v2008
        %2118 = vmatprep.subr.mxu0 0.0
        %2119 = vmatpush1.msra.mxu0 %v2009
        %2120 = vmatprep.subr.mxu0 0.0
        %2121 = vmatpush1.msra.mxu0 %v2010
        %2122 = vmatprep.subr.mxu0 0.0
        %2123 = vmatpush1.msra.mxu0 %v2011
        %2124 = vmatprep.subr.mxu0 0.0
        %2125 = vmatpush1.msra.mxu0 0.0
        %2126 = vmatprep.subr.mxu0 0.0
        %2127 = vmatpush1.msra.mxu0 0.0
        %2128 = vmatprep.subr.mxu0 0.0
        %2129 = vmatpush1.msra.mxu0 0.0
        %2130 = vmatprep.subr.mxu0 0.0
        %2131 = vmatpush1.msra.mxu0 0.0
        %2132 = vmatprep.subr.mxu0 0.0
        %2133 = vmatpush1.msra.mxu0 0.0
        %2134 = vmatprep.subr.mxu0 0.0
        %2135 = vmatpush1.msra.mxu0 0.0
        %2136 = vmatprep.subr.mxu0 0.0
        %2137 = vmatpush1.msra.mxu0 0.0
        %2138 = vmatprep.subr.mxu0 0.0
        %2139 = vmatpush1.msra.mxu0 0.0
        %2140 = vmatprep.subr.mxu0 0.0
        %2141 = vmatpush1.msra.mxu0 0.0
        %2142 = vmatprep.subr.mxu0 0.0
        %2143 = vmatpush1.msra.mxu0 0.0
        %2144 = vmatprep.subr.mxu0 0.0
        %2145 = vmatpush1.msra.mxu0 0.0
        %2146 = vmatprep.subr.mxu0 0.0
        %2147 = vmatpush1.msra.mxu0 0.0
        %2148 = vmatprep.subr.mxu0 0.0
        %2149 = vmatpush1.msra.mxu0 0.0
        %2150 = vmatprep.subr.mxu0 0.0
        %2151 = vmatpush1.msra.mxu0 0.0
        %2152 = vmatprep.subr.mxu0 0.0
        %2153 = vmatpush1.msra.mxu0 0.0
        %2154 = vmatprep.subr.mxu0 0.0
        %2155 = vmatpush1.msra.mxu0 0.0
        %2156 = vmatprep.subr.mxu0 0.0
        %2157 = vmatpush1.msra.mxu0 0.0
        %2158 = vmatprep.subr.mxu0 0.0
        %2159 = vmatpush1.msra.mxu0 0.0
        %2160 = vmatprep.subr.mxu0 0.0
        %2161 = vmatpush1.msra.mxu0 0.0
        %2162 = vmatprep.subr.mxu0 0.0
        %2163 = vmatpush1.msra.mxu0 0.0
        %2164 = vmatprep.subr.mxu0 0.0
        %2165 = vmatpush1.msra.mxu0 0.0
        %2166 = vmatprep.subr.mxu0 0.0
        %2167 = vmatpush1.msra.mxu0 0.0
        %2168 = vmatprep.subr.mxu0 0.0
        %2169 = vmatpush1.msra.mxu0 0.0
        %2170 = vmatprep.subr.mxu0 0.0
        %2171 = vmatpush1.msra.mxu0 0.0
        %2172 = vmatprep.mubr.f32.mxu0 0.0
        %2173 = vmatmul.mubr.f32.gmra.mrb[0].mxu0 %v2013
        %v2174 = vpop.f32.mrb[0].mxu0
        %v2175 = vadd.f32 0.0, %v2174
        %v2176 = vpop.f32.mrb[0].mxu0
        %2177 = vmatprep.mubr.f32.mxu0 0.0
        %2178 = vmatmul.mubr.f32.gmra.mrb[0].mxu0 %v2016
        %v2179 = vpop.f32.mrb[0].mxu0
        %v2180 = vadd.f32 0.0, %v2179
        %v2181 = vpop.f32.mrb[0].mxu0
        %2182 = vmatprep.mubr.f32.mxu0 0.0
        %2183 = vmatmul.mubr.f32.gmra.mrb[0].mxu0 %v2019
        %v2184 = vpop.f32.mrb[0].mxu0
        %v2185 = vadd.f32 0.0, %v2184
        %v2186 = vpop.f32.mrb[0].mxu0
        %2187 = vmatprep.mubr.f32.mxu0 0.0
        %2188 = vmatmul.mubr.f32.gmra.mrb[0].mxu0 %v2022
        %v2189 = vpop.f32.mrb[0].mxu0
        %v2190 = vadd.f32 0.0, %v2189
        %v2191 = vpop.f32.mrb[0].mxu0
        %2192 = vmatprep.mubr.f32.mxu0 0.0
        %2193 = vmatmul.mubr.f32.gmra.mrb[0].mxu0 %v2025
        %v2194 = vpop.f32.mrb[0].mxu0
        %v2195 = vadd.f32 0.0, %v2194
        %v2196 = vpop.f32.mrb[0].mxu0
        %2197 = vmatprep.mubr.f32.mxu0 0.0
        %2198 = vmatmul.mubr.f32.gmra.mrb[0].mxu0 %v2028
        %v2199 = vpop.f32.mrb[0].mxu0
        %v2200 = vadd.f32 0.0, %v2199
        %v2201 = vpop.f32.mrb[0].mxu0
        %2202 = vmatprep.mubr.f32.mxu0 0.0
        %2203 = vmatmul.mubr.f32.gmra.mrb[0].mxu0 %v2031
        %v2204 = vpop.f32.mrb[0].mxu0
        %v2205 = vadd.f32 0.0, %v2204
        %v2206 = vpop.f32.mrb[0].mxu0
        %2207 = vmatprep.mubr.f32.mxu0 0.0
        %2208 = vmatmul.mubr.f32.gmra.mrb[0].mxu0 %v2034
        %v2209 = vpop.f32.mrb[0].mxu0
        %v2210 = vadd.f32 0.0, %v2209
        %v2211 = vpop.f32.mrb[0].mxu0
        %2212 = vmatprep.mubr.f32.mxu0 0.0
        %2213 = vmatmul.mubr.f32.gmra.mrb[0].mxu0 %v2037
        %v2214 = vpop.f32.mrb[0].mxu0
        %v2215 = vadd.f32 0.0, %v2214
        %v2216 = vpop.f32.mrb[0].mxu0
        %2217 = vmatprep.mubr.f32.mxu0 0.0
        %2218 = vmatmul.mubr.f32.gmra.mrb[0].mxu0 %v2040
        %v2219 = vpop.f32.mrb[0].mxu0
        %v2220 = vadd.f32 0.0, %v2219
        %v2221 = vpop.f32.mrb[0].mxu0
        %2222 = vmatprep.mubr.f32.mxu0 0.0
        %2223 = vmatmul.mubr.f32.gmra.mrb[0].mxu0 %v2043
        %v2224 = vpop.f32.mrb[0].mxu0
        %v2225 = vadd.f32 0.0, %v2224
        %v2226 = vpop.f32.mrb[0].mxu0
        %2227 = vmatprep.mubr.f32.mxu0 0.0
        %2228 = vmatmul.mubr.f32.gmra.mrb[0].mxu0 %v2046
        %v2229 = vpop.f32.mrb[0].mxu0
        %v2230 = vadd.f32 0.0, %v2229
        %v2231 = vpop.f32.mrb[0].mxu0
        %2232 = vmatprep.mubr.f32.mxu0 0.0
        %2233 = vmatmul.mubr.f32.gmra.mrb[0].mxu0 %v2049
        %v2234 = vpop.f32.mrb[0].mxu0
        %v2235 = vadd.f32 0.0, %v2234
        %v2236 = vpop.f32.mrb[0].mxu0
        %2237 = vmatprep.mubr.f32.mxu0 0.0
        %2238 = vmatmul.mubr.f32.gmra.mrb[0].mxu0 %v2052
        %v2239 = vpop.f32.mrb[0].mxu0
        %v2240 = vadd.f32 0.0, %v2239
        %v2241 = vpop.f32.mrb[0].mxu0
        %2242 = vmatprep.mubr.f32.mxu0 0.0
        %2243 = vmatmul.mubr.f32.gmra.mrb[0].mxu0 %v2055
        %v2244 = vpop.f32.mrb[0].mxu0
        %v2245 = vadd.f32 0.0, %v2244
        %v2246 = vpop.f32.mrb[0].mxu0
        %2247 = vmatprep.mubr.f32.mxu0 0.0
        %2248 = vmatmul.mubr.f32.gmra.mrb[0].mxu0 %v2058
        %v2249 = vpop.f32.mrb[0].mxu0
        %v2250 = vadd.f32 0.0, %v2249
        %v2251 = vpop.f32.mrb[0].mxu0
        %2252 = vmatprep.mubr.f32.mxu0 0.0
        %2253 = vmatmul.mubr.f32.gmra.mrb[0].mxu0 %v2061
        %v2254 = vpop.f32.mrb[0].mxu0
        %v2255 = vadd.f32 0.0, %v2254
        %v2256 = vpop.f32.mrb[0].mxu0
        %2257 = vmatprep.mubr.f32.mxu0 0.0
        %2258 = vmatmul.mubr.f32.gmra.mrb[0].mxu0 %v2064
        %v2259 = vpop.f32.mrb[0].mxu0
        %v2260 = vadd.f32 0.0, %v2259
        %v2261 = vpop.f32.mrb[0].mxu0
        %2262 = vmatprep.mubr.f32.mxu0 0.0
        %2263 = vmatmul.mubr.f32.gmra.mrb[0].mxu0 %v2067
        %v2264 = vpop.f32.mrb[0].mxu0
        %v2265 = vadd.f32 0.0, %v2264
        %v2266 = vpop.f32.mrb[0].mxu0
        %2267 = vmatprep.mubr.f32.mxu0 0.0
        %2268 = vmatmul.mubr.f32.gmra.mrb[0].mxu0 %v2070
        %v2269 = vpop.f32.mrb[0].mxu0
        %v2270 = vadd.f32 0.0, %v2269
        %v2271 = vpop.f32.mrb[0].mxu0
        %2272 = vmatprep.mubr.f32.mxu0 0.0
        %2273 = vmatmul.mubr.f32.gmra.mrb[0].mxu0 %v2073
        %v2274 = vpop.f32.mrb[0].mxu0
        %v2275 = vadd.f32 0.0, %v2274
        %v2276 = vpop.f32.mrb[0].mxu0
        %2277 = vmatprep.mubr.f32.mxu0 0.0
        %2278 = vmatmul.mubr.f32.gmra.mrb[0].mxu0 %v2076
        %v2279 = vpop.f32.mrb[0].mxu0
        %v2280 = vadd.f32 0.0, %v2279
        %v2281 = vpop.f32.mrb[0].mxu0
        %2282 = vmatprep.mubr.f32.mxu0 0.0
        %2283 = vmatmul.mubr.f32.gmra.mrb[0].mxu0 %v2079
        %v2284 = vpop.f32.mrb[0].mxu0
        %v2285 = vadd.f32 0.0, %v2284
        %v2286 = vpop.f32.mrb[0].mxu0
        %2287 = vmatprep.mubr.f32.mxu0 0.0
        %2288 = vmatmul.mubr.f32.gmra.mrb[0].mxu0 %v2082
        %v2289 = vpop.f32.mrb[0].mxu0
        %v2290 = vadd.f32 0.0, %v2289
        %v2291 = vpop.f32.mrb[0].mxu0
        %2292 = vmatprep.mubr.f32.mxu0 0.0
        %2293 = vmatmul.mubr.f32.gmra.mrb[0].mxu0 %v2085
        %v2294 = vpop.f32.mrb[0].mxu0
        %v2295 = vadd.f32 0.0, %v2294
        %v2296 = vpop.f32.mrb[0].mxu0
        %2297 = vmatprep.mubr.f32.mxu0 0.0
        %2298 = vmatmul.mubr.f32.gmra.mrb[0].mxu0 %v2088
        %v2299 = vpop.f32.mrb[0].mxu0
        %v2300 = vadd.f32 0.0, %v2299
        %v2301 = vpop.f32.mrb[0].mxu0
        %2302 = vmatprep.mubr.f32.mxu0 0.0
        %2303 = vmatmul.mubr.f32.gmra.mrb[0].mxu0 %v2091
        %v2304 = vpop.f32.mrb[0].mxu0
        %v2305 = vadd.f32 0.0, %v2304
        %v2306 = vpop.f32.mrb[0].mxu0
        %2307 = vmatprep.mubr.f32.mxu0 0.0
        %2308 = vmatmul.mubr.f32.gmra.mrb[0].mxu0 %v2094
        %v2309 = vpop.f32.mrb[0].mxu0
        %v2310 = vadd.f32 0.0, %v2309
        %v2311 = vpop.f32.mrb[0].mxu0
        %2312 = vmatprep.mubr.f32.mxu0 0.0
        %2313 = vmatmul.mubr.f32.gmra.mrb[0].mxu0 %v2097
        %v2314 = vpop.f32.mrb[0].mxu0
        %v2315 = vadd.f32 0.0, %v2314
        %v2316 = vpop.f32.mrb[0].mxu0
        %2317 = vmatprep.mubr.f32.mxu0 0.0
        %2318 = vmatmul.mubr.f32.gmra.mrb[0].mxu0 %v2100
        %v2319 = vpop.f32.mrb[0].mxu0
        %v2320 = vadd.f32 0.0, %v2319
        %v2321 = vpop.f32.mrb[0].mxu0
        %2322 = vmatprep.mubr.f32.mxu0 0.0
        %2323 = vmatmul.mubr.f32.gmra.mrb[0].mxu0 %v2103
        %v2324 = vpop.f32.mrb[0].mxu0
        %v2325 = vadd.f32 0.0, %v2324
        %v2326 = vpop.f32.mrb[0].mxu0
        %2327 = vmatprep.mubr.f32.mxu0 0.0
        %2328 = vmatmul.mubr.f32.gmra.mrb[0].mxu0 %v2106
        %v2329 = vpop.f32.mrb[0].mxu0
        %v2330 = vadd.f32 0.0, %v2329
        %v2331 = vpop.f32.mrb[0].mxu0
        %2332 = vdwg.mxu0
        %v2333 = vadd.f32 %v1971, %v2175
        %v2334 = vadd.f32 %v1972, %v2180
        %v2335 = vadd.f32 %v1973, %v2185
        %v2336 = vadd.f32 %v1974, %v2190
        %v2337 = vadd.f32 %v1975, %v2195
        %v2338 = vadd.f32 %v1976, %v2200
        %v2339 = vadd.f32 %v1977, %v2205
        %v2340 = vadd.f32 %v1978, %v2210
        %v2341 = vadd.f32 %v1979, %v2215
        %v2342 = vadd.f32 %v1980, %v2220
        %v2343 = vadd.f32 %v1981, %v2225
        %v2344 = vadd.f32 %v1982, %v2230
        %v2345 = vadd.f32 %v1983, %v2235
        %v2346 = vadd.f32 %v1984, %v2240
        %v2347 = vadd.f32 %v1985, %v2245
        %v2348 = vadd.f32 %v1986, %v2250
        %v2349 = vadd.f32 %v1987, %v2255
        %v2350 = vadd.f32 %v1988, %v2260
        %v2351 = vadd.f32 %v1989, %v2265
        %v2352 = vadd.f32 %v1990, %v2270
        %v2353 = vadd.f32 %v1991, %v2275
        %v2354 = vadd.f32 %v1992, %v2280
        %v2355 = vadd.f32 %v1993, %v2285
        %v2356 = vadd.f32 %v1994, %v2290
        %v2357 = vadd.f32 %v1995, %v2295
        %v2358 = vadd.f32 %v1996, %v2300
        %v2359 = vadd.f32 %v1997, %v2305
        %v2360 = vadd.f32 %v1998, %v2310
        %v2361 = vadd.f32 %v1999, %v2315
        %v2362 = vadd.f32 %v2000, %v2320
        %v2363 = vadd.f32 %v2001, %v2325
        %v2364 = vadd.f32 %v2002, %v2330
        %2365 = vst [vmem:[#allocation3] sm:$0xff] %v2333
        %2366 = vst [vmem:[#allocation3 + $0x8] sm:$0xff] %v2334
        %2367 = vst [vmem:[#allocation3 + $0x10] sm:$0xff] %v2335
        %2368 = vst [vmem:[#allocation3 + $0x18] sm:$0xff] %v2336
        %2369 = vst [vmem:[#allocation3 + $0x20] sm:$0xff] %v2337
        %2370 = vst [vmem:[#allocation3 + $0x28] sm:$0xff] %v2338
        %2371 = vst [vmem:[#allocation3 + $0x30] sm:$0xff] %v2339
        %2372 = vst [vmem:[#allocation3 + $0x38] sm:$0xff] %v2340
        %2373 = vst [vmem:[#allocation3 + $0x40] sm:$0xff] %v2341
        %2374 = vst [vmem:[#allocation3 + $0x48] sm:$0xff] %v2342
        %2375 = vst [vmem:[#allocation3 + $0x50] sm:$0xff] %v2343
        %2376 = vst [vmem:[#allocation3 + $0x58] sm:$0xff] %v2344
        %2377 = vst [vmem:[#allocation3 + $0x60] sm:$0xff] %v2345
        %2378 = vst [vmem:[#allocation3 + $0x68] sm:$0xff] %v2346
        %2379 = vst [vmem:[#allocation3 + $0x70] sm:$0xff] %v2347
        %2380 = vst [vmem:[#allocation3 + $0x78] sm:$0xff] %v2348
        %2381 = vst [vmem:[#allocation3 + $0x80] sm:$0xff] %v2349
        %2382 = vst [vmem:[#allocation3 + $0x88] sm:$0xff] %v2350
        %2383 = vst [vmem:[#allocation3 + $0x90] sm:$0xff] %v2351
        %2384 = vst [vmem:[#allocation3 + $0x98] sm:$0xff] %v2352
        %2385 = vst [vmem:[#allocation3 + $0xa0] sm:$0xff] %v2353
        %2386 = vst [vmem:[#allocation3 + $0xa8] sm:$0xff] %v2354
        %2387 = vst [vmem:[#allocation3 + $0xb0] sm:$0xff] %v2355
        %2388 = vst [vmem:[#allocation3 + $0xb8] sm:$0xff] %v2356
        %2389 = vst [vmem:[#allocation3 + $0xc0] sm:$0xff] %v2357
        %2390 = vst [vmem:[#allocation3 + $0xc8] sm:$0xff] %v2358
        %2391 = vst [vmem:[#allocation3 + $0xd0] sm:$0xff] %v2359
        %2392 = vst [vmem:[#allocation3 + $0xd8] sm:$0xff] %v2360
        %2393 = vst [vmem:[#allocation3 + $0xe0] sm:$0xff] %v2361
        %2394 = vst [vmem:[#allocation3 + $0xe8] sm:$0xff] %v2362
        %2395 = vst [vmem:[#allocation3 + $0xf0] sm:$0xff] %v2363
        %2396 = vst [vmem:[#allocation3 + $0xf8] sm:$0xff] %v2364
        %v2397 = vld [vmem:[#allocation2 + $0x2] sm:$0xff]
        %v2398 = vld [vmem:[#allocation2 + $0x12] sm:$0xff]
        %v2399 = vld [vmem:[#allocation2 + $0x22] sm:$0xff]
        %v2400 = vld [vmem:[#allocation2 + $0x32] sm:$0xff]
        %v2401 = vld [vmem:[#allocation2 + $0x42] sm:$0xff]
        %v2402 = vld [vmem:[#allocation2 + $0x52] sm:$0xff]
        %v2403 = vld [vmem:[#allocation2 + $0x62] sm:$0xff]
        %v2404 = vld [vmem:[#allocation2 + $0x72] sm:$0xff]
        %v2405 = vld [vmem:[#allocation2 + $0xa2] sm:$0xff]
        %v2406 = vld [vmem:[#allocation2 + $0xb2] sm:$0xff]
        %v2407 = vld [vmem:[#allocation2 + $0xc2] sm:$0xff]
        %v2408 = vld [vmem:[#allocation2 + $0xd2] sm:$0xff]
        %v2409 = vld [vmem:[#allocation2 + $0xe2] sm:$0xff]
        %v2410 = vld [vmem:[#allocation2 + $0xf2] sm:$0xff]
        %v2411 = vld [vmem:[#allocation2 + $0x102] sm:$0xff]
        %v2412 = vld [vmem:[#allocation2 + $0x112] sm:$0xff]
        %v2413 = vld [vmem:[#allocation2 + $0x142] sm:$0xff]
        %v2414 = vld [vmem:[#allocation2 + $0x152] sm:$0xff]
        %v2415 = vld [vmem:[#allocation2 + $0x162] sm:$0xff]
        %v2416 = vld [vmem:[#allocation2 + $0x172] sm:$0xff]
        %v2417 = vld [vmem:[#allocation2 + $0x182] sm:$0xff]
        %v2418 = vld [vmem:[#allocation2 + $0x192] sm:$0xff]
        %v2419 = vld [vmem:[#allocation2 + $0x1a2] sm:$0xff]
        %v2420 = vld [vmem:[#allocation2 + $0x1b2] sm:$0xff]
        %v2421 = vld [vmem:[#allocation2 + $0x1e2] sm:$0xff]
        %v2422 = vld [vmem:[#allocation2 + $0x1f2] sm:$0xff]
        %v2423 = vld [vmem:[#allocation2 + $0x202] sm:$0xff]
        %v2424 = vld [vmem:[#allocation2 + $0x212] sm:$0xff]
        %v2425 = vld [vmem:[#allocation2 + $0x222] sm:$0xff]
        %v2426 = vld [vmem:[#allocation2 + $0x232] sm:$0xff]
        %v2427 = vld [vmem:[#allocation2 + $0x242] sm:$0xff]
        %v2428 = vld [vmem:[#allocation2 + $0x252] sm:$0xff]
        %v2429 = vld [vmem:[#allocation3] sm:$0xff]
        %v2430 = vld [vmem:[#allocation3 + $0x8] sm:$0xff]
        %v2431 = vld [vmem:[#allocation3 + $0x10] sm:$0xff]
        %v2432 = vld [vmem:[#allocation3 + $0x18] sm:$0xff]
        %v2433 = vld [vmem:[#allocation3 + $0x20] sm:$0xff]
        %v2434 = vld [vmem:[#allocation3 + $0x28] sm:$0xff]
        %v2435 = vld [vmem:[#allocation3 + $0x30] sm:$0xff]
        %v2436 = vld [vmem:[#allocation3 + $0x38] sm:$0xff]
        %v2437 = vld [vmem:[#allocation3 + $0x40] sm:$0xff]
        %v2438 = vld [vmem:[#allocation3 + $0x48] sm:$0xff]
        %v2439 = vld [vmem:[#allocation3 + $0x50] sm:$0xff]
        %v2440 = vld [vmem:[#allocation3 + $0x58] sm:$0xff]
        %v2441 = vld [vmem:[#allocation3 + $0x60] sm:$0xff]
        %v2442 = vld [vmem:[#allocation3 + $0x68] sm:$0xff]
        %v2443 = vld [vmem:[#allocation3 + $0x70] sm:$0xff]
        %v2444 = vld [vmem:[#allocation3 + $0x78] sm:$0xff]
        %v2445 = vld [vmem:[#allocation3 + $0x80] sm:$0xff]
        %v2446 = vld [vmem:[#allocation3 + $0x88] sm:$0xff]
        %v2447 = vld [vmem:[#allocation3 + $0x90] sm:$0xff]
        %v2448 = vld [vmem:[#allocation3 + $0x98] sm:$0xff]
        %v2449 = vld [vmem:[#allocation3 + $0xa0] sm:$0xff]
        %v2450 = vld [vmem:[#allocation3 + $0xa8] sm:$0xff]
        %v2451 = vld [vmem:[#allocation3 + $0xb0] sm:$0xff]
        %v2452 = vld [vmem:[#allocation3 + $0xb8] sm:$0xff]
        %v2453 = vld [vmem:[#allocation3 + $0xc0] sm:$0xff]
        %v2454 = vld [vmem:[#allocation3 + $0xc8] sm:$0xff]
        %v2455 = vld [vmem:[#allocation3 + $0xd0] sm:$0xff]
        %v2456 = vld [vmem:[#allocation3 + $0xd8] sm:$0xff]
        %v2457 = vld [vmem:[#allocation3 + $0xe0] sm:$0xff]
        %v2458 = vld [vmem:[#allocation3 + $0xe8] sm:$0xff]
        %v2459 = vld [vmem:[#allocation3 + $0xf0] sm:$0xff]
        %v2460 = vld [vmem:[#allocation3 + $0xf8] sm:$0xff]
        %s2461 = scalar_lea.vmem [#allocation15], 128
        %v2462 = vld [vmem:[%s2461] sm:$0xff]
        %v2463 = vld [vmem:[%s2461 + $0x8] sm:$0xff]
        %v2464 = vld [vmem:[%s2461 + $0x10] sm:$0xff]
        %v2465 = vld [vmem:[%s2461 + $0x18] sm:$0xff]
        %v2466 = vld [vmem:[%s2461 + $0x20] sm:$0xff]
        %v2467 = vld [vmem:[%s2461 + $0x28] sm:$0xff]
        %v2468 = vld [vmem:[%s2461 + $0x30] sm:$0xff]
        %v2469 = vld [vmem:[%s2461 + $0x38] sm:$0xff]
        %v2471 = vsel %vm447, %v2397, 0
        %v2474 = vsel %vm447, %v2398, 0
        %v2477 = vsel %vm447, %v2399, 0
        %v2480 = vsel %vm447, %v2400, 0
        %v2483 = vsel %vm447, %v2401, 0
        %v2486 = vsel %vm447, %v2402, 0
        %v2489 = vsel %vm447, %v2403, 0
        %v2492 = vsel %vm447, %v2404, 0
        %v2495 = vsel %vm447, %v2405, 0
        %v2498 = vsel %vm447, %v2406, 0
        %v2501 = vsel %vm447, %v2407, 0
        %v2504 = vsel %vm447, %v2408, 0
        %v2507 = vsel %vm447, %v2409, 0
        %v2510 = vsel %vm447, %v2410, 0
        %v2513 = vsel %vm447, %v2411, 0
        %v2516 = vsel %vm447, %v2412, 0
        %v2519 = vsel %vm447, %v2413, 0
        %v2522 = vsel %vm447, %v2414, 0
        %v2525 = vsel %vm447, %v2415, 0
        %v2528 = vsel %vm447, %v2416, 0
        %v2531 = vsel %vm447, %v2417, 0
        %v2534 = vsel %vm447, %v2418, 0
        %v2537 = vsel %vm447, %v2419, 0
        %v2540 = vsel %vm447, %v2420, 0
        %v2543 = vsel %vm447, %v2421, 0
        %v2546 = vsel %vm447, %v2422, 0
        %v2549 = vsel %vm447, %v2423, 0
        %v2552 = vsel %vm447, %v2424, 0
        %v2555 = vsel %vm447, %v2425, 0
        %v2558 = vsel %vm447, %v2426, 0
        %v2561 = vsel %vm447, %v2427, 0
        %v2564 = vsel %vm447, %v2428, 0
        %2566 = vmatprep.subr.mxu0 0.0
        %2567 = vmatpush1.msra.mxu0 %v2462
        %2568 = vmatprep.subr.mxu0 0.0
        %2569 = vmatpush1.msra.mxu0 %v2463
        %2570 = vmatprep.subr.mxu0 0.0
        %2571 = vmatpush1.msra.mxu0 %v2464
        %2572 = vmatprep.subr.mxu0 0.0
        %2573 = vmatpush1.msra.mxu0 %v2465
        %2574 = vmatprep.subr.mxu0 0.0
        %2575 = vmatpush1.msra.mxu0 %v2466
        %2576 = vmatprep.subr.mxu0 0.0
        %2577 = vmatpush1.msra.mxu0 %v2467
        %2578 = vmatprep.subr.mxu0 0.0
        %2579 = vmatpush1.msra.mxu0 %v2468
        %2580 = vmatprep.subr.mxu0 0.0
        %2581 = vmatpush1.msra.mxu0 %v2469
        %2582 = vmatprep.subr.mxu0 0.0
        %2583 = vmatpush1.msra.mxu0 0.0
        %2584 = vmatprep.subr.mxu0 0.0
        %2585 = vmatpush1.msra.mxu0 0.0
        %2586 = vmatprep.subr.mxu0 0.0
        %2587 = vmatpush1.msra.mxu0 0.0
        %2588 = vmatprep.subr.mxu0 0.0
        %2589 = vmatpush1.msra.mxu0 0.0
        %2590 = vmatprep.subr.mxu0 0.0
        %2591 = vmatpush1.msra.mxu0 0.0
        %2592 = vmatprep.subr.mxu0 0.0
        %2593 = vmatpush1.msra.mxu0 0.0
        %2594 = vmatprep.subr.mxu0 0.0
        %2595 = vmatpush1.msra.mxu0 0.0
        %2596 = vmatprep.subr.mxu0 0.0
        %2597 = vmatpush1.msra.mxu0 0.0
        %2598 = vmatprep.subr.mxu0 0.0
        %2599 = vmatpush1.msra.mxu0 0.0
        %2600 = vmatprep.subr.mxu0 0.0
        %2601 = vmatpush1.msra.mxu0 0.0
        %2602 = vmatprep.subr.mxu0 0.0
        %2603 = vmatpush1.msra.mxu0 0.0
        %2604 = vmatprep.subr.mxu0 0.0
        %2605 = vmatpush1.msra.mxu0 0.0
        %2606 = vmatprep.subr.mxu0 0.0
        %2607 = vmatpush1.msra.mxu0 0.0
        %2608 = vmatprep.subr.mxu0 0.0
        %2609 = vmatpush1.msra.mxu0 0.0
        %2610 = vmatprep.subr.mxu0 0.0
        %2611 = vmatpush1.msra.mxu0 0.0
        %2612 = vmatprep.subr.mxu0 0.0
        %2613 = vmatpush1.msra.mxu0 0.0
        %2614 = vmatprep.subr.mxu0 0.0
        %2615 = vmatpush1.msra.mxu0 0.0
        %2616 = vmatprep.subr.mxu0 0.0
        %2617 = vmatpush1.msra.mxu0 0.0
        %2618 = vmatprep.subr.mxu0 0.0
        %2619 = vmatpush1.msra.mxu0 0.0
        %2620 = vmatprep.subr.mxu0 0.0
        %2621 = vmatpush1.msra.mxu0 0.0
        %2622 = vmatprep.subr.mxu0 0.0
        %2623 = vmatpush1.msra.mxu0 0.0
        %2624 = vmatprep.subr.mxu0 0.0
        %2625 = vmatpush1.msra.mxu0 0.0
        %2626 = vmatprep.subr.mxu0 0.0
        %2627 = vmatpush1.msra.mxu0 0.0
        %2628 = vmatprep.subr.mxu0 0.0
        %2629 = vmatpush1.msra.mxu0 0.0
        %2630 = vmatprep.mubr.f32.mxu0 0.0
        %2631 = vmatmul.mubr.f32.gmra.mrb[0].mxu0 %v2471
        %v2632 = vpop.f32.mrb[0].mxu0
        %v2633 = vadd.f32 0.0, %v2632
        %v2634 = vpop.f32.mrb[0].mxu0
        %2635 = vmatprep.mubr.f32.mxu0 0.0
        %2636 = vmatmul.mubr.f32.gmra.mrb[0].mxu0 %v2474
        %v2637 = vpop.f32.mrb[0].mxu0
        %v2638 = vadd.f32 0.0, %v2637
        %v2639 = vpop.f32.mrb[0].mxu0
        %2640 = vmatprep.mubr.f32.mxu0 0.0
        %2641 = vmatmul.mubr.f32.gmra.mrb[0].mxu0 %v2477
        %v2642 = vpop.f32.mrb[0].mxu0
        %v2643 = vadd.f32 0.0, %v2642
        %v2644 = vpop.f32.mrb[0].mxu0
        %2645 = vmatprep.mubr.f32.mxu0 0.0
        %2646 = vmatmul.mubr.f32.gmra.mrb[0].mxu0 %v2480
        %v2647 = vpop.f32.mrb[0].mxu0
        %v2648 = vadd.f32 0.0, %v2647
        %v2649 = vpop.f32.mrb[0].mxu0
        %2650 = vmatprep.mubr.f32.mxu0 0.0
        %2651 = vmatmul.mubr.f32.gmra.mrb[0].mxu0 %v2483
        %v2652 = vpop.f32.mrb[0].mxu0
        %v2653 = vadd.f32 0.0, %v2652
        %v2654 = vpop.f32.mrb[0].mxu0
        %2655 = vmatprep.mubr.f32.mxu0 0.0
        %2656 = vmatmul.mubr.f32.gmra.mrb[0].mxu0 %v2486
        %v2657 = vpop.f32.mrb[0].mxu0
        %v2658 = vadd.f32 0.0, %v2657
        %v2659 = vpop.f32.mrb[0].mxu0
        %2660 = vmatprep.mubr.f32.mxu0 0.0
        %2661 = vmatmul.mubr.f32.gmra.mrb[0].mxu0 %v2489
        %v2662 = vpop.f32.mrb[0].mxu0
        %v2663 = vadd.f32 0.0, %v2662
        %v2664 = vpop.f32.mrb[0].mxu0
        %2665 = vmatprep.mubr.f32.mxu0 0.0
        %2666 = vmatmul.mubr.f32.gmra.mrb[0].mxu0 %v2492
        %v2667 = vpop.f32.mrb[0].mxu0
        %v2668 = vadd.f32 0.0, %v2667
        %v2669 = vpop.f32.mrb[0].mxu0
        %2670 = vmatprep.mubr.f32.mxu0 0.0
        %2671 = vmatmul.mubr.f32.gmra.mrb[0].mxu0 %v2495
        %v2672 = vpop.f32.mrb[0].mxu0
        %v2673 = vadd.f32 0.0, %v2672
        %v2674 = vpop.f32.mrb[0].mxu0
        %2675 = vmatprep.mubr.f32.mxu0 0.0
        %2676 = vmatmul.mubr.f32.gmra.mrb[0].mxu0 %v2498
        %v2677 = vpop.f32.mrb[0].mxu0
        %v2678 = vadd.f32 0.0, %v2677
        %v2679 = vpop.f32.mrb[0].mxu0
        %2680 = vmatprep.mubr.f32.mxu0 0.0
        %2681 = vmatmul.mubr.f32.gmra.mrb[0].mxu0 %v2501
        %v2682 = vpop.f32.mrb[0].mxu0
        %v2683 = vadd.f32 0.0, %v2682
        %v2684 = vpop.f32.mrb[0].mxu0
        %2685 = vmatprep.mubr.f32.mxu0 0.0
        %2686 = vmatmul.mubr.f32.gmra.mrb[0].mxu0 %v2504
        %v2687 = vpop.f32.mrb[0].mxu0
        %v2688 = vadd.f32 0.0, %v2687
        %v2689 = vpop.f32.mrb[0].mxu0
        %2690 = vmatprep.mubr.f32.mxu0 0.0
        %2691 = vmatmul.mubr.f32.gmra.mrb[0].mxu0 %v2507
        %v2692 = vpop.f32.mrb[0].mxu0
        %v2693 = vadd.f32 0.0, %v2692
        %v2694 = vpop.f32.mrb[0].mxu0
        %2695 = vmatprep.mubr.f32.mxu0 0.0
        %2696 = vmatmul.mubr.f32.gmra.mrb[0].mxu0 %v2510
        %v2697 = vpop.f32.mrb[0].mxu0
        %v2698 = vadd.f32 0.0, %v2697
        %v2699 = vpop.f32.mrb[0].mxu0
        %2700 = vmatprep.mubr.f32.mxu0 0.0
        %2701 = vmatmul.mubr.f32.gmra.mrb[0].mxu0 %v2513
        %v2702 = vpop.f32.mrb[0].mxu0
        %v2703 = vadd.f32 0.0, %v2702
        %v2704 = vpop.f32.mrb[0].mxu0
        %2705 = vmatprep.mubr.f32.mxu0 0.0
        %2706 = vmatmul.mubr.f32.gmra.mrb[0].mxu0 %v2516
        %v2707 = vpop.f32.mrb[0].mxu0
        %v2708 = vadd.f32 0.0, %v2707
        %v2709 = vpop.f32.mrb[0].mxu0
        %2710 = vmatprep.mubr.f32.mxu0 0.0
        %2711 = vmatmul.mubr.f32.gmra.mrb[0].mxu0 %v2519
        %v2712 = vpop.f32.mrb[0].mxu0
        %v2713 = vadd.f32 0.0, %v2712
        %v2714 = vpop.f32.mrb[0].mxu0
        %2715 = vmatprep.mubr.f32.mxu0 0.0
        %2716 = vmatmul.mubr.f32.gmra.mrb[0].mxu0 %v2522
        %v2717 = vpop.f32.mrb[0].mxu0
        %v2718 = vadd.f32 0.0, %v2717
        %v2719 = vpop.f32.mrb[0].mxu0
        %2720 = vmatprep.mubr.f32.mxu0 0.0
        %2721 = vmatmul.mubr.f32.gmra.mrb[0].mxu0 %v2525
        %v2722 = vpop.f32.mrb[0].mxu0
        %v2723 = vadd.f32 0.0, %v2722
        %v2724 = vpop.f32.mrb[0].mxu0
        %2725 = vmatprep.mubr.f32.mxu0 0.0
        %2726 = vmatmul.mubr.f32.gmra.mrb[0].mxu0 %v2528
        %v2727 = vpop.f32.mrb[0].mxu0
        %v2728 = vadd.f32 0.0, %v2727
        %v2729 = vpop.f32.mrb[0].mxu0
        %2730 = vmatprep.mubr.f32.mxu0 0.0
        %2731 = vmatmul.mubr.f32.gmra.mrb[0].mxu0 %v2531
        %v2732 = vpop.f32.mrb[0].mxu0
        %v2733 = vadd.f32 0.0, %v2732
        %v2734 = vpop.f32.mrb[0].mxu0
        %2735 = vmatprep.mubr.f32.mxu0 0.0
        %2736 = vmatmul.mubr.f32.gmra.mrb[0].mxu0 %v2534
        %v2737 = vpop.f32.mrb[0].mxu0
        %v2738 = vadd.f32 0.0, %v2737
        %v2739 = vpop.f32.mrb[0].mxu0
        %2740 = vmatprep.mubr.f32.mxu0 0.0
        %2741 = vmatmul.mubr.f32.gmra.mrb[0].mxu0 %v2537
        %v2742 = vpop.f32.mrb[0].mxu0
        %v2743 = vadd.f32 0.0, %v2742
        %v2744 = vpop.f32.mrb[0].mxu0
        %2745 = vmatprep.mubr.f32.mxu0 0.0
        %2746 = vmatmul.mubr.f32.gmra.mrb[0].mxu0 %v2540
        %v2747 = vpop.f32.mrb[0].mxu0
        %v2748 = vadd.f32 0.0, %v2747
        %v2749 = vpop.f32.mrb[0].mxu0
        %2750 = vmatprep.mubr.f32.mxu0 0.0
        %2751 = vmatmul.mubr.f32.gmra.mrb[0].mxu0 %v2543
        %v2752 = vpop.f32.mrb[0].mxu0
        %v2753 = vadd.f32 0.0, %v2752
        %v2754 = vpop.f32.mrb[0].mxu0
        %2755 = vmatprep.mubr.f32.mxu0 0.0
        %2756 = vmatmul.mubr.f32.gmra.mrb[0].mxu0 %v2546
        %v2757 = vpop.f32.mrb[0].mxu0
        %v2758 = vadd.f32 0.0, %v2757
        %v2759 = vpop.f32.mrb[0].mxu0
        %2760 = vmatprep.mubr.f32.mxu0 0.0
        %2761 = vmatmul.mubr.f32.gmra.mrb[0].mxu0 %v2549
        %v2762 = vpop.f32.mrb[0].mxu0
        %v2763 = vadd.f32 0.0, %v2762
        %v2764 = vpop.f32.mrb[0].mxu0
        %2765 = vmatprep.mubr.f32.mxu0 0.0
        %2766 = vmatmul.mubr.f32.gmra.mrb[0].mxu0 %v2552
        %v2767 = vpop.f32.mrb[0].mxu0
        %v2768 = vadd.f32 0.0, %v2767
        %v2769 = vpop.f32.mrb[0].mxu0
        %2770 = vmatprep.mubr.f32.mxu0 0.0
        %2771 = vmatmul.mubr.f32.gmra.mrb[0].mxu0 %v2555
        %v2772 = vpop.f32.mrb[0].mxu0
        %v2773 = vadd.f32 0.0, %v2772
        %v2774 = vpop.f32.mrb[0].mxu0
        %2775 = vmatprep.mubr.f32.mxu0 0.0
        %2776 = vmatmul.mubr.f32.gmra.mrb[0].mxu0 %v2558
        %v2777 = vpop.f32.mrb[0].mxu0
        %v2778 = vadd.f32 0.0, %v2777
        %v2779 = vpop.f32.mrb[0].mxu0
        %2780 = vmatprep.mubr.f32.mxu0 0.0
        %2781 = vmatmul.mubr.f32.gmra.mrb[0].mxu0 %v2561
        %v2782 = vpop.f32.mrb[0].mxu0
        %v2783 = vadd.f32 0.0, %v2782
        %v2784 = vpop.f32.mrb[0].mxu0
        %2785 = vmatprep.mubr.f32.mxu0 0.0
        %2786 = vmatmul.mubr.f32.gmra.mrb[0].mxu0 %v2564
        %v2787 = vpop.f32.mrb[0].mxu0
        %v2788 = vadd.f32 0.0, %v2787
        %v2789 = vpop.f32.mrb[0].mxu0
        %2790 = vdwg.mxu0
        %v2791 = vadd.f32 %v2429, %v2633
        %v2792 = vadd.f32 %v2430, %v2638
        %v2793 = vadd.f32 %v2431, %v2643
        %v2794 = vadd.f32 %v2432, %v2648
        %v2795 = vadd.f32 %v2433, %v2653
        %v2796 = vadd.f32 %v2434, %v2658
        %v2797 = vadd.f32 %v2435, %v2663
        %v2798 = vadd.f32 %v2436, %v2668
        %v2799 = vadd.f32 %v2437, %v2673
        %v2800 = vadd.f32 %v2438, %v2678
        %v2801 = vadd.f32 %v2439, %v2683
        %v2802 = vadd.f32 %v2440, %v2688
        %v2803 = vadd.f32 %v2441, %v2693
        %v2804 = vadd.f32 %v2442, %v2698
        %v2805 = vadd.f32 %v2443, %v2703
        %v2806 = vadd.f32 %v2444, %v2708
        %v2807 = vadd.f32 %v2445, %v2713
        %v2808 = vadd.f32 %v2446, %v2718
        %v2809 = vadd.f32 %v2447, %v2723
        %v2810 = vadd.f32 %v2448, %v2728
        %v2811 = vadd.f32 %v2449, %v2733
        %v2812 = vadd.f32 %v2450, %v2738
        %v2813 = vadd.f32 %v2451, %v2743
        %v2814 = vadd.f32 %v2452, %v2748
        %v2815 = vadd.f32 %v2453, %v2753
        %v2816 = vadd.f32 %v2454, %v2758
        %v2817 = vadd.f32 %v2455, %v2763
        %v2818 = vadd.f32 %v2456, %v2768
        %v2819 = vadd.f32 %v2457, %v2773
        %v2820 = vadd.f32 %v2458, %v2778
        %v2821 = vadd.f32 %v2459, %v2783
        %v2822 = vadd.f32 %v2460, %v2788
        %2823 = vst [vmem:[#allocation3] sm:$0xff] %v2791
        %2824 = vst [vmem:[#allocation3 + $0x8] sm:$0xff] %v2792
        %2825 = vst [vmem:[#allocation3 + $0x10] sm:$0xff] %v2793
        %2826 = vst [vmem:[#allocation3 + $0x18] sm:$0xff] %v2794
        %2827 = vst [vmem:[#allocation3 + $0x20] sm:$0xff] %v2795
        %2828 = vst [vmem:[#allocation3 + $0x28] sm:$0xff] %v2796
        %2829 = vst [vmem:[#allocation3 + $0x30] sm:$0xff] %v2797
        %2830 = vst [vmem:[#allocation3 + $0x38] sm:$0xff] %v2798
        %2831 = vst [vmem:[#allocation3 + $0x40] sm:$0xff] %v2799
        %2832 = vst [vmem:[#allocation3 + $0x48] sm:$0xff] %v2800
        %2833 = vst [vmem:[#allocation3 + $0x50] sm:$0xff] %v2801
        %2834 = vst [vmem:[#allocation3 + $0x58] sm:$0xff] %v2802
        %2835 = vst [vmem:[#allocation3 + $0x60] sm:$0xff] %v2803
        %2836 = vst [vmem:[#allocation3 + $0x68] sm:$0xff] %v2804
        %2837 = vst [vmem:[#allocation3 + $0x70] sm:$0xff] %v2805
        %2838 = vst [vmem:[#allocation3 + $0x78] sm:$0xff] %v2806
        %2839 = vst [vmem:[#allocation3 + $0x80] sm:$0xff] %v2807
        %2840 = vst [vmem:[#allocation3 + $0x88] sm:$0xff] %v2808
        %2841 = vst [vmem:[#allocation3 + $0x90] sm:$0xff] %v2809
        %2842 = vst [vmem:[#allocation3 + $0x98] sm:$0xff] %v2810
        %2843 = vst [vmem:[#allocation3 + $0xa0] sm:$0xff] %v2811
        %2844 = vst [vmem:[#allocation3 + $0xa8] sm:$0xff] %v2812
        %2845 = vst [vmem:[#allocation3 + $0xb0] sm:$0xff] %v2813
        %2846 = vst [vmem:[#allocation3 + $0xb8] sm:$0xff] %v2814
        %2847 = vst [vmem:[#allocation3 + $0xc0] sm:$0xff] %v2815
        %2848 = vst [vmem:[#allocation3 + $0xc8] sm:$0xff] %v2816
        %2849 = vst [vmem:[#allocation3 + $0xd0] sm:$0xff] %v2817
        %2850 = vst [vmem:[#allocation3 + $0xd8] sm:$0xff] %v2818
        %2851 = vst [vmem:[#allocation3 + $0xe0] sm:$0xff] %v2819
        %2852 = vst [vmem:[#allocation3 + $0xe8] sm:$0xff] %v2820
        %2853 = vst [vmem:[#allocation3 + $0xf0] sm:$0xff] %v2821
        %2854 = vst [vmem:[#allocation3 + $0xf8] sm:$0xff] %v2822
        %v2855 = vld [vmem:[%s1410] sm:$0xff]
        %v2856 = vld [vmem:[%s1410 + $0x10] sm:$0xff]
        %v2857 = vld [vmem:[%s1410 + $0x20] sm:$0xff]
        %v2858 = vld [vmem:[%s1410 + $0x30] sm:$0xff]
        %v2859 = vld [vmem:[%s1410 + $0x40] sm:$0xff]
        %v2860 = vld [vmem:[%s1410 + $0x50] sm:$0xff]
        %v2861 = vld [vmem:[%s1410 + $0x60] sm:$0xff]
        %v2862 = vld [vmem:[%s1410 + $0x70] sm:$0xff]
        %v2863 = vld [vmem:[%s1410 + $0xa0] sm:$0xff]
        %v2864 = vld [vmem:[%s1410 + $0xb0] sm:$0xff]
        %v2865 = vld [vmem:[%s1410 + $0xc0] sm:$0xff]
        %v2866 = vld [vmem:[%s1410 + $0xd0] sm:$0xff]
        %v2867 = vld [vmem:[%s1410 + $0xe0] sm:$0xff]
        %v2868 = vld [vmem:[%s1410 + $0xf0] sm:$0xff]
        %v2869 = vld [vmem:[%s1410 + $0x100] sm:$0xff]
        %v2870 = vld [vmem:[%s1410 + $0x110] sm:$0xff]
        %v2871 = vld [vmem:[%s1410 + $0x140] sm:$0xff]
        %v2872 = vld [vmem:[%s1410 + $0x150] sm:$0xff]
        %v2873 = vld [vmem:[%s1410 + $0x160] sm:$0xff]
        %v2874 = vld [vmem:[%s1410 + $0x170] sm:$0xff]
        %v2875 = vld [vmem:[%s1410 + $0x180] sm:$0xff]
        %v2876 = vld [vmem:[%s1410 + $0x190] sm:$0xff]
        %v2877 = vld [vmem:[%s1410 + $0x1a0] sm:$0xff]
        %v2878 = vld [vmem:[%s1410 + $0x1b0] sm:$0xff]
        %v2879 = vld [vmem:[%s1410 + $0x1e0] sm:$0xff]
        %v2880 = vld [vmem:[%s1410 + $0x1f0] sm:$0xff]
        %v2881 = vld [vmem:[%s1410 + $0x200] sm:$0xff]
        %v2882 = vld [vmem:[%s1410 + $0x210] sm:$0xff]
        %v2883 = vld [vmem:[%s1410 + $0x220] sm:$0xff]
        %v2884 = vld [vmem:[%s1410 + $0x230] sm:$0xff]
        %v2885 = vld [vmem:[%s1410 + $0x240] sm:$0xff]
        %v2886 = vld [vmem:[%s1410 + $0x250] sm:$0xff]
        %v2887 = vld [vmem:[#allocation3] sm:$0xff]
        %v2888 = vld [vmem:[#allocation3 + $0x8] sm:$0xff]
        %v2889 = vld [vmem:[#allocation3 + $0x10] sm:$0xff]
        %v2890 = vld [vmem:[#allocation3 + $0x18] sm:$0xff]
        %v2891 = vld [vmem:[#allocation3 + $0x20] sm:$0xff]
        %v2892 = vld [vmem:[#allocation3 + $0x28] sm:$0xff]
        %v2893 = vld [vmem:[#allocation3 + $0x30] sm:$0xff]
        %v2894 = vld [vmem:[#allocation3 + $0x38] sm:$0xff]
        %v2895 = vld [vmem:[#allocation3 + $0x40] sm:$0xff]
        %v2896 = vld [vmem:[#allocation3 + $0x48] sm:$0xff]
        %v2897 = vld [vmem:[#allocation3 + $0x50] sm:$0xff]
        %v2898 = vld [vmem:[#allocation3 + $0x58] sm:$0xff]
        %v2899 = vld [vmem:[#allocation3 + $0x60] sm:$0xff]
        %v2900 = vld [vmem:[#allocation3 + $0x68] sm:$0xff]
        %v2901 = vld [vmem:[#allocation3 + $0x70] sm:$0xff]
        %v2902 = vld [vmem:[#allocation3 + $0x78] sm:$0xff]
        %v2903 = vld [vmem:[#allocation3 + $0x80] sm:$0xff]
        %v2904 = vld [vmem:[#allocation3 + $0x88] sm:$0xff]
        %v2905 = vld [vmem:[#allocation3 + $0x90] sm:$0xff]
        %v2906 = vld [vmem:[#allocation3 + $0x98] sm:$0xff]
        %v2907 = vld [vmem:[#allocation3 + $0xa0] sm:$0xff]
        %v2908 = vld [vmem:[#allocation3 + $0xa8] sm:$0xff]
        %v2909 = vld [vmem:[#allocation3 + $0xb0] sm:$0xff]
        %v2910 = vld [vmem:[#allocation3 + $0xb8] sm:$0xff]
        %v2911 = vld [vmem:[#allocation3 + $0xc0] sm:$0xff]
        %v2912 = vld [vmem:[#allocation3 + $0xc8] sm:$0xff]
        %v2913 = vld [vmem:[#allocation3 + $0xd0] sm:$0xff]
        %v2914 = vld [vmem:[#allocation3 + $0xd8] sm:$0xff]
        %v2915 = vld [vmem:[#allocation3 + $0xe0] sm:$0xff]
        %v2916 = vld [vmem:[#allocation3 + $0xe8] sm:$0xff]
        %v2917 = vld [vmem:[#allocation3 + $0xf0] sm:$0xff]
        %v2918 = vld [vmem:[#allocation3 + $0xf8] sm:$0xff]
        %s2919 = scalar_lea.vmem [#allocation15], 192
        %v2920 = vld [vmem:[%s2919] sm:$0xff]
        %v2921 = vld [vmem:[%s2919 + $0x8] sm:$0xff]
        %v2922 = vld [vmem:[%s2919 + $0x10] sm:$0xff]
        %v2923 = vld [vmem:[%s2919 + $0x18] sm:$0xff]
        %v2924 = vld [vmem:[%s2919 + $0x20] sm:$0xff]
        %v2925 = vld [vmem:[%s2919 + $0x28] sm:$0xff]
        %v2926 = vld [vmem:[%s2919 + $0x30] sm:$0xff]
        %v2927 = vld [vmem:[%s2919 + $0x38] sm:$0xff]
        %v2929 = vsel %vm447, %v2855, 0
        %v2932 = vsel %vm447, %v2856, 0
        %v2935 = vsel %vm447, %v2857, 0
        %v2938 = vsel %vm447, %v2858, 0
        %v2941 = vsel %vm447, %v2859, 0
        %v2944 = vsel %vm447, %v2860, 0
        %v2947 = vsel %vm447, %v2861, 0
        %v2950 = vsel %vm447, %v2862, 0
        %v2953 = vsel %vm447, %v2863, 0
        %v2956 = vsel %vm447, %v2864, 0
        %v2959 = vsel %vm447, %v2865, 0
        %v2962 = vsel %vm447, %v2866, 0
        %v2965 = vsel %vm447, %v2867, 0
        %v2968 = vsel %vm447, %v2868, 0
        %v2971 = vsel %vm447, %v2869, 0
        %v2974 = vsel %vm447, %v2870, 0
        %v2977 = vsel %vm447, %v2871, 0
        %v2980 = vsel %vm447, %v2872, 0
        %v2983 = vsel %vm447, %v2873, 0
        %v2986 = vsel %vm447, %v2874, 0
        %v2989 = vsel %vm447, %v2875, 0
        %v2992 = vsel %vm447, %v2876, 0
        %v2995 = vsel %vm447, %v2877, 0
        %v2998 = vsel %vm447, %v2878, 0
        %v3001 = vsel %vm447, %v2879, 0
        %v3004 = vsel %vm447, %v2880, 0
        %v3007 = vsel %vm447, %v2881, 0
        %v3010 = vsel %vm447, %v2882, 0
        %v3013 = vsel %vm447, %v2883, 0
        %v3016 = vsel %vm447, %v2884, 0
        %v3019 = vsel %vm447, %v2885, 0
        %v3022 = vsel %vm447, %v2886, 0
        %3024 = vmatprep.subr.mxu0 0.0
        %3025 = vmatpush1.msra.mxu0 %v2920
        %3026 = vmatprep.subr.mxu0 0.0
        %3027 = vmatpush1.msra.mxu0 %v2921
        %3028 = vmatprep.subr.mxu0 0.0
        %3029 = vmatpush1.msra.mxu0 %v2922
        %3030 = vmatprep.subr.mxu0 0.0
        %3031 = vmatpush1.msra.mxu0 %v2923
        %3032 = vmatprep.subr.mxu0 0.0
        %3033 = vmatpush1.msra.mxu0 %v2924
        %3034 = vmatprep.subr.mxu0 0.0
        %3035 = vmatpush1.msra.mxu0 %v2925
        %3036 = vmatprep.subr.mxu0 0.0
        %3037 = vmatpush1.msra.mxu0 %v2926
        %3038 = vmatprep.subr.mxu0 0.0
        %3039 = vmatpush1.msra.mxu0 %v2927
        %3040 = vmatprep.subr.mxu0 0.0
        %3041 = vmatpush1.msra.mxu0 0.0
        %3042 = vmatprep.subr.mxu0 0.0
        %3043 = vmatpush1.msra.mxu0 0.0
        %3044 = vmatprep.subr.mxu0 0.0
        %3045 = vmatpush1.msra.mxu0 0.0
        %3046 = vmatprep.subr.mxu0 0.0
        %3047 = vmatpush1.msra.mxu0 0.0
        %3048 = vmatprep.subr.mxu0 0.0
        %3049 = vmatpush1.msra.mxu0 0.0
        %3050 = vmatprep.subr.mxu0 0.0
        %3051 = vmatpush1.msra.mxu0 0.0
        %3052 = vmatprep.subr.mxu0 0.0
        %3053 = vmatpush1.msra.mxu0 0.0
        %3054 = vmatprep.subr.mxu0 0.0
        %3055 = vmatpush1.msra.mxu0 0.0
        %3056 = vmatprep.subr.mxu0 0.0
        %3057 = vmatpush1.msra.mxu0 0.0
        %3058 = vmatprep.subr.mxu0 0.0
        %3059 = vmatpush1.msra.mxu0 0.0
        %3060 = vmatprep.subr.mxu0 0.0
        %3061 = vmatpush1.msra.mxu0 0.0
        %3062 = vmatprep.subr.mxu0 0.0
        %3063 = vmatpush1.msra.mxu0 0.0
        %3064 = vmatprep.subr.mxu0 0.0
        %3065 = vmatpush1.msra.mxu0 0.0
        %3066 = vmatprep.subr.mxu0 0.0
        %3067 = vmatpush1.msra.mxu0 0.0
        %3068 = vmatprep.subr.mxu0 0.0
        %3069 = vmatpush1.msra.mxu0 0.0
        %3070 = vmatprep.subr.mxu0 0.0
        %3071 = vmatpush1.msra.mxu0 0.0
        %3072 = vmatprep.subr.mxu0 0.0
        %3073 = vmatpush1.msra.mxu0 0.0
        %3074 = vmatprep.subr.mxu0 0.0
        %3075 = vmatpush1.msra.mxu0 0.0
        %3076 = vmatprep.subr.mxu0 0.0
        %3077 = vmatpush1.msra.mxu0 0.0
        %3078 = vmatprep.subr.mxu0 0.0
        %3079 = vmatpush1.msra.mxu0 0.0
        %3080 = vmatprep.subr.mxu0 0.0
        %3081 = vmatpush1.msra.mxu0 0.0
        %3082 = vmatprep.subr.mxu0 0.0
        %3083 = vmatpush1.msra.mxu0 0.0
        %3084 = vmatprep.subr.mxu0 0.0
        %3085 = vmatpush1.msra.mxu0 0.0
        %3086 = vmatprep.subr.mxu0 0.0
        %3087 = vmatpush1.msra.mxu0 0.0
        %3088 = vmatprep.mubr.f32.mxu0 0.0
        %3089 = vmatmul.mubr.f32.gmra.mrb[0].mxu0 %v2929
        %v3090 = vpop.f32.mrb[0].mxu0
        %v3091 = vadd.f32 0.0, %v3090
        %v3092 = vpop.f32.mrb[0].mxu0
        %3093 = vmatprep.mubr.f32.mxu0 0.0
        %3094 = vmatmul.mubr.f32.gmra.mrb[0].mxu0 %v2932
        %v3095 = vpop.f32.mrb[0].mxu0
        %v3096 = vadd.f32 0.0, %v3095
        %v3097 = vpop.f32.mrb[0].mxu0
        %3098 = vmatprep.mubr.f32.mxu0 0.0
        %3099 = vmatmul.mubr.f32.gmra.mrb[0].mxu0 %v2935
        %v3100 = vpop.f32.mrb[0].mxu0
        %v3101 = vadd.f32 0.0, %v3100
        %v3102 = vpop.f32.mrb[0].mxu0
        %3103 = vmatprep.mubr.f32.mxu0 0.0
        %3104 = vmatmul.mubr.f32.gmra.mrb[0].mxu0 %v2938
        %v3105 = vpop.f32.mrb[0].mxu0
        %v3106 = vadd.f32 0.0, %v3105
        %v3107 = vpop.f32.mrb[0].mxu0
        %3108 = vmatprep.mubr.f32.mxu0 0.0
        %3109 = vmatmul.mubr.f32.gmra.mrb[0].mxu0 %v2941
        %v3110 = vpop.f32.mrb[0].mxu0
        %v3111 = vadd.f32 0.0, %v3110
        %v3112 = vpop.f32.mrb[0].mxu0
        %3113 = vmatprep.mubr.f32.mxu0 0.0
        %3114 = vmatmul.mubr.f32.gmra.mrb[0].mxu0 %v2944
        %v3115 = vpop.f32.mrb[0].mxu0
        %v3116 = vadd.f32 0.0, %v3115
        %v3117 = vpop.f32.mrb[0].mxu0
        %3118 = vmatprep.mubr.f32.mxu0 0.0
        %3119 = vmatmul.mubr.f32.gmra.mrb[0].mxu0 %v2947
        %v3120 = vpop.f32.mrb[0].mxu0
        %v3121 = vadd.f32 0.0, %v3120
        %v3122 = vpop.f32.mrb[0].mxu0
        %3123 = vmatprep.mubr.f32.mxu0 0.0
        %3124 = vmatmul.mubr.f32.gmra.mrb[0].mxu0 %v2950
        %v3125 = vpop.f32.mrb[0].mxu0
        %v3126 = vadd.f32 0.0, %v3125
        %v3127 = vpop.f32.mrb[0].mxu0
        %3128 = vmatprep.mubr.f32.mxu0 0.0
        %3129 = vmatmul.mubr.f32.gmra.mrb[0].mxu0 %v2953
        %v3130 = vpop.f32.mrb[0].mxu0
        %v3131 = vadd.f32 0.0, %v3130
        %v3132 = vpop.f32.mrb[0].mxu0
        %3133 = vmatprep.mubr.f32.mxu0 0.0
        %3134 = vmatmul.mubr.f32.gmra.mrb[0].mxu0 %v2956
        %v3135 = vpop.f32.mrb[0].mxu0
        %v3136 = vadd.f32 0.0, %v3135
        %v3137 = vpop.f32.mrb[0].mxu0
        %3138 = vmatprep.mubr.f32.mxu0 0.0
        %3139 = vmatmul.mubr.f32.gmra.mrb[0].mxu0 %v2959
        %v3140 = vpop.f32.mrb[0].mxu0
        %v3141 = vadd.f32 0.0, %v3140
        %v3142 = vpop.f32.mrb[0].mxu0
        %3143 = vmatprep.mubr.f32.mxu0 0.0
        %3144 = vmatmul.mubr.f32.gmra.mrb[0].mxu0 %v2962
        %v3145 = vpop.f32.mrb[0].mxu0
        %v3146 = vadd.f32 0.0, %v3145
        %v3147 = vpop.f32.mrb[0].mxu0
        %3148 = vmatprep.mubr.f32.mxu0 0.0
        %3149 = vmatmul.mubr.f32.gmra.mrb[0].mxu0 %v2965
        %v3150 = vpop.f32.mrb[0].mxu0
        %v3151 = vadd.f32 0.0, %v3150
        %v3152 = vpop.f32.mrb[0].mxu0
        %3153 = vmatprep.mubr.f32.mxu0 0.0
        %3154 = vmatmul.mubr.f32.gmra.mrb[0].mxu0 %v2968
        %v3155 = vpop.f32.mrb[0].mxu0
        %v3156 = vadd.f32 0.0, %v3155
        %v3157 = vpop.f32.mrb[0].mxu0
        %3158 = vmatprep.mubr.f32.mxu0 0.0
        %3159 = vmatmul.mubr.f32.gmra.mrb[0].mxu0 %v2971
        %v3160 = vpop.f32.mrb[0].mxu0
        %v3161 = vadd.f32 0.0, %v3160
        %v3162 = vpop.f32.mrb[0].mxu0
        %3163 = vmatprep.mubr.f32.mxu0 0.0
        %3164 = vmatmul.mubr.f32.gmra.mrb[0].mxu0 %v2974
        %v3165 = vpop.f32.mrb[0].mxu0
        %v3166 = vadd.f32 0.0, %v3165
        %v3167 = vpop.f32.mrb[0].mxu0
        %3168 = vmatprep.mubr.f32.mxu0 0.0
        %3169 = vmatmul.mubr.f32.gmra.mrb[0].mxu0 %v2977
        %v3170 = vpop.f32.mrb[0].mxu0
        %v3171 = vadd.f32 0.0, %v3170
        %v3172 = vpop.f32.mrb[0].mxu0
        %3173 = vmatprep.mubr.f32.mxu0 0.0
        %3174 = vmatmul.mubr.f32.gmra.mrb[0].mxu0 %v2980
        %v3175 = vpop.f32.mrb[0].mxu0
        %v3176 = vadd.f32 0.0, %v3175
        %v3177 = vpop.f32.mrb[0].mxu0
        %3178 = vmatprep.mubr.f32.mxu0 0.0
        %3179 = vmatmul.mubr.f32.gmra.mrb[0].mxu0 %v2983
        %v3180 = vpop.f32.mrb[0].mxu0
        %v3181 = vadd.f32 0.0, %v3180
        %v3182 = vpop.f32.mrb[0].mxu0
        %3183 = vmatprep.mubr.f32.mxu0 0.0
        %3184 = vmatmul.mubr.f32.gmra.mrb[0].mxu0 %v2986
        %v3185 = vpop.f32.mrb[0].mxu0
        %v3186 = vadd.f32 0.0, %v3185
        %v3187 = vpop.f32.mrb[0].mxu0
        %3188 = vmatprep.mubr.f32.mxu0 0.0
        %3189 = vmatmul.mubr.f32.gmra.mrb[0].mxu0 %v2989
        %v3190 = vpop.f32.mrb[0].mxu0
        %v3191 = vadd.f32 0.0, %v3190
        %v3192 = vpop.f32.mrb[0].mxu0
        %3193 = vmatprep.mubr.f32.mxu0 0.0
        %3194 = vmatmul.mubr.f32.gmra.mrb[0].mxu0 %v2992
        %v3195 = vpop.f32.mrb[0].mxu0
        %v3196 = vadd.f32 0.0, %v3195
        %v3197 = vpop.f32.mrb[0].mxu0
        %3198 = vmatprep.mubr.f32.mxu0 0.0
        %3199 = vmatmul.mubr.f32.gmra.mrb[0].mxu0 %v2995
        %v3200 = vpop.f32.mrb[0].mxu0
        %v3201 = vadd.f32 0.0, %v3200
        %v3202 = vpop.f32.mrb[0].mxu0
        %3203 = vmatprep.mubr.f32.mxu0 0.0
        %3204 = vmatmul.mubr.f32.gmra.mrb[0].mxu0 %v2998
        %v3205 = vpop.f32.mrb[0].mxu0
        %v3206 = vadd.f32 0.0, %v3205
        %v3207 = vpop.f32.mrb[0].mxu0
        %3208 = vmatprep.mubr.f32.mxu0 0.0
        %3209 = vmatmul.mubr.f32.gmra.mrb[0].mxu0 %v3001
        %v3210 = vpop.f32.mrb[0].mxu0
        %v3211 = vadd.f32 0.0, %v3210
        %v3212 = vpop.f32.mrb[0].mxu0
        %3213 = vmatprep.mubr.f32.mxu0 0.0
        %3214 = vmatmul.mubr.f32.gmra.mrb[0].mxu0 %v3004
        %v3215 = vpop.f32.mrb[0].mxu0
        %v3216 = vadd.f32 0.0, %v3215
        %v3217 = vpop.f32.mrb[0].mxu0
        %3218 = vmatprep.mubr.f32.mxu0 0.0
        %3219 = vmatmul.mubr.f32.gmra.mrb[0].mxu0 %v3007
        %v3220 = vpop.f32.mrb[0].mxu0
        %v3221 = vadd.f32 0.0, %v3220
        %v3222 = vpop.f32.mrb[0].mxu0
        %3223 = vmatprep.mubr.f32.mxu0 0.0
        %3224 = vmatmul.mubr.f32.gmra.mrb[0].mxu0 %v3010
        %v3225 = vpop.f32.mrb[0].mxu0
        %v3226 = vadd.f32 0.0, %v3225
        %v3227 = vpop.f32.mrb[0].mxu0
        %3228 = vmatprep.mubr.f32.mxu0 0.0
        %3229 = vmatmul.mubr.f32.gmra.mrb[0].mxu0 %v3013
        %v3230 = vpop.f32.mrb[0].mxu0
        %v3231 = vadd.f32 0.0, %v3230
        %v3232 = vpop.f32.mrb[0].mxu0
        %3233 = vmatprep.mubr.f32.mxu0 0.0
        %3234 = vmatmul.mubr.f32.gmra.mrb[0].mxu0 %v3016
        %v3235 = vpop.f32.mrb[0].mxu0
        %v3236 = vadd.f32 0.0, %v3235
        %v3237 = vpop.f32.mrb[0].mxu0
        %3238 = vmatprep.mubr.f32.mxu0 0.0
        %3239 = vmatmul.mubr.f32.gmra.mrb[0].mxu0 %v3019
        %v3240 = vpop.f32.mrb[0].mxu0
        %v3241 = vadd.f32 0.0, %v3240
        %v3242 = vpop.f32.mrb[0].mxu0
        %3243 = vmatprep.mubr.f32.mxu0 0.0
        %3244 = vmatmul.mubr.f32.gmra.mrb[0].mxu0 %v3022
        %v3245 = vpop.f32.mrb[0].mxu0
        %v3246 = vadd.f32 0.0, %v3245
        %v3247 = vpop.f32.mrb[0].mxu0
        %3248 = vdwg.mxu0
        %v3249 = vadd.f32 %v2887, %v3091
        %v3250 = vadd.f32 %v2888, %v3096
        %v3251 = vadd.f32 %v2889, %v3101
        %v3252 = vadd.f32 %v2890, %v3106
        %v3253 = vadd.f32 %v2891, %v3111
        %v3254 = vadd.f32 %v2892, %v3116
        %v3255 = vadd.f32 %v2893, %v3121
        %v3256 = vadd.f32 %v2894, %v3126
        %v3257 = vadd.f32 %v2895, %v3131
        %v3258 = vadd.f32 %v2896, %v3136
        %v3259 = vadd.f32 %v2897, %v3141
        %v3260 = vadd.f32 %v2898, %v3146
        %v3261 = vadd.f32 %v2899, %v3151
        %v3262 = vadd.f32 %v2900, %v3156
        %v3263 = vadd.f32 %v2901, %v3161
        %v3264 = vadd.f32 %v2902, %v3166
        %v3265 = vadd.f32 %v2903, %v3171
        %v3266 = vadd.f32 %v2904, %v3176
        %v3267 = vadd.f32 %v2905, %v3181
        %v3268 = vadd.f32 %v2906, %v3186
        %v3269 = vadd.f32 %v2907, %v3191
        %v3270 = vadd.f32 %v2908, %v3196
        %v3271 = vadd.f32 %v2909, %v3201
        %v3272 = vadd.f32 %v2910, %v3206
        %v3273 = vadd.f32 %v2911, %v3211
        %v3274 = vadd.f32 %v2912, %v3216
        %v3275 = vadd.f32 %v2913, %v3221
        %v3276 = vadd.f32 %v2914, %v3226
        %v3277 = vadd.f32 %v2915, %v3231
        %v3278 = vadd.f32 %v2916, %v3236
        %v3279 = vadd.f32 %v2917, %v3241
        %v3280 = vadd.f32 %v2918, %v3246
        %3281 = vst [vmem:[#allocation3] sm:$0xff] %v3249
        %3282 = vst [vmem:[#allocation3 + $0x8] sm:$0xff] %v3250
        %3283 = vst [vmem:[#allocation3 + $0x10] sm:$0xff] %v3251
        %3284 = vst [vmem:[#allocation3 + $0x18] sm:$0xff] %v3252
        %3285 = vst [vmem:[#allocation3 + $0x20] sm:$0xff] %v3253
        %3286 = vst [vmem:[#allocation3 + $0x28] sm:$0xff] %v3254
        %3287 = vst [vmem:[#allocation3 + $0x30] sm:$0xff] %v3255
        %3288 = vst [vmem:[#allocation3 + $0x38] sm:$0xff] %v3256
        %3289 = vst [vmem:[#allocation3 + $0x40] sm:$0xff] %v3257
        %3290 = vst [vmem:[#allocation3 + $0x48] sm:$0xff] %v3258
        %3291 = vst [vmem:[#allocation3 + $0x50] sm:$0xff] %v3259
        %3292 = vst [vmem:[#allocation3 + $0x58] sm:$0xff] %v3260
        %3293 = vst [vmem:[#allocation3 + $0x60] sm:$0xff] %v3261
        %3294 = vst [vmem:[#allocation3 + $0x68] sm:$0xff] %v3262
        %3295 = vst [vmem:[#allocation3 + $0x70] sm:$0xff] %v3263
        %3296 = vst [vmem:[#allocation3 + $0x78] sm:$0xff] %v3264
        %3297 = vst [vmem:[#allocation3 + $0x80] sm:$0xff] %v3265
        %3298 = vst [vmem:[#allocation3 + $0x88] sm:$0xff] %v3266
        %3299 = vst [vmem:[#allocation3 + $0x90] sm:$0xff] %v3267
        %3300 = vst [vmem:[#allocation3 + $0x98] sm:$0xff] %v3268
        %3301 = vst [vmem:[#allocation3 + $0xa0] sm:$0xff] %v3269
        %3302 = vst [vmem:[#allocation3 + $0xa8] sm:$0xff] %v3270
        %3303 = vst [vmem:[#allocation3 + $0xb0] sm:$0xff] %v3271
        %3304 = vst [vmem:[#allocation3 + $0xb8] sm:$0xff] %v3272
        %3305 = vst [vmem:[#allocation3 + $0xc0] sm:$0xff] %v3273
        %3306 = vst [vmem:[#allocation3 + $0xc8] sm:$0xff] %v3274
        %3307 = vst [vmem:[#allocation3 + $0xd0] sm:$0xff] %v3275
        %3308 = vst [vmem:[#allocation3 + $0xd8] sm:$0xff] %v3276
        %3309 = vst [vmem:[#allocation3 + $0xe0] sm:$0xff] %v3277
        %3310 = vst [vmem:[#allocation3 + $0xe8] sm:$0xff] %v3278
        %3311 = vst [vmem:[#allocation3 + $0xf0] sm:$0xff] %v3279
        %3312 = vst [vmem:[#allocation3 + $0xf8] sm:$0xff] %v3280
        %v3313 = vld [vmem:[%s1410 + $0x1] sm:$0xff]
        %v3314 = vld [vmem:[%s1410 + $0x11] sm:$0xff]
        %v3315 = vld [vmem:[%s1410 + $0x21] sm:$0xff]
        %v3316 = vld [vmem:[%s1410 + $0x31] sm:$0xff]
        %v3317 = vld [vmem:[%s1410 + $0x41] sm:$0xff]
        %v3318 = vld [vmem:[%s1410 + $0x51] sm:$0xff]
        %v3319 = vld [vmem:[%s1410 + $0x61] sm:$0xff]
        %v3320 = vld [vmem:[%s1410 + $0x71] sm:$0xff]
        %v3321 = vld [vmem:[%s1410 + $0xa1] sm:$0xff]
        %v3322 = vld [vmem:[%s1410 + $0xb1] sm:$0xff]
        %v3323 = vld [vmem:[%s1410 + $0xc1] sm:$0xff]
        %v3324 = vld [vmem:[%s1410 + $0xd1] sm:$0xff]
        %v3325 = vld [vmem:[%s1410 + $0xe1] sm:$0xff]
        %v3326 = vld [vmem:[%s1410 + $0xf1] sm:$0xff]
        %v3327 = vld [vmem:[%s1410 + $0x101] sm:$0xff]
        %v3328 = vld [vmem:[%s1410 + $0x111] sm:$0xff]
        %v3329 = vld [vmem:[%s1410 + $0x141] sm:$0xff]
        %v3330 = vld [vmem:[%s1410 + $0x151] sm:$0xff]
        %v3331 = vld [vmem:[%s1410 + $0x161] sm:$0xff]
        %v3332 = vld [vmem:[%s1410 + $0x171] sm:$0xff]
        %v3333 = vld [vmem:[%s1410 + $0x181] sm:$0xff]
        %v3334 = vld [vmem:[%s1410 + $0x191] sm:$0xff]
        %v3335 = vld [vmem:[%s1410 + $0x1a1] sm:$0xff]
        %v3336 = vld [vmem:[%s1410 + $0x1b1] sm:$0xff]
        %v3337 = vld [vmem:[%s1410 + $0x1e1] sm:$0xff]
        %v3338 = vld [vmem:[%s1410 + $0x1f1] sm:$0xff]
        %v3339 = vld [vmem:[%s1410 + $0x201] sm:$0xff]
        %v3340 = vld [vmem:[%s1410 + $0x211] sm:$0xff]
        %v3341 = vld [vmem:[%s1410 + $0x221] sm:$0xff]
        %v3342 = vld [vmem:[%s1410 + $0x231] sm:$0xff]
        %v3343 = vld [vmem:[%s1410 + $0x241] sm:$0xff]
        %v3344 = vld [vmem:[%s1410 + $0x251] sm:$0xff]
        %v3345 = vld [vmem:[#allocation3] sm:$0xff]
        %v3346 = vld [vmem:[#allocation3 + $0x8] sm:$0xff]
        %v3347 = vld [vmem:[#allocation3 + $0x10] sm:$0xff]
        %v3348 = vld [vmem:[#allocation3 + $0x18] sm:$0xff]
        %v3349 = vld [vmem:[#allocation3 + $0x20] sm:$0xff]
        %v3350 = vld [vmem:[#allocation3 + $0x28] sm:$0xff]
        %v3351 = vld [vmem:[#allocation3 + $0x30] sm:$0xff]
        %v3352 = vld [vmem:[#allocation3 + $0x38] sm:$0xff]
        %v3353 = vld [vmem:[#allocation3 + $0x40] sm:$0xff]
        %v3354 = vld [vmem:[#allocation3 + $0x48] sm:$0xff]
        %v3355 = vld [vmem:[#allocation3 + $0x50] sm:$0xff]
        %v3356 = vld [vmem:[#allocation3 + $0x58] sm:$0xff]
        %v3357 = vld [vmem:[#allocation3 + $0x60] sm:$0xff]
        %v3358 = vld [vmem:[#allocation3 + $0x68] sm:$0xff]
        %v3359 = vld [vmem:[#allocation3 + $0x70] sm:$0xff]
        %v3360 = vld [vmem:[#allocation3 + $0x78] sm:$0xff]
        %v3361 = vld [vmem:[#allocation3 + $0x80] sm:$0xff]
        %v3362 = vld [vmem:[#allocation3 + $0x88] sm:$0xff]
        %v3363 = vld [vmem:[#allocation3 + $0x90] sm:$0xff]
        %v3364 = vld [vmem:[#allocation3 + $0x98] sm:$0xff]
        %v3365 = vld [vmem:[#allocation3 + $0xa0] sm:$0xff]
        %v3366 = vld [vmem:[#allocation3 + $0xa8] sm:$0xff]
        %v3367 = vld [vmem:[#allocation3 + $0xb0] sm:$0xff]
        %v3368 = vld [vmem:[#allocation3 + $0xb8] sm:$0xff]
        %v3369 = vld [vmem:[#allocation3 + $0xc0] sm:$0xff]
        %v3370 = vld [vmem:[#allocation3 + $0xc8] sm:$0xff]
        %v3371 = vld [vmem:[#allocation3 + $0xd0] sm:$0xff]
        %v3372 = vld [vmem:[#allocation3 + $0xd8] sm:$0xff]
        %v3373 = vld [vmem:[#allocation3 + $0xe0] sm:$0xff]
        %v3374 = vld [vmem:[#allocation3 + $0xe8] sm:$0xff]
        %v3375 = vld [vmem:[#allocation3 + $0xf0] sm:$0xff]
        %v3376 = vld [vmem:[#allocation3 + $0xf8] sm:$0xff]
        %s3377 = scalar_lea.vmem [#allocation15], 256
        %v3378 = vld [vmem:[%s3377] sm:$0xff]
        %v3379 = vld [vmem:[%s3377 + $0x8] sm:$0xff]
        %v3380 = vld [vmem:[%s3377 + $0x10] sm:$0xff]
        %v3381 = vld [vmem:[%s3377 + $0x18] sm:$0xff]
        %v3382 = vld [vmem:[%s3377 + $0x20] sm:$0xff]
        %v3383 = vld [vmem:[%s3377 + $0x28] sm:$0xff]
        %v3384 = vld [vmem:[%s3377 + $0x30] sm:$0xff]
        %v3385 = vld [vmem:[%s3377 + $0x38] sm:$0xff]
        %v3387 = vsel %vm447, %v3313, 0
        %v3390 = vsel %vm447, %v3314, 0
        %v3393 = vsel %vm447, %v3315, 0
        %v3396 = vsel %vm447, %v3316, 0
        %v3399 = vsel %vm447, %v3317, 0
        %v3402 = vsel %vm447, %v3318, 0
        %v3405 = vsel %vm447, %v3319, 0
        %v3408 = vsel %vm447, %v3320, 0
        %v3411 = vsel %vm447, %v3321, 0
        %v3414 = vsel %vm447, %v3322, 0
        %v3417 = vsel %vm447, %v3323, 0
        %v3420 = vsel %vm447, %v3324, 0
        %v3423 = vsel %vm447, %v3325, 0
        %v3426 = vsel %vm447, %v3326, 0
        %v3429 = vsel %vm447, %v3327, 0
        %v3432 = vsel %vm447, %v3328, 0
        %v3435 = vsel %vm447, %v3329, 0
        %v3438 = vsel %vm447, %v3330, 0
        %v3441 = vsel %vm447, %v3331, 0
        %v3444 = vsel %vm447, %v3332, 0
        %v3447 = vsel %vm447, %v3333, 0
        %v3450 = vsel %vm447, %v3334, 0
        %v3453 = vsel %vm447, %v3335, 0
        %v3456 = vsel %vm447, %v3336, 0
        %v3459 = vsel %vm447, %v3337, 0
        %v3462 = vsel %vm447, %v3338, 0
        %v3465 = vsel %vm447, %v3339, 0
        %v3468 = vsel %vm447, %v3340, 0
        %v3471 = vsel %vm447, %v3341, 0
        %v3474 = vsel %vm447, %v3342, 0
        %v3477 = vsel %vm447, %v3343, 0
        %v3480 = vsel %vm447, %v3344, 0
        %3482 = vmatprep.subr.mxu0 0.0
        %3483 = vmatpush1.msra.mxu0 %v3378
        %3484 = vmatprep.subr.mxu0 0.0
        %3485 = vmatpush1.msra.mxu0 %v3379
        %3486 = vmatprep.subr.mxu0 0.0
        %3487 = vmatpush1.msra.mxu0 %v3380
        %3488 = vmatprep.subr.mxu0 0.0
        %3489 = vmatpush1.msra.mxu0 %v3381
        %3490 = vmatprep.subr.mxu0 0.0
        %3491 = vmatpush1.msra.mxu0 %v3382
        %3492 = vmatprep.subr.mxu0 0.0
        %3493 = vmatpush1.msra.mxu0 %v3383
        %3494 = vmatprep.subr.mxu0 0.0
        %3495 = vmatpush1.msra.mxu0 %v3384
        %3496 = vmatprep.subr.mxu0 0.0
        %3497 = vmatpush1.msra.mxu0 %v3385
        %3498 = vmatprep.subr.mxu0 0.0
        %3499 = vmatpush1.msra.mxu0 0.0
        %3500 = vmatprep.subr.mxu0 0.0
        %3501 = vmatpush1.msra.mxu0 0.0
        %3502 = vmatprep.subr.mxu0 0.0
        %3503 = vmatpush1.msra.mxu0 0.0
        %3504 = vmatprep.subr.mxu0 0.0
        %3505 = vmatpush1.msra.mxu0 0.0
        %3506 = vmatprep.subr.mxu0 0.0
        %3507 = vmatpush1.msra.mxu0 0.0
        %3508 = vmatprep.subr.mxu0 0.0
        %3509 = vmatpush1.msra.mxu0 0.0
        %3510 = vmatprep.subr.mxu0 0.0
        %3511 = vmatpush1.msra.mxu0 0.0
        %3512 = vmatprep.subr.mxu0 0.0
        %3513 = vmatpush1.msra.mxu0 0.0
        %3514 = vmatprep.subr.mxu0 0.0
        %3515 = vmatpush1.msra.mxu0 0.0
        %3516 = vmatprep.subr.mxu0 0.0
        %3517 = vmatpush1.msra.mxu0 0.0
        %3518 = vmatprep.subr.mxu0 0.0
        %3519 = vmatpush1.msra.mxu0 0.0
        %3520 = vmatprep.subr.mxu0 0.0
        %3521 = vmatpush1.msra.mxu0 0.0
        %3522 = vmatprep.subr.mxu0 0.0
        %3523 = vmatpush1.msra.mxu0 0.0
        %3524 = vmatprep.subr.mxu0 0.0
        %3525 = vmatpush1.msra.mxu0 0.0
        %3526 = vmatprep.subr.mxu0 0.0
        %3527 = vmatpush1.msra.mxu0 0.0
        %3528 = vmatprep.subr.mxu0 0.0
        %3529 = vmatpush1.msra.mxu0 0.0
        %3530 = vmatprep.subr.mxu0 0.0
        %3531 = vmatpush1.msra.mxu0 0.0
        %3532 = vmatprep.subr.mxu0 0.0
        %3533 = vmatpush1.msra.mxu0 0.0
        %3534 = vmatprep.subr.mxu0 0.0
        %3535 = vmatpush1.msra.mxu0 0.0
        %3536 = vmatprep.subr.mxu0 0.0
        %3537 = vmatpush1.msra.mxu0 0.0
        %3538 = vmatprep.subr.mxu0 0.0
        %3539 = vmatpush1.msra.mxu0 0.0
        %3540 = vmatprep.subr.mxu0 0.0
        %3541 = vmatpush1.msra.mxu0 0.0
        %3542 = vmatprep.subr.mxu0 0.0
        %3543 = vmatpush1.msra.mxu0 0.0
        %3544 = vmatprep.subr.mxu0 0.0
        %3545 = vmatpush1.msra.mxu0 0.0
        %3546 = vmatprep.mubr.f32.mxu0 0.0
        %3547 = vmatmul.mubr.f32.gmra.mrb[0].mxu0 %v3387
        %v3548 = vpop.f32.mrb[0].mxu0
        %v3549 = vadd.f32 0.0, %v3548
        %v3550 = vpop.f32.mrb[0].mxu0
        %3551 = vmatprep.mubr.f32.mxu0 0.0
        %3552 = vmatmul.mubr.f32.gmra.mrb[0].mxu0 %v3390
        %v3553 = vpop.f32.mrb[0].mxu0
        %v3554 = vadd.f32 0.0, %v3553
        %v3555 = vpop.f32.mrb[0].mxu0
        %3556 = vmatprep.mubr.f32.mxu0 0.0
        %3557 = vmatmul.mubr.f32.gmra.mrb[0].mxu0 %v3393
        %v3558 = vpop.f32.mrb[0].mxu0
        %v3559 = vadd.f32 0.0, %v3558
        %v3560 = vpop.f32.mrb[0].mxu0
        %3561 = vmatprep.mubr.f32.mxu0 0.0
        %3562 = vmatmul.mubr.f32.gmra.mrb[0].mxu0 %v3396
        %v3563 = vpop.f32.mrb[0].mxu0
        %v3564 = vadd.f32 0.0, %v3563
        %v3565 = vpop.f32.mrb[0].mxu0
        %3566 = vmatprep.mubr.f32.mxu0 0.0
        %3567 = vmatmul.mubr.f32.gmra.mrb[0].mxu0 %v3399
        %v3568 = vpop.f32.mrb[0].mxu0
        %v3569 = vadd.f32 0.0, %v3568
        %v3570 = vpop.f32.mrb[0].mxu0
        %3571 = vmatprep.mubr.f32.mxu0 0.0
        %3572 = vmatmul.mubr.f32.gmra.mrb[0].mxu0 %v3402
        %v3573 = vpop.f32.mrb[0].mxu0
        %v3574 = vadd.f32 0.0, %v3573
        %v3575 = vpop.f32.mrb[0].mxu0
        %3576 = vmatprep.mubr.f32.mxu0 0.0
        %3577 = vmatmul.mubr.f32.gmra.mrb[0].mxu0 %v3405
        %v3578 = vpop.f32.mrb[0].mxu0
        %v3579 = vadd.f32 0.0, %v3578
        %v3580 = vpop.f32.mrb[0].mxu0
        %3581 = vmatprep.mubr.f32.mxu0 0.0
        %3582 = vmatmul.mubr.f32.gmra.mrb[0].mxu0 %v3408
        %v3583 = vpop.f32.mrb[0].mxu0
        %v3584 = vadd.f32 0.0, %v3583
        %v3585 = vpop.f32.mrb[0].mxu0
        %3586 = vmatprep.mubr.f32.mxu0 0.0
        %3587 = vmatmul.mubr.f32.gmra.mrb[0].mxu0 %v3411
        %v3588 = vpop.f32.mrb[0].mxu0
        %v3589 = vadd.f32 0.0, %v3588
        %v3590 = vpop.f32.mrb[0].mxu0
        %3591 = vmatprep.mubr.f32.mxu0 0.0
        %3592 = vmatmul.mubr.f32.gmra.mrb[0].mxu0 %v3414
        %v3593 = vpop.f32.mrb[0].mxu0
        %v3594 = vadd.f32 0.0, %v3593
        %v3595 = vpop.f32.mrb[0].mxu0
        %3596 = vmatprep.mubr.f32.mxu0 0.0
        %3597 = vmatmul.mubr.f32.gmra.mrb[0].mxu0 %v3417
        %v3598 = vpop.f32.mrb[0].mxu0
        %v3599 = vadd.f32 0.0, %v3598
        %v3600 = vpop.f32.mrb[0].mxu0
        %3601 = vmatprep.mubr.f32.mxu0 0.0
        %3602 = vmatmul.mubr.f32.gmra.mrb[0].mxu0 %v3420
        %v3603 = vpop.f32.mrb[0].mxu0
        %v3604 = vadd.f32 0.0, %v3603
        %v3605 = vpop.f32.mrb[0].mxu0
        %3606 = vmatprep.mubr.f32.mxu0 0.0
        %3607 = vmatmul.mubr.f32.gmra.mrb[0].mxu0 %v3423
        %v3608 = vpop.f32.mrb[0].mxu0
        %v3609 = vadd.f32 0.0, %v3608
        %v3610 = vpop.f32.mrb[0].mxu0
        %3611 = vmatprep.mubr.f32.mxu0 0.0
        %3612 = vmatmul.mubr.f32.gmra.mrb[0].mxu0 %v3426
        %v3613 = vpop.f32.mrb[0].mxu0
        %v3614 = vadd.f32 0.0, %v3613
        %v3615 = vpop.f32.mrb[0].mxu0
        %3616 = vmatprep.mubr.f32.mxu0 0.0
        %3617 = vmatmul.mubr.f32.gmra.mrb[0].mxu0 %v3429
        %v3618 = vpop.f32.mrb[0].mxu0
        %v3619 = vadd.f32 0.0, %v3618
        %v3620 = vpop.f32.mrb[0].mxu0
        %3621 = vmatprep.mubr.f32.mxu0 0.0
        %3622 = vmatmul.mubr.f32.gmra.mrb[0].mxu0 %v3432
        %v3623 = vpop.f32.mrb[0].mxu0
        %v3624 = vadd.f32 0.0, %v3623
        %v3625 = vpop.f32.mrb[0].mxu0
        %3626 = vmatprep.mubr.f32.mxu0 0.0
        %3627 = vmatmul.mubr.f32.gmra.mrb[0].mxu0 %v3435
        %v3628 = vpop.f32.mrb[0].mxu0
        %v3629 = vadd.f32 0.0, %v3628
        %v3630 = vpop.f32.mrb[0].mxu0
        %3631 = vmatprep.mubr.f32.mxu0 0.0
        %3632 = vmatmul.mubr.f32.gmra.mrb[0].mxu0 %v3438
        %v3633 = vpop.f32.mrb[0].mxu0
        %v3634 = vadd.f32 0.0, %v3633
        %v3635 = vpop.f32.mrb[0].mxu0
        %3636 = vmatprep.mubr.f32.mxu0 0.0
        %3637 = vmatmul.mubr.f32.gmra.mrb[0].mxu0 %v3441
        %v3638 = vpop.f32.mrb[0].mxu0
        %v3639 = vadd.f32 0.0, %v3638
        %v3640 = vpop.f32.mrb[0].mxu0
        %3641 = vmatprep.mubr.f32.mxu0 0.0
        %3642 = vmatmul.mubr.f32.gmra.mrb[0].mxu0 %v3444
        %v3643 = vpop.f32.mrb[0].mxu0
        %v3644 = vadd.f32 0.0, %v3643
        %v3645 = vpop.f32.mrb[0].mxu0
        %3646 = vmatprep.mubr.f32.mxu0 0.0
        %3647 = vmatmul.mubr.f32.gmra.mrb[0].mxu0 %v3447
        %v3648 = vpop.f32.mrb[0].mxu0
        %v3649 = vadd.f32 0.0, %v3648
        %v3650 = vpop.f32.mrb[0].mxu0
        %3651 = vmatprep.mubr.f32.mxu0 0.0
        %3652 = vmatmul.mubr.f32.gmra.mrb[0].mxu0 %v3450
        %v3653 = vpop.f32.mrb[0].mxu0
        %v3654 = vadd.f32 0.0, %v3653
        %v3655 = vpop.f32.mrb[0].mxu0
        %3656 = vmatprep.mubr.f32.mxu0 0.0
        %3657 = vmatmul.mubr.f32.gmra.mrb[0].mxu0 %v3453
        %v3658 = vpop.f32.mrb[0].mxu0
        %v3659 = vadd.f32 0.0, %v3658
        %v3660 = vpop.f32.mrb[0].mxu0
        %3661 = vmatprep.mubr.f32.mxu0 0.0
        %3662 = vmatmul.mubr.f32.gmra.mrb[0].mxu0 %v3456
        %v3663 = vpop.f32.mrb[0].mxu0
        %v3664 = vadd.f32 0.0, %v3663
        %v3665 = vpop.f32.mrb[0].mxu0
        %3666 = vmatprep.mubr.f32.mxu0 0.0
        %3667 = vmatmul.mubr.f32.gmra.mrb[0].mxu0 %v3459
        %v3668 = vpop.f32.mrb[0].mxu0
        %v3669 = vadd.f32 0.0, %v3668
        %v3670 = vpop.f32.mrb[0].mxu0
        %3671 = vmatprep.mubr.f32.mxu0 0.0
        %3672 = vmatmul.mubr.f32.gmra.mrb[0].mxu0 %v3462
        %v3673 = vpop.f32.mrb[0].mxu0
        %v3674 = vadd.f32 0.0, %v3673
        %v3675 = vpop.f32.mrb[0].mxu0
        %3676 = vmatprep.mubr.f32.mxu0 0.0
        %3677 = vmatmul.mubr.f32.gmra.mrb[0].mxu0 %v3465
        %v3678 = vpop.f32.mrb[0].mxu0
        %v3679 = vadd.f32 0.0, %v3678
        %v3680 = vpop.f32.mrb[0].mxu0
        %3681 = vmatprep.mubr.f32.mxu0 0.0
        %3682 = vmatmul.mubr.f32.gmra.mrb[0].mxu0 %v3468
        %v3683 = vpop.f32.mrb[0].mxu0
        %v3684 = vadd.f32 0.0, %v3683
        %v3685 = vpop.f32.mrb[0].mxu0
        %3686 = vmatprep.mubr.f32.mxu0 0.0
        %3687 = vmatmul.mubr.f32.gmra.mrb[0].mxu0 %v3471
        %v3688 = vpop.f32.mrb[0].mxu0
        %v3689 = vadd.f32 0.0, %v3688
        %v3690 = vpop.f32.mrb[0].mxu0
        %3691 = vmatprep.mubr.f32.mxu0 0.0
        %3692 = vmatmul.mubr.f32.gmra.mrb[0].mxu0 %v3474
        %v3693 = vpop.f32.mrb[0].mxu0
        %v3694 = vadd.f32 0.0, %v3693
        %v3695 = vpop.f32.mrb[0].mxu0
        %3696 = vmatprep.mubr.f32.mxu0 0.0
        %3697 = vmatmul.mubr.f32.gmra.mrb[0].mxu0 %v3477
        %v3698 = vpop.f32.mrb[0].mxu0
        %v3699 = vadd.f32 0.0, %v3698
        %v3700 = vpop.f32.mrb[0].mxu0
        %3701 = vmatprep.mubr.f32.mxu0 0.0
        %3702 = vmatmul.mubr.f32.gmra.mrb[0].mxu0 %v3480
        %v3703 = vpop.f32.mrb[0].mxu0
        %v3704 = vadd.f32 0.0, %v3703
        %v3705 = vpop.f32.mrb[0].mxu0
        %3706 = vdwg.mxu0
        %v3707 = vadd.f32 %v3345, %v3549
        %v3708 = vadd.f32 %v3346, %v3554
        %v3709 = vadd.f32 %v3347, %v3559
        %v3710 = vadd.f32 %v3348, %v3564
        %v3711 = vadd.f32 %v3349, %v3569
        %v3712 = vadd.f32 %v3350, %v3574
        %v3713 = vadd.f32 %v3351, %v3579
        %v3714 = vadd.f32 %v3352, %v3584
        %v3715 = vadd.f32 %v3353, %v3589
        %v3716 = vadd.f32 %v3354, %v3594
        %v3717 = vadd.f32 %v3355, %v3599
        %v3718 = vadd.f32 %v3356, %v3604
        %v3719 = vadd.f32 %v3357, %v3609
        %v3720 = vadd.f32 %v3358, %v3614
        %v3721 = vadd.f32 %v3359, %v3619
        %v3722 = vadd.f32 %v3360, %v3624
        %v3723 = vadd.f32 %v3361, %v3629
        %v3724 = vadd.f32 %v3362, %v3634
        %v3725 = vadd.f32 %v3363, %v3639
        %v3726 = vadd.f32 %v3364, %v3644
        %v3727 = vadd.f32 %v3365, %v3649
        %v3728 = vadd.f32 %v3366, %v3654
        %v3729 = vadd.f32 %v3367, %v3659
        %v3730 = vadd.f32 %v3368, %v3664
        %v3731 = vadd.f32 %v3369, %v3669
        %v3732 = vadd.f32 %v3370, %v3674
        %v3733 = vadd.f32 %v3371, %v3679
        %v3734 = vadd.f32 %v3372, %v3684
        %v3735 = vadd.f32 %v3373, %v3689
        %v3736 = vadd.f32 %v3374, %v3694
        %v3737 = vadd.f32 %v3375, %v3699
        %v3738 = vadd.f32 %v3376, %v3704
        %3739 = vst [vmem:[#allocation3] sm:$0xff] %v3707
        %3740 = vst [vmem:[#allocation3 + $0x8] sm:$0xff] %v3708
        %3741 = vst [vmem:[#allocation3 + $0x10] sm:$0xff] %v3709
        %3742 = vst [vmem:[#allocation3 + $0x18] sm:$0xff] %v3710
        %3743 = vst [vmem:[#allocation3 + $0x20] sm:$0xff] %v3711
        %3744 = vst [vmem:[#allocation3 + $0x28] sm:$0xff] %v3712
        %3745 = vst [vmem:[#allocation3 + $0x30] sm:$0xff] %v3713
        %3746 = vst [vmem:[#allocation3 + $0x38] sm:$0xff] %v3714
        %3747 = vst [vmem:[#allocation3 + $0x40] sm:$0xff] %v3715
        %3748 = vst [vmem:[#allocation3 + $0x48] sm:$0xff] %v3716
        %3749 = vst [vmem:[#allocation3 + $0x50] sm:$0xff] %v3717
        %3750 = vst [vmem:[#allocation3 + $0x58] sm:$0xff] %v3718
        %3751 = vst [vmem:[#allocation3 + $0x60] sm:$0xff] %v3719
        %3752 = vst [vmem:[#allocation3 + $0x68] sm:$0xff] %v3720
        %3753 = vst [vmem:[#allocation3 + $0x70] sm:$0xff] %v3721
        %3754 = vst [vmem:[#allocation3 + $0x78] sm:$0xff] %v3722
        %3755 = vst [vmem:[#allocation3 + $0x80] sm:$0xff] %v3723
        %3756 = vst [vmem:[#allocation3 + $0x88] sm:$0xff] %v3724
        %3757 = vst [vmem:[#allocation3 + $0x90] sm:$0xff] %v3725
        %3758 = vst [vmem:[#allocation3 + $0x98] sm:$0xff] %v3726
        %3759 = vst [vmem:[#allocation3 + $0xa0] sm:$0xff] %v3727
        %3760 = vst [vmem:[#allocation3 + $0xa8] sm:$0xff] %v3728
        %3761 = vst [vmem:[#allocation3 + $0xb0] sm:$0xff] %v3729
        %3762 = vst [vmem:[#allocation3 + $0xb8] sm:$0xff] %v3730
        %3763 = vst [vmem:[#allocation3 + $0xc0] sm:$0xff] %v3731
        %3764 = vst [vmem:[#allocation3 + $0xc8] sm:$0xff] %v3732
        %3765 = vst [vmem:[#allocation3 + $0xd0] sm:$0xff] %v3733
        %3766 = vst [vmem:[#allocation3 + $0xd8] sm:$0xff] %v3734
        %3767 = vst [vmem:[#allocation3 + $0xe0] sm:$0xff] %v3735
        %3768 = vst [vmem:[#allocation3 + $0xe8] sm:$0xff] %v3736
        %3769 = vst [vmem:[#allocation3 + $0xf0] sm:$0xff] %v3737
        %3770 = vst [vmem:[#allocation3 + $0xf8] sm:$0xff] %v3738
        %v3771 = vld [vmem:[%s1410 + $0x2] sm:$0xff]
        %v3772 = vld [vmem:[%s1410 + $0x12] sm:$0xff]
        %v3773 = vld [vmem:[%s1410 + $0x22] sm:$0xff]
        %v3774 = vld [vmem:[%s1410 + $0x32] sm:$0xff]
        %v3775 = vld [vmem:[%s1410 + $0x42] sm:$0xff]
        %v3776 = vld [vmem:[%s1410 + $0x52] sm:$0xff]
        %v3777 = vld [vmem:[%s1410 + $0x62] sm:$0xff]
        %v3778 = vld [vmem:[%s1410 + $0x72] sm:$0xff]
        %v3779 = vld [vmem:[%s1410 + $0xa2] sm:$0xff]
        %v3780 = vld [vmem:[%s1410 + $0xb2] sm:$0xff]
        %v3781 = vld [vmem:[%s1410 + $0xc2] sm:$0xff]
        %v3782 = vld [vmem:[%s1410 + $0xd2] sm:$0xff]
        %v3783 = vld [vmem:[%s1410 + $0xe2] sm:$0xff]
        %v3784 = vld [vmem:[%s1410 + $0xf2] sm:$0xff]
        %v3785 = vld [vmem:[%s1410 + $0x102] sm:$0xff]
        %v3786 = vld [vmem:[%s1410 + $0x112] sm:$0xff]
        %v3787 = vld [vmem:[%s1410 + $0x142] sm:$0xff]
        %v3788 = vld [vmem:[%s1410 + $0x152] sm:$0xff]
        %v3789 = vld [vmem:[%s1410 + $0x162] sm:$0xff]
        %v3790 = vld [vmem:[%s1410 + $0x172] sm:$0xff]
        %v3791 = vld [vmem:[%s1410 + $0x182] sm:$0xff]
        %v3792 = vld [vmem:[%s1410 + $0x192] sm:$0xff]
        %v3793 = vld [vmem:[%s1410 + $0x1a2] sm:$0xff]
        %v3794 = vld [vmem:[%s1410 + $0x1b2] sm:$0xff]
        %v3795 = vld [vmem:[%s1410 + $0x1e2] sm:$0xff]
        %v3796 = vld [vmem:[%s1410 + $0x1f2] sm:$0xff]
        %v3797 = vld [vmem:[%s1410 + $0x202] sm:$0xff]
        %v3798 = vld [vmem:[%s1410 + $0x212] sm:$0xff]
        %v3799 = vld [vmem:[%s1410 + $0x222] sm:$0xff]
        %v3800 = vld [vmem:[%s1410 + $0x232] sm:$0xff]
        %v3801 = vld [vmem:[%s1410 + $0x242] sm:$0xff]
        %v3802 = vld [vmem:[%s1410 + $0x252] sm:$0xff]
        %v3803 = vld [vmem:[#allocation3] sm:$0xff]
        %v3804 = vld [vmem:[#allocation3 + $0x8] sm:$0xff]
        %v3805 = vld [vmem:[#allocation3 + $0x10] sm:$0xff]
        %v3806 = vld [vmem:[#allocation3 + $0x18] sm:$0xff]
        %v3807 = vld [vmem:[#allocation3 + $0x20] sm:$0xff]
        %v3808 = vld [vmem:[#allocation3 + $0x28] sm:$0xff]
        %v3809 = vld [vmem:[#allocation3 + $0x30] sm:$0xff]
        %v3810 = vld [vmem:[#allocation3 + $0x38] sm:$0xff]
        %v3811 = vld [vmem:[#allocation3 + $0x40] sm:$0xff]
        %v3812 = vld [vmem:[#allocation3 + $0x48] sm:$0xff]
        %v3813 = vld [vmem:[#allocation3 + $0x50] sm:$0xff]
        %v3814 = vld [vmem:[#allocation3 + $0x58] sm:$0xff]
        %v3815 = vld [vmem:[#allocation3 + $0x60] sm:$0xff]
        %v3816 = vld [vmem:[#allocation3 + $0x68] sm:$0xff]
        %v3817 = vld [vmem:[#allocation3 + $0x70] sm:$0xff]
        %v3818 = vld [vmem:[#allocation3 + $0x78] sm:$0xff]
        %v3819 = vld [vmem:[#allocation3 + $0x80] sm:$0xff]
        %v3820 = vld [vmem:[#allocation3 + $0x88] sm:$0xff]
        %v3821 = vld [vmem:[#allocation3 + $0x90] sm:$0xff]
        %v3822 = vld [vmem:[#allocation3 + $0x98] sm:$0xff]
        %v3823 = vld [vmem:[#allocation3 + $0xa0] sm:$0xff]
        %v3824 = vld [vmem:[#allocation3 + $0xa8] sm:$0xff]
        %v3825 = vld [vmem:[#allocation3 + $0xb0] sm:$0xff]
        %v3826 = vld [vmem:[#allocation3 + $0xb8] sm:$0xff]
        %v3827 = vld [vmem:[#allocation3 + $0xc0] sm:$0xff]
        %v3828 = vld [vmem:[#allocation3 + $0xc8] sm:$0xff]
        %v3829 = vld [vmem:[#allocation3 + $0xd0] sm:$0xff]
        %v3830 = vld [vmem:[#allocation3 + $0xd8] sm:$0xff]
        %v3831 = vld [vmem:[#allocation3 + $0xe0] sm:$0xff]
        %v3832 = vld [vmem:[#allocation3 + $0xe8] sm:$0xff]
        %v3833 = vld [vmem:[#allocation3 + $0xf0] sm:$0xff]
        %v3834 = vld [vmem:[#allocation3 + $0xf8] sm:$0xff]
        %s3835 = scalar_lea.vmem [#allocation15], 320
        %v3836 = vld [vmem:[%s3835] sm:$0xff]
        %v3837 = vld [vmem:[%s3835 + $0x8] sm:$0xff]
        %v3838 = vld [vmem:[%s3835 + $0x10] sm:$0xff]
        %v3839 = vld [vmem:[%s3835 + $0x18] sm:$0xff]
        %v3840 = vld [vmem:[%s3835 + $0x20] sm:$0xff]
        %v3841 = vld [vmem:[%s3835 + $0x28] sm:$0xff]
        %v3842 = vld [vmem:[%s3835 + $0x30] sm:$0xff]
        %v3843 = vld [vmem:[%s3835 + $0x38] sm:$0xff]
        %v3845 = vsel %vm447, %v3771, 0
        %v3848 = vsel %vm447, %v3772, 0
        %v3851 = vsel %vm447, %v3773, 0
        %v3854 = vsel %vm447, %v3774, 0
        %v3857 = vsel %vm447, %v3775, 0
        %v3860 = vsel %vm447, %v3776, 0
        %v3863 = vsel %vm447, %v3777, 0
        %v3866 = vsel %vm447, %v3778, 0
        %v3869 = vsel %vm447, %v3779, 0
        %v3872 = vsel %vm447, %v3780, 0
        %v3875 = vsel %vm447, %v3781, 0
        %v3878 = vsel %vm447, %v3782, 0
        %v3881 = vsel %vm447, %v3783, 0
        %v3884 = vsel %vm447, %v3784, 0
        %v3887 = vsel %vm447, %v3785, 0
        %v3890 = vsel %vm447, %v3786, 0
        %v3893 = vsel %vm447, %v3787, 0
        %v3896 = vsel %vm447, %v3788, 0
        %v3899 = vsel %vm447, %v3789, 0
        %v3902 = vsel %vm447, %v3790, 0
        %v3905 = vsel %vm447, %v3791, 0
        %v3908 = vsel %vm447, %v3792, 0
        %v3911 = vsel %vm447, %v3793, 0
        %v3914 = vsel %vm447, %v3794, 0
        %v3917 = vsel %vm447, %v3795, 0
        %v3920 = vsel %vm447, %v3796, 0
        %v3923 = vsel %vm447, %v3797, 0
        %v3926 = vsel %vm447, %v3798, 0
        %v3929 = vsel %vm447, %v3799, 0
        %v3932 = vsel %vm447, %v3800, 0
        %v3935 = vsel %vm447, %v3801, 0
        %v3938 = vsel %vm447, %v3802, 0
        %3940 = vmatprep.subr.mxu0 0.0
        %3941 = vmatpush1.msra.mxu0 %v3836
        %3942 = vmatprep.subr.mxu0 0.0
        %3943 = vmatpush1.msra.mxu0 %v3837
        %3944 = vmatprep.subr.mxu0 0.0
        %3945 = vmatpush1.msra.mxu0 %v3838
        %3946 = vmatprep.subr.mxu0 0.0
        %3947 = vmatpush1.msra.mxu0 %v3839
        %3948 = vmatprep.subr.mxu0 0.0
        %3949 = vmatpush1.msra.mxu0 %v3840
        %3950 = vmatprep.subr.mxu0 0.0
        %3951 = vmatpush1.msra.mxu0 %v3841
        %3952 = vmatprep.subr.mxu0 0.0
        %3953 = vmatpush1.msra.mxu0 %v3842
        %3954 = vmatprep.subr.mxu0 0.0
        %3955 = vmatpush1.msra.mxu0 %v3843
        %3956 = vmatprep.subr.mxu0 0.0
        %3957 = vmatpush1.msra.mxu0 0.0
        %3958 = vmatprep.subr.mxu0 0.0
        %3959 = vmatpush1.msra.mxu0 0.0
        %3960 = vmatprep.subr.mxu0 0.0
        %3961 = vmatpush1.msra.mxu0 0.0
        %3962 = vmatprep.subr.mxu0 0.0
        %3963 = vmatpush1.msra.mxu0 0.0
        %3964 = vmatprep.subr.mxu0 0.0
        %3965 = vmatpush1.msra.mxu0 0.0
        %3966 = vmatprep.subr.mxu0 0.0
        %3967 = vmatpush1.msra.mxu0 0.0
        %3968 = vmatprep.subr.mxu0 0.0
        %3969 = vmatpush1.msra.mxu0 0.0
        %3970 = vmatprep.subr.mxu0 0.0
        %3971 = vmatpush1.msra.mxu0 0.0
        %3972 = vmatprep.subr.mxu0 0.0
        %3973 = vmatpush1.msra.mxu0 0.0
        %3974 = vmatprep.subr.mxu0 0.0
        %3975 = vmatpush1.msra.mxu0 0.0
        %3976 = vmatprep.subr.mxu0 0.0
        %3977 = vmatpush1.msra.mxu0 0.0
        %3978 = vmatprep.subr.mxu0 0.0
        %3979 = vmatpush1.msra.mxu0 0.0
        %3980 = vmatprep.subr.mxu0 0.0
        %3981 = vmatpush1.msra.mxu0 0.0
        %3982 = vmatprep.subr.mxu0 0.0
        %3983 = vmatpush1.msra.mxu0 0.0
        %3984 = vmatprep.subr.mxu0 0.0
        %3985 = vmatpush1.msra.mxu0 0.0
        %3986 = vmatprep.subr.mxu0 0.0
        %3987 = vmatpush1.msra.mxu0 0.0
        %3988 = vmatprep.subr.mxu0 0.0
        %3989 = vmatpush1.msra.mxu0 0.0
        %3990 = vmatprep.subr.mxu0 0.0
        %3991 = vmatpush1.msra.mxu0 0.0
        %3992 = vmatprep.subr.mxu0 0.0
        %3993 = vmatpush1.msra.mxu0 0.0
        %3994 = vmatprep.subr.mxu0 0.0
        %3995 = vmatpush1.msra.mxu0 0.0
        %3996 = vmatprep.subr.mxu0 0.0
        %3997 = vmatpush1.msra.mxu0 0.0
        %3998 = vmatprep.subr.mxu0 0.0
        %3999 = vmatpush1.msra.mxu0 0.0
        %4000 = vmatprep.subr.mxu0 0.0
        %4001 = vmatpush1.msra.mxu0 0.0
        %4002 = vmatprep.subr.mxu0 0.0
        %4003 = vmatpush1.msra.mxu0 0.0
        %4004 = vmatprep.mubr.f32.mxu0 0.0
        %4005 = vmatmul.mubr.f32.gmra.mrb[0].mxu0 %v3845
        %v4006 = vpop.f32.mrb[0].mxu0
        %v4007 = vadd.f32 0.0, %v4006
        %v4008 = vpop.f32.mrb[0].mxu0
        %4009 = vmatprep.mubr.f32.mxu0 0.0
        %4010 = vmatmul.mubr.f32.gmra.mrb[0].mxu0 %v3848
        %v4011 = vpop.f32.mrb[0].mxu0
        %v4012 = vadd.f32 0.0, %v4011
        %v4013 = vpop.f32.mrb[0].mxu0
        %4014 = vmatprep.mubr.f32.mxu0 0.0
        %4015 = vmatmul.mubr.f32.gmra.mrb[0].mxu0 %v3851
        %v4016 = vpop.f32.mrb[0].mxu0
        %v4017 = vadd.f32 0.0, %v4016
        %v4018 = vpop.f32.mrb[0].mxu0
        %4019 = vmatprep.mubr.f32.mxu0 0.0
        %4020 = vmatmul.mubr.f32.gmra.mrb[0].mxu0 %v3854
        %v4021 = vpop.f32.mrb[0].mxu0
        %v4022 = vadd.f32 0.0, %v4021
        %v4023 = vpop.f32.mrb[0].mxu0
        %4024 = vmatprep.mubr.f32.mxu0 0.0
        %4025 = vmatmul.mubr.f32.gmra.mrb[0].mxu0 %v3857
        %v4026 = vpop.f32.mrb[0].mxu0
        %v4027 = vadd.f32 0.0, %v4026
        %v4028 = vpop.f32.mrb[0].mxu0
        %4029 = vmatprep.mubr.f32.mxu0 0.0
        %4030 = vmatmul.mubr.f32.gmra.mrb[0].mxu0 %v3860
        %v4031 = vpop.f32.mrb[0].mxu0
        %v4032 = vadd.f32 0.0, %v4031
        %v4033 = vpop.f32.mrb[0].mxu0
        %4034 = vmatprep.mubr.f32.mxu0 0.0
        %4035 = vmatmul.mubr.f32.gmra.mrb[0].mxu0 %v3863
        %v4036 = vpop.f32.mrb[0].mxu0
        %v4037 = vadd.f32 0.0, %v4036
        %v4038 = vpop.f32.mrb[0].mxu0
        %4039 = vmatprep.mubr.f32.mxu0 0.0
        %4040 = vmatmul.mubr.f32.gmra.mrb[0].mxu0 %v3866
        %v4041 = vpop.f32.mrb[0].mxu0
        %v4042 = vadd.f32 0.0, %v4041
        %v4043 = vpop.f32.mrb[0].mxu0
        %4044 = vmatprep.mubr.f32.mxu0 0.0
        %4045 = vmatmul.mubr.f32.gmra.mrb[0].mxu0 %v3869
        %v4046 = vpop.f32.mrb[0].mxu0
        %v4047 = vadd.f32 0.0, %v4046
        %v4048 = vpop.f32.mrb[0].mxu0
        %4049 = vmatprep.mubr.f32.mxu0 0.0
        %4050 = vmatmul.mubr.f32.gmra.mrb[0].mxu0 %v3872
        %v4051 = vpop.f32.mrb[0].mxu0
        %v4052 = vadd.f32 0.0, %v4051
        %v4053 = vpop.f32.mrb[0].mxu0
        %4054 = vmatprep.mubr.f32.mxu0 0.0
        %4055 = vmatmul.mubr.f32.gmra.mrb[0].mxu0 %v3875
        %v4056 = vpop.f32.mrb[0].mxu0
        %v4057 = vadd.f32 0.0, %v4056
        %v4058 = vpop.f32.mrb[0].mxu0
        %4059 = vmatprep.mubr.f32.mxu0 0.0
        %4060 = vmatmul.mubr.f32.gmra.mrb[0].mxu0 %v3878
        %v4061 = vpop.f32.mrb[0].mxu0
        %v4062 = vadd.f32 0.0, %v4061
        %v4063 = vpop.f32.mrb[0].mxu0
        %4064 = vmatprep.mubr.f32.mxu0 0.0
        %4065 = vmatmul.mubr.f32.gmra.mrb[0].mxu0 %v3881
        %v4066 = vpop.f32.mrb[0].mxu0
        %v4067 = vadd.f32 0.0, %v4066
        %v4068 = vpop.f32.mrb[0].mxu0
        %4069 = vmatprep.mubr.f32.mxu0 0.0
        %4070 = vmatmul.mubr.f32.gmra.mrb[0].mxu0 %v3884
        %v4071 = vpop.f32.mrb[0].mxu0
        %v4072 = vadd.f32 0.0, %v4071
        %v4073 = vpop.f32.mrb[0].mxu0
        %4074 = vmatprep.mubr.f32.mxu0 0.0
        %4075 = vmatmul.mubr.f32.gmra.mrb[0].mxu0 %v3887
        %v4076 = vpop.f32.mrb[0].mxu0
        %v4077 = vadd.f32 0.0, %v4076
        %v4078 = vpop.f32.mrb[0].mxu0
        %4079 = vmatprep.mubr.f32.mxu0 0.0
        %4080 = vmatmul.mubr.f32.gmra.mrb[0].mxu0 %v3890
        %v4081 = vpop.f32.mrb[0].mxu0
        %v4082 = vadd.f32 0.0, %v4081
        %v4083 = vpop.f32.mrb[0].mxu0
        %4084 = vmatprep.mubr.f32.mxu0 0.0
        %4085 = vmatmul.mubr.f32.gmra.mrb[0].mxu0 %v3893
        %v4086 = vpop.f32.mrb[0].mxu0
        %v4087 = vadd.f32 0.0, %v4086
        %v4088 = vpop.f32.mrb[0].mxu0
        %4089 = vmatprep.mubr.f32.mxu0 0.0
        %4090 = vmatmul.mubr.f32.gmra.mrb[0].mxu0 %v3896
        %v4091 = vpop.f32.mrb[0].mxu0
        %v4092 = vadd.f32 0.0, %v4091
        %v4093 = vpop.f32.mrb[0].mxu0
        %4094 = vmatprep.mubr.f32.mxu0 0.0
        %4095 = vmatmul.mubr.f32.gmra.mrb[0].mxu0 %v3899
        %v4096 = vpop.f32.mrb[0].mxu0
        %v4097 = vadd.f32 0.0, %v4096
        %v4098 = vpop.f32.mrb[0].mxu0
        %4099 = vmatprep.mubr.f32.mxu0 0.0
        %4100 = vmatmul.mubr.f32.gmra.mrb[0].mxu0 %v3902
        %v4101 = vpop.f32.mrb[0].mxu0
        %v4102 = vadd.f32 0.0, %v4101
        %v4103 = vpop.f32.mrb[0].mxu0
        %4104 = vmatprep.mubr.f32.mxu0 0.0
        %4105 = vmatmul.mubr.f32.gmra.mrb[0].mxu0 %v3905
        %v4106 = vpop.f32.mrb[0].mxu0
        %v4107 = vadd.f32 0.0, %v4106
        %v4108 = vpop.f32.mrb[0].mxu0
        %4109 = vmatprep.mubr.f32.mxu0 0.0
        %4110 = vmatmul.mubr.f32.gmra.mrb[0].mxu0 %v3908
        %v4111 = vpop.f32.mrb[0].mxu0
        %v4112 = vadd.f32 0.0, %v4111
        %v4113 = vpop.f32.mrb[0].mxu0
        %4114 = vmatprep.mubr.f32.mxu0 0.0
        %4115 = vmatmul.mubr.f32.gmra.mrb[0].mxu0 %v3911
        %v4116 = vpop.f32.mrb[0].mxu0
        %v4117 = vadd.f32 0.0, %v4116
        %v4118 = vpop.f32.mrb[0].mxu0
        %4119 = vmatprep.mubr.f32.mxu0 0.0
        %4120 = vmatmul.mubr.f32.gmra.mrb[0].mxu0 %v3914
        %v4121 = vpop.f32.mrb[0].mxu0
        %v4122 = vadd.f32 0.0, %v4121
        %v4123 = vpop.f32.mrb[0].mxu0
        %4124 = vmatprep.mubr.f32.mxu0 0.0
        %4125 = vmatmul.mubr.f32.gmra.mrb[0].mxu0 %v3917
        %v4126 = vpop.f32.mrb[0].mxu0
        %v4127 = vadd.f32 0.0, %v4126
        %v4128 = vpop.f32.mrb[0].mxu0
        %4129 = vmatprep.mubr.f32.mxu0 0.0
        %4130 = vmatmul.mubr.f32.gmra.mrb[0].mxu0 %v3920
        %v4131 = vpop.f32.mrb[0].mxu0
        %v4132 = vadd.f32 0.0, %v4131
        %v4133 = vpop.f32.mrb[0].mxu0
        %4134 = vmatprep.mubr.f32.mxu0 0.0
        %4135 = vmatmul.mubr.f32.gmra.mrb[0].mxu0 %v3923
        %v4136 = vpop.f32.mrb[0].mxu0
        %v4137 = vadd.f32 0.0, %v4136
        %v4138 = vpop.f32.mrb[0].mxu0
        %4139 = vmatprep.mubr.f32.mxu0 0.0
        %4140 = vmatmul.mubr.f32.gmra.mrb[0].mxu0 %v3926
        %v4141 = vpop.f32.mrb[0].mxu0
        %v4142 = vadd.f32 0.0, %v4141
        %v4143 = vpop.f32.mrb[0].mxu0
        %4144 = vmatprep.mubr.f32.mxu0 0.0
        %4145 = vmatmul.mubr.f32.gmra.mrb[0].mxu0 %v3929
        %v4146 = vpop.f32.mrb[0].mxu0
        %v4147 = vadd.f32 0.0, %v4146
        %v4148 = vpop.f32.mrb[0].mxu0
        %4149 = vmatprep.mubr.f32.mxu0 0.0
        %4150 = vmatmul.mubr.f32.gmra.mrb[0].mxu0 %v3932
        %v4151 = vpop.f32.mrb[0].mxu0
        %v4152 = vadd.f32 0.0, %v4151
        %v4153 = vpop.f32.mrb[0].mxu0
        %4154 = vmatprep.mubr.f32.mxu0 0.0
        %4155 = vmatmul.mubr.f32.gmra.mrb[0].mxu0 %v3935
        %v4156 = vpop.f32.mrb[0].mxu0
        %v4157 = vadd.f32 0.0, %v4156
        %v4158 = vpop.f32.mrb[0].mxu0
        %4159 = vmatprep.mubr.f32.mxu0 0.0
        %4160 = vmatmul.mubr.f32.gmra.mrb[0].mxu0 %v3938
        %v4161 = vpop.f32.mrb[0].mxu0
        %v4162 = vadd.f32 0.0, %v4161
        %v4163 = vpop.f32.mrb[0].mxu0
        %4164 = vdwg.mxu0
        %v4165 = vadd.f32 %v3803, %v4007
        %v4166 = vadd.f32 %v3804, %v4012
        %v4167 = vadd.f32 %v3805, %v4017
        %v4168 = vadd.f32 %v3806, %v4022
        %v4169 = vadd.f32 %v3807, %v4027
        %v4170 = vadd.f32 %v3808, %v4032
        %v4171 = vadd.f32 %v3809, %v4037
        %v4172 = vadd.f32 %v3810, %v4042
        %v4173 = vadd.f32 %v3811, %v4047
        %v4174 = vadd.f32 %v3812, %v4052
        %v4175 = vadd.f32 %v3813, %v4057
        %v4176 = vadd.f32 %v3814, %v4062
        %v4177 = vadd.f32 %v3815, %v4067
        %v4178 = vadd.f32 %v3816, %v4072
        %v4179 = vadd.f32 %v3817, %v4077
        %v4180 = vadd.f32 %v3818, %v4082
        %v4181 = vadd.f32 %v3819, %v4087
        %v4182 = vadd.f32 %v3820, %v4092
        %v4183 = vadd.f32 %v3821, %v4097
        %v4184 = vadd.f32 %v3822, %v4102
        %v4185 = vadd.f32 %v3823, %v4107
        %v4186 = vadd.f32 %v3824, %v4112
        %v4187 = vadd.f32 %v3825, %v4117
        %v4188 = vadd.f32 %v3826, %v4122
        %v4189 = vadd.f32 %v3827, %v4127
        %v4190 = vadd.f32 %v3828, %v4132
        %v4191 = vadd.f32 %v3829, %v4137
        %v4192 = vadd.f32 %v3830, %v4142
        %v4193 = vadd.f32 %v3831, %v4147
        %v4194 = vadd.f32 %v3832, %v4152
        %v4195 = vadd.f32 %v3833, %v4157
        %v4196 = vadd.f32 %v3834, %v4162
        %4197 = vst [vmem:[#allocation3] sm:$0xff] %v4165
        %4198 = vst [vmem:[#allocation3 + $0x8] sm:$0xff] %v4166
        %4199 = vst [vmem:[#allocation3 + $0x10] sm:$0xff] %v4167
        %4200 = vst [vmem:[#allocation3 + $0x18] sm:$0xff] %v4168
        %4201 = vst [vmem:[#allocation3 + $0x20] sm:$0xff] %v4169
        %4202 = vst [vmem:[#allocation3 + $0x28] sm:$0xff] %v4170
        %4203 = vst [vmem:[#allocation3 + $0x30] sm:$0xff] %v4171
        %4204 = vst [vmem:[#allocation3 + $0x38] sm:$0xff] %v4172
        %4205 = vst [vmem:[#allocation3 + $0x40] sm:$0xff] %v4173
        %4206 = vst [vmem:[#allocation3 + $0x48] sm:$0xff] %v4174
        %4207 = vst [vmem:[#allocation3 + $0x50] sm:$0xff] %v4175
        %4208 = vst [vmem:[#allocation3 + $0x58] sm:$0xff] %v4176
        %4209 = vst [vmem:[#allocation3 + $0x60] sm:$0xff] %v4177
        %4210 = vst [vmem:[#allocation3 + $0x68] sm:$0xff] %v4178
        %4211 = vst [vmem:[#allocation3 + $0x70] sm:$0xff] %v4179
        %4212 = vst [vmem:[#allocation3 + $0x78] sm:$0xff] %v4180
        %4213 = vst [vmem:[#allocation3 + $0x80] sm:$0xff] %v4181
        %4214 = vst [vmem:[#allocation3 + $0x88] sm:$0xff] %v4182
        %4215 = vst [vmem:[#allocation3 + $0x90] sm:$0xff] %v4183
        %4216 = vst [vmem:[#allocation3 + $0x98] sm:$0xff] %v4184
        %4217 = vst [vmem:[#allocation3 + $0xa0] sm:$0xff] %v4185
        %4218 = vst [vmem:[#allocation3 + $0xa8] sm:$0xff] %v4186
        %4219 = vst [vmem:[#allocation3 + $0xb0] sm:$0xff] %v4187
        %4220 = vst [vmem:[#allocation3 + $0xb8] sm:$0xff] %v4188
        %4221 = vst [vmem:[#allocation3 + $0xc0] sm:$0xff] %v4189
        %4222 = vst [vmem:[#allocation3 + $0xc8] sm:$0xff] %v4190
        %4223 = vst [vmem:[#allocation3 + $0xd0] sm:$0xff] %v4191
        %4224 = vst [vmem:[#allocation3 + $0xd8] sm:$0xff] %v4192
        %4225 = vst [vmem:[#allocation3 + $0xe0] sm:$0xff] %v4193
        %4226 = vst [vmem:[#allocation3 + $0xe8] sm:$0xff] %v4194
        %4227 = vst [vmem:[#allocation3 + $0xf0] sm:$0xff] %v4195
        %4228 = vst [vmem:[#allocation3 + $0xf8] sm:$0xff] %v4196
        %s4229 = scalar_lea.vmem [#allocation2], 32
        %v4230 = vld [vmem:[%s4229] sm:$0xff]
        %v4231 = vld [vmem:[%s4229 + $0x10] sm:$0xff]
        %v4232 = vld [vmem:[%s4229 + $0x20] sm:$0xff]
        %v4233 = vld [vmem:[%s4229 + $0x30] sm:$0xff]
        %v4234 = vld [vmem:[%s4229 + $0x40] sm:$0xff]
        %v4235 = vld [vmem:[%s4229 + $0x50] sm:$0xff]
        %v4236 = vld [vmem:[%s4229 + $0x60] sm:$0xff]
        %v4237 = vld [vmem:[%s4229 + $0x70] sm:$0xff]
        %v4238 = vld [vmem:[%s4229 + $0xa0] sm:$0xff]
        %v4239 = vld [vmem:[%s4229 + $0xb0] sm:$0xff]
        %v4240 = vld [vmem:[%s4229 + $0xc0] sm:$0xff]
        %v4241 = vld [vmem:[%s4229 + $0xd0] sm:$0xff]
        %v4242 = vld [vmem:[%s4229 + $0xe0] sm:$0xff]
        %v4243 = vld [vmem:[%s4229 + $0xf0] sm:$0xff]
        %v4244 = vld [vmem:[%s4229 + $0x100] sm:$0xff]
        %v4245 = vld [vmem:[%s4229 + $0x110] sm:$0xff]
        %v4246 = vld [vmem:[%s4229 + $0x140] sm:$0xff]
        %v4247 = vld [vmem:[%s4229 + $0x150] sm:$0xff]
        %v4248 = vld [vmem:[%s4229 + $0x160] sm:$0xff]
        %v4249 = vld [vmem:[%s4229 + $0x170] sm:$0xff]
        %v4250 = vld [vmem:[%s4229 + $0x180] sm:$0xff]
        %v4251 = vld [vmem:[%s4229 + $0x190] sm:$0xff]
        %v4252 = vld [vmem:[%s4229 + $0x1a0] sm:$0xff]
        %v4253 = vld [vmem:[%s4229 + $0x1b0] sm:$0xff]
        %v4254 = vld [vmem:[%s4229 + $0x1e0] sm:$0xff]
        %v4255 = vld [vmem:[%s4229 + $0x1f0] sm:$0xff]
        %v4256 = vld [vmem:[%s4229 + $0x200] sm:$0xff]
        %v4257 = vld [vmem:[%s4229 + $0x210] sm:$0xff]
        %v4258 = vld [vmem:[%s4229 + $0x220] sm:$0xff]
        %v4259 = vld [vmem:[%s4229 + $0x230] sm:$0xff]
        %v4260 = vld [vmem:[%s4229 + $0x240] sm:$0xff]
        %v4261 = vld [vmem:[%s4229 + $0x250] sm:$0xff]
        %v4262 = vld [vmem:[#allocation3] sm:$0xff]
        %v4263 = vld [vmem:[#allocation3 + $0x8] sm:$0xff]
        %v4264 = vld [vmem:[#allocation3 + $0x10] sm:$0xff]
        %v4265 = vld [vmem:[#allocation3 + $0x18] sm:$0xff]
        %v4266 = vld [vmem:[#allocation3 + $0x20] sm:$0xff]
        %v4267 = vld [vmem:[#allocation3 + $0x28] sm:$0xff]
        %v4268 = vld [vmem:[#allocation3 + $0x30] sm:$0xff]
        %v4269 = vld [vmem:[#allocation3 + $0x38] sm:$0xff]
        %v4270 = vld [vmem:[#allocation3 + $0x40] sm:$0xff]
        %v4271 = vld [vmem:[#allocation3 + $0x48] sm:$0xff]
        %v4272 = vld [vmem:[#allocation3 + $0x50] sm:$0xff]
        %v4273 = vld [vmem:[#allocation3 + $0x58] sm:$0xff]
        %v4274 = vld [vmem:[#allocation3 + $0x60] sm:$0xff]
        %v4275 = vld [vmem:[#allocation3 + $0x68] sm:$0xff]
        %v4276 = vld [vmem:[#allocation3 + $0x70] sm:$0xff]
        %v4277 = vld [vmem:[#allocation3 + $0x78] sm:$0xff]
        %v4278 = vld [vmem:[#allocation3 + $0x80] sm:$0xff]
        %v4279 = vld [vmem:[#allocation3 + $0x88] sm:$0xff]
        %v4280 = vld [vmem:[#allocation3 + $0x90] sm:$0xff]
        %v4281 = vld [vmem:[#allocation3 + $0x98] sm:$0xff]
        %v4282 = vld [vmem:[#allocation3 + $0xa0] sm:$0xff]
        %v4283 = vld [vmem:[#allocation3 + $0xa8] sm:$0xff]
        %v4284 = vld [vmem:[#allocation3 + $0xb0] sm:$0xff]
        %v4285 = vld [vmem:[#allocation3 + $0xb8] sm:$0xff]
        %v4286 = vld [vmem:[#allocation3 + $0xc0] sm:$0xff]
        %v4287 = vld [vmem:[#allocation3 + $0xc8] sm:$0xff]
        %v4288 = vld [vmem:[#allocation3 + $0xd0] sm:$0xff]
        %v4289 = vld [vmem:[#allocation3 + $0xd8] sm:$0xff]
        %v4290 = vld [vmem:[#allocation3 + $0xe0] sm:$0xff]
        %v4291 = vld [vmem:[#allocation3 + $0xe8] sm:$0xff]
        %v4292 = vld [vmem:[#allocation3 + $0xf0] sm:$0xff]
        %v4293 = vld [vmem:[#allocation3 + $0xf8] sm:$0xff]
        %s4294 = scalar_lea.vmem [#allocation15], 384
        %v4295 = vld [vmem:[%s4294] sm:$0xff]
        %v4296 = vld [vmem:[%s4294 + $0x8] sm:$0xff]
        %v4297 = vld [vmem:[%s4294 + $0x10] sm:$0xff]
        %v4298 = vld [vmem:[%s4294 + $0x18] sm:$0xff]
        %v4299 = vld [vmem:[%s4294 + $0x20] sm:$0xff]
        %v4300 = vld [vmem:[%s4294 + $0x28] sm:$0xff]
        %v4301 = vld [vmem:[%s4294 + $0x30] sm:$0xff]
        %v4302 = vld [vmem:[%s4294 + $0x38] sm:$0xff]
        %v4304 = vsel %vm447, %v4230, 0
        %v4307 = vsel %vm447, %v4231, 0
        %v4310 = vsel %vm447, %v4232, 0
        %v4313 = vsel %vm447, %v4233, 0
        %v4316 = vsel %vm447, %v4234, 0
        %v4319 = vsel %vm447, %v4235, 0
        %v4322 = vsel %vm447, %v4236, 0
        %v4325 = vsel %vm447, %v4237, 0
        %v4328 = vsel %vm447, %v4238, 0
        %v4331 = vsel %vm447, %v4239, 0
        %v4334 = vsel %vm447, %v4240, 0
        %v4337 = vsel %vm447, %v4241, 0
        %v4340 = vsel %vm447, %v4242, 0
        %v4343 = vsel %vm447, %v4243, 0
        %v4346 = vsel %vm447, %v4244, 0
        %v4349 = vsel %vm447, %v4245, 0
        %v4352 = vsel %vm447, %v4246, 0
        %v4355 = vsel %vm447, %v4247, 0
        %v4358 = vsel %vm447, %v4248, 0
        %v4361 = vsel %vm447, %v4249, 0
        %v4364 = vsel %vm447, %v4250, 0
        %v4367 = vsel %vm447, %v4251, 0
        %v4370 = vsel %vm447, %v4252, 0
        %v4373 = vsel %vm447, %v4253, 0
        %v4376 = vsel %vm447, %v4254, 0
        %v4379 = vsel %vm447, %v4255, 0
        %v4382 = vsel %vm447, %v4256, 0
        %v4385 = vsel %vm447, %v4257, 0
        %v4388 = vsel %vm447, %v4258, 0
        %v4391 = vsel %vm447, %v4259, 0
        %v4394 = vsel %vm447, %v4260, 0
        %v4397 = vsel %vm447, %v4261, 0
        %4399 = vmatprep.subr.mxu0 0.0
        %4400 = vmatpush1.msra.mxu0 %v4295
        %4401 = vmatprep.subr.mxu0 0.0
        %4402 = vmatpush1.msra.mxu0 %v4296
        %4403 = vmatprep.subr.mxu0 0.0
        %4404 = vmatpush1.msra.mxu0 %v4297
        %4405 = vmatprep.subr.mxu0 0.0
        %4406 = vmatpush1.msra.mxu0 %v4298
        %4407 = vmatprep.subr.mxu0 0.0
        %4408 = vmatpush1.msra.mxu0 %v4299
        %4409 = vmatprep.subr.mxu0 0.0
        %4410 = vmatpush1.msra.mxu0 %v4300
        %4411 = vmatprep.subr.mxu0 0.0
        %4412 = vmatpush1.msra.mxu0 %v4301
        %4413 = vmatprep.subr.mxu0 0.0
        %4414 = vmatpush1.msra.mxu0 %v4302
        %4415 = vmatprep.subr.mxu0 0.0
        %4416 = vmatpush1.msra.mxu0 0.0
        %4417 = vmatprep.subr.mxu0 0.0
        %4418 = vmatpush1.msra.mxu0 0.0
        %4419 = vmatprep.subr.mxu0 0.0
        %4420 = vmatpush1.msra.mxu0 0.0
        %4421 = vmatprep.subr.mxu0 0.0
        %4422 = vmatpush1.msra.mxu0 0.0
        %4423 = vmatprep.subr.mxu0 0.0
        %4424 = vmatpush1.msra.mxu0 0.0
        %4425 = vmatprep.subr.mxu0 0.0
        %4426 = vmatpush1.msra.mxu0 0.0
        %4427 = vmatprep.subr.mxu0 0.0
        %4428 = vmatpush1.msra.mxu0 0.0
        %4429 = vmatprep.subr.mxu0 0.0
        %4430 = vmatpush1.msra.mxu0 0.0
        %4431 = vmatprep.subr.mxu0 0.0
        %4432 = vmatpush1.msra.mxu0 0.0
        %4433 = vmatprep.subr.mxu0 0.0
        %4434 = vmatpush1.msra.mxu0 0.0
        %4435 = vmatprep.subr.mxu0 0.0
        %4436 = vmatpush1.msra.mxu0 0.0
        %4437 = vmatprep.subr.mxu0 0.0
        %4438 = vmatpush1.msra.mxu0 0.0
        %4439 = vmatprep.subr.mxu0 0.0
        %4440 = vmatpush1.msra.mxu0 0.0
        %4441 = vmatprep.subr.mxu0 0.0
        %4442 = vmatpush1.msra.mxu0 0.0
        %4443 = vmatprep.subr.mxu0 0.0
        %4444 = vmatpush1.msra.mxu0 0.0
        %4445 = vmatprep.subr.mxu0 0.0
        %4446 = vmatpush1.msra.mxu0 0.0
        %4447 = vmatprep.subr.mxu0 0.0
        %4448 = vmatpush1.msra.mxu0 0.0
        %4449 = vmatprep.subr.mxu0 0.0
        %4450 = vmatpush1.msra.mxu0 0.0
        %4451 = vmatprep.subr.mxu0 0.0
        %4452 = vmatpush1.msra.mxu0 0.0
        %4453 = vmatprep.subr.mxu0 0.0
        %4454 = vmatpush1.msra.mxu0 0.0
        %4455 = vmatprep.subr.mxu0 0.0
        %4456 = vmatpush1.msra.mxu0 0.0
        %4457 = vmatprep.subr.mxu0 0.0
        %4458 = vmatpush1.msra.mxu0 0.0
        %4459 = vmatprep.subr.mxu0 0.0
        %4460 = vmatpush1.msra.mxu0 0.0
        %4461 = vmatprep.subr.mxu0 0.0
        %4462 = vmatpush1.msra.mxu0 0.0
        %4463 = vmatprep.mubr.f32.mxu0 0.0
        %4464 = vmatmul.mubr.f32.gmra.mrb[0].mxu0 %v4304
        %v4465 = vpop.f32.mrb[0].mxu0
        %v4466 = vadd.f32 0.0, %v4465
        %v4467 = vpop.f32.mrb[0].mxu0
        %4468 = vmatprep.mubr.f32.mxu0 0.0
        %4469 = vmatmul.mubr.f32.gmra.mrb[0].mxu0 %v4307
        %v4470 = vpop.f32.mrb[0].mxu0
        %v4471 = vadd.f32 0.0, %v4470
        %v4472 = vpop.f32.mrb[0].mxu0
        %4473 = vmatprep.mubr.f32.mxu0 0.0
        %4474 = vmatmul.mubr.f32.gmra.mrb[0].mxu0 %v4310
        %v4475 = vpop.f32.mrb[0].mxu0
        %v4476 = vadd.f32 0.0, %v4475
        %v4477 = vpop.f32.mrb[0].mxu0
        %4478 = vmatprep.mubr.f32.mxu0 0.0
        %4479 = vmatmul.mubr.f32.gmra.mrb[0].mxu0 %v4313
        %v4480 = vpop.f32.mrb[0].mxu0
        %v4481 = vadd.f32 0.0, %v4480
        %v4482 = vpop.f32.mrb[0].mxu0
        %4483 = vmatprep.mubr.f32.mxu0 0.0
        %4484 = vmatmul.mubr.f32.gmra.mrb[0].mxu0 %v4316
        %v4485 = vpop.f32.mrb[0].mxu0
        %v4486 = vadd.f32 0.0, %v4485
        %v4487 = vpop.f32.mrb[0].mxu0
        %4488 = vmatprep.mubr.f32.mxu0 0.0
        %4489 = vmatmul.mubr.f32.gmra.mrb[0].mxu0 %v4319
        %v4490 = vpop.f32.mrb[0].mxu0
        %v4491 = vadd.f32 0.0, %v4490
        %v4492 = vpop.f32.mrb[0].mxu0
        %4493 = vmatprep.mubr.f32.mxu0 0.0
        %4494 = vmatmul.mubr.f32.gmra.mrb[0].mxu0 %v4322
        %v4495 = vpop.f32.mrb[0].mxu0
        %v4496 = vadd.f32 0.0, %v4495
        %v4497 = vpop.f32.mrb[0].mxu0
        %4498 = vmatprep.mubr.f32.mxu0 0.0
        %4499 = vmatmul.mubr.f32.gmra.mrb[0].mxu0 %v4325
        %v4500 = vpop.f32.mrb[0].mxu0
        %v4501 = vadd.f32 0.0, %v4500
        %v4502 = vpop.f32.mrb[0].mxu0
        %4503 = vmatprep.mubr.f32.mxu0 0.0
        %4504 = vmatmul.mubr.f32.gmra.mrb[0].mxu0 %v4328
        %v4505 = vpop.f32.mrb[0].mxu0
        %v4506 = vadd.f32 0.0, %v4505
        %v4507 = vpop.f32.mrb[0].mxu0
        %4508 = vmatprep.mubr.f32.mxu0 0.0
        %4509 = vmatmul.mubr.f32.gmra.mrb[0].mxu0 %v4331
        %v4510 = vpop.f32.mrb[0].mxu0
        %v4511 = vadd.f32 0.0, %v4510
        %v4512 = vpop.f32.mrb[0].mxu0
        %4513 = vmatprep.mubr.f32.mxu0 0.0
        %4514 = vmatmul.mubr.f32.gmra.mrb[0].mxu0 %v4334
        %v4515 = vpop.f32.mrb[0].mxu0
        %v4516 = vadd.f32 0.0, %v4515
        %v4517 = vpop.f32.mrb[0].mxu0
        %4518 = vmatprep.mubr.f32.mxu0 0.0
        %4519 = vmatmul.mubr.f32.gmra.mrb[0].mxu0 %v4337
        %v4520 = vpop.f32.mrb[0].mxu0
        %v4521 = vadd.f32 0.0, %v4520
        %v4522 = vpop.f32.mrb[0].mxu0
        %4523 = vmatprep.mubr.f32.mxu0 0.0
        %4524 = vmatmul.mubr.f32.gmra.mrb[0].mxu0 %v4340
        %v4525 = vpop.f32.mrb[0].mxu0
        %v4526 = vadd.f32 0.0, %v4525
        %v4527 = vpop.f32.mrb[0].mxu0
        %4528 = vmatprep.mubr.f32.mxu0 0.0
        %4529 = vmatmul.mubr.f32.gmra.mrb[0].mxu0 %v4343
        %v4530 = vpop.f32.mrb[0].mxu0
        %v4531 = vadd.f32 0.0, %v4530
        %v4532 = vpop.f32.mrb[0].mxu0
        %4533 = vmatprep.mubr.f32.mxu0 0.0
        %4534 = vmatmul.mubr.f32.gmra.mrb[0].mxu0 %v4346
        %v4535 = vpop.f32.mrb[0].mxu0
        %v4536 = vadd.f32 0.0, %v4535
        %v4537 = vpop.f32.mrb[0].mxu0
        %4538 = vmatprep.mubr.f32.mxu0 0.0
        %4539 = vmatmul.mubr.f32.gmra.mrb[0].mxu0 %v4349
        %v4540 = vpop.f32.mrb[0].mxu0
        %v4541 = vadd.f32 0.0, %v4540
        %v4542 = vpop.f32.mrb[0].mxu0
        %4543 = vmatprep.mubr.f32.mxu0 0.0
        %4544 = vmatmul.mubr.f32.gmra.mrb[0].mxu0 %v4352
        %v4545 = vpop.f32.mrb[0].mxu0
        %v4546 = vadd.f32 0.0, %v4545
        %v4547 = vpop.f32.mrb[0].mxu0
        %4548 = vmatprep.mubr.f32.mxu0 0.0
        %4549 = vmatmul.mubr.f32.gmra.mrb[0].mxu0 %v4355
        %v4550 = vpop.f32.mrb[0].mxu0
        %v4551 = vadd.f32 0.0, %v4550
        %v4552 = vpop.f32.mrb[0].mxu0
        %4553 = vmatprep.mubr.f32.mxu0 0.0
        %4554 = vmatmul.mubr.f32.gmra.mrb[0].mxu0 %v4358
        %v4555 = vpop.f32.mrb[0].mxu0
        %v4556 = vadd.f32 0.0, %v4555
        %v4557 = vpop.f32.mrb[0].mxu0
        %4558 = vmatprep.mubr.f32.mxu0 0.0
        %4559 = vmatmul.mubr.f32.gmra.mrb[0].mxu0 %v4361
        %v4560 = vpop.f32.mrb[0].mxu0
        %v4561 = vadd.f32 0.0, %v4560
        %v4562 = vpop.f32.mrb[0].mxu0
        %4563 = vmatprep.mubr.f32.mxu0 0.0
        %4564 = vmatmul.mubr.f32.gmra.mrb[0].mxu0 %v4364
        %v4565 = vpop.f32.mrb[0].mxu0
        %v4566 = vadd.f32 0.0, %v4565
        %v4567 = vpop.f32.mrb[0].mxu0
        %4568 = vmatprep.mubr.f32.mxu0 0.0
        %4569 = vmatmul.mubr.f32.gmra.mrb[0].mxu0 %v4367
        %v4570 = vpop.f32.mrb[0].mxu0
        %v4571 = vadd.f32 0.0, %v4570
        %v4572 = vpop.f32.mrb[0].mxu0
        %4573 = vmatprep.mubr.f32.mxu0 0.0
        %4574 = vmatmul.mubr.f32.gmra.mrb[0].mxu0 %v4370
        %v4575 = vpop.f32.mrb[0].mxu0
        %v4576 = vadd.f32 0.0, %v4575
        %v4577 = vpop.f32.mrb[0].mxu0
        %4578 = vmatprep.mubr.f32.mxu0 0.0
        %4579 = vmatmul.mubr.f32.gmra.mrb[0].mxu0 %v4373
        %v4580 = vpop.f32.mrb[0].mxu0
        %v4581 = vadd.f32 0.0, %v4580
        %v4582 = vpop.f32.mrb[0].mxu0
        %4583 = vmatprep.mubr.f32.mxu0 0.0
        %4584 = vmatmul.mubr.f32.gmra.mrb[0].mxu0 %v4376
        %v4585 = vpop.f32.mrb[0].mxu0
        %v4586 = vadd.f32 0.0, %v4585
        %v4587 = vpop.f32.mrb[0].mxu0
        %4588 = vmatprep.mubr.f32.mxu0 0.0
        %4589 = vmatmul.mubr.f32.gmra.mrb[0].mxu0 %v4379
        %v4590 = vpop.f32.mrb[0].mxu0
        %v4591 = vadd.f32 0.0, %v4590
        %v4592 = vpop.f32.mrb[0].mxu0
        %4593 = vmatprep.mubr.f32.mxu0 0.0
        %4594 = vmatmul.mubr.f32.gmra.mrb[0].mxu0 %v4382
        %v4595 = vpop.f32.mrb[0].mxu0
        %v4596 = vadd.f32 0.0, %v4595
        %v4597 = vpop.f32.mrb[0].mxu0
        %4598 = vmatprep.mubr.f32.mxu0 0.0
        %4599 = vmatmul.mubr.f32.gmra.mrb[0].mxu0 %v4385
        %v4600 = vpop.f32.mrb[0].mxu0
        %v4601 = vadd.f32 0.0, %v4600
        %v4602 = vpop.f32.mrb[0].mxu0
        %4603 = vmatprep.mubr.f32.mxu0 0.0
        %4604 = vmatmul.mubr.f32.gmra.mrb[0].mxu0 %v4388
        %v4605 = vpop.f32.mrb[0].mxu0
        %v4606 = vadd.f32 0.0, %v4605
        %v4607 = vpop.f32.mrb[0].mxu0
        %4608 = vmatprep.mubr.f32.mxu0 0.0
        %4609 = vmatmul.mubr.f32.gmra.mrb[0].mxu0 %v4391
        %v4610 = vpop.f32.mrb[0].mxu0
        %v4611 = vadd.f32 0.0, %v4610
        %v4612 = vpop.f32.mrb[0].mxu0
        %4613 = vmatprep.mubr.f32.mxu0 0.0
        %4614 = vmatmul.mubr.f32.gmra.mrb[0].mxu0 %v4394
        %v4615 = vpop.f32.mrb[0].mxu0
        %v4616 = vadd.f32 0.0, %v4615
        %v4617 = vpop.f32.mrb[0].mxu0
        %4618 = vmatprep.mubr.f32.mxu0 0.0
        %4619 = vmatmul.mubr.f32.gmra.mrb[0].mxu0 %v4397
        %v4620 = vpop.f32.mrb[0].mxu0
        %v4621 = vadd.f32 0.0, %v4620
        %v4622 = vpop.f32.mrb[0].mxu0
        %4623 = vdwg.mxu0
        %v4624 = vadd.f32 %v4262, %v4466
        %v4625 = vadd.f32 %v4263, %v4471
        %v4626 = vadd.f32 %v4264, %v4476
        %v4627 = vadd.f32 %v4265, %v4481
        %v4628 = vadd.f32 %v4266, %v4486
        %v4629 = vadd.f32 %v4267, %v4491
        %v4630 = vadd.f32 %v4268, %v4496
        %v4631 = vadd.f32 %v4269, %v4501
        %v4632 = vadd.f32 %v4270, %v4506
        %v4633 = vadd.f32 %v4271, %v4511
        %v4634 = vadd.f32 %v4272, %v4516
        %v4635 = vadd.f32 %v4273, %v4521
        %v4636 = vadd.f32 %v4274, %v4526
        %v4637 = vadd.f32 %v4275, %v4531
        %v4638 = vadd.f32 %v4276, %v4536
        %v4639 = vadd.f32 %v4277, %v4541
        %v4640 = vadd.f32 %v4278, %v4546
        %v4641 = vadd.f32 %v4279, %v4551
        %v4642 = vadd.f32 %v4280, %v4556
        %v4643 = vadd.f32 %v4281, %v4561
        %v4644 = vadd.f32 %v4282, %v4566
        %v4645 = vadd.f32 %v4283, %v4571
        %v4646 = vadd.f32 %v4284, %v4576
        %v4647 = vadd.f32 %v4285, %v4581
        %v4648 = vadd.f32 %v4286, %v4586
        %v4649 = vadd.f32 %v4287, %v4591
        %v4650 = vadd.f32 %v4288, %v4596
        %v4651 = vadd.f32 %v4289, %v4601
        %v4652 = vadd.f32 %v4290, %v4606
        %v4653 = vadd.f32 %v4291, %v4611
        %v4654 = vadd.f32 %v4292, %v4616
        %v4655 = vadd.f32 %v4293, %v4621
        %4656 = vst [vmem:[#allocation3] sm:$0xff] %v4624
        %4657 = vst [vmem:[#allocation3 + $0x8] sm:$0xff] %v4625
        %4658 = vst [vmem:[#allocation3 + $0x10] sm:$0xff] %v4626
        %4659 = vst [vmem:[#allocation3 + $0x18] sm:$0xff] %v4627
        %4660 = vst [vmem:[#allocation3 + $0x20] sm:$0xff] %v4628
        %4661 = vst [vmem:[#allocation3 + $0x28] sm:$0xff] %v4629
        %4662 = vst [vmem:[#allocation3 + $0x30] sm:$0xff] %v4630
        %4663 = vst [vmem:[#allocation3 + $0x38] sm:$0xff] %v4631
        %4664 = vst [vmem:[#allocation3 + $0x40] sm:$0xff] %v4632
        %4665 = vst [vmem:[#allocation3 + $0x48] sm:$0xff] %v4633
        %4666 = vst [vmem:[#allocation3 + $0x50] sm:$0xff] %v4634
        %4667 = vst [vmem:[#allocation3 + $0x58] sm:$0xff] %v4635
        %4668 = vst [vmem:[#allocation3 + $0x60] sm:$0xff] %v4636
        %4669 = vst [vmem:[#allocation3 + $0x68] sm:$0xff] %v4637
        %4670 = vst [vmem:[#allocation3 + $0x70] sm:$0xff] %v4638
        %4671 = vst [vmem:[#allocation3 + $0x78] sm:$0xff] %v4639
        %4672 = vst [vmem:[#allocation3 + $0x80] sm:$0xff] %v4640
        %4673 = vst [vmem:[#allocation3 + $0x88] sm:$0xff] %v4641
        %4674 = vst [vmem:[#allocation3 + $0x90] sm:$0xff] %v4642
        %4675 = vst [vmem:[#allocation3 + $0x98] sm:$0xff] %v4643
        %4676 = vst [vmem:[#allocation3 + $0xa0] sm:$0xff] %v4644
        %4677 = vst [vmem:[#allocation3 + $0xa8] sm:$0xff] %v4645
        %4678 = vst [vmem:[#allocation3 + $0xb0] sm:$0xff] %v4646
        %4679 = vst [vmem:[#allocation3 + $0xb8] sm:$0xff] %v4647
        %4680 = vst [vmem:[#allocation3 + $0xc0] sm:$0xff] %v4648
        %4681 = vst [vmem:[#allocation3 + $0xc8] sm:$0xff] %v4649
        %4682 = vst [vmem:[#allocation3 + $0xd0] sm:$0xff] %v4650
        %4683 = vst [vmem:[#allocation3 + $0xd8] sm:$0xff] %v4651
        %4684 = vst [vmem:[#allocation3 + $0xe0] sm:$0xff] %v4652
        %4685 = vst [vmem:[#allocation3 + $0xe8] sm:$0xff] %v4653
        %4686 = vst [vmem:[#allocation3 + $0xf0] sm:$0xff] %v4654
        %4687 = vst [vmem:[#allocation3 + $0xf8] sm:$0xff] %v4655
        %v4688 = vld [vmem:[%s4229 + $0x1] sm:$0xff]
        %v4689 = vld [vmem:[%s4229 + $0x11] sm:$0xff]
        %v4690 = vld [vmem:[%s4229 + $0x21] sm:$0xff]
        %v4691 = vld [vmem:[%s4229 + $0x31] sm:$0xff]
        %v4692 = vld [vmem:[%s4229 + $0x41] sm:$0xff]
        %v4693 = vld [vmem:[%s4229 + $0x51] sm:$0xff]
        %v4694 = vld [vmem:[%s4229 + $0x61] sm:$0xff]
        %v4695 = vld [vmem:[%s4229 + $0x71] sm:$0xff]
        %v4696 = vld [vmem:[%s4229 + $0xa1] sm:$0xff]
        %v4697 = vld [vmem:[%s4229 + $0xb1] sm:$0xff]
        %v4698 = vld [vmem:[%s4229 + $0xc1] sm:$0xff]
        %v4699 = vld [vmem:[%s4229 + $0xd1] sm:$0xff]
        %v4700 = vld [vmem:[%s4229 + $0xe1] sm:$0xff]
        %v4701 = vld [vmem:[%s4229 + $0xf1] sm:$0xff]
        %v4702 = vld [vmem:[%s4229 + $0x101] sm:$0xff]
        %v4703 = vld [vmem:[%s4229 + $0x111] sm:$0xff]
        %v4704 = vld [vmem:[%s4229 + $0x141] sm:$0xff]
        %v4705 = vld [vmem:[%s4229 + $0x151] sm:$0xff]
        %v4706 = vld [vmem:[%s4229 + $0x161] sm:$0xff]
        %v4707 = vld [vmem:[%s4229 + $0x171] sm:$0xff]
        %v4708 = vld [vmem:[%s4229 + $0x181] sm:$0xff]
        %v4709 = vld [vmem:[%s4229 + $0x191] sm:$0xff]
        %v4710 = vld [vmem:[%s4229 + $0x1a1] sm:$0xff]
        %v4711 = vld [vmem:[%s4229 + $0x1b1] sm:$0xff]
        %v4712 = vld [vmem:[%s4229 + $0x1e1] sm:$0xff]
        %v4713 = vld [vmem:[%s4229 + $0x1f1] sm:$0xff]
        %v4714 = vld [vmem:[%s4229 + $0x201] sm:$0xff]
        %v4715 = vld [vmem:[%s4229 + $0x211] sm:$0xff]
        %v4716 = vld [vmem:[%s4229 + $0x221] sm:$0xff]
        %v4717 = vld [vmem:[%s4229 + $0x231] sm:$0xff]
        %v4718 = vld [vmem:[%s4229 + $0x241] sm:$0xff]
        %v4719 = vld [vmem:[%s4229 + $0x251] sm:$0xff]
        %v4720 = vld [vmem:[#allocation3] sm:$0xff]
        %v4721 = vld [vmem:[#allocation3 + $0x8] sm:$0xff]
        %v4722 = vld [vmem:[#allocation3 + $0x10] sm:$0xff]
        %v4723 = vld [vmem:[#allocation3 + $0x18] sm:$0xff]
        %v4724 = vld [vmem:[#allocation3 + $0x20] sm:$0xff]
        %v4725 = vld [vmem:[#allocation3 + $0x28] sm:$0xff]
        %v4726 = vld [vmem:[#allocation3 + $0x30] sm:$0xff]
        %v4727 = vld [vmem:[#allocation3 + $0x38] sm:$0xff]
        %v4728 = vld [vmem:[#allocation3 + $0x40] sm:$0xff]
        %v4729 = vld [vmem:[#allocation3 + $0x48] sm:$0xff]
        %v4730 = vld [vmem:[#allocation3 + $0x50] sm:$0xff]
        %v4731 = vld [vmem:[#allocation3 + $0x58] sm:$0xff]
        %v4732 = vld [vmem:[#allocation3 + $0x60] sm:$0xff]
        %v4733 = vld [vmem:[#allocation3 + $0x68] sm:$0xff]
        %v4734 = vld [vmem:[#allocation3 + $0x70] sm:$0xff]
        %v4735 = vld [vmem:[#allocation3 + $0x78] sm:$0xff]
        %v4736 = vld [vmem:[#allocation3 + $0x80] sm:$0xff]
        %v4737 = vld [vmem:[#allocation3 + $0x88] sm:$0xff]
        %v4738 = vld [vmem:[#allocation3 + $0x90] sm:$0xff]
        %v4739 = vld [vmem:[#allocation3 + $0x98] sm:$0xff]
        %v4740 = vld [vmem:[#allocation3 + $0xa0] sm:$0xff]
        %v4741 = vld [vmem:[#allocation3 + $0xa8] sm:$0xff]
        %v4742 = vld [vmem:[#allocation3 + $0xb0] sm:$0xff]
        %v4743 = vld [vmem:[#allocation3 + $0xb8] sm:$0xff]
        %v4744 = vld [vmem:[#allocation3 + $0xc0] sm:$0xff]
        %v4745 = vld [vmem:[#allocation3 + $0xc8] sm:$0xff]
        %v4746 = vld [vmem:[#allocation3 + $0xd0] sm:$0xff]
        %v4747 = vld [vmem:[#allocation3 + $0xd8] sm:$0xff]
        %v4748 = vld [vmem:[#allocation3 + $0xe0] sm:$0xff]
        %v4749 = vld [vmem:[#allocation3 + $0xe8] sm:$0xff]
        %v4750 = vld [vmem:[#allocation3 + $0xf0] sm:$0xff]
        %v4751 = vld [vmem:[#allocation3 + $0xf8] sm:$0xff]
        %s4752 = scalar_lea.vmem [#allocation15], 448
        %v4753 = vld [vmem:[%s4752] sm:$0xff]
        %v4754 = vld [vmem:[%s4752 + $0x8] sm:$0xff]
        %v4755 = vld [vmem:[%s4752 + $0x10] sm:$0xff]
        %v4756 = vld [vmem:[%s4752 + $0x18] sm:$0xff]
        %v4757 = vld [vmem:[%s4752 + $0x20] sm:$0xff]
        %v4758 = vld [vmem:[%s4752 + $0x28] sm:$0xff]
        %v4759 = vld [vmem:[%s4752 + $0x30] sm:$0xff]
        %v4760 = vld [vmem:[%s4752 + $0x38] sm:$0xff]
        %v4762 = vsel %vm447, %v4688, 0
        %v4765 = vsel %vm447, %v4689, 0
        %v4768 = vsel %vm447, %v4690, 0
        %v4771 = vsel %vm447, %v4691, 0
        %v4774 = vsel %vm447, %v4692, 0
        %v4777 = vsel %vm447, %v4693, 0
        %v4780 = vsel %vm447, %v4694, 0
        %v4783 = vsel %vm447, %v4695, 0
        %v4786 = vsel %vm447, %v4696, 0
        %v4789 = vsel %vm447, %v4697, 0
        %v4792 = vsel %vm447, %v4698, 0
        %v4795 = vsel %vm447, %v4699, 0
        %v4798 = vsel %vm447, %v4700, 0
        %v4801 = vsel %vm447, %v4701, 0
        %v4804 = vsel %vm447, %v4702, 0
        %v4807 = vsel %vm447, %v4703, 0
        %v4810 = vsel %vm447, %v4704, 0
        %v4813 = vsel %vm447, %v4705, 0
        %v4816 = vsel %vm447, %v4706, 0
        %v4819 = vsel %vm447, %v4707, 0
        %v4822 = vsel %vm447, %v4708, 0
        %v4825 = vsel %vm447, %v4709, 0
        %v4828 = vsel %vm447, %v4710, 0
        %v4831 = vsel %vm447, %v4711, 0
        %v4834 = vsel %vm447, %v4712, 0
        %v4837 = vsel %vm447, %v4713, 0
        %v4840 = vsel %vm447, %v4714, 0
        %v4843 = vsel %vm447, %v4715, 0
        %v4846 = vsel %vm447, %v4716, 0
        %v4849 = vsel %vm447, %v4717, 0
        %v4852 = vsel %vm447, %v4718, 0
        %v4855 = vsel %vm447, %v4719, 0
        %4857 = vmatprep.subr.mxu0 0.0
        %4858 = vmatpush1.msra.mxu0 %v4753
        %4859 = vmatprep.subr.mxu0 0.0
        %4860 = vmatpush1.msra.mxu0 %v4754
        %4861 = vmatprep.subr.mxu0 0.0
        %4862 = vmatpush1.msra.mxu0 %v4755
        %4863 = vmatprep.subr.mxu0 0.0
        %4864 = vmatpush1.msra.mxu0 %v4756
        %4865 = vmatprep.subr.mxu0 0.0
        %4866 = vmatpush1.msra.mxu0 %v4757
        %4867 = vmatprep.subr.mxu0 0.0
        %4868 = vmatpush1.msra.mxu0 %v4758
        %4869 = vmatprep.subr.mxu0 0.0
        %4870 = vmatpush1.msra.mxu0 %v4759
        %4871 = vmatprep.subr.mxu0 0.0
        %4872 = vmatpush1.msra.mxu0 %v4760
        %4873 = vmatprep.subr.mxu0 0.0
        %4874 = vmatpush1.msra.mxu0 0.0
        %4875 = vmatprep.subr.mxu0 0.0
        %4876 = vmatpush1.msra.mxu0 0.0
        %4877 = vmatprep.subr.mxu0 0.0
        %4878 = vmatpush1.msra.mxu0 0.0
        %4879 = vmatprep.subr.mxu0 0.0
        %4880 = vmatpush1.msra.mxu0 0.0
        %4881 = vmatprep.subr.mxu0 0.0
        %4882 = vmatpush1.msra.mxu0 0.0
        %4883 = vmatprep.subr.mxu0 0.0
        %4884 = vmatpush1.msra.mxu0 0.0
        %4885 = vmatprep.subr.mxu0 0.0
        %4886 = vmatpush1.msra.mxu0 0.0
        %4887 = vmatprep.subr.mxu0 0.0
        %4888 = vmatpush1.msra.mxu0 0.0
        %4889 = vmatprep.subr.mxu0 0.0
        %4890 = vmatpush1.msra.mxu0 0.0
        %4891 = vmatprep.subr.mxu0 0.0
        %4892 = vmatpush1.msra.mxu0 0.0
        %4893 = vmatprep.subr.mxu0 0.0
        %4894 = vmatpush1.msra.mxu0 0.0
        %4895 = vmatprep.subr.mxu0 0.0
        %4896 = vmatpush1.msra.mxu0 0.0
        %4897 = vmatprep.subr.mxu0 0.0
        %4898 = vmatpush1.msra.mxu0 0.0
        %4899 = vmatprep.subr.mxu0 0.0
        %4900 = vmatpush1.msra.mxu0 0.0
        %4901 = vmatprep.subr.mxu0 0.0
        %4902 = vmatpush1.msra.mxu0 0.0
        %4903 = vmatprep.subr.mxu0 0.0
        %4904 = vmatpush1.msra.mxu0 0.0
        %4905 = vmatprep.subr.mxu0 0.0
        %4906 = vmatpush1.msra.mxu0 0.0
        %4907 = vmatprep.subr.mxu0 0.0
        %4908 = vmatpush1.msra.mxu0 0.0
        %4909 = vmatprep.subr.mxu0 0.0
        %4910 = vmatpush1.msra.mxu0 0.0
        %4911 = vmatprep.subr.mxu0 0.0
        %4912 = vmatpush1.msra.mxu0 0.0
        %4913 = vmatprep.subr.mxu0 0.0
        %4914 = vmatpush1.msra.mxu0 0.0
        %4915 = vmatprep.subr.mxu0 0.0
        %4916 = vmatpush1.msra.mxu0 0.0
        %4917 = vmatprep.subr.mxu0 0.0
        %4918 = vmatpush1.msra.mxu0 0.0
        %4919 = vmatprep.subr.mxu0 0.0
        %4920 = vmatpush1.msra.mxu0 0.0
        %4921 = vmatprep.mubr.f32.mxu0 0.0
        %4922 = vmatmul.mubr.f32.gmra.mrb[0].mxu0 %v4762
        %v4923 = vpop.f32.mrb[0].mxu0
        %v4924 = vadd.f32 0.0, %v4923
        %v4925 = vpop.f32.mrb[0].mxu0
        %4926 = vmatprep.mubr.f32.mxu0 0.0
        %4927 = vmatmul.mubr.f32.gmra.mrb[0].mxu0 %v4765
        %v4928 = vpop.f32.mrb[0].mxu0
        %v4929 = vadd.f32 0.0, %v4928
        %v4930 = vpop.f32.mrb[0].mxu0
        %4931 = vmatprep.mubr.f32.mxu0 0.0
        %4932 = vmatmul.mubr.f32.gmra.mrb[0].mxu0 %v4768
        %v4933 = vpop.f32.mrb[0].mxu0
        %v4934 = vadd.f32 0.0, %v4933
        %v4935 = vpop.f32.mrb[0].mxu0
        %4936 = vmatprep.mubr.f32.mxu0 0.0
        %4937 = vmatmul.mubr.f32.gmra.mrb[0].mxu0 %v4771
        %v4938 = vpop.f32.mrb[0].mxu0
        %v4939 = vadd.f32 0.0, %v4938
        %v4940 = vpop.f32.mrb[0].mxu0
        %4941 = vmatprep.mubr.f32.mxu0 0.0
        %4942 = vmatmul.mubr.f32.gmra.mrb[0].mxu0 %v4774
        %v4943 = vpop.f32.mrb[0].mxu0
        %v4944 = vadd.f32 0.0, %v4943
        %v4945 = vpop.f32.mrb[0].mxu0
        %4946 = vmatprep.mubr.f32.mxu0 0.0
        %4947 = vmatmul.mubr.f32.gmra.mrb[0].mxu0 %v4777
        %v4948 = vpop.f32.mrb[0].mxu0
        %v4949 = vadd.f32 0.0, %v4948
        %v4950 = vpop.f32.mrb[0].mxu0
        %4951 = vmatprep.mubr.f32.mxu0 0.0
        %4952 = vmatmul.mubr.f32.gmra.mrb[0].mxu0 %v4780
        %v4953 = vpop.f32.mrb[0].mxu0
        %v4954 = vadd.f32 0.0, %v4953
        %v4955 = vpop.f32.mrb[0].mxu0
        %4956 = vmatprep.mubr.f32.mxu0 0.0
        %4957 = vmatmul.mubr.f32.gmra.mrb[0].mxu0 %v4783
        %v4958 = vpop.f32.mrb[0].mxu0
        %v4959 = vadd.f32 0.0, %v4958
        %v4960 = vpop.f32.mrb[0].mxu0
        %4961 = vmatprep.mubr.f32.mxu0 0.0
        %4962 = vmatmul.mubr.f32.gmra.mrb[0].mxu0 %v4786
        %v4963 = vpop.f32.mrb[0].mxu0
        %v4964 = vadd.f32 0.0, %v4963
        %v4965 = vpop.f32.mrb[0].mxu0
        %4966 = vmatprep.mubr.f32.mxu0 0.0
        %4967 = vmatmul.mubr.f32.gmra.mrb[0].mxu0 %v4789
        %v4968 = vpop.f32.mrb[0].mxu0
        %v4969 = vadd.f32 0.0, %v4968
        %v4970 = vpop.f32.mrb[0].mxu0
        %4971 = vmatprep.mubr.f32.mxu0 0.0
        %4972 = vmatmul.mubr.f32.gmra.mrb[0].mxu0 %v4792
        %v4973 = vpop.f32.mrb[0].mxu0
        %v4974 = vadd.f32 0.0, %v4973
        %v4975 = vpop.f32.mrb[0].mxu0
        %4976 = vmatprep.mubr.f32.mxu0 0.0
        %4977 = vmatmul.mubr.f32.gmra.mrb[0].mxu0 %v4795
        %v4978 = vpop.f32.mrb[0].mxu0
        %v4979 = vadd.f32 0.0, %v4978
        %v4980 = vpop.f32.mrb[0].mxu0
        %4981 = vmatprep.mubr.f32.mxu0 0.0
        %4982 = vmatmul.mubr.f32.gmra.mrb[0].mxu0 %v4798
        %v4983 = vpop.f32.mrb[0].mxu0
        %v4984 = vadd.f32 0.0, %v4983
        %v4985 = vpop.f32.mrb[0].mxu0
        %4986 = vmatprep.mubr.f32.mxu0 0.0
        %4987 = vmatmul.mubr.f32.gmra.mrb[0].mxu0 %v4801
        %v4988 = vpop.f32.mrb[0].mxu0
        %v4989 = vadd.f32 0.0, %v4988
        %v4990 = vpop.f32.mrb[0].mxu0
        %4991 = vmatprep.mubr.f32.mxu0 0.0
        %4992 = vmatmul.mubr.f32.gmra.mrb[0].mxu0 %v4804
        %v4993 = vpop.f32.mrb[0].mxu0
        %v4994 = vadd.f32 0.0, %v4993
        %v4995 = vpop.f32.mrb[0].mxu0
        %4996 = vmatprep.mubr.f32.mxu0 0.0
        %4997 = vmatmul.mubr.f32.gmra.mrb[0].mxu0 %v4807
        %v4998 = vpop.f32.mrb[0].mxu0
        %v4999 = vadd.f32 0.0, %v4998
        %v5000 = vpop.f32.mrb[0].mxu0
        %5001 = vmatprep.mubr.f32.mxu0 0.0
        %5002 = vmatmul.mubr.f32.gmra.mrb[0].mxu0 %v4810
        %v5003 = vpop.f32.mrb[0].mxu0
        %v5004 = vadd.f32 0.0, %v5003
        %v5005 = vpop.f32.mrb[0].mxu0
        %5006 = vmatprep.mubr.f32.mxu0 0.0
        %5007 = vmatmul.mubr.f32.gmra.mrb[0].mxu0 %v4813
        %v5008 = vpop.f32.mrb[0].mxu0
        %v5009 = vadd.f32 0.0, %v5008
        %v5010 = vpop.f32.mrb[0].mxu0
        %5011 = vmatprep.mubr.f32.mxu0 0.0
        %5012 = vmatmul.mubr.f32.gmra.mrb[0].mxu0 %v4816
        %v5013 = vpop.f32.mrb[0].mxu0
        %v5014 = vadd.f32 0.0, %v5013
        %v5015 = vpop.f32.mrb[0].mxu0
        %5016 = vmatprep.mubr.f32.mxu0 0.0
        %5017 = vmatmul.mubr.f32.gmra.mrb[0].mxu0 %v4819
        %v5018 = vpop.f32.mrb[0].mxu0
        %v5019 = vadd.f32 0.0, %v5018
        %v5020 = vpop.f32.mrb[0].mxu0
        %5021 = vmatprep.mubr.f32.mxu0 0.0
        %5022 = vmatmul.mubr.f32.gmra.mrb[0].mxu0 %v4822
        %v5023 = vpop.f32.mrb[0].mxu0
        %v5024 = vadd.f32 0.0, %v5023
        %v5025 = vpop.f32.mrb[0].mxu0
        %5026 = vmatprep.mubr.f32.mxu0 0.0
        %5027 = vmatmul.mubr.f32.gmra.mrb[0].mxu0 %v4825
        %v5028 = vpop.f32.mrb[0].mxu0
        %v5029 = vadd.f32 0.0, %v5028
        %v5030 = vpop.f32.mrb[0].mxu0
        %5031 = vmatprep.mubr.f32.mxu0 0.0
        %5032 = vmatmul.mubr.f32.gmra.mrb[0].mxu0 %v4828
        %v5033 = vpop.f32.mrb[0].mxu0
        %v5034 = vadd.f32 0.0, %v5033
        %v5035 = vpop.f32.mrb[0].mxu0
        %5036 = vmatprep.mubr.f32.mxu0 0.0
        %5037 = vmatmul.mubr.f32.gmra.mrb[0].mxu0 %v4831
        %v5038 = vpop.f32.mrb[0].mxu0
        %v5039 = vadd.f32 0.0, %v5038
        %v5040 = vpop.f32.mrb[0].mxu0
        %5041 = vmatprep.mubr.f32.mxu0 0.0
        %5042 = vmatmul.mubr.f32.gmra.mrb[0].mxu0 %v4834
        %v5043 = vpop.f32.mrb[0].mxu0
        %v5044 = vadd.f32 0.0, %v5043
        %v5045 = vpop.f32.mrb[0].mxu0
        %5046 = vmatprep.mubr.f32.mxu0 0.0
        %5047 = vmatmul.mubr.f32.gmra.mrb[0].mxu0 %v4837
        %v5048 = vpop.f32.mrb[0].mxu0
        %v5049 = vadd.f32 0.0, %v5048
        %v5050 = vpop.f32.mrb[0].mxu0
        %5051 = vmatprep.mubr.f32.mxu0 0.0
        %5052 = vmatmul.mubr.f32.gmra.mrb[0].mxu0 %v4840
        %v5053 = vpop.f32.mrb[0].mxu0
        %v5054 = vadd.f32 0.0, %v5053
        %v5055 = vpop.f32.mrb[0].mxu0
        %5056 = vmatprep.mubr.f32.mxu0 0.0
        %5057 = vmatmul.mubr.f32.gmra.mrb[0].mxu0 %v4843
        %v5058 = vpop.f32.mrb[0].mxu0
        %v5059 = vadd.f32 0.0, %v5058
        %v5060 = vpop.f32.mrb[0].mxu0
        %5061 = vmatprep.mubr.f32.mxu0 0.0
        %5062 = vmatmul.mubr.f32.gmra.mrb[0].mxu0 %v4846
        %v5063 = vpop.f32.mrb[0].mxu0
        %v5064 = vadd.f32 0.0, %v5063
        %v5065 = vpop.f32.mrb[0].mxu0
        %5066 = vmatprep.mubr.f32.mxu0 0.0
        %5067 = vmatmul.mubr.f32.gmra.mrb[0].mxu0 %v4849
        %v5068 = vpop.f32.mrb[0].mxu0
        %v5069 = vadd.f32 0.0, %v5068
        %v5070 = vpop.f32.mrb[0].mxu0
        %5071 = vmatprep.mubr.f32.mxu0 0.0
        %5072 = vmatmul.mubr.f32.gmra.mrb[0].mxu0 %v4852
        %v5073 = vpop.f32.mrb[0].mxu0
        %v5074 = vadd.f32 0.0, %v5073
        %v5075 = vpop.f32.mrb[0].mxu0
        %5076 = vmatprep.mubr.f32.mxu0 0.0
        %5077 = vmatmul.mubr.f32.gmra.mrb[0].mxu0 %v4855
        %v5078 = vpop.f32.mrb[0].mxu0
        %v5079 = vadd.f32 0.0, %v5078
        %v5080 = vpop.f32.mrb[0].mxu0
        %5081 = vdwg.mxu0
        %v5082 = vadd.f32 %v4720, %v4924
        %v5083 = vadd.f32 %v4721, %v4929
        %v5084 = vadd.f32 %v4722, %v4934
        %v5085 = vadd.f32 %v4723, %v4939
        %v5086 = vadd.f32 %v4724, %v4944
        %v5087 = vadd.f32 %v4725, %v4949
        %v5088 = vadd.f32 %v4726, %v4954
        %v5089 = vadd.f32 %v4727, %v4959
        %v5090 = vadd.f32 %v4728, %v4964
        %v5091 = vadd.f32 %v4729, %v4969
        %v5092 = vadd.f32 %v4730, %v4974
        %v5093 = vadd.f32 %v4731, %v4979
        %v5094 = vadd.f32 %v4732, %v4984
        %v5095 = vadd.f32 %v4733, %v4989
        %v5096 = vadd.f32 %v4734, %v4994
        %v5097 = vadd.f32 %v4735, %v4999
        %v5098 = vadd.f32 %v4736, %v5004
        %v5099 = vadd.f32 %v4737, %v5009
        %v5100 = vadd.f32 %v4738, %v5014
        %v5101 = vadd.f32 %v4739, %v5019
        %v5102 = vadd.f32 %v4740, %v5024
        %v5103 = vadd.f32 %v4741, %v5029
        %v5104 = vadd.f32 %v4742, %v5034
        %v5105 = vadd.f32 %v4743, %v5039
        %v5106 = vadd.f32 %v4744, %v5044
        %v5107 = vadd.f32 %v4745, %v5049
        %v5108 = vadd.f32 %v4746, %v5054
        %v5109 = vadd.f32 %v4747, %v5059
        %v5110 = vadd.f32 %v4748, %v5064
        %v5111 = vadd.f32 %v4749, %v5069
        %v5112 = vadd.f32 %v4750, %v5074
        %v5113 = vadd.f32 %v4751, %v5079
        %5114 = vst [vmem:[#allocation3] sm:$0xff] %v5082
        %5115 = vst [vmem:[#allocation3 + $0x8] sm:$0xff] %v5083
        %5116 = vst [vmem:[#allocation3 + $0x10] sm:$0xff] %v5084
        %5117 = vst [vmem:[#allocation3 + $0x18] sm:$0xff] %v5085
        %5118 = vst [vmem:[#allocation3 + $0x20] sm:$0xff] %v5086
        %5119 = vst [vmem:[#allocation3 + $0x28] sm:$0xff] %v5087
        %5120 = vst [vmem:[#allocation3 + $0x30] sm:$0xff] %v5088
        %5121 = vst [vmem:[#allocation3 + $0x38] sm:$0xff] %v5089
        %5122 = vst [vmem:[#allocation3 + $0x40] sm:$0xff] %v5090
        %5123 = vst [vmem:[#allocation3 + $0x48] sm:$0xff] %v5091
        %5124 = vst [vmem:[#allocation3 + $0x50] sm:$0xff] %v5092
        %5125 = vst [vmem:[#allocation3 + $0x58] sm:$0xff] %v5093
        %5126 = vst [vmem:[#allocation3 + $0x60] sm:$0xff] %v5094
        %5127 = vst [vmem:[#allocation3 + $0x68] sm:$0xff] %v5095
        %5128 = vst [vmem:[#allocation3 + $0x70] sm:$0xff] %v5096
        %5129 = vst [vmem:[#allocation3 + $0x78] sm:$0xff] %v5097
        %5130 = vst [vmem:[#allocation3 + $0x80] sm:$0xff] %v5098
        %5131 = vst [vmem:[#allocation3 + $0x88] sm:$0xff] %v5099
        %5132 = vst [vmem:[#allocation3 + $0x90] sm:$0xff] %v5100
        %5133 = vst [vmem:[#allocation3 + $0x98] sm:$0xff] %v5101
        %5134 = vst [vmem:[#allocation3 + $0xa0] sm:$0xff] %v5102
        %5135 = vst [vmem:[#allocation3 + $0xa8] sm:$0xff] %v5103
        %5136 = vst [vmem:[#allocation3 + $0xb0] sm:$0xff] %v5104
        %5137 = vst [vmem:[#allocation3 + $0xb8] sm:$0xff] %v5105
        %5138 = vst [vmem:[#allocation3 + $0xc0] sm:$0xff] %v5106
        %5139 = vst [vmem:[#allocation3 + $0xc8] sm:$0xff] %v5107
        %5140 = vst [vmem:[#allocation3 + $0xd0] sm:$0xff] %v5108
        %5141 = vst [vmem:[#allocation3 + $0xd8] sm:$0xff] %v5109
        %5142 = vst [vmem:[#allocation3 + $0xe0] sm:$0xff] %v5110
        %5143 = vst [vmem:[#allocation3 + $0xe8] sm:$0xff] %v5111
        %5144 = vst [vmem:[#allocation3 + $0xf0] sm:$0xff] %v5112
        %5145 = vst [vmem:[#allocation3 + $0xf8] sm:$0xff] %v5113
        %v5146 = vld [vmem:[%s4229 + $0x2] sm:$0xff]
        %v5147 = vld [vmem:[%s4229 + $0x12] sm:$0xff]
        %v5148 = vld [vmem:[%s4229 + $0x22] sm:$0xff]
        %v5149 = vld [vmem:[%s4229 + $0x32] sm:$0xff]
        %v5150 = vld [vmem:[%s4229 + $0x42] sm:$0xff]
        %v5151 = vld [vmem:[%s4229 + $0x52] sm:$0xff]
        %v5152 = vld [vmem:[%s4229 + $0x62] sm:$0xff]
        %v5153 = vld [vmem:[%s4229 + $0x72] sm:$0xff]
        %v5154 = vld [vmem:[%s4229 + $0xa2] sm:$0xff]
        %v5155 = vld [vmem:[%s4229 + $0xb2] sm:$0xff]
        %v5156 = vld [vmem:[%s4229 + $0xc2] sm:$0xff]
        %v5157 = vld [vmem:[%s4229 + $0xd2] sm:$0xff]
        %v5158 = vld [vmem:[%s4229 + $0xe2] sm:$0xff]
        %v5159 = vld [vmem:[%s4229 + $0xf2] sm:$0xff]
        %v5160 = vld [vmem:[%s4229 + $0x102] sm:$0xff]
        %v5161 = vld [vmem:[%s4229 + $0x112] sm:$0xff]
        %v5162 = vld [vmem:[%s4229 + $0x142] sm:$0xff]
        %v5163 = vld [vmem:[%s4229 + $0x152] sm:$0xff]
        %v5164 = vld [vmem:[%s4229 + $0x162] sm:$0xff]
        %v5165 = vld [vmem:[%s4229 + $0x172] sm:$0xff]
        %v5166 = vld [vmem:[%s4229 + $0x182] sm:$0xff]
        %v5167 = vld [vmem:[%s4229 + $0x192] sm:$0xff]
        %v5168 = vld [vmem:[%s4229 + $0x1a2] sm:$0xff]
        %v5169 = vld [vmem:[%s4229 + $0x1b2] sm:$0xff]
        %v5170 = vld [vmem:[%s4229 + $0x1e2] sm:$0xff]
        %v5171 = vld [vmem:[%s4229 + $0x1f2] sm:$0xff]
        %v5172 = vld [vmem:[%s4229 + $0x202] sm:$0xff]
        %v5173 = vld [vmem:[%s4229 + $0x212] sm:$0xff]
        %v5174 = vld [vmem:[%s4229 + $0x222] sm:$0xff]
        %v5175 = vld [vmem:[%s4229 + $0x232] sm:$0xff]
        %v5176 = vld [vmem:[%s4229 + $0x242] sm:$0xff]
        %v5177 = vld [vmem:[%s4229 + $0x252] sm:$0xff]
        %v5178 = vld [vmem:[#allocation3] sm:$0xff]
        %v5179 = vld [vmem:[#allocation3 + $0x8] sm:$0xff]
        %v5180 = vld [vmem:[#allocation3 + $0x10] sm:$0xff]
        %v5181 = vld [vmem:[#allocation3 + $0x18] sm:$0xff]
        %v5182 = vld [vmem:[#allocation3 + $0x20] sm:$0xff]
        %v5183 = vld [vmem:[#allocation3 + $0x28] sm:$0xff]
        %v5184 = vld [vmem:[#allocation3 + $0x30] sm:$0xff]
        %v5185 = vld [vmem:[#allocation3 + $0x38] sm:$0xff]
        %v5186 = vld [vmem:[#allocation3 + $0x40] sm:$0xff]
        %v5187 = vld [vmem:[#allocation3 + $0x48] sm:$0xff]
        %v5188 = vld [vmem:[#allocation3 + $0x50] sm:$0xff]
        %v5189 = vld [vmem:[#allocation3 + $0x58] sm:$0xff]
        %v5190 = vld [vmem:[#allocation3 + $0x60] sm:$0xff]
        %v5191 = vld [vmem:[#allocation3 + $0x68] sm:$0xff]
        %v5192 = vld [vmem:[#allocation3 + $0x70] sm:$0xff]
        %v5193 = vld [vmem:[#allocation3 + $0x78] sm:$0xff]
        %v5194 = vld [vmem:[#allocation3 + $0x80] sm:$0xff]
        %v5195 = vld [vmem:[#allocation3 + $0x88] sm:$0xff]
        %v5196 = vld [vmem:[#allocation3 + $0x90] sm:$0xff]
        %v5197 = vld [vmem:[#allocation3 + $0x98] sm:$0xff]
        %v5198 = vld [vmem:[#allocation3 + $0xa0] sm:$0xff]
        %v5199 = vld [vmem:[#allocation3 + $0xa8] sm:$0xff]
        %v5200 = vld [vmem:[#allocation3 + $0xb0] sm:$0xff]
        %v5201 = vld [vmem:[#allocation3 + $0xb8] sm:$0xff]
        %v5202 = vld [vmem:[#allocation3 + $0xc0] sm:$0xff]
        %v5203 = vld [vmem:[#allocation3 + $0xc8] sm:$0xff]
        %v5204 = vld [vmem:[#allocation3 + $0xd0] sm:$0xff]
        %v5205 = vld [vmem:[#allocation3 + $0xd8] sm:$0xff]
        %v5206 = vld [vmem:[#allocation3 + $0xe0] sm:$0xff]
        %v5207 = vld [vmem:[#allocation3 + $0xe8] sm:$0xff]
        %v5208 = vld [vmem:[#allocation3 + $0xf0] sm:$0xff]
        %v5209 = vld [vmem:[#allocation3 + $0xf8] sm:$0xff]
        %s5210 = scalar_lea.vmem [#allocation15], 512
        %v5211 = vld [vmem:[%s5210] sm:$0xff]
        %v5212 = vld [vmem:[%s5210 + $0x8] sm:$0xff]
        %v5213 = vld [vmem:[%s5210 + $0x10] sm:$0xff]
        %v5214 = vld [vmem:[%s5210 + $0x18] sm:$0xff]
        %v5215 = vld [vmem:[%s5210 + $0x20] sm:$0xff]
        %v5216 = vld [vmem:[%s5210 + $0x28] sm:$0xff]
        %v5217 = vld [vmem:[%s5210 + $0x30] sm:$0xff]
        %v5218 = vld [vmem:[%s5210 + $0x38] sm:$0xff]
        %v5220 = vsel %vm447, %v5146, 0
        %v5223 = vsel %vm447, %v5147, 0
        %v5226 = vsel %vm447, %v5148, 0
        %v5229 = vsel %vm447, %v5149, 0
        %v5232 = vsel %vm447, %v5150, 0
        %v5235 = vsel %vm447, %v5151, 0
        %v5238 = vsel %vm447, %v5152, 0
        %v5241 = vsel %vm447, %v5153, 0
        %v5244 = vsel %vm447, %v5154, 0
        %v5247 = vsel %vm447, %v5155, 0
        %v5250 = vsel %vm447, %v5156, 0
        %v5253 = vsel %vm447, %v5157, 0
        %v5256 = vsel %vm447, %v5158, 0
        %v5259 = vsel %vm447, %v5159, 0
        %v5262 = vsel %vm447, %v5160, 0
        %v5265 = vsel %vm447, %v5161, 0
        %v5268 = vsel %vm447, %v5162, 0
        %v5271 = vsel %vm447, %v5163, 0
        %v5274 = vsel %vm447, %v5164, 0
        %v5277 = vsel %vm447, %v5165, 0
        %v5280 = vsel %vm447, %v5166, 0
        %v5283 = vsel %vm447, %v5167, 0
        %v5286 = vsel %vm447, %v5168, 0
        %v5289 = vsel %vm447, %v5169, 0
        %v5292 = vsel %vm447, %v5170, 0
        %v5295 = vsel %vm447, %v5171, 0
        %v5298 = vsel %vm447, %v5172, 0
        %v5301 = vsel %vm447, %v5173, 0
        %v5304 = vsel %vm447, %v5174, 0
        %v5307 = vsel %vm447, %v5175, 0
        %v5310 = vsel %vm447, %v5176, 0
        %v5313 = vsel %vm447, %v5177, 0
        %5315 = vmatprep.subr.mxu0 0.0
        %5316 = vmatpush1.msra.mxu0 %v5211
        %5317 = vmatprep.subr.mxu0 0.0
        %5318 = vmatpush1.msra.mxu0 %v5212
        %5319 = vmatprep.subr.mxu0 0.0
        %5320 = vmatpush1.msra.mxu0 %v5213
        %5321 = vmatprep.subr.mxu0 0.0
        %5322 = vmatpush1.msra.mxu0 %v5214
        %5323 = vmatprep.subr.mxu0 0.0
        %5324 = vmatpush1.msra.mxu0 %v5215
        %5325 = vmatprep.subr.mxu0 0.0
        %5326 = vmatpush1.msra.mxu0 %v5216
        %5327 = vmatprep.subr.mxu0 0.0
        %5328 = vmatpush1.msra.mxu0 %v5217
        %5329 = vmatprep.subr.mxu0 0.0
        %5330 = vmatpush1.msra.mxu0 %v5218
        %5331 = vmatprep.subr.mxu0 0.0
        %5332 = vmatpush1.msra.mxu0 0.0
        %5333 = vmatprep.subr.mxu0 0.0
        %5334 = vmatpush1.msra.mxu0 0.0
        %5335 = vmatprep.subr.mxu0 0.0
        %5336 = vmatpush1.msra.mxu0 0.0
        %5337 = vmatprep.subr.mxu0 0.0
        %5338 = vmatpush1.msra.mxu0 0.0
        %5339 = vmatprep.subr.mxu0 0.0
        %5340 = vmatpush1.msra.mxu0 0.0
        %5341 = vmatprep.subr.mxu0 0.0
        %5342 = vmatpush1.msra.mxu0 0.0
        %5343 = vmatprep.subr.mxu0 0.0
        %5344 = vmatpush1.msra.mxu0 0.0
        %5345 = vmatprep.subr.mxu0 0.0
        %5346 = vmatpush1.msra.mxu0 0.0
        %5347 = vmatprep.subr.mxu0 0.0
        %5348 = vmatpush1.msra.mxu0 0.0
        %5349 = vmatprep.subr.mxu0 0.0
        %5350 = vmatpush1.msra.mxu0 0.0
        %5351 = vmatprep.subr.mxu0 0.0
        %5352 = vmatpush1.msra.mxu0 0.0
        %5353 = vmatprep.subr.mxu0 0.0
        %5354 = vmatpush1.msra.mxu0 0.0
        %5355 = vmatprep.subr.mxu0 0.0
        %5356 = vmatpush1.msra.mxu0 0.0
        %5357 = vmatprep.subr.mxu0 0.0
        %5358 = vmatpush1.msra.mxu0 0.0
        %5359 = vmatprep.subr.mxu0 0.0
        %5360 = vmatpush1.msra.mxu0 0.0
        %5361 = vmatprep.subr.mxu0 0.0
        %5362 = vmatpush1.msra.mxu0 0.0
        %5363 = vmatprep.subr.mxu0 0.0
        %5364 = vmatpush1.msra.mxu0 0.0
        %5365 = vmatprep.subr.mxu0 0.0
        %5366 = vmatpush1.msra.mxu0 0.0
        %5367 = vmatprep.subr.mxu0 0.0
        %5368 = vmatpush1.msra.mxu0 0.0
        %5369 = vmatprep.subr.mxu0 0.0
        %5370 = vmatpush1.msra.mxu0 0.0
        %5371 = vmatprep.subr.mxu0 0.0
        %5372 = vmatpush1.msra.mxu0 0.0
        %5373 = vmatprep.subr.mxu0 0.0
        %5374 = vmatpush1.msra.mxu0 0.0
        %5375 = vmatprep.subr.mxu0 0.0
        %5376 = vmatpush1.msra.mxu0 0.0
        %5377 = vmatprep.subr.mxu0 0.0
        %5378 = vmatpush1.msra.mxu0 0.0
        %5379 = vmatprep.mubr.f32.mxu0 0.0
        %5380 = vmatmul.mubr.f32.gmra.mrb[0].mxu0 %v5220
        %v5381 = vpop.f32.mrb[0].mxu0
        %v5382 = vadd.f32 0.0, %v5381
        %v5383 = vpop.f32.mrb[0].mxu0
        %5384 = vmatprep.mubr.f32.mxu0 0.0
        %5385 = vmatmul.mubr.f32.gmra.mrb[0].mxu0 %v5223
        %v5386 = vpop.f32.mrb[0].mxu0
        %v5387 = vadd.f32 0.0, %v5386
        %v5388 = vpop.f32.mrb[0].mxu0
        %5389 = vmatprep.mubr.f32.mxu0 0.0
        %5390 = vmatmul.mubr.f32.gmra.mrb[0].mxu0 %v5226
        %v5391 = vpop.f32.mrb[0].mxu0
        %v5392 = vadd.f32 0.0, %v5391
        %v5393 = vpop.f32.mrb[0].mxu0
        %5394 = vmatprep.mubr.f32.mxu0 0.0
        %5395 = vmatmul.mubr.f32.gmra.mrb[0].mxu0 %v5229
        %v5396 = vpop.f32.mrb[0].mxu0
        %v5397 = vadd.f32 0.0, %v5396
        %v5398 = vpop.f32.mrb[0].mxu0
        %5399 = vmatprep.mubr.f32.mxu0 0.0
        %5400 = vmatmul.mubr.f32.gmra.mrb[0].mxu0 %v5232
        %v5401 = vpop.f32.mrb[0].mxu0
        %v5402 = vadd.f32 0.0, %v5401
        %v5403 = vpop.f32.mrb[0].mxu0
        %5404 = vmatprep.mubr.f32.mxu0 0.0
        %5405 = vmatmul.mubr.f32.gmra.mrb[0].mxu0 %v5235
        %v5406 = vpop.f32.mrb[0].mxu0
        %v5407 = vadd.f32 0.0, %v5406
        %v5408 = vpop.f32.mrb[0].mxu0
        %5409 = vmatprep.mubr.f32.mxu0 0.0
        %5410 = vmatmul.mubr.f32.gmra.mrb[0].mxu0 %v5238
        %v5411 = vpop.f32.mrb[0].mxu0
        %v5412 = vadd.f32 0.0, %v5411
        %v5413 = vpop.f32.mrb[0].mxu0
        %5414 = vmatprep.mubr.f32.mxu0 0.0
        %5415 = vmatmul.mubr.f32.gmra.mrb[0].mxu0 %v5241
        %v5416 = vpop.f32.mrb[0].mxu0
        %v5417 = vadd.f32 0.0, %v5416
        %v5418 = vpop.f32.mrb[0].mxu0
        %5419 = vmatprep.mubr.f32.mxu0 0.0
        %5420 = vmatmul.mubr.f32.gmra.mrb[0].mxu0 %v5244
        %v5421 = vpop.f32.mrb[0].mxu0
        %v5422 = vadd.f32 0.0, %v5421
        %v5423 = vpop.f32.mrb[0].mxu0
        %5424 = vmatprep.mubr.f32.mxu0 0.0
        %5425 = vmatmul.mubr.f32.gmra.mrb[0].mxu0 %v5247
        %v5426 = vpop.f32.mrb[0].mxu0
        %v5427 = vadd.f32 0.0, %v5426
        %v5428 = vpop.f32.mrb[0].mxu0
        %5429 = vmatprep.mubr.f32.mxu0 0.0
        %5430 = vmatmul.mubr.f32.gmra.mrb[0].mxu0 %v5250
        %v5431 = vpop.f32.mrb[0].mxu0
        %v5432 = vadd.f32 0.0, %v5431
        %v5433 = vpop.f32.mrb[0].mxu0
        %5434 = vmatprep.mubr.f32.mxu0 0.0
        %5435 = vmatmul.mubr.f32.gmra.mrb[0].mxu0 %v5253
        %v5436 = vpop.f32.mrb[0].mxu0
        %v5437 = vadd.f32 0.0, %v5436
        %v5438 = vpop.f32.mrb[0].mxu0
        %5439 = vmatprep.mubr.f32.mxu0 0.0
        %5440 = vmatmul.mubr.f32.gmra.mrb[0].mxu0 %v5256
        %v5441 = vpop.f32.mrb[0].mxu0
        %v5442 = vadd.f32 0.0, %v5441
        %v5443 = vpop.f32.mrb[0].mxu0
        %5444 = vmatprep.mubr.f32.mxu0 0.0
        %5445 = vmatmul.mubr.f32.gmra.mrb[0].mxu0 %v5259
        %v5446 = vpop.f32.mrb[0].mxu0
        %v5447 = vadd.f32 0.0, %v5446
        %v5448 = vpop.f32.mrb[0].mxu0
        %5449 = vmatprep.mubr.f32.mxu0 0.0
        %5450 = vmatmul.mubr.f32.gmra.mrb[0].mxu0 %v5262
        %v5451 = vpop.f32.mrb[0].mxu0
        %v5452 = vadd.f32 0.0, %v5451
        %v5453 = vpop.f32.mrb[0].mxu0
        %5454 = vmatprep.mubr.f32.mxu0 0.0
        %5455 = vmatmul.mubr.f32.gmra.mrb[0].mxu0 %v5265
        %v5456 = vpop.f32.mrb[0].mxu0
        %v5457 = vadd.f32 0.0, %v5456
        %v5458 = vpop.f32.mrb[0].mxu0
        %5459 = vmatprep.mubr.f32.mxu0 0.0
        %5460 = vmatmul.mubr.f32.gmra.mrb[0].mxu0 %v5268
        %v5461 = vpop.f32.mrb[0].mxu0
        %v5462 = vadd.f32 0.0, %v5461
        %v5463 = vpop.f32.mrb[0].mxu0
        %5464 = vmatprep.mubr.f32.mxu0 0.0
        %5465 = vmatmul.mubr.f32.gmra.mrb[0].mxu0 %v5271
        %v5466 = vpop.f32.mrb[0].mxu0
        %v5467 = vadd.f32 0.0, %v5466
        %v5468 = vpop.f32.mrb[0].mxu0
        %5469 = vmatprep.mubr.f32.mxu0 0.0
        %5470 = vmatmul.mubr.f32.gmra.mrb[0].mxu0 %v5274
        %v5471 = vpop.f32.mrb[0].mxu0
        %v5472 = vadd.f32 0.0, %v5471
        %v5473 = vpop.f32.mrb[0].mxu0
        %5474 = vmatprep.mubr.f32.mxu0 0.0
        %5475 = vmatmul.mubr.f32.gmra.mrb[0].mxu0 %v5277
        %v5476 = vpop.f32.mrb[0].mxu0
        %v5477 = vadd.f32 0.0, %v5476
        %v5478 = vpop.f32.mrb[0].mxu0
        %5479 = vmatprep.mubr.f32.mxu0 0.0
        %5480 = vmatmul.mubr.f32.gmra.mrb[0].mxu0 %v5280
        %v5481 = vpop.f32.mrb[0].mxu0
        %v5482 = vadd.f32 0.0, %v5481
        %v5483 = vpop.f32.mrb[0].mxu0
        %5484 = vmatprep.mubr.f32.mxu0 0.0
        %5485 = vmatmul.mubr.f32.gmra.mrb[0].mxu0 %v5283
        %v5486 = vpop.f32.mrb[0].mxu0
        %v5487 = vadd.f32 0.0, %v5486
        %v5488 = vpop.f32.mrb[0].mxu0
        %5489 = vmatprep.mubr.f32.mxu0 0.0
        %5490 = vmatmul.mubr.f32.gmra.mrb[0].mxu0 %v5286
        %v5491 = vpop.f32.mrb[0].mxu0
        %v5492 = vadd.f32 0.0, %v5491
        %v5493 = vpop.f32.mrb[0].mxu0
        %5494 = vmatprep.mubr.f32.mxu0 0.0
        %5495 = vmatmul.mubr.f32.gmra.mrb[0].mxu0 %v5289
        %v5496 = vpop.f32.mrb[0].mxu0
        %v5497 = vadd.f32 0.0, %v5496
        %v5498 = vpop.f32.mrb[0].mxu0
        %5499 = vmatprep.mubr.f32.mxu0 0.0
        %5500 = vmatmul.mubr.f32.gmra.mrb[0].mxu0 %v5292
        %v5501 = vpop.f32.mrb[0].mxu0
        %v5502 = vadd.f32 0.0, %v5501
        %v5503 = vpop.f32.mrb[0].mxu0
        %5504 = vmatprep.mubr.f32.mxu0 0.0
        %5505 = vmatmul.mubr.f32.gmra.mrb[0].mxu0 %v5295
        %v5506 = vpop.f32.mrb[0].mxu0
        %v5507 = vadd.f32 0.0, %v5506
        %v5508 = vpop.f32.mrb[0].mxu0
        %5509 = vmatprep.mubr.f32.mxu0 0.0
        %5510 = vmatmul.mubr.f32.gmra.mrb[0].mxu0 %v5298
        %v5511 = vpop.f32.mrb[0].mxu0
        %v5512 = vadd.f32 0.0, %v5511
        %v5513 = vpop.f32.mrb[0].mxu0
        %5514 = vmatprep.mubr.f32.mxu0 0.0
        %5515 = vmatmul.mubr.f32.gmra.mrb[0].mxu0 %v5301
        %v5516 = vpop.f32.mrb[0].mxu0
        %v5517 = vadd.f32 0.0, %v5516
        %v5518 = vpop.f32.mrb[0].mxu0
        %5519 = vmatprep.mubr.f32.mxu0 0.0
        %5520 = vmatmul.mubr.f32.gmra.mrb[0].mxu0 %v5304
        %v5521 = vpop.f32.mrb[0].mxu0
        %v5522 = vadd.f32 0.0, %v5521
        %v5523 = vpop.f32.mrb[0].mxu0
        %5524 = vmatprep.mubr.f32.mxu0 0.0
        %5525 = vmatmul.mubr.f32.gmra.mrb[0].mxu0 %v5307
        %v5526 = vpop.f32.mrb[0].mxu0
        %v5527 = vadd.f32 0.0, %v5526
        %v5528 = vpop.f32.mrb[0].mxu0
        %5529 = vmatprep.mubr.f32.mxu0 0.0
        %5530 = vmatmul.mubr.f32.gmra.mrb[0].mxu0 %v5310
        %v5531 = vpop.f32.mrb[0].mxu0
        %v5532 = vadd.f32 0.0, %v5531
        %v5533 = vpop.f32.mrb[0].mxu0
        %5534 = vmatprep.mubr.f32.mxu0 0.0
        %5535 = vmatmul.mubr.f32.gmra.mrb[0].mxu0 %v5313
        %v5536 = vpop.f32.mrb[0].mxu0
        %v5537 = vadd.f32 0.0, %v5536
        %v5538 = vpop.f32.mrb[0].mxu0
        %5539 = vdwg.mxu0
        %v5540 = vadd.f32 %v5178, %v5382
        %v5541 = vadd.f32 %v5179, %v5387
        %v5542 = vadd.f32 %v5180, %v5392
        %v5543 = vadd.f32 %v5181, %v5397
        %v5544 = vadd.f32 %v5182, %v5402
        %v5545 = vadd.f32 %v5183, %v5407
        %v5546 = vadd.f32 %v5184, %v5412
        %v5547 = vadd.f32 %v5185, %v5417
        %v5548 = vadd.f32 %v5186, %v5422
        %v5549 = vadd.f32 %v5187, %v5427
        %v5550 = vadd.f32 %v5188, %v5432
        %v5551 = vadd.f32 %v5189, %v5437
        %v5552 = vadd.f32 %v5190, %v5442
        %v5553 = vadd.f32 %v5191, %v5447
        %v5554 = vadd.f32 %v5192, %v5452
        %v5555 = vadd.f32 %v5193, %v5457
        %v5556 = vadd.f32 %v5194, %v5462
        %v5557 = vadd.f32 %v5195, %v5467
        %v5558 = vadd.f32 %v5196, %v5472
        %v5559 = vadd.f32 %v5197, %v5477
        %v5560 = vadd.f32 %v5198, %v5482
        %v5561 = vadd.f32 %v5199, %v5487
        %v5562 = vadd.f32 %v5200, %v5492
        %v5563 = vadd.f32 %v5201, %v5497
        %v5564 = vadd.f32 %v5202, %v5502
        %v5565 = vadd.f32 %v5203, %v5507
        %v5566 = vadd.f32 %v5204, %v5512
        %v5567 = vadd.f32 %v5205, %v5517
        %v5568 = vadd.f32 %v5206, %v5522
        %v5569 = vadd.f32 %v5207, %v5527
        %v5570 = vadd.f32 %v5208, %v5532
        %v5571 = vadd.f32 %v5209, %v5537
        %5572 = vst [vmem:[#allocation3] sm:$0xff] %v5540
        %5573 = vst [vmem:[#allocation3 + $0x8] sm:$0xff] %v5541
        %5574 = vst [vmem:[#allocation3 + $0x10] sm:$0xff] %v5542
        %5575 = vst [vmem:[#allocation3 + $0x18] sm:$0xff] %v5543
        %5576 = vst [vmem:[#allocation3 + $0x20] sm:$0xff] %v5544
        %5577 = vst [vmem:[#allocation3 + $0x28] sm:$0xff] %v5545
        %5578 = vst [vmem:[#allocation3 + $0x30] sm:$0xff] %v5546
        %5579 = vst [vmem:[#allocation3 + $0x38] sm:$0xff] %v5547
        %5580 = vst [vmem:[#allocation3 + $0x40] sm:$0xff] %v5548
        %5581 = vst [vmem:[#allocation3 + $0x48] sm:$0xff] %v5549
        %5582 = vst [vmem:[#allocation3 + $0x50] sm:$0xff] %v5550
        %5583 = vst [vmem:[#allocation3 + $0x58] sm:$0xff] %v5551
        %5584 = vst [vmem:[#allocation3 + $0x60] sm:$0xff] %v5552
        %5585 = vst [vmem:[#allocation3 + $0x68] sm:$0xff] %v5553
        %5586 = vst [vmem:[#allocation3 + $0x70] sm:$0xff] %v5554
        %5587 = vst [vmem:[#allocation3 + $0x78] sm:$0xff] %v5555
        %5588 = vst [vmem:[#allocation3 + $0x80] sm:$0xff] %v5556
        %5589 = vst [vmem:[#allocation3 + $0x88] sm:$0xff] %v5557
        %5590 = vst [vmem:[#allocation3 + $0x90] sm:$0xff] %v5558
        %5591 = vst [vmem:[#allocation3 + $0x98] sm:$0xff] %v5559
        %5592 = vst [vmem:[#allocation3 + $0xa0] sm:$0xff] %v5560
        %5593 = vst [vmem:[#allocation3 + $0xa8] sm:$0xff] %v5561
        %5594 = vst [vmem:[#allocation3 + $0xb0] sm:$0xff] %v5562
        %5595 = vst [vmem:[#allocation3 + $0xb8] sm:$0xff] %v5563
        %5596 = vst [vmem:[#allocation3 + $0xc0] sm:$0xff] %v5564
        %5597 = vst [vmem:[#allocation3 + $0xc8] sm:$0xff] %v5565
        %5598 = vst [vmem:[#allocation3 + $0xd0] sm:$0xff] %v5566
        %5599 = vst [vmem:[#allocation3 + $0xd8] sm:$0xff] %v5567
        %5600 = vst [vmem:[#allocation3 + $0xe0] sm:$0xff] %v5568
        %5601 = vst [vmem:[#allocation3 + $0xe8] sm:$0xff] %v5569
        %5602 = vst [vmem:[#allocation3 + $0xf0] sm:$0xff] %v5570
        %5603 = vst [vmem:[#allocation3 + $0xf8] sm:$0xff] %v5571
        %v5604 = vld [vmem:[#allocation3] sm:$0xff]
        %v5605 = vld [vmem:[#allocation3 + $0x8] sm:$0xff]
        %v5606 = vld [vmem:[#allocation3 + $0x10] sm:$0xff]
        %v5607 = vld [vmem:[#allocation3 + $0x18] sm:$0xff]
        %v5608 = vld [vmem:[#allocation3 + $0x20] sm:$0xff]
        %v5609 = vld [vmem:[#allocation3 + $0x28] sm:$0xff]
        %v5610 = vld [vmem:[#allocation3 + $0x30] sm:$0xff]
        %v5611 = vld [vmem:[#allocation3 + $0x38] sm:$0xff]
        %v5612 = vld [vmem:[#allocation3 + $0x40] sm:$0xff]
        %v5613 = vld [vmem:[#allocation3 + $0x48] sm:$0xff]
        %v5614 = vld [vmem:[#allocation3 + $0x50] sm:$0xff]
        %v5615 = vld [vmem:[#allocation3 + $0x58] sm:$0xff]
        %v5616 = vld [vmem:[#allocation3 + $0x60] sm:$0xff]
        %v5617 = vld [vmem:[#allocation3 + $0x68] sm:$0xff]
        %v5618 = vld [vmem:[#allocation3 + $0x70] sm:$0xff]
        %v5619 = vld [vmem:[#allocation3 + $0x78] sm:$0xff]
        %v5620 = vld [vmem:[#allocation3 + $0x80] sm:$0xff]
        %v5621 = vld [vmem:[#allocation3 + $0x88] sm:$0xff]
        %v5622 = vld [vmem:[#allocation3 + $0x90] sm:$0xff]
        %v5623 = vld [vmem:[#allocation3 + $0x98] sm:$0xff]
        %v5624 = vld [vmem:[#allocation3 + $0xa0] sm:$0xff]
        %v5625 = vld [vmem:[#allocation3 + $0xa8] sm:$0xff]
        %v5626 = vld [vmem:[#allocation3 + $0xb0] sm:$0xff]
        %v5627 = vld [vmem:[#allocation3 + $0xb8] sm:$0xff]
        %v5628 = vld [vmem:[#allocation3 + $0xc0] sm:$0xff]
        %v5629 = vld [vmem:[#allocation3 + $0xc8] sm:$0xff]
        %v5630 = vld [vmem:[#allocation3 + $0xd0] sm:$0xff]
        %v5631 = vld [vmem:[#allocation3 + $0xd8] sm:$0xff]
        %v5632 = vld [vmem:[#allocation3 + $0xe0] sm:$0xff]
        %v5633 = vld [vmem:[#allocation3 + $0xe8] sm:$0xff]
        %v5634 = vld [vmem:[#allocation3 + $0xf0] sm:$0xff]
        %v5635 = vld [vmem:[#allocation3 + $0xf8] sm:$0xff]
        %5636 = vst [vmem:[%s443] sm:$0xff] %v5604
        %5637 = vst [vmem:[%s443 + $0x8] sm:$0xff] %v5605
        %5638 = vst [vmem:[%s443 + $0x10] sm:$0xff] %v5606
        %5639 = vst [vmem:[%s443 + $0x18] sm:$0xff] %v5607
        %5640 = vst [vmem:[%s443 + $0x20] sm:$0xff] %v5608
        %5641 = vst [vmem:[%s443 + $0x28] sm:$0xff] %v5609
        %5642 = vst [vmem:[%s443 + $0x30] sm:$0xff] %v5610
        %5643 = vst [vmem:[%s443 + $0x38] sm:$0xff] %v5611
        %5644 = vst [vmem:[%s443 + $0x40] sm:$0xff] %v5612
        %5645 = vst [vmem:[%s443 + $0x48] sm:$0xff] %v5613
        %5646 = vst [vmem:[%s443 + $0x50] sm:$0xff] %v5614
        %5647 = vst [vmem:[%s443 + $0x58] sm:$0xff] %v5615
        %5648 = vst [vmem:[%s443 + $0x60] sm:$0xff] %v5616
        %5649 = vst [vmem:[%s443 + $0x68] sm:$0xff] %v5617
        %5650 = vst [vmem:[%s443 + $0x70] sm:$0xff] %v5618
        %5651 = vst [vmem:[%s443 + $0x78] sm:$0xff] %v5619
        %5652 = vst [vmem:[%s443 + $0x80] sm:$0xff] %v5620
        %5653 = vst [vmem:[%s443 + $0x88] sm:$0xff] %v5621
        %5654 = vst [vmem:[%s443 + $0x90] sm:$0xff] %v5622
        %5655 = vst [vmem:[%s443 + $0x98] sm:$0xff] %v5623
        %5656 = vst [vmem:[%s443 + $0xa0] sm:$0xff] %v5624
        %5657 = vst [vmem:[%s443 + $0xa8] sm:$0xff] %v5625
        %5658 = vst [vmem:[%s443 + $0xb0] sm:$0xff] %v5626
        %5659 = vst [vmem:[%s443 + $0xb8] sm:$0xff] %v5627
        %5660 = vst [vmem:[%s443 + $0xc0] sm:$0xff] %v5628
        %5661 = vst [vmem:[%s443 + $0xc8] sm:$0xff] %v5629
        %5662 = vst [vmem:[%s443 + $0xd0] sm:$0xff] %v5630
        %5663 = vst [vmem:[%s443 + $0xd8] sm:$0xff] %v5631
        %5664 = vst [vmem:[%s443 + $0xe0] sm:$0xff] %v5632
        %5665 = vst [vmem:[%s443 + $0xe8] sm:$0xff] %v5633
        %5666 = vst [vmem:[%s443 + $0xf0] sm:$0xff] %v5634
        %5667 = vst [vmem:[%s443 + $0xf8] sm:$0xff] %v5635
        %s5668 = sand.u32 %s217, 1
        %s5669 = scalar_lea.sflag [#allocation6], %s5668
        %s5670 = sand.u32 %s217, 1
        %s5671 = smul.addr %s5670, 256
        %s5672 = scalar_lea.vmem [#allocation18], %s5671
        // Predicated region
        $region85: #{templ_emb_forward.2} parent=51 // pred_check
          %p5673 = pneg %p227
        $region86: #{templ_emb_forward.2} parent=51 // pred_check_branch
          %5675 = sbr.rel (%p5673) target = $region88
        $region87: #{templ_emb_forward.2} parent=51 // pred_region
          %s5676 = smul.u32 4, %s31
          %s5678 = ssub.s32 4096, 4096
          %5679 = vsyncadd %s5669, %s5678
          %s5680 = smul.addr %s5676, 8
          %s5681 = smul.addr %s5680, 128
          %s5682 = scalar_lea.hbm %s8, %s5681
          %s5683 = sshll.u32 %s5672, 4
          %s5684 = int_to_ptr.vmem [resolvable:$true] %s5683
          %5689 = dma.vmem_to_hbm [thread:$0]  %s5684, 4096, %s5682, %s5669, 128, 128, 8
        $region88: #{templ_emb_forward.2} parent=51 // pred_fallthru
          _
      $region52: #{templ_emb_forward.2} parent=5 // pred_fallthru
        _
      %p5690 = scmp.le.s32.totalorder 2, %s26
      // Predicated region
      $region89: #{templ_emb_forward.2} parent=5 // pred_check
        %p5691 = pneg %p5690
      $region90: #{templ_emb_forward.2} parent=5 // pred_check_branch
        %5693 = sbr.rel (%p5691) target = $region92
      $region91: #{templ_emb_forward.2} parent=5 // pred_region
        %s5694 = ssub.s32 %s26, 2
        // Predicated region
        $region93: #{templ_emb_forward.2} parent=91 // pred_check
          %p5695 = pneg %p233
        $region94: #{templ_emb_forward.2} parent=91 // pred_check_branch
          %5697 = sbr.rel (%p5695) target = $region96
        $region95: #{templ_emb_forward.2} parent=91 // pred_region
          %s5698 = sand.u32 %s218, 1
          %s5699 = scalar_lea.sflag [#allocation6], %s5698
          %s5700 = sand.u32 %s218, 1
          %s5701 = smul.addr %s5700, 256
          %s5702 = scalar_lea.vmem [#allocation18], %s5701
          %5703 = dma.done %s5699, 4096
        $region96: #{templ_emb_forward.2} parent=91 // pred_fallthru
          _
      $region92: #{templ_emb_forward.2} parent=5 // pred_fallthru
        _
    $region6: #{templ_emb_forward.2} parent=1 // loop_footer
      %s30 = sadd.s32 1, %s26
    $region7: #{templ_emb_forward.2} parent=1 // loop_footer_branch
      %25 = sbr.rel target = $region3
    $region8: #{templ_emb_forward.2} parent=1 // loop_exit
      _
    %5704 = vsyncpa [#allocation5], 1
    %s5705 = scalar_lea.sflag [#allocation5], 1
    %5706 = vsyncpa %s5705, 1
    %5707 = vsyncpa [#allocation8], 1
    %s5708 = scalar_lea.sflag [#allocation8], 1
    %5709 = vsyncpa %s5708, 1
    %5710 = vsyncpa [#allocation11], 1
    %5711 = vsyncpa [#allocation14], 1
    %5712 = vsyncpa [#allocation17], 1
    %5713 = vsyncpa [#allocation6], 1
    %s5714 = scalar_lea.sflag [#allocation6], 1
    %5715 = vsyncpa %s5714, 1

</llo_original>
